<compile_context>
chip_gen: v7x
topology: tpu7x:2x2x1
jax: 0.10.0
libtpu: 0.0.40
codegen_flags: <defaults>
</compile_context>

<pallas_src>
import functools

import jax
import jax.numpy as jnp
from jax import lax
from jax.experimental import pallas as pl
from jax.experimental.pallas import tpu as pltpu


def _round_up(x, m):
    return (x + m - 1) // m * m


def _const_spec(shape):
    zeros = (0,) * len(shape)
    return pl.BlockSpec(shape, lambda c, _z=zeros: _z)


# ---------------------------------------------------------------------------
# Kernel 1: fused bidirectional GRU layer (input projection + recurrence)
# ---------------------------------------------------------------------------
def _bigru_layer_kernel(*refs, num_x, tc, bsz, hidden, unroll):
    """One time chunk of one bidirectional GRU layer.

    Inputs (refs, in order):
      x_fwd[num_x]  : (tc*B, D_i)  chunk c of the layer input (fwd time order)
      x_bwd[num_x]  : (tc*B, D_i)  chunk nc-1-c of the layer input
      wih_f[num_x]  : (D_i, 3H)    input weights, columns [r | z | n]
      wih_b[num_x]  : (D_i, 3H)
      b_f, b_b      : (1, 3H)      b_ih (+ b_hh folded for r/z gates)
      whh_f, whh_b  : (H, 3H)      hidden weights, pre-transposed
      bhn           : (2, 1, H)    n-gate hidden bias (r-gated, kept separate)
    Outputs:
      out_f, out_b  : (tc*B, H)    chunk c / chunk nc-1-c of the direction out
    Scratch:
      gi_f, gi_b    : (tc*B, 3H)   per-chunk input projections (VMEM only)
      hf, hb        : (B, H)       hidden carries persisting across grid steps
    """
    h2 = 2 * hidden
    idx = 0
    xf_refs = refs[idx:idx + num_x]; idx += num_x
    xb_refs = refs[idx:idx + num_x]; idx += num_x
    wf_refs = refs[idx:idx + num_x]; idx += num_x
    wb_refs = refs[idx:idx + num_x]; idx += num_x
    bf_ref, bb_ref, whhf_ref, whhb_ref, bhn_ref = refs[idx:idx + 5]; idx += 5
    out_f_ref, out_b_ref = refs[idx:idx + 2]; idx += 2
    gif_scr, gib_scr, hf_scr, hb_scr = refs[idx:idx + 4]

    @pl.when(pl.program_id(0) == 0)
    def _init():
        hf_scr[...] = jnp.zeros_like(hf_scr)
        hb_scr[...] = jnp.zeros_like(hb_scr)

    # --- per-chunk input projection, hoisted out of the serial loop ---------
    gf = bf_ref[...]
    for xr, wr in zip(xf_refs, wf_refs):
        gf = gf + jnp.dot(xr[...], wr[...], preferred_element_type=jnp.float32)
    gif_scr[...] = gf
    gb = bb_ref[...]
    for xr, wr in zip(xb_refs, wb_refs):
        gb = gb + jnp.dot(xr[...], wr[...], preferred_element_type=jnp.float32)
    gib_scr[...] = gb

    # --- loop-invariant loads / broadcasts -----------------------------------
    whh_f = whhf_ref[...]
    whh_b = whhb_ref[...]
    bhn_f = jnp.broadcast_to(bhn_ref[0], (bsz, hidden))
    bhn_b = jnp.broadcast_to(bhn_ref[1], (bsz, hidden))

    def step(j, carry):
        hf, hb = carry
        rf = pl.multiple_of(j * bsz, bsz)                 # fwd local time j
        rb = pl.multiple_of((tc - 1 - j) * bsz, bsz)      # bwd local time

        # forward direction
        gi_f = gif_scr[pl.ds(rf, bsz), :]
        gh_f = jnp.dot(hf, whh_f, preferred_element_type=jnp.float32)
        rz_f = jax.nn.sigmoid(gi_f[:, :h2] + gh_f[:, :h2])
        n_f = jnp.tanh(gi_f[:, h2:] + rz_f[:, :hidden] * (gh_f[:, h2:] + bhn_f))
        hf_new = n_f + rz_f[:, hidden:] * (hf - n_f)      # == (1-z)*n + z*h

        # backward direction (reversed-order chunk)
        gi_b = gib_scr[pl.ds(rb, bsz), :]
        gh_b = jnp.dot(hb, whh_b, preferred_element_type=jnp.float32)
        rz_b = jax.nn.sigmoid(gi_b[:, :h2] + gh_b[:, :h2])
        n_b = jnp.tanh(gi_b[:, h2:] + rz_b[:, :hidden] * (gh_b[:, h2:] + bhn_b))
        hb_new = n_b + rz_b[:, hidden:] * (hb - n_b)

        out_f_ref[pl.ds(rf, bsz), :] = hf_new
        out_b_ref[pl.ds(rb, bsz), :] = hb_new
        return hf_new, hb_new

    hf_last, hb_last = lax.fori_loop(0, tc, step, (hf_scr[...], hb_scr[...]),
                                     unroll=unroll)
    # scratch only needs to persist across grid steps -> write once per chunk
    hf_scr[...] = hf_last
    hb_scr[...] = hb_last


# ---------------------------------------------------------------------------
# Kernel 2: lane-dense, row-tiled final projection  (1, N) = wf@xf^T + wb@xb^T
# ---------------------------------------------------------------------------
def _proj_kernel(xf_ref, xb_ref, wf_ref, wb_ref, b_ref, o_ref):
    dn = (((1,), (1,)), ((), ()))              # contract last dims, no batch
    o = lax.dot_general(wf_ref[...], xf_ref[...], dn,
                        preferred_element_type=jnp.float32)
    o = o + lax.dot_general(wb_ref[...], xb_ref[...], dn,
                            preferred_element_type=jnp.float32)
    o_ref[...] = o + b_ref[...]


# ---------------------------------------------------------------------------
# pallas_call wrappers
# ---------------------------------------------------------------------------
def _pick_time_chunk(seq_len, b_pad, d_total, hidden,
                     budget_bytes=20 * 1024 * 1024):
    """Largest divisor of T whose chunk footprint fits the VMEM budget."""
    # per chunk-row f32 words: x fwd+bwd double-buffered (4*D) + gi scratch
    # both dirs (6H) + out both dirs double-buffered (4H)
    per_row = 4 * (4 * d_total + 10 * hidden)
    cap = max(1, min(seq_len, budget_bytes // max(per_row * b_pad, 1), 512))
    for tc in range(cap, 0, -1):
        if seq_len % tc == 0:
            return tc
    return 1


def bigru_layer(x_parts, lp, seq_len, b_pad):
    hidden = lp["whh_f"].shape[0]
    num_x = len(x_parts)
    d_total = sum(int(p.shape[1]) for p in x_parts)
    tc = _pick_time_chunk(seq_len, b_pad, d_total, hidden)
    nc = seq_len // tc
    tcb = tc * b_pad

    if tc <= 8:
        unroll = True
    else:
        unroll = next((u for u in (8, 4, 2) if tc % u == 0), 1)

    fwd_map = lambda c: (c, 0)
    bwd_map = lambda c: (nc - 1 - c, 0)

    x_fwd_specs = [pl.BlockSpec((tcb, int(p.shape[1])), fwd_map) for p in x_parts]
    x_bwd_specs = [pl.BlockSpec((tcb, int(p.shape[1])), bwd_map) for p in x_parts]
    w_f_specs = [_const_spec(w.shape) for w in lp["wih_f_parts"]]
    w_b_specs = [_const_spec(w.shape) for w in lp["wih_b_parts"]]

    kernel = functools.partial(_bigru_layer_kernel, num_x=num_x, tc=tc,
                               bsz=b_pad, hidden=hidden, unroll=unroll)

    # rough per-chunk VMEM footprint -> scoped limit (valid on all generations)
    est = tcb * 4 * (4 * d_total + 10 * hidden) \
        + 4 * 2 * (2 * d_total + hidden) * 3 * hidden
    vmem_limit = int(min(max(2 * est, 32 * 1024 * 1024), 56 * 1024 * 1024))

    return pl.pallas_call(
        kernel,
        out_shape=(jax.ShapeDtypeStruct((seq_len * b_pad, hidden), jnp.float32),
                   jax.ShapeDtypeStruct((seq_len * b_pad, hidden), jnp.float32)),
        grid=(nc,),
        in_specs=(x_fwd_specs + x_bwd_specs + w_f_specs + w_b_specs +
                  [_const_spec(lp["b_f"].shape), _const_spec(lp["b_b"].shape),
                   _const_spec(lp["whh_f"].shape), _const_spec(lp["whh_b"].shape),
                   _const_spec(lp["bhn"].shape)]),
        out_specs=(pl.BlockSpec((tcb, hidden), fwd_map),
                   pl.BlockSpec((tcb, hidden), bwd_map)),
        scratch_shapes=[pltpu.VMEM((tcb, 3 * hidden), jnp.float32),
                        pltpu.VMEM((tcb, 3 * hidden), jnp.float32),
                        pltpu.VMEM((b_pad, hidden), jnp.float32),
                        pltpu.VMEM((b_pad, hidden), jnp.float32)],
        compiler_params=pltpu.CompilerParams(
            dimension_semantics=("arbitrary",),
            vmem_limit_bytes=vmem_limit),
    )(*x_parts, *x_parts, *lp["wih_f_parts"], *lp["wih_b_parts"],
      lp["b_f"], lp["b_b"], lp["whh_f"], lp["whh_b"], lp["bhn"])


def _pick_row_tile(n_rows):
    if n_rows % 128:
        return n_rows                       # full array (single block)
    for cand in (4096, 2048, 1024, 512, 256, 128):
        if n_rows % cand == 0:
            return cand
    return n_rows


def linear_projection(xf2d, xb2d, wf, wb, bias):
    n_rows, hidden = xf2d.shape
    nt = _pick_row_tile(n_rows)
    grid = (n_rows // nt,)
    return pl.pallas_call(
        _proj_kernel,
        out_shape=jax.ShapeDtypeStruct((1, n_rows), jnp.float32),
        grid=grid,
        in_specs=[pl.BlockSpec((nt, hidden), lambda c: (c, 0)),
                  pl.BlockSpec((nt, hidden), lambda c: (c, 0)),
                  _const_spec(wf.shape),
                  _const_spec(wb.shape),
                  _const_spec(bias.shape)],
        out_specs=pl.BlockSpec((1, nt), lambda c: (0, c)),
        compiler_params=pltpu.CompilerParams(
            dimension_semantics=("parallel",)),
    )(xf2d, xb2d, wf, wb, bias)


# ---------------------------------------------------------------------------
# One-time parameter preparation (transposes / gate splits / bias folds)
# ---------------------------------------------------------------------------
def prepare_params(params):
    fp = {"embedding": params["embedding"].astype(jnp.float32), "gru": []}

    for idx, lpt in enumerate(params["gru"]):
        hidden = lpt["w_hh_f"].shape[1]
        d_in = lpt["w_ih_f"].shape[1]

        def fold(b_ih, b_hh):
            # r/z gates: fold b_ih + b_hh; n gate: b_ih only (b_hn stays inside
            # the recurrence because it is multiplied by r).
            return jnp.concatenate(
                [b_ih[:2 * hidden] + b_hh[:2 * hidden], b_ih[2 * hidden:]]
            ).reshape(1, 3 * hidden).astype(jnp.float32)

        wih_f = jnp.transpose(lpt["w_ih_f"]).astype(jnp.float32)   # (D, 3H)
        wih_b = jnp.transpose(lpt["w_ih_b"]).astype(jnp.float32)
        if idx == 0:
            wih_f_parts = (wih_f,)
            wih_b_parts = (wih_b,)
        else:
            # split so the next layer consumes out_f / out_b without a concat
            half = d_in // 2
            wih_f_parts = (wih_f[:half], wih_f[half:])
            wih_b_parts = (wih_b[:half], wih_b[half:])

        fp["gru"].append({
            "wih_f_parts": wih_f_parts,
            "wih_b_parts": wih_b_parts,
            "b_f": fold(lpt["b_ih_f"], lpt["b_hh_f"]),
            "b_b": fold(lpt["b_ih_b"], lpt["b_hh_b"]),
            "whh_f": jnp.transpose(lpt["w_hh_f"]).astype(jnp.float32),  # (H,3H)
            "whh_b": jnp.transpose(lpt["w_hh_b"]).astype(jnp.float32),
            "bhn": jnp.stack([lpt["b_hh_f"][2 * hidden:],
                              lpt["b_hh_b"][2 * hidden:]],
                             axis=0).reshape(2, 1, hidden).astype(jnp.float32),
        })

    h_last = params["gru"][-1]["w_hh_f"].shape[1]
    fp["proj_wf"] = params["proj_w"][:, :h_last].astype(jnp.float32)   # (1, H)
    fp["proj_wb"] = params["proj_w"][:, h_last:].astype(jnp.float32)   # (1, H)
    fp["proj_b"] = params["proj_b"].reshape(1, 1).astype(jnp.float32)
    return fp


# ---------------------------------------------------------------------------
# Full model forward (embedding gather + small reshapes are plain-JAX glue)
# ---------------------------------------------------------------------------
def sentiment_bigru_forward(fparams, sentences):
    """sentences: (B, T) int32 -> (B, T, 1) float32."""
    bsz, seq_len = sentences.shape
    b_pad = _round_up(bsz, 8)                            # sublane alignment
    # TODO(synk): embedding gather kept as plain-JAX glue (no rectangular tile)
    emb = jnp.take(fparams["embedding"], sentences, axis=0)          # (B,T,E)
    x = jnp.transpose(emb, (1, 0, 2))                                # (T,B,E)
    if b_pad != bsz:
        x = jnp.pad(x, ((0, 0), (0, b_pad - bsz), (0, 0)))
    # time-major rows: row n = t*B_pad + b
    x_parts = (x.reshape(seq_len * b_pad, -1),)

    for lp in fparams["gru"]:
        out_f, out_b = bigru_layer(x_parts, lp, seq_len, b_pad)
        x_parts = (out_f, out_b)

    proj = linear_projection(x_parts[0], x_parts[1],
                             fparams["proj_wf"], fparams["proj_wb"],
                             fparams["proj_b"])                      # (1, T*Bp)
    out = proj.reshape(seq_len, b_pad)[:, :bsz]                      # (T, B)
    return jnp.transpose(out, (1, 0))[:, :, None]


# ---------------------------------------------------------------------------
# Pure-JAX reference (PyTorch semantics, f32) for the correctness check
# ---------------------------------------------------------------------------
def _gru_dir_ref(x_tbd, w_ih, w_hh, b_ih, b_hh):
    seq_len, bsz, _ = x_tbd.shape
    hidden = w_hh.shape[1]
    h = jnp.zeros((bsz, hidden), jnp.float32)
    outs = []
    for t in range(seq_len):
        gi = x_tbd[t] @ w_ih.T + b_ih
        gh = h @ w_hh.T + b_hh
        i_r, i_z, i_n = gi[:, :hidden], gi[:, hidden:2 * hidden], gi[:, 2 * hidden:]
        h_r, h_z, h_n = gh[:, :hidden], gh[:, hidden:2 * hidden], gh[:, 2 * hidden:]
        r = jax.nn.sigmoid(i_r + h_r)
        z = jax.nn.sigmoid(i_z + h_z)
        n = jnp.tanh(i_n + r * h_n)
        h = (1.0 - z) * n + z * h
        outs.append(h)
    return jnp.stack(outs, axis=0)


def sentiment_bigru_ref(params, sentences):
    bsz, seq_len = sentences.shape
    emb = jnp.take(params["embedding"], sentences, axis=0)
    x = jnp.transpose(emb, (1, 0, 2)).astype(jnp.float32)
    for lp in params["gru"]:
        of = _gru_dir_ref(x, lp["w_ih_f"], lp["w_hh_f"], lp["b_ih_f"], lp["b_hh_f"])
        ob = _gru_dir_ref(x[::-1], lp["w_ih_b"], lp["w_hh_b"],
                          lp["b_ih_b"], lp["b_hh_b"])[::-1]
        x = jnp.concatenate([of, ob], axis=-1)
    out = jnp.transpose(x, (1, 0, 2)).reshape(bsz * seq_len, -1)
    proj = out @ params["proj_w"].T + params["proj_b"]
    return proj.reshape(bsz, seq_len, 1)


# ---------------------------------------------------------------------------
# Deterministic parameter construction (shapes follow nn.Embedding / nn.GRU /
# nn.Linear of the PyTorch module)
# ---------------------------------------------------------------------------
def init_params(key, vocab_size, embedding_size, hidden_size, num_layers):
    keys = jax.random.split(key, 3 + num_layers)
    k = 1.0 / jnp.sqrt(hidden_size)

    params = {
        "embedding": jax.random.normal(
            keys[0], (vocab_size, embedding_size), jnp.float32),
        "proj_w": jax.random.uniform(
            keys[1], (1, 2 * hidden_size), jnp.float32, -k, k),
        "proj_b": jax.random.uniform(keys[2], (1,), jnp.float32, -k, k),
        "gru": [],
    }

    for layer in range(num_layers):
        d_in = embedding_size if layer == 0 else 2 * hidden_size
        lk = jax.random.split(keys[3 + layer], 8)
        params["gru"].append({
            "w_ih_f": jax.random.uniform(lk[0], (3 * hidden_size, d_in), jnp.float32, -k, k),
            "w_hh_f": jax.random.uniform(lk[1], (3 * hidden_size, hidden_size), jnp.float32, -k, k),
            "b_ih_f": jax.random.uniform(lk[2], (3 * hidden_size,), jnp.float32, -k, k),
            "b_hh_f": jax.random.uniform(lk[3], (3 * hidden_size,), jnp.float32, -k, k),
            "w_ih_b": jax.random.uniform(lk[4], (3 * hidden_size, d_in), jnp.float32, -k, k),
            "w_hh_b": jax.random.uniform(lk[5], (3 * hidden_size, hidden_size), jnp.float32, -k, k),
            "b_ih_b": jax.random.uniform(lk[6], (3 * hidden_size,), jnp.float32, -k, k),
            "b_hh_b": jax.random.uniform(lk[7], (3 * hidden_size,), jnp.float32, -k, k),
        })
    return params


# ---------------------------------------------------------------------------
if __name__ == "__main__":
    VOCAB = 50
    EMB = 16
    HIDDEN = 32
    NUM_LAYERS = 2
    B, T = 2, 8

    key = jax.random.PRNGKey(0)
    pkey, dkey = jax.random.split(key)
    params = init_params(pkey, VOCAB, EMB, HIDDEN, NUM_LAYERS)
    fparams = prepare_params(params)
    sentences = jax.random.randint(dkey, (B, T), 0, VOCAB, dtype=jnp.int32)

    fwd = jax.jit(sentiment_bigru_forward)
    out = jax.block_until_ready(fwd(fparams, sentences))
    assert out.shape == (B, T, 1), out.shape

    ref = jax.block_until_ready(sentiment_bigru_ref(params, sentences))
    max_err = float(jnp.max(jnp.abs(out - ref)))
    assert max_err < 2e-4, f"mismatch vs reference: {max_err}"

    print("KERNEL_OK")
</pallas_src>

<mosaic_0001>
module attributes {stable_mosaic.version = 11 : i64} {
  func.func @_proj_kernel(%arg0: i32, %arg1: memref<64x32xf32, #tpu.memory_space<vmem>>, %arg2: memref<64x32xf32, #tpu.memory_space<vmem>>, %arg3: memref<1x32xf32, #tpu.memory_space<vmem>>, %arg4: memref<1x32xf32, #tpu.memory_space<vmem>>, %arg5: memref<1x1xf32, #tpu.memory_space<vmem>>, %arg6: memref<1x64xf32, #tpu.memory_space<vmem>>) attributes {dimension_semantics = [#tpu.dimension_semantics<parallel>], iteration_bounds = array<i64: 1>, scalar_prefetch = 0 : i64, scratch_operands = 0 : i64, tpu.core_type = #tpu.core_type<tc>, window_params = [{transform_indices = @transform_0, window_bounds = array<i64: 64, 32>}, {transform_indices = @transform_1, window_bounds = array<i64: 64, 32>}, {pipeline_mode = #tpu.pipeline_mode<synchronous>, transform_indices = @transform_2, window_bounds = array<i64: 1, 32>}, {pipeline_mode = #tpu.pipeline_mode<synchronous>, transform_indices = @transform_3, window_bounds = array<i64: 1, 32>}, {pipeline_mode = #tpu.pipeline_mode<synchronous>, transform_indices = @transform_4, window_bounds = array<i64: 1, 1>}, {transform_indices = @transform_5, window_bounds = array<i64: 1, 64>}]} {
    %c0 = arith.constant 0 : index
    %c0_0 = arith.constant 0 : index
    %0 = vector.load %arg3[%c0, %c0_0] : memref<1x32xf32, #tpu.memory_space<vmem>>, vector<1x32xf32>
    %c0_1 = arith.constant 0 : index
    %c0_2 = arith.constant 0 : index
    %1 = vector.load %arg1[%c0_1, %c0_2] : memref<64x32xf32, #tpu.memory_space<vmem>>, vector<64x32xf32>
    %cst = arith.constant dense<0.000000e+00> : vector<1x64xf32>
    %2 = tpu.matmul %0, %1, %cst {dimension_numbers = #tpu.dot_dimension_numbers<[1], [1], [0], [0], [0, 0, 1, 0], [], []>} : vector<1x32xf32>, vector<64x32xf32>, vector<1x64xf32> -> vector<1x64xf32>
    %c0_3 = arith.constant 0 : index
    %c0_4 = arith.constant 0 : index
    %3 = vector.load %arg4[%c0_3, %c0_4] : memref<1x32xf32, #tpu.memory_space<vmem>>, vector<1x32xf32>
    %c0_5 = arith.constant 0 : index
    %c0_6 = arith.constant 0 : index
    %4 = vector.load %arg2[%c0_5, %c0_6] : memref<64x32xf32, #tpu.memory_space<vmem>>, vector<64x32xf32>
    %cst_7 = arith.constant dense<0.000000e+00> : vector<1x64xf32>
    %5 = tpu.matmul %3, %4, %cst_7 {dimension_numbers = #tpu.dot_dimension_numbers<[1], [1], [0], [0], [0, 0, 1, 0], [], []>} : vector<1x32xf32>, vector<64x32xf32>, vector<1x64xf32> -> vector<1x64xf32>
    %6 = arith.addf %2, %5 : vector<1x64xf32>
    %c0_8 = arith.constant 0 : index
    %c0_9 = arith.constant 0 : index
    %7 = vector.load %arg5[%c0_8, %c0_9] : memref<1x1xf32, #tpu.memory_space<vmem>>, vector<1x1xf32>
    %8 = vector.broadcast %7 : vector<1x1xf32> to vector<1x64xf32>
    %9 = arith.addf %6, %8 : vector<1x64xf32>
    %c0_10 = arith.constant 0 : index
    %c0_11 = arith.constant 0 : index
    %10 = vector.load %arg6[%c0_10, %c0_11] : memref<1x64xf32, #tpu.memory_space<vmem>>, vector<1x64xf32>
    tpu.vector_store %arg6[%c0_10, %c0_11], %9 {strides = array<i32>} : memref<1x64xf32, #tpu.memory_space<vmem>>, vector<1x64xf32>,
    return
  }
  func.func @transform_0(%arg0: i32) -> (i32, i32) {
    %c0_i32 = arith.constant 0 : i32
    %c0_i32_0 = arith.constant 0 : i32
    return %arg0, %c0_i32 : i32, i32
  }
  func.func @transform_1(%arg0: i32) -> (i32, i32) {
    %c0_i32 = arith.constant 0 : i32
    %c0_i32_0 = arith.constant 0 : i32
    return %arg0, %c0_i32 : i32, i32
  }
  func.func @transform_2(%arg0: i32) -> (i32, i32) {
    %c0_i32 = arith.constant 0 : i32
    %c0_i32_0 = arith.constant 0 : i32
    %c0_i32_1 = arith.constant 0 : i32
    return %c0_i32, %c0_i32_0 : i32, i32
  }
  func.func @transform_3(%arg0: i32) -> (i32, i32) {
    %c0_i32 = arith.constant 0 : i32
    %c0_i32_0 = arith.constant 0 : i32
    %c0_i32_1 = arith.constant 0 : i32
    return %c0_i32, %c0_i32_0 : i32, i32
  }
  func.func @transform_4(%arg0: i32) -> (i32, i32) {
    %c0_i32 = arith.constant 0 : i32
    %c0_i32_0 = arith.constant 0 : i32
    %c0_i32_1 = arith.constant 0 : i32
    return %c0_i32, %c0_i32_0 : i32, i32
  }
  func.func @transform_5(%arg0: i32) -> (i32, i32) {
    %c0_i32 = arith.constant 0 : i32
    %c0_i32_0 = arith.constant 0 : i32
    return %c0_i32, %arg0 : i32, i32
  }
}

module attributes {stable_mosaic.version = 11 : i64} {
  func.func @_bigru_layer_kernel(%arg0: i32, %arg1: memref<64x16xf32, #tpu.memory_space<vmem>>, %arg2: memref<64x16xf32, #tpu.memory_space<vmem>>, %arg3: memref<16x96xf32, #tpu.memory_space<vmem>>, %arg4: memref<16x96xf32, #tpu.memory_space<vmem>>, %arg5: memref<1x96xf32, #tpu.memory_space<vmem>>, %arg6: memref<1x96xf32, #tpu.memory_space<vmem>>, %arg7: memref<32x96xf32, #tpu.memory_space<vmem>>, %arg8: memref<32x96xf32, #tpu.memory_space<vmem>>, %arg9: memref<2x1x32xf32, #tpu.memory_space<vmem>>, %arg10: memref<64x32xf32, #tpu.memory_space<vmem>>, %arg11: memref<64x32xf32, #tpu.memory_space<vmem>>, %arg12: memref<64x96xf32, #tpu.memory_space<vmem>>, %arg13: memref<64x96xf32, #tpu.memory_space<vmem>>, %arg14: memref<8x32xf32, #tpu.memory_space<vmem>>, %arg15: memref<8x32xf32, #tpu.memory_space<vmem>>) attributes {dimension_semantics = [#tpu.dimension_semantics<arbitrary>], iteration_bounds = array<i64: 1>, scalar_prefetch = 0 : i64, scratch_operands = 4 : i64, tpu.core_type = #tpu.core_type<tc>, window_params = [{transform_indices = @transform_0, window_bounds = array<i64: 64, 16>}, {transform_indices = @transform_1, window_bounds = array<i64: 64, 16>}, {pipeline_mode = #tpu.pipeline_mode<synchronous>, transform_indices = @transform_2, window_bounds = array<i64: 16, 96>}, {pipeline_mode = #tpu.pipeline_mode<synchronous>, transform_indices = @transform_3, window_bounds = array<i64: 16, 96>}, {pipeline_mode = #tpu.pipeline_mode<synchronous>, transform_indices = @transform_4, window_bounds = array<i64: 1, 96>}, {pipeline_mode = #tpu.pipeline_mode<synchronous>, transform_indices = @transform_5, window_bounds = array<i64: 1, 96>}, {pipeline_mode = #tpu.pipeline_mode<synchronous>, transform_indices = @transform_6, window_bounds = array<i64: 32, 96>}, {pipeline_mode = #tpu.pipeline_mode<synchronous>, transform_indices = @transform_7, window_bounds = array<i64: 32, 96>}, {pipeline_mode = #tpu.pipeline_mode<synchronous>, transform_indices = @transform_8, window_bounds = array<i64: 2, 1, 32>}, {transform_indices = @transform_9, window_bounds = array<i64: 64, 32>}, {transform_indices = @transform_10, window_bounds = array<i64: 64, 32>}]} {
    %c0_i32 = arith.constant 0 : i32
    %0 = arith.cmpi eq, %arg0, %c0_i32 : i32
    %1 = arith.extui %0 : i1 to i32
    %c0_i32_0 = arith.constant 0 : i32
    %2 = arith.cmpi ne, %1, %c0_i32_0 : i32
    scf.if %2 {
      %cst_123 = arith.constant 0.000000e+00 : f32
      %455 = vector.broadcast %cst_123 : f32 to vector<8x32xf32>
      %c0_124 = arith.constant 0 : index
      %c0_125 = arith.constant 0 : index
      %456 = vector.load %arg14[%c0_124, %c0_125] : memref<8x32xf32, #tpu.memory_space<vmem>>, vector<8x32xf32>
      tpu.vector_store %arg14[%c0_124, %c0_125], %455 {strides = array<i32>} : memref<8x32xf32, #tpu.memory_space<vmem>>, vector<8x32xf32>,
      %cst_126 = arith.constant 0.000000e+00 : f32
      %457 = vector.broadcast %cst_126 : f32 to vector<8x32xf32>
      %c0_127 = arith.constant 0 : index
      %c0_128 = arith.constant 0 : index
      %458 = vector.load %arg15[%c0_127, %c0_128] : memref<8x32xf32, #tpu.memory_space<vmem>>, vector<8x32xf32>
      tpu.vector_store %arg15[%c0_127, %c0_128], %457 {strides = array<i32>} : memref<8x32xf32, #tpu.memory_space<vmem>>, vector<8x32xf32>,
    } else {
    }
    %c0 = arith.constant 0 : index
    %c0_1 = arith.constant 0 : index
    %3 = vector.load %arg5[%c0, %c0_1] : memref<1x96xf32, #tpu.memory_space<vmem>>, vector<1x96xf32>
    %c0_2 = arith.constant 0 : index
    %c0_3 = arith.constant 0 : index
    %4 = vector.load %arg1[%c0_2, %c0_3] : memref<64x16xf32, #tpu.memory_space<vmem>>, vector<64x16xf32>
    %c0_4 = arith.constant 0 : index
    %c0_5 = arith.constant 0 : index
    %5 = vector.load %arg3[%c0_4, %c0_5] : memref<16x96xf32, #tpu.memory_space<vmem>>, vector<16x96xf32>
    %cst = arith.constant dense<0.000000e+00> : vector<64x96xf32>
    %6 = tpu.matmul %4, %5, %cst {dimension_numbers = #tpu.dot_dimension_numbers<[1], [0], [0], [1], [0, 0, 1, 1], [], []>} : vector<64x16xf32>, vector<16x96xf32>, vector<64x96xf32> -> vector<64x96xf32>
    %7 = vector.broadcast %3 : vector<1x96xf32> to vector<64x96xf32>
    %8 = arith.addf %7, %6 : vector<64x96xf32>
    %c0_6 = arith.constant 0 : index
    %c0_7 = arith.constant 0 : index
    %9 = vector.load %arg12[%c0_6, %c0_7] : memref<64x96xf32, #tpu.memory_space<vmem>>, vector<64x96xf32>
    tpu.vector_store %arg12[%c0_6, %c0_7], %8 {strides = array<i32>} : memref<64x96xf32, #tpu.memory_space<vmem>>, vector<64x96xf32>,
    %c0_8 = arith.constant 0 : index
    %c0_9 = arith.constant 0 : index
    %10 = vector.load %arg6[%c0_8, %c0_9] : memref<1x96xf32, #tpu.memory_space<vmem>>, vector<1x96xf32>
    %c0_10 = arith.constant 0 : index
    %c0_11 = arith.constant 0 : index
    %11 = vector.load %arg2[%c0_10, %c0_11] : memref<64x16xf32, #tpu.memory_space<vmem>>, vector<64x16xf32>
    %c0_12 = arith.constant 0 : index
    %c0_13 = arith.constant 0 : index
    %12 = vector.load %arg4[%c0_12, %c0_13] : memref<16x96xf32, #tpu.memory_space<vmem>>, vector<16x96xf32>
    %cst_14 = arith.constant dense<0.000000e+00> : vector<64x96xf32>
    %13 = tpu.matmul %11, %12, %cst_14 {dimension_numbers = #tpu.dot_dimension_numbers<[1], [0], [0], [1], [0, 0, 1, 1], [], []>} : vector<64x16xf32>, vector<16x96xf32>, vector<64x96xf32> -> vector<64x96xf32>
    %14 = vector.broadcast %10 : vector<1x96xf32> to vector<64x96xf32>
    %15 = arith.addf %14, %13 : vector<64x96xf32>
    %c0_15 = arith.constant 0 : index
    %c0_16 = arith.constant 0 : index
    %16 = vector.load %arg13[%c0_15, %c0_16] : memref<64x96xf32, #tpu.memory_space<vmem>>, vector<64x96xf32>
    tpu.vector_store %arg13[%c0_15, %c0_16], %15 {strides = array<i32>} : memref<64x96xf32, #tpu.memory_space<vmem>>, vector<64x96xf32>,
    %c0_17 = arith.constant 0 : index
    %c0_18 = arith.constant 0 : index
    %17 = vector.load %arg7[%c0_17, %c0_18] : memref<32x96xf32, #tpu.memory_space<vmem>>, vector<32x96xf32>
    %c0_19 = arith.constant 0 : index
    %c0_20 = arith.constant 0 : index
    %18 = vector.load %arg8[%c0_19, %c0_20] : memref<32x96xf32, #tpu.memory_space<vmem>>, vector<32x96xf32>
    %c0_21 = arith.constant 0 : index
    %c0_22 = arith.constant 0 : index
    %c0_23 = arith.constant 0 : index
    %19 = vector.load %arg9[%c0_21, %c0_22, %c0_23] : memref<2x1x32xf32, #tpu.memory_space<vmem>>, vector<1x1x32xf32>
    %20 = vector.shape_cast %19 : vector<1x1x32xf32> to vector<1x32xf32>
    %21 = vector.shape_cast %20 : vector<1x32xf32> to vector<1x32xf32>
    %22 = vector.broadcast %21 : vector<1x32xf32> to vector<8x32xf32>
    %c1 = arith.constant 1 : index
    %c0_24 = arith.constant 0 : index
    %c0_25 = arith.constant 0 : index
    %23 = vector.load %arg9[%c1, %c0_24, %c0_25] : memref<2x1x32xf32, #tpu.memory_space<vmem>>, vector<1x1x32xf32>
    %24 = vector.shape_cast %23 : vector<1x1x32xf32> to vector<1x32xf32>
    %25 = vector.shape_cast %24 : vector<1x32xf32> to vector<1x32xf32>
    %26 = vector.broadcast %25 : vector<1x32xf32> to vector<8x32xf32>
    %c0_26 = arith.constant 0 : index
    %c0_27 = arith.constant 0 : index
    %27 = vector.load %arg14[%c0_26, %c0_27] : memref<8x32xf32, #tpu.memory_space<vmem>>, vector<8x32xf32>
    %c0_28 = arith.constant 0 : index
    %c0_29 = arith.constant 0 : index
    %28 = vector.load %arg15[%c0_28, %c0_29] : memref<8x32xf32, #tpu.memory_space<vmem>>, vector<8x32xf32>
    %c0_i32_30 = arith.constant 0 : i32
    %c8_i32 = arith.constant 8 : i32
    %29 = arith.muli %c0_i32_30, %c8_i32 : i32
    %30 = tpu.assume_multiple %29, 8 : i32
    %c7_i32 = arith.constant 7 : i32
    %31 = arith.subi %c7_i32, %c0_i32_30 : i32
    %c8_i32_31 = arith.constant 8 : i32
    %32 = arith.muli %31, %c8_i32_31 : i32
    %33 = tpu.assume_multiple %32, 8 : i32
    %34 = arith.index_cast %30 : i32 to index
    %c0_32 = arith.constant 0 : index
    %35 = vector.load %arg12[%34, %c0_32] : memref<64x96xf32, #tpu.memory_space<vmem>>, vector<8x96xf32>
    %cst_33 = arith.constant dense<0.000000e+00> : vector<8x96xf32>
    %36 = tpu.matmul %27, %17, %cst_33 {dimension_numbers = #tpu.dot_dimension_numbers<[1], [0], [0], [1], [0, 0, 1, 1], [], []>} : vector<8x32xf32>, vector<32x96xf32>, vector<8x96xf32> -> vector<8x96xf32>
    %37 = vector.extract_strided_slice %35 {offsets = [0, 0], sizes = [8, 64], strides = [1, 1]} : vector<8x96xf32> to vector<8x64xf32>
    %38 = vector.extract_strided_slice %36 {offsets = [0, 0], sizes = [8, 64], strides = [1, 1]} : vector<8x96xf32> to vector<8x64xf32>
    %39 = arith.addf %37, %38 : vector<8x64xf32>
    %40 = arith.negf %39 : vector<8x64xf32>
    %41 = math.exp %40 : vector<8x64xf32>
    %cst_34 = arith.constant 1.000000e+00 : f32
    %42 = vector.broadcast %cst_34 : f32 to vector<8x64xf32>
    %43 = arith.addf %42, %41 : vector<8x64xf32>
    %44 = arith.divf %42, %43 : vector<8x64xf32>
    %45 = vector.extract_strided_slice %35 {offsets = [0, 64], sizes = [8, 32], strides = [1, 1]} : vector<8x96xf32> to vector<8x32xf32>
    %46 = vector.extract_strided_slice %44 {offsets = [0, 0], sizes = [8, 32], strides = [1, 1]} : vector<8x64xf32> to vector<8x32xf32>
    %47 = vector.extract_strided_slice %36 {offsets = [0, 64], sizes = [8, 32], strides = [1, 1]} : vector<8x96xf32> to vector<8x32xf32>
    %48 = arith.addf %47, %22 : vector<8x32xf32>
    %49 = arith.mulf %46, %48 : vector<8x32xf32>
    %50 = arith.addf %45, %49 : vector<8x32xf32>
    %51 = math.tanh %50 : vector<8x32xf32>
    %52 = vector.extract_strided_slice %44 {offsets = [0, 32], sizes = [8, 32], strides = [1, 1]} : vector<8x64xf32> to vector<8x32xf32>
    %53 = arith.subf %27, %51 : vector<8x32xf32>
    %54 = arith.mulf %52, %53 : vector<8x32xf32>
    %55 = arith.addf %51, %54 : vector<8x32xf32>
    %56 = arith.index_cast %33 : i32 to index
    %c0_35 = arith.constant 0 : index
    %57 = vector.load %arg13[%56, %c0_35] : memref<64x96xf32, #tpu.memory_space<vmem>>, vector<8x96xf32>
    %cst_36 = arith.constant dense<0.000000e+00> : vector<8x96xf32>
    %58 = tpu.matmul %28, %18, %cst_36 {dimension_numbers = #tpu.dot_dimension_numbers<[1], [0], [0], [1], [0, 0, 1, 1], [], []>} : vector<8x32xf32>, vector<32x96xf32>, vector<8x96xf32> -> vector<8x96xf32>
    %59 = vector.extract_strided_slice %57 {offsets = [0, 0], sizes = [8, 64], strides = [1, 1]} : vector<8x96xf32> to vector<8x64xf32>
    %60 = vector.extract_strided_slice %58 {offsets = [0, 0], sizes = [8, 64], strides = [1, 1]} : vector<8x96xf32> to vector<8x64xf32>
    %61 = arith.addf %59, %60 : vector<8x64xf32>
    %62 = arith.negf %61 : vector<8x64xf32>
    %63 = math.exp %62 : vector<8x64xf32>
    %cst_37 = arith.constant 1.000000e+00 : f32
    %64 = vector.broadcast %cst_37 : f32 to vector<8x64xf32>
    %65 = arith.addf %64, %63 : vector<8x64xf32>
    %66 = arith.divf %64, %65 : vector<8x64xf32>
    %67 = vector.extract_strided_slice %57 {offsets = [0, 64], sizes = [8, 32], strides = [1, 1]} : vector<8x96xf32> to vector<8x32xf32>
    %68 = vector.extract_strided_slice %66 {offsets = [0, 0], sizes = [8, 32], strides = [1, 1]} : vector<8x64xf32> to vector<8x32xf32>
    %69 = vector.extract_strided_slice %58 {offsets = [0, 64], sizes = [8, 32], strides = [1, 1]} : vector<8x96xf32> to vector<8x32xf32>
    %70 = arith.addf %69, %26 : vector<8x32xf32>
    %71 = arith.mulf %68, %70 : vector<8x32xf32>
    %72 = arith.addf %67, %71 : vector<8x32xf32>
    %73 = math.tanh %72 : vector<8x32xf32>
    %74 = vector.extract_strided_slice %66 {offsets = [0, 32], sizes = [8, 32], strides = [1, 1]} : vector<8x64xf32> to vector<8x32xf32>
    %75 = arith.subf %28, %73 : vector<8x32xf32>
    %76 = arith.mulf %74, %75 : vector<8x32xf32>
    %77 = arith.addf %73, %76 : vector<8x32xf32>
    %78 = arith.index_cast %30 : i32 to index
    %c0_38 = arith.constant 0 : index
    %79 = vector.load %arg10[%78, %c0_38] : memref<64x32xf32, #tpu.memory_space<vmem>>, vector<8x32xf32>
    tpu.vector_store %arg10[%78, %c0_38], %55 {strides = array<i32>} : memref<64x32xf32, #tpu.memory_space<vmem>>, vector<8x32xf32>,
    %80 = arith.index_cast %33 : i32 to index
    %c0_39 = arith.constant 0 : index
    %81 = vector.load %arg11[%80, %c0_39] : memref<64x32xf32, #tpu.memory_space<vmem>>, vector<8x32xf32>
    tpu.vector_store %arg11[%80, %c0_39], %77 {strides = array<i32>} : memref<64x32xf32, #tpu.memory_space<vmem>>, vector<8x32xf32>,
    %c1_i32 = arith.constant 1 : i32
    %c8_i32_40 = arith.constant 8 : i32
    %82 = arith.muli %c1_i32, %c8_i32_40 : i32
    %83 = tpu.assume_multiple %82, 8 : i32
    %c7_i32_41 = arith.constant 7 : i32
    %84 = arith.subi %c7_i32_41, %c1_i32 : i32
    %c8_i32_42 = arith.constant 8 : i32
    %85 = arith.muli %84, %c8_i32_42 : i32
    %86 = tpu.assume_multiple %85, 8 : i32
    %87 = arith.index_cast %83 : i32 to index
    %c0_43 = arith.constant 0 : index
    %88 = vector.load %arg12[%87, %c0_43] : memref<64x96xf32, #tpu.memory_space<vmem>>, vector<8x96xf32>
    %cst_44 = arith.constant dense<0.000000e+00> : vector<8x96xf32>
    %89 = tpu.matmul %55, %17, %cst_44 {dimension_numbers = #tpu.dot_dimension_numbers<[1], [0], [0], [1], [0, 0, 1, 1], [], []>} : vector<8x32xf32>, vector<32x96xf32>, vector<8x96xf32> -> vector<8x96xf32>
    %90 = vector.extract_strided_slice %88 {offsets = [0, 0], sizes = [8, 64], strides = [1, 1]} : vector<8x96xf32> to vector<8x64xf32>
    %91 = vector.extract_strided_slice %89 {offsets = [0, 0], sizes = [8, 64], strides = [1, 1]} : vector<8x96xf32> to vector<8x64xf32>
    %92 = arith.addf %90, %91 : vector<8x64xf32>
    %93 = arith.negf %92 : vector<8x64xf32>
    %94 = math.exp %93 : vector<8x64xf32>
    %cst_45 = arith.constant 1.000000e+00 : f32
    %95 = vector.broadcast %cst_45 : f32 to vector<8x64xf32>
    %96 = arith.addf %95, %94 : vector<8x64xf32>
    %97 = arith.divf %95, %96 : vector<8x64xf32>
    %98 = vector.extract_strided_slice %88 {offsets = [0, 64], sizes = [8, 32], strides = [1, 1]} : vector<8x96xf32> to vector<8x32xf32>
    %99 = vector.extract_strided_slice %97 {offsets = [0, 0], sizes = [8, 32], strides = [1, 1]} : vector<8x64xf32> to vector<8x32xf32>
    %100 = vector.extract_strided_slice %89 {offsets = [0, 64], sizes = [8, 32], strides = [1, 1]} : vector<8x96xf32> to vector<8x32xf32>
    %101 = arith.addf %100, %22 : vector<8x32xf32>
    %102 = arith.mulf %99, %101 : vector<8x32xf32>
    %103 = arith.addf %98, %102 : vector<8x32xf32>
    %104 = math.tanh %103 : vector<8x32xf32>
    %105 = vector.extract_strided_slice %97 {offsets = [0, 32], sizes = [8, 32], strides = [1, 1]} : vector<8x64xf32> to vector<8x32xf32>
    %106 = arith.subf %55, %104 : vector<8x32xf32>
    %107 = arith.mulf %105, %106 : vector<8x32xf32>
    %108 = arith.addf %104, %107 : vector<8x32xf32>
    %109 = arith.index_cast %86 : i32 to index
    %c0_46 = arith.constant 0 : index
    %110 = vector.load %arg13[%109, %c0_46] : memref<64x96xf32, #tpu.memory_space<vmem>>, vector<8x96xf32>
    %cst_47 = arith.constant dense<0.000000e+00> : vector<8x96xf32>
    %111 = tpu.matmul %77, %18, %cst_47 {dimension_numbers = #tpu.dot_dimension_numbers<[1], [0], [0], [1], [0, 0, 1, 1], [], []>} : vector<8x32xf32>, vector<32x96xf32>, vector<8x96xf32> -> vector<8x96xf32>
    %112 = vector.extract_strided_slice %110 {offsets = [0, 0], sizes = [8, 64], strides = [1, 1]} : vector<8x96xf32> to vector<8x64xf32>
    %113 = vector.extract_strided_slice %111 {offsets = [0, 0], sizes = [8, 64], strides = [1, 1]} : vector<8x96xf32> to vector<8x64xf32>
    %114 = arith.addf %112, %113 : vector<8x64xf32>
    %115 = arith.negf %114 : vector<8x64xf32>
    %116 = math.exp %115 : vector<8x64xf32>
    %cst_48 = arith.constant 1.000000e+00 : f32
    %117 = vector.broadcast %cst_48 : f32 to vector<8x64xf32>
    %118 = arith.addf %117, %116 : vector<8x64xf32>
    %119 = arith.divf %117, %118 : vector<8x64xf32>
    %120 = vector.extract_strided_slice %110 {offsets = [0, 64], sizes = [8, 32], strides = [1, 1]} : vector<8x96xf32> to vector<8x32xf32>
    %121 = vector.extract_strided_slice %119 {offsets = [0, 0], sizes = [8, 32], strides = [1, 1]} : vector<8x64xf32> to vector<8x32xf32>
    %122 = vector.extract_strided_slice %111 {offsets = [0, 64], sizes = [8, 32], strides = [1, 1]} : vector<8x96xf32> to vector<8x32xf32>
    %123 = arith.addf %122, %26 : vector<8x32xf32>
    %124 = arith.mulf %121, %123 : vector<8x32xf32>
    %125 = arith.addf %120, %124 : vector<8x32xf32>
    %126 = math.tanh %125 : vector<8x32xf32>
    %127 = vector.extract_strided_slice %119 {offsets = [0, 32], sizes = [8, 32], strides = [1, 1]} : vector<8x64xf32> to vector<8x32xf32>
    %128 = arith.subf %77, %126 : vector<8x32xf32>
    %129 = arith.mulf %127, %128 : vector<8x32xf32>
    %130 = arith.addf %126, %129 : vector<8x32xf32>
    %131 = arith.index_cast %83 : i32 to index
    %c0_49 = arith.constant 0 : index
    %132 = vector.load %arg10[%131, %c0_49] : memref<64x32xf32, #tpu.memory_space<vmem>>, vector<8x32xf32>
    tpu.vector_store %arg10[%131, %c0_49], %108 {strides = array<i32>} : memref<64x32xf32, #tpu.memory_space<vmem>>, vector<8x32xf32>,
    %133 = arith.index_cast %86 : i32 to index
    %c0_50 = arith.constant 0 : index
    %134 = vector.load %arg11[%133, %c0_50] : memref<64x32xf32, #tpu.memory_space<vmem>>, vector<8x32xf32>
    tpu.vector_store %arg11[%133, %c0_50], %130 {strides = array<i32>} : memref<64x32xf32, #tpu.memory_space<vmem>>, vector<8x32xf32>,
    %c2_i32 = arith.constant 2 : i32
    %c8_i32_51 = arith.constant 8 : i32
    %135 = arith.muli %c2_i32, %c8_i32_51 : i32
    %136 = tpu.assume_multiple %135, 8 : i32
    %c7_i32_52 = arith.constant 7 : i32
    %137 = arith.subi %c7_i32_52, %c2_i32 : i32
    %c8_i32_53 = arith.constant 8 : i32
    %138 = arith.muli %137, %c8_i32_53 : i32
    %139 = tpu.assume_multiple %138, 8 : i32
    %140 = arith.index_cast %136 : i32 to index
    %c0_54 = arith.constant 0 : index
    %141 = vector.load %arg12[%140, %c0_54] : memref<64x96xf32, #tpu.memory_space<vmem>>, vector<8x96xf32>
    %cst_55 = arith.constant dense<0.000000e+00> : vector<8x96xf32>
    %142 = tpu.matmul %108, %17, %cst_55 {dimension_numbers = #tpu.dot_dimension_numbers<[1], [0], [0], [1], [0, 0, 1, 1], [], []>} : vector<8x32xf32>, vector<32x96xf32>, vector<8x96xf32> -> vector<8x96xf32>
    %143 = vector.extract_strided_slice %141 {offsets = [0, 0], sizes = [8, 64], strides = [1, 1]} : vector<8x96xf32> to vector<8x64xf32>
    %144 = vector.extract_strided_slice %142 {offsets = [0, 0], sizes = [8, 64], strides = [1, 1]} : vector<8x96xf32> to vector<8x64xf32>
    %145 = arith.addf %143, %144 : vector<8x64xf32>
    %146 = arith.negf %145 : vector<8x64xf32>
    %147 = math.exp %146 : vector<8x64xf32>
    %cst_56 = arith.constant 1.000000e+00 : f32
    %148 = vector.broadcast %cst_56 : f32 to vector<8x64xf32>
    %149 = arith.addf %148, %147 : vector<8x64xf32>
    %150 = arith.divf %148, %149 : vector<8x64xf32>
    %151 = vector.extract_strided_slice %141 {offsets = [0, 64], sizes = [8, 32], strides = [1, 1]} : vector<8x96xf32> to vector<8x32xf32>
    %152 = vector.extract_strided_slice %150 {offsets = [0, 0], sizes = [8, 32], strides = [1, 1]} : vector<8x64xf32> to vector<8x32xf32>
    %153 = vector.extract_strided_slice %142 {offsets = [0, 64], sizes = [8, 32], strides = [1, 1]} : vector<8x96xf32> to vector<8x32xf32>
    %154 = arith.addf %153, %22 : vector<8x32xf32>
    %155 = arith.mulf %152, %154 : vector<8x32xf32>
    %156 = arith.addf %151, %155 : vector<8x32xf32>
    %157 = math.tanh %156 : vector<8x32xf32>
    %158 = vector.extract_strided_slice %150 {offsets = [0, 32], sizes = [8, 32], strides = [1, 1]} : vector<8x64xf32> to vector<8x32xf32>
    %159 = arith.subf %108, %157 : vector<8x32xf32>
    %160 = arith.mulf %158, %159 : vector<8x32xf32>
    %161 = arith.addf %157, %160 : vector<8x32xf32>
    %162 = arith.index_cast %139 : i32 to index
    %c0_57 = arith.constant 0 : index
    %163 = vector.load %arg13[%162, %c0_57] : memref<64x96xf32, #tpu.memory_space<vmem>>, vector<8x96xf32>
    %cst_58 = arith.constant dense<0.000000e+00> : vector<8x96xf32>
    %164 = tpu.matmul %130, %18, %cst_58 {dimension_numbers = #tpu.dot_dimension_numbers<[1], [0], [0], [1], [0, 0, 1, 1], [], []>} : vector<8x32xf32>, vector<32x96xf32>, vector<8x96xf32> -> vector<8x96xf32>
    %165 = vector.extract_strided_slice %163 {offsets = [0, 0], sizes = [8, 64], strides = [1, 1]} : vector<8x96xf32> to vector<8x64xf32>
    %166 = vector.extract_strided_slice %164 {offsets = [0, 0], sizes = [8, 64], strides = [1, 1]} : vector<8x96xf32> to vector<8x64xf32>
    %167 = arith.addf %165, %166 : vector<8x64xf32>
    %168 = arith.negf %167 : vector<8x64xf32>
    %169 = math.exp %168 : vector<8x64xf32>
    %cst_59 = arith.constant 1.000000e+00 : f32
    %170 = vector.broadcast %cst_59 : f32 to vector<8x64xf32>
    %171 = arith.addf %170, %169 : vector<8x64xf32>
    %172 = arith.divf %170, %171 : vector<8x64xf32>
    %173 = vector.extract_strided_slice %163 {offsets = [0, 64], sizes = [8, 32], strides = [1, 1]} : vector<8x96xf32> to vector<8x32xf32>
    %174 = vector.extract_strided_slice %172 {offsets = [0, 0], sizes = [8, 32], strides = [1, 1]} : vector<8x64xf32> to vector<8x32xf32>
    %175 = vector.extract_strided_slice %164 {offsets = [0, 64], sizes = [8, 32], strides = [1, 1]} : vector<8x96xf32> to vector<8x32xf32>
    %176 = arith.addf %175, %26 : vector<8x32xf32>
    %177 = arith.mulf %174, %176 : vector<8x32xf32>
    %178 = arith.addf %173, %177 : vector<8x32xf32>
    %179 = math.tanh %178 : vector<8x32xf32>
    %180 = vector.extract_strided_slice %172 {offsets = [0, 32], sizes = [8, 32], strides = [1, 1]} : vector<8x64xf32> to vector<8x32xf32>
    %181 = arith.subf %130, %179 : vector<8x32xf32>
    %182 = arith.mulf %180, %181 : vector<8x32xf32>
    %183 = arith.addf %179, %182 : vector<8x32xf32>
    %184 = arith.index_cast %136 : i32 to index
    %c0_60 = arith.constant 0 : index
    %185 = vector.load %arg10[%184, %c0_60] : memref<64x32xf32, #tpu.memory_space<vmem>>, vector<8x32xf32>
    tpu.vector_store %arg10[%184, %c0_60], %161 {strides = array<i32>} : memref<64x32xf32, #tpu.memory_space<vmem>>, vector<8x32xf32>,
    %186 = arith.index_cast %139 : i32 to index
    %c0_61 = arith.constant 0 : index
    %187 = vector.load %arg11[%186, %c0_61] : memref<64x32xf32, #tpu.memory_space<vmem>>, vector<8x32xf32>
    tpu.vector_store %arg11[%186, %c0_61], %183 {strides = array<i32>} : memref<64x32xf32, #tpu.memory_space<vmem>>, vector<8x32xf32>,
    %c3_i32 = arith.constant 3 : i32
    %c8_i32_62 = arith.constant 8 : i32
    %188 = arith.muli %c3_i32, %c8_i32_62 : i32
    %189 = tpu.assume_multiple %188, 8 : i32
    %c7_i32_63 = arith.constant 7 : i32
    %190 = arith.subi %c7_i32_63, %c3_i32 : i32
    %c8_i32_64 = arith.constant 8 : i32
    %191 = arith.muli %190, %c8_i32_64 : i32
    %192 = tpu.assume_multiple %191, 8 : i32
    %193 = arith.index_cast %189 : i32 to index
    %c0_65 = arith.constant 0 : index
    %194 = vector.load %arg12[%193, %c0_65] : memref<64x96xf32, #tpu.memory_space<vmem>>, vector<8x96xf32>
    %cst_66 = arith.constant dense<0.000000e+00> : vector<8x96xf32>
    %195 = tpu.matmul %161, %17, %cst_66 {dimension_numbers = #tpu.dot_dimension_numbers<[1], [0], [0], [1], [0, 0, 1, 1], [], []>} : vector<8x32xf32>, vector<32x96xf32>, vector<8x96xf32> -> vector<8x96xf32>
    %196 = vector.extract_strided_slice %194 {offsets = [0, 0], sizes = [8, 64], strides = [1, 1]} : vector<8x96xf32> to vector<8x64xf32>
    %197 = vector.extract_strided_slice %195 {offsets = [0, 0], sizes = [8, 64], strides = [1, 1]} : vector<8x96xf32> to vector<8x64xf32>
    %198 = arith.addf %196, %197 : vector<8x64xf32>
    %199 = arith.negf %198 : vector<8x64xf32>
    %200 = math.exp %199 : vector<8x64xf32>
    %cst_67 = arith.constant 1.000000e+00 : f32
    %201 = vector.broadcast %cst_67 : f32 to vector<8x64xf32>
    %202 = arith.addf %201, %200 : vector<8x64xf32>
    %203 = arith.divf %201, %202 : vector<8x64xf32>
    %204 = vector.extract_strided_slice %194 {offsets = [0, 64], sizes = [8, 32], strides = [1, 1]} : vector<8x96xf32> to vector<8x32xf32>
    %205 = vector.extract_strided_slice %203 {offsets = [0, 0], sizes = [8, 32], strides = [1, 1]} : vector<8x64xf32> to vector<8x32xf32>
    %206 = vector.extract_strided_slice %195 {offsets = [0, 64], sizes = [8, 32], strides = [1, 1]} : vector<8x96xf32> to vector<8x32xf32>
    %207 = arith.addf %206, %22 : vector<8x32xf32>
    %208 = arith.mulf %205, %207 : vector<8x32xf32>
    %209 = arith.addf %204, %208 : vector<8x32xf32>
    %210 = math.tanh %209 : vector<8x32xf32>
    %211 = vector.extract_strided_slice %203 {offsets = [0, 32], sizes = [8, 32], strides = [1, 1]} : vector<8x64xf32> to vector<8x32xf32>
    %212 = arith.subf %161, %210 : vector<8x32xf32>
    %213 = arith.mulf %211, %212 : vector<8x32xf32>
    %214 = arith.addf %210, %213 : vector<8x32xf32>
    %215 = arith.index_cast %192 : i32 to index
    %c0_68 = arith.constant 0 : index
    %216 = vector.load %arg13[%215, %c0_68] : memref<64x96xf32, #tpu.memory_space<vmem>>, vector<8x96xf32>
    %cst_69 = arith.constant dense<0.000000e+00> : vector<8x96xf32>
    %217 = tpu.matmul %183, %18, %cst_69 {dimension_numbers = #tpu.dot_dimension_numbers<[1], [0], [0], [1], [0, 0, 1, 1], [], []>} : vector<8x32xf32>, vector<32x96xf32>, vector<8x96xf32> -> vector<8x96xf32>
    %218 = vector.extract_strided_slice %216 {offsets = [0, 0], sizes = [8, 64], strides = [1, 1]} : vector<8x96xf32> to vector<8x64xf32>
    %219 = vector.extract_strided_slice %217 {offsets = [0, 0], sizes = [8, 64], strides = [1, 1]} : vector<8x96xf32> to vector<8x64xf32>
    %220 = arith.addf %218, %219 : vector<8x64xf32>
    %221 = arith.negf %220 : vector<8x64xf32>
    %222 = math.exp %221 : vector<8x64xf32>
    %cst_70 = arith.constant 1.000000e+00 : f32
    %223 = vector.broadcast %cst_70 : f32 to vector<8x64xf32>
    %224 = arith.addf %223, %222 : vector<8x64xf32>
    %225 = arith.divf %223, %224 : vector<8x64xf32>
    %226 = vector.extract_strided_slice %216 {offsets = [0, 64], sizes = [8, 32], strides = [1, 1]} : vector<8x96xf32> to vector<8x32xf32>
    %227 = vector.extract_strided_slice %225 {offsets = [0, 0], sizes = [8, 32], strides = [1, 1]} : vector<8x64xf32> to vector<8x32xf32>
    %228 = vector.extract_strided_slice %217 {offsets = [0, 64], sizes = [8, 32], strides = [1, 1]} : vector<8x96xf32> to vector<8x32xf32>
    %229 = arith.addf %228, %26 : vector<8x32xf32>
    %230 = arith.mulf %227, %229 : vector<8x32xf32>
    %231 = arith.addf %226, %230 : vector<8x32xf32>
    %232 = math.tanh %231 : vector<8x32xf32>
    %233 = vector.extract_strided_slice %225 {offsets = [0, 32], sizes = [8, 32], strides = [1, 1]} : vector<8x64xf32> to vector<8x32xf32>
    %234 = arith.subf %183, %232 : vector<8x32xf32>
    %235 = arith.mulf %233, %234 : vector<8x32xf32>
    %236 = arith.addf %232, %235 : vector<8x32xf32>
    %237 = arith.index_cast %189 : i32 to index
    %c0_71 = arith.constant 0 : index
    %238 = vector.load %arg10[%237, %c0_71] : memref<64x32xf32, #tpu.memory_space<vmem>>, vector<8x32xf32>
    tpu.vector_store %arg10[%237, %c0_71], %214 {strides = array<i32>} : memref<64x32xf32, #tpu.memory_space<vmem>>, vector<8x32xf32>,
    %239 = arith.index_cast %192 : i32 to index
    %c0_72 = arith.constant 0 : index
    %240 = vector.load %arg11[%239, %c0_72] : memref<64x32xf32, #tpu.memory_space<vmem>>, vector<8x32xf32>
    tpu.vector_store %arg11[%239, %c0_72], %236 {strides = array<i32>} : memref<64x32xf32, #tpu.memory_space<vmem>>, vector<8x32xf32>,
    %c4_i32 = arith.constant 4 : i32
    %c8_i32_73 = arith.constant 8 : i32
    %241 = arith.muli %c4_i32, %c8_i32_73 : i32
    %242 = tpu.assume_multiple %241, 8 : i32
    %c7_i32_74 = arith.constant 7 : i32
    %243 = arith.subi %c7_i32_74, %c4_i32 : i32
    %c8_i32_75 = arith.constant 8 : i32
    %244 = arith.muli %243, %c8_i32_75 : i32
    %245 = tpu.assume_multiple %244, 8 : i32
    %246 = arith.index_cast %242 : i32 to index
    %c0_76 = arith.constant 0 : index
    %247 = vector.load %arg12[%246, %c0_76] : memref<64x96xf32, #tpu.memory_space<vmem>>, vector<8x96xf32>
    %cst_77 = arith.constant dense<0.000000e+00> : vector<8x96xf32>
    %248 = tpu.matmul %214, %17, %cst_77 {dimension_numbers = #tpu.dot_dimension_numbers<[1], [0], [0], [1], [0, 0, 1, 1], [], []>} : vector<8x32xf32>, vector<32x96xf32>, vector<8x96xf32> -> vector<8x96xf32>
    %249 = vector.extract_strided_slice %247 {offsets = [0, 0], sizes = [8, 64], strides = [1, 1]} : vector<8x96xf32> to vector<8x64xf32>
    %250 = vector.extract_strided_slice %248 {offsets = [0, 0], sizes = [8, 64], strides = [1, 1]} : vector<8x96xf32> to vector<8x64xf32>
    %251 = arith.addf %249, %250 : vector<8x64xf32>
    %252 = arith.negf %251 : vector<8x64xf32>
    %253 = math.exp %252 : vector<8x64xf32>
    %cst_78 = arith.constant 1.000000e+00 : f32
    %254 = vector.broadcast %cst_78 : f32 to vector<8x64xf32>
    %255 = arith.addf %254, %253 : vector<8x64xf32>
    %256 = arith.divf %254, %255 : vector<8x64xf32>
    %257 = vector.extract_strided_slice %247 {offsets = [0, 64], sizes = [8, 32], strides = [1, 1]} : vector<8x96xf32> to vector<8x32xf32>
    %258 = vector.extract_strided_slice %256 {offsets = [0, 0], sizes = [8, 32], strides = [1, 1]} : vector<8x64xf32> to vector<8x32xf32>
    %259 = vector.extract_strided_slice %248 {offsets = [0, 64], sizes = [8, 32], strides = [1, 1]} : vector<8x96xf32> to vector<8x32xf32>
    %260 = arith.addf %259, %22 : vector<8x32xf32>
    %261 = arith.mulf %258, %260 : vector<8x32xf32>
    %262 = arith.addf %257, %261 : vector<8x32xf32>
    %263 = math.tanh %262 : vector<8x32xf32>
    %264 = vector.extract_strided_slice %256 {offsets = [0, 32], sizes = [8, 32], strides = [1, 1]} : vector<8x64xf32> to vector<8x32xf32>
    %265 = arith.subf %214, %263 : vector<8x32xf32>
    %266 = arith.mulf %264, %265 : vector<8x32xf32>
    %267 = arith.addf %263, %266 : vector<8x32xf32>
    %268 = arith.index_cast %245 : i32 to index
    %c0_79 = arith.constant 0 : index
    %269 = vector.load %arg13[%268, %c0_79] : memref<64x96xf32, #tpu.memory_space<vmem>>, vector<8x96xf32>
    %cst_80 = arith.constant dense<0.000000e+00> : vector<8x96xf32>
    %270 = tpu.matmul %236, %18, %cst_80 {dimension_numbers = #tpu.dot_dimension_numbers<[1], [0], [0], [1], [0, 0, 1, 1], [], []>} : vector<8x32xf32>, vector<32x96xf32>, vector<8x96xf32> -> vector<8x96xf32>
    %271 = vector.extract_strided_slice %269 {offsets = [0, 0], sizes = [8, 64], strides = [1, 1]} : vector<8x96xf32> to vector<8x64xf32>
    %272 = vector.extract_strided_slice %270 {offsets = [0, 0], sizes = [8, 64], strides = [1, 1]} : vector<8x96xf32> to vector<8x64xf32>
    %273 = arith.addf %271, %272 : vector<8x64xf32>
    %274 = arith.negf %273 : vector<8x64xf32>
    %275 = math.exp %274 : vector<8x64xf32>
    %cst_81 = arith.constant 1.000000e+00 : f32
    %276 = vector.broadcast %cst_81 : f32 to vector<8x64xf32>
    %277 = arith.addf %276, %275 : vector<8x64xf32>
    %278 = arith.divf %276, %277 : vector<8x64xf32>
    %279 = vector.extract_strided_slice %269 {offsets = [0, 64], sizes = [8, 32], strides = [1, 1]} : vector<8x96xf32> to vector<8x32xf32>
    %280 = vector.extract_strided_slice %278 {offsets = [0, 0], sizes = [8, 32], strides = [1, 1]} : vector<8x64xf32> to vector<8x32xf32>
    %281 = vector.extract_strided_slice %270 {offsets = [0, 64], sizes = [8, 32], strides = [1, 1]} : vector<8x96xf32> to vector<8x32xf32>
    %282 = arith.addf %281, %26 : vector<8x32xf32>
    %283 = arith.mulf %280, %282 : vector<8x32xf32>
    %284 = arith.addf %279, %283 : vector<8x32xf32>
    %285 = math.tanh %284 : vector<8x32xf32>
    %286 = vector.extract_strided_slice %278 {offsets = [0, 32], sizes = [8, 32], strides = [1, 1]} : vector<8x64xf32> to vector<8x32xf32>
    %287 = arith.subf %236, %285 : vector<8x32xf32>
    %288 = arith.mulf %286, %287 : vector<8x32xf32>
    %289 = arith.addf %285, %288 : vector<8x32xf32>
    %290 = arith.index_cast %242 : i32 to index
    %c0_82 = arith.constant 0 : index
    %291 = vector.load %arg10[%290, %c0_82] : memref<64x32xf32, #tpu.memory_space<vmem>>, vector<8x32xf32>
    tpu.vector_store %arg10[%290, %c0_82], %267 {strides = array<i32>} : memref<64x32xf32, #tpu.memory_space<vmem>>, vector<8x32xf32>,
    %292 = arith.index_cast %245 : i32 to index
    %c0_83 = arith.constant 0 : index
    %293 = vector.load %arg11[%292, %c0_83] : memref<64x32xf32, #tpu.memory_space<vmem>>, vector<8x32xf32>
    tpu.vector_store %arg11[%292, %c0_83], %289 {strides = array<i32>} : memref<64x32xf32, #tpu.memory_space<vmem>>, vector<8x32xf32>,
    %c5_i32 = arith.constant 5 : i32
    %c8_i32_84 = arith.constant 8 : i32
    %294 = arith.muli %c5_i32, %c8_i32_84 : i32
    %295 = tpu.assume_multiple %294, 8 : i32
    %c7_i32_85 = arith.constant 7 : i32
    %296 = arith.subi %c7_i32_85, %c5_i32 : i32
    %c8_i32_86 = arith.constant 8 : i32
    %297 = arith.muli %296, %c8_i32_86 : i32
    %298 = tpu.assume_multiple %297, 8 : i32
    %299 = arith.index_cast %295 : i32 to index
    %c0_87 = arith.constant 0 : index
    %300 = vector.load %arg12[%299, %c0_87] : memref<64x96xf32, #tpu.memory_space<vmem>>, vector<8x96xf32>
    %cst_88 = arith.constant dense<0.000000e+00> : vector<8x96xf32>
    %301 = tpu.matmul %267, %17, %cst_88 {dimension_numbers = #tpu.dot_dimension_numbers<[1], [0], [0], [1], [0, 0, 1, 1], [], []>} : vector<8x32xf32>, vector<32x96xf32>, vector<8x96xf32> -> vector<8x96xf32>
    %302 = vector.extract_strided_slice %300 {offsets = [0, 0], sizes = [8, 64], strides = [1, 1]} : vector<8x96xf32> to vector<8x64xf32>
    %303 = vector.extract_strided_slice %301 {offsets = [0, 0], sizes = [8, 64], strides = [1, 1]} : vector<8x96xf32> to vector<8x64xf32>
    %304 = arith.addf %302, %303 : vector<8x64xf32>
    %305 = arith.negf %304 : vector<8x64xf32>
    %306 = math.exp %305 : vector<8x64xf32>
    %cst_89 = arith.constant 1.000000e+00 : f32
    %307 = vector.broadcast %cst_89 : f32 to vector<8x64xf32>
    %308 = arith.addf %307, %306 : vector<8x64xf32>
    %309 = arith.divf %307, %308 : vector<8x64xf32>
    %310 = vector.extract_strided_slice %300 {offsets = [0, 64], sizes = [8, 32], strides = [1, 1]} : vector<8x96xf32> to vector<8x32xf32>
    %311 = vector.extract_strided_slice %309 {offsets = [0, 0], sizes = [8, 32], strides = [1, 1]} : vector<8x64xf32> to vector<8x32xf32>
    %312 = vector.extract_strided_slice %301 {offsets = [0, 64], sizes = [8, 32], strides = [1, 1]} : vector<8x96xf32> to vector<8x32xf32>
    %313 = arith.addf %312, %22 : vector<8x32xf32>
    %314 = arith.mulf %311, %313 : vector<8x32xf32>
    %315 = arith.addf %310, %314 : vector<8x32xf32>
    %316 = math.tanh %315 : vector<8x32xf32>
    %317 = vector.extract_strided_slice %309 {offsets = [0, 32], sizes = [8, 32], strides = [1, 1]} : vector<8x64xf32> to vector<8x32xf32>
    %318 = arith.subf %267, %316 : vector<8x32xf32>
    %319 = arith.mulf %317, %318 : vector<8x32xf32>
    %320 = arith.addf %316, %319 : vector<8x32xf32>
    %321 = arith.index_cast %298 : i32 to index
    %c0_90 = arith.constant 0 : index
    %322 = vector.load %arg13[%321, %c0_90] : memref<64x96xf32, #tpu.memory_space<vmem>>, vector<8x96xf32>
    %cst_91 = arith.constant dense<0.000000e+00> : vector<8x96xf32>
    %323 = tpu.matmul %289, %18, %cst_91 {dimension_numbers = #tpu.dot_dimension_numbers<[1], [0], [0], [1], [0, 0, 1, 1], [], []>} : vector<8x32xf32>, vector<32x96xf32>, vector<8x96xf32> -> vector<8x96xf32>
    %324 = vector.extract_strided_slice %322 {offsets = [0, 0], sizes = [8, 64], strides = [1, 1]} : vector<8x96xf32> to vector<8x64xf32>
    %325 = vector.extract_strided_slice %323 {offsets = [0, 0], sizes = [8, 64], strides = [1, 1]} : vector<8x96xf32> to vector<8x64xf32>
    %326 = arith.addf %324, %325 : vector<8x64xf32>
    %327 = arith.negf %326 : vector<8x64xf32>
    %328 = math.exp %327 : vector<8x64xf32>
    %cst_92 = arith.constant 1.000000e+00 : f32
    %329 = vector.broadcast %cst_92 : f32 to vector<8x64xf32>
    %330 = arith.addf %329, %328 : vector<8x64xf32>
    %331 = arith.divf %329, %330 : vector<8x64xf32>
    %332 = vector.extract_strided_slice %322 {offsets = [0, 64], sizes = [8, 32], strides = [1, 1]} : vector<8x96xf32> to vector<8x32xf32>
    %333 = vector.extract_strided_slice %331 {offsets = [0, 0], sizes = [8, 32], strides = [1, 1]} : vector<8x64xf32> to vector<8x32xf32>
    %334 = vector.extract_strided_slice %323 {offsets = [0, 64], sizes = [8, 32], strides = [1, 1]} : vector<8x96xf32> to vector<8x32xf32>
    %335 = arith.addf %334, %26 : vector<8x32xf32>
    %336 = arith.mulf %333, %335 : vector<8x32xf32>
    %337 = arith.addf %332, %336 : vector<8x32xf32>
    %338 = math.tanh %337 : vector<8x32xf32>
    %339 = vector.extract_strided_slice %331 {offsets = [0, 32], sizes = [8, 32], strides = [1, 1]} : vector<8x64xf32> to vector<8x32xf32>
    %340 = arith.subf %289, %338 : vector<8x32xf32>
    %341 = arith.mulf %339, %340 : vector<8x32xf32>
    %342 = arith.addf %338, %341 : vector<8x32xf32>
    %343 = arith.index_cast %295 : i32 to index
    %c0_93 = arith.constant 0 : index
    %344 = vector.load %arg10[%343, %c0_93] : memref<64x32xf32, #tpu.memory_space<vmem>>, vector<8x32xf32>
    tpu.vector_store %arg10[%343, %c0_93], %320 {strides = array<i32>} : memref<64x32xf32, #tpu.memory_space<vmem>>, vector<8x32xf32>,
    %345 = arith.index_cast %298 : i32 to index
    %c0_94 = arith.constant 0 : index
    %346 = vector.load %arg11[%345, %c0_94] : memref<64x32xf32, #tpu.memory_space<vmem>>, vector<8x32xf32>
    tpu.vector_store %arg11[%345, %c0_94], %342 {strides = array<i32>} : memref<64x32xf32, #tpu.memory_space<vmem>>, vector<8x32xf32>,
    %c6_i32 = arith.constant 6 : i32
    %c8_i32_95 = arith.constant 8 : i32
    %347 = arith.muli %c6_i32, %c8_i32_95 : i32
    %348 = tpu.assume_multiple %347, 8 : i32
    %c7_i32_96 = arith.constant 7 : i32
    %349 = arith.subi %c7_i32_96, %c6_i32 : i32
    %c8_i32_97 = arith.constant 8 : i32
    %350 = arith.muli %349, %c8_i32_97 : i32
    %351 = tpu.assume_multiple %350, 8 : i32
    %352 = arith.index_cast %348 : i32 to index
    %c0_98 = arith.constant 0 : index
    %353 = vector.load %arg12[%352, %c0_98] : memref<64x96xf32, #tpu.memory_space<vmem>>, vector<8x96xf32>
    %cst_99 = arith.constant dense<0.000000e+00> : vector<8x96xf32>
    %354 = tpu.matmul %320, %17, %cst_99 {dimension_numbers = #tpu.dot_dimension_numbers<[1], [0], [0], [1], [0, 0, 1, 1], [], []>} : vector<8x32xf32>, vector<32x96xf32>, vector<8x96xf32> -> vector<8x96xf32>
    %355 = vector.extract_strided_slice %353 {offsets = [0, 0], sizes = [8, 64], strides = [1, 1]} : vector<8x96xf32> to vector<8x64xf32>
    %356 = vector.extract_strided_slice %354 {offsets = [0, 0], sizes = [8, 64], strides = [1, 1]} : vector<8x96xf32> to vector<8x64xf32>
    %357 = arith.addf %355, %356 : vector<8x64xf32>
    %358 = arith.negf %357 : vector<8x64xf32>
    %359 = math.exp %358 : vector<8x64xf32>
    %cst_100 = arith.constant 1.000000e+00 : f32
    %360 = vector.broadcast %cst_100 : f32 to vector<8x64xf32>
    %361 = arith.addf %360, %359 : vector<8x64xf32>
    %362 = arith.divf %360, %361 : vector<8x64xf32>
    %363 = vector.extract_strided_slice %353 {offsets = [0, 64], sizes = [8, 32], strides = [1, 1]} : vector<8x96xf32> to vector<8x32xf32>
    %364 = vector.extract_strided_slice %362 {offsets = [0, 0], sizes = [8, 32], strides = [1, 1]} : vector<8x64xf32> to vector<8x32xf32>
    %365 = vector.extract_strided_slice %354 {offsets = [0, 64], sizes = [8, 32], strides = [1, 1]} : vector<8x96xf32> to vector<8x32xf32>
    %366 = arith.addf %365, %22 : vector<8x32xf32>
    %367 = arith.mulf %364, %366 : vector<8x32xf32>
    %368 = arith.addf %363, %367 : vector<8x32xf32>
    %369 = math.tanh %368 : vector<8x32xf32>
    %370 = vector.extract_strided_slice %362 {offsets = [0, 32], sizes = [8, 32], strides = [1, 1]} : vector<8x64xf32> to vector<8x32xf32>
    %371 = arith.subf %320, %369 : vector<8x32xf32>
    %372 = arith.mulf %370, %371 : vector<8x32xf32>
    %373 = arith.addf %369, %372 : vector<8x32xf32>
    %374 = arith.index_cast %351 : i32 to index
    %c0_101 = arith.constant 0 : index
    %375 = vector.load %arg13[%374, %c0_101] : memref<64x96xf32, #tpu.memory_space<vmem>>, vector<8x96xf32>
    %cst_102 = arith.constant dense<0.000000e+00> : vector<8x96xf32>
    %376 = tpu.matmul %342, %18, %cst_102 {dimension_numbers = #tpu.dot_dimension_numbers<[1], [0], [0], [1], [0, 0, 1, 1], [], []>} : vector<8x32xf32>, vector<32x96xf32>, vector<8x96xf32> -> vector<8x96xf32>
    %377 = vector.extract_strided_slice %375 {offsets = [0, 0], sizes = [8, 64], strides = [1, 1]} : vector<8x96xf32> to vector<8x64xf32>
    %378 = vector.extract_strided_slice %376 {offsets = [0, 0], sizes = [8, 64], strides = [1, 1]} : vector<8x96xf32> to vector<8x64xf32>
    %379 = arith.addf %377, %378 : vector<8x64xf32>
    %380 = arith.negf %379 : vector<8x64xf32>
    %381 = math.exp %380 : vector<8x64xf32>
    %cst_103 = arith.constant 1.000000e+00 : f32
    %382 = vector.broadcast %cst_103 : f32 to vector<8x64xf32>
    %383 = arith.addf %382, %381 : vector<8x64xf32>
    %384 = arith.divf %382, %383 : vector<8x64xf32>
    %385 = vector.extract_strided_slice %375 {offsets = [0, 64], sizes = [8, 32], strides = [1, 1]} : vector<8x96xf32> to vector<8x32xf32>
    %386 = vector.extract_strided_slice %384 {offsets = [0, 0], sizes = [8, 32], strides = [1, 1]} : vector<8x64xf32> to vector<8x32xf32>
    %387 = vector.extract_strided_slice %376 {offsets = [0, 64], sizes = [8, 32], strides = [1, 1]} : vector<8x96xf32> to vector<8x32xf32>
    %388 = arith.addf %387, %26 : vector<8x32xf32>
    %389 = arith.mulf %386, %388 : vector<8x32xf32>
    %390 = arith.addf %385, %389 : vector<8x32xf32>
    %391 = math.tanh %390 : vector<8x32xf32>
    %392 = vector.extract_strided_slice %384 {offsets = [0, 32], sizes = [8, 32], strides = [1, 1]} : vector<8x64xf32> to vector<8x32xf32>
    %393 = arith.subf %342, %391 : vector<8x32xf32>
    %394 = arith.mulf %392, %393 : vector<8x32xf32>
    %395 = arith.addf %391, %394 : vector<8x32xf32>
    %396 = arith.index_cast %348 : i32 to index
    %c0_104 = arith.constant 0 : index
    %397 = vector.load %arg10[%396, %c0_104] : memref<64x32xf32, #tpu.memory_space<vmem>>, vector<8x32xf32>
    tpu.vector_store %arg10[%396, %c0_104], %373 {strides = array<i32>} : memref<64x32xf32, #tpu.memory_space<vmem>>, vector<8x32xf32>,
    %398 = arith.index_cast %351 : i32 to index
    %c0_105 = arith.constant 0 : index
    %399 = vector.load %arg11[%398, %c0_105] : memref<64x32xf32, #tpu.memory_space<vmem>>, vector<8x32xf32>
    tpu.vector_store %arg11[%398, %c0_105], %395 {strides = array<i32>} : memref<64x32xf32, #tpu.memory_space<vmem>>, vector<8x32xf32>,
    %c7_i32_106 = arith.constant 7 : i32
    %c8_i32_107 = arith.constant 8 : i32
    %400 = arith.muli %c7_i32_106, %c8_i32_107 : i32
    %401 = tpu.assume_multiple %400, 8 : i32
    %c7_i32_108 = arith.constant 7 : i32
    %402 = arith.subi %c7_i32_108, %c7_i32_106 : i32
    %c8_i32_109 = arith.constant 8 : i32
    %403 = arith.muli %402, %c8_i32_109 : i32
    %404 = tpu.assume_multiple %403, 8 : i32
    %405 = arith.index_cast %401 : i32 to index
    %c0_110 = arith.constant 0 : index
    %406 = vector.load %arg12[%405, %c0_110] : memref<64x96xf32, #tpu.memory_space<vmem>>, vector<8x96xf32>
    %cst_111 = arith.constant dense<0.000000e+00> : vector<8x96xf32>
    %407 = tpu.matmul %373, %17, %cst_111 {dimension_numbers = #tpu.dot_dimension_numbers<[1], [0], [0], [1], [0, 0, 1, 1], [], []>} : vector<8x32xf32>, vector<32x96xf32>, vector<8x96xf32> -> vector<8x96xf32>
    %408 = vector.extract_strided_slice %406 {offsets = [0, 0], sizes = [8, 64], strides = [1, 1]} : vector<8x96xf32> to vector<8x64xf32>
    %409 = vector.extract_strided_slice %407 {offsets = [0, 0], sizes = [8, 64], strides = [1, 1]} : vector<8x96xf32> to vector<8x64xf32>
    %410 = arith.addf %408, %409 : vector<8x64xf32>
    %411 = arith.negf %410 : vector<8x64xf32>
    %412 = math.exp %411 : vector<8x64xf32>
    %cst_112 = arith.constant 1.000000e+00 : f32
    %413 = vector.broadcast %cst_112 : f32 to vector<8x64xf32>
    %414 = arith.addf %413, %412 : vector<8x64xf32>
    %415 = arith.divf %413, %414 : vector<8x64xf32>
    %416 = vector.extract_strided_slice %406 {offsets = [0, 64], sizes = [8, 32], strides = [1, 1]} : vector<8x96xf32> to vector<8x32xf32>
    %417 = vector.extract_strided_slice %415 {offsets = [0, 0], sizes = [8, 32], strides = [1, 1]} : vector<8x64xf32> to vector<8x32xf32>
    %418 = vector.extract_strided_slice %407 {offsets = [0, 64], sizes = [8, 32], strides = [1, 1]} : vector<8x96xf32> to vector<8x32xf32>
    %419 = arith.addf %418, %22 : vector<8x32xf32>
    %420 = arith.mulf %417, %419 : vector<8x32xf32>
    %421 = arith.addf %416, %420 : vector<8x32xf32>
    %422 = math.tanh %421 : vector<8x32xf32>
    %423 = vector.extract_strided_slice %415 {offsets = [0, 32], sizes = [8, 32], strides = [1, 1]} : vector<8x64xf32> to vector<8x32xf32>
    %424 = arith.subf %373, %422 : vector<8x32xf32>
    %425 = arith.mulf %423, %424 : vector<8x32xf32>
    %426 = arith.addf %422, %425 : vector<8x32xf32>
    %427 = arith.index_cast %404 : i32 to index
    %c0_113 = arith.constant 0 : index
    %428 = vector.load %arg13[%427, %c0_113] : memref<64x96xf32, #tpu.memory_space<vmem>>, vector<8x96xf32>
    %cst_114 = arith.constant dense<0.000000e+00> : vector<8x96xf32>
    %429 = tpu.matmul %395, %18, %cst_114 {dimension_numbers = #tpu.dot_dimension_numbers<[1], [0], [0], [1], [0, 0, 1, 1], [], []>} : vector<8x32xf32>, vector<32x96xf32>, vector<8x96xf32> -> vector<8x96xf32>
    %430 = vector.extract_strided_slice %428 {offsets = [0, 0], sizes = [8, 64], strides = [1, 1]} : vector<8x96xf32> to vector<8x64xf32>
    %431 = vector.extract_strided_slice %429 {offsets = [0, 0], sizes = [8, 64], strides = [1, 1]} : vector<8x96xf32> to vector<8x64xf32>
    %432 = arith.addf %430, %431 : vector<8x64xf32>
    %433 = arith.negf %432 : vector<8x64xf32>
    %434 = math.exp %433 : vector<8x64xf32>
    %cst_115 = arith.constant 1.000000e+00 : f32
    %435 = vector.broadcast %cst_115 : f32 to vector<8x64xf32>
    %436 = arith.addf %435, %434 : vector<8x64xf32>
    %437 = arith.divf %435, %436 : vector<8x64xf32>
    %438 = vector.extract_strided_slice %428 {offsets = [0, 64], sizes = [8, 32], strides = [1, 1]} : vector<8x96xf32> to vector<8x32xf32>
    %439 = vector.extract_strided_slice %437 {offsets = [0, 0], sizes = [8, 32], strides = [1, 1]} : vector<8x64xf32> to vector<8x32xf32>
    %440 = vector.extract_strided_slice %429 {offsets = [0, 64], sizes = [8, 32], strides = [1, 1]} : vector<8x96xf32> to vector<8x32xf32>
    %441 = arith.addf %440, %26 : vector<8x32xf32>
    %442 = arith.mulf %439, %441 : vector<8x32xf32>
    %443 = arith.addf %438, %442 : vector<8x32xf32>
    %444 = math.tanh %443 : vector<8x32xf32>
    %445 = vector.extract_strided_slice %437 {offsets = [0, 32], sizes = [8, 32], strides = [1, 1]} : vector<8x64xf32> to vector<8x32xf32>
    %446 = arith.subf %395, %444 : vector<8x32xf32>
    %447 = arith.mulf %445, %446 : vector<8x32xf32>
    %448 = arith.addf %444, %447 : vector<8x32xf32>
    %449 = arith.index_cast %401 : i32 to index
    %c0_116 = arith.constant 0 : index
    %450 = vector.load %arg10[%449, %c0_116] : memref<64x32xf32, #tpu.memory_space<vmem>>, vector<8x32xf32>
    tpu.vector_store %arg10[%449, %c0_116], %426 {strides = array<i32>} : memref<64x32xf32, #tpu.memory_space<vmem>>, vector<8x32xf32>,
    %451 = arith.index_cast %404 : i32 to index
    %c0_117 = arith.constant 0 : index
    %452 = vector.load %arg11[%451, %c0_117] : memref<64x32xf32, #tpu.memory_space<vmem>>, vector<8x32xf32>
    tpu.vector_store %arg11[%451, %c0_117], %448 {strides = array<i32>} : memref<64x32xf32, #tpu.memory_space<vmem>>, vector<8x32xf32>,
    %c8_i32_118 = arith.constant 8 : i32
    %c0_119 = arith.constant 0 : index
    %c0_120 = arith.constant 0 : index
    %453 = vector.load %arg14[%c0_119, %c0_120] : memref<8x32xf32, #tpu.memory_space<vmem>>, vector<8x32xf32>
    tpu.vector_store %arg14[%c0_119, %c0_120], %426 {strides = array<i32>} : memref<8x32xf32, #tpu.memory_space<vmem>>, vector<8x32xf32>,
    %c0_121 = arith.constant 0 : index
    %c0_122 = arith.constant 0 : index
    %454 = vector.load %arg15[%c0_121, %c0_122] : memref<8x32xf32, #tpu.memory_space<vmem>>, vector<8x32xf32>
    tpu.vector_store %arg15[%c0_121, %c0_122], %448 {strides = array<i32>} : memref<8x32xf32, #tpu.memory_space<vmem>>, vector<8x32xf32>,
    return
  }
  func.func @transform_0(%arg0: i32) -> (i32, i32) {
    %c0_i32 = arith.constant 0 : i32
    %c0_i32_0 = arith.constant 0 : i32
    return %arg0, %c0_i32 : i32, i32
  }
  func.func @transform_1(%arg0: i32) -> (i32, i32) {
    %c0_i32 = arith.constant 0 : i32
    %0 = arith.subi %c0_i32, %arg0 : i32
    %c0_i32_0 = arith.constant 0 : i32
    %c0_i32_1 = arith.constant 0 : i32
    return %0, %c0_i32_0 : i32, i32
  }
  func.func @transform_2(%arg0: i32) -> (i32, i32) {
    %c0_i32 = arith.constant 0 : i32
    %c0_i32_0 = arith.constant 0 : i32
    %c0_i32_1 = arith.constant 0 : i32
    return %c0_i32, %c0_i32_0 : i32, i32
  }
  func.func @transform_3(%arg0: i32) -> (i32, i32) {
    %c0_i32 = arith.constant 0 : i32
    %c0_i32_0 = arith.constant 0 : i32
    %c0_i32_1 = arith.constant 0 : i32
    return %c0_i32, %c0_i32_0 : i32, i32
  }
  func.func @transform_4(%arg0: i32) -> (i32, i32) {
    %c0_i32 = arith.constant 0 : i32
    %c0_i32_0 = arith.constant 0 : i32
    %c0_i32_1 = arith.constant 0 : i32
    return %c0_i32, %c0_i32_0 : i32, i32
  }
  func.func @transform_5(%arg0: i32) -> (i32, i32) {
    %c0_i32 = arith.constant 0 : i32
    %c0_i32_0 = arith.constant 0 : i32
    %c0_i32_1 = arith.constant 0 : i32
    return %c0_i32, %c0_i32_0 : i32, i32
  }
  func.func @transform_6(%arg0: i32) -> (i32, i32) {
    %c0_i32 = arith.constant 0 : i32
    %c0_i32_0 = arith.constant 0 : i32
    %c0_i32_1 = arith.constant 0 : i32
    return %c0_i32, %c0_i32_0 : i32, i32
  }
  func.func @transform_7(%arg0: i32) -> (i32, i32) {
    %c0_i32 = arith.constant 0 : i32
    %c0_i32_0 = arith.constant 0 : i32
    %c0_i32_1 = arith.constant 0 : i32
    return %c0_i32, %c0_i32_0 : i32, i32
  }
  func.func @transform_8(%arg0: i32) -> (i32, i32, i32) {
    %c0_i32 = arith.constant 0 : i32
    %c0_i32_0 = arith.constant 0 : i32
    %c0_i32_1 = arith.constant 0 : i32
    %c0_i32_2 = arith.constant 0 : i32
    return %c0_i32, %c0_i32_0, %c0_i32_1 : i32, i32, i32
  }
  func.func @transform_9(%arg0: i32) -> (i32, i32) {
    %c0_i32 = arith.constant 0 : i32
    %c0_i32_0 = arith.constant 0 : i32
    return %arg0, %c0_i32 : i32, i32
  }
  func.func @transform_10(%arg0: i32) -> (i32, i32) {
    %c0_i32 = arith.constant 0 : i32
    %0 = arith.subi %c0_i32, %arg0 : i32
    %c0_i32_0 = arith.constant 0 : i32
    %c0_i32_1 = arith.constant 0 : i32
    return %0, %c0_i32_0 : i32, i32
  }
}

module attributes {stable_mosaic.version = 11 : i64} {
  func.func @_bigru_layer_kernel(%arg0: i32, %arg1: memref<64x32xf32, #tpu.memory_space<vmem>>, %arg2: memref<64x32xf32, #tpu.memory_space<vmem>>, %arg3: memref<64x32xf32, #tpu.memory_space<vmem>>, %arg4: memref<64x32xf32, #tpu.memory_space<vmem>>, %arg5: memref<32x96xf32, #tpu.memory_space<vmem>>, %arg6: memref<32x96xf32, #tpu.memory_space<vmem>>, %arg7: memref<32x96xf32, #tpu.memory_space<vmem>>, %arg8: memref<32x96xf32, #tpu.memory_space<vmem>>, %arg9: memref<1x96xf32, #tpu.memory_space<vmem>>, %arg10: memref<1x96xf32, #tpu.memory_space<vmem>>, %arg11: memref<32x96xf32, #tpu.memory_space<vmem>>, %arg12: memref<32x96xf32, #tpu.memory_space<vmem>>, %arg13: memref<2x1x32xf32, #tpu.memory_space<vmem>>, %arg14: memref<64x32xf32, #tpu.memory_space<vmem>>, %arg15: memref<64x32xf32, #tpu.memory_space<vmem>>, %arg16: memref<64x96xf32, #tpu.memory_space<vmem>>, %arg17: memref<64x96xf32, #tpu.memory_space<vmem>>, %arg18: memref<8x32xf32, #tpu.memory_space<vmem>>, %arg19: memref<8x32xf32, #tpu.memory_space<vmem>>) attributes {dimension_semantics = [#tpu.dimension_semantics<arbitrary>], iteration_bounds = array<i64: 1>, scalar_prefetch = 0 : i64, scratch_operands = 4 : i64, tpu.core_type = #tpu.core_type<tc>, window_params = [{transform_indices = @transform_0, window_bounds = array<i64: 64, 32>}, {transform_indices = @transform_1, window_bounds = array<i64: 64, 32>}, {transform_indices = @transform_2, window_bounds = array<i64: 64, 32>}, {transform_indices = @transform_3, window_bounds = array<i64: 64, 32>}, {pipeline_mode = #tpu.pipeline_mode<synchronous>, transform_indices = @transform_4, window_bounds = array<i64: 32, 96>}, {pipeline_mode = #tpu.pipeline_mode<synchronous>, transform_indices = @transform_5, window_bounds = array<i64: 32, 96>}, {pipeline_mode = #tpu.pipeline_mode<synchronous>, transform_indices = @transform_6, window_bounds = array<i64: 32, 96>}, {pipeline_mode = #tpu.pipeline_mode<synchronous>, transform_indices = @transform_7, window_bounds = array<i64: 32, 96>}, {pipeline_mode = #tpu.pipeline_mode<synchronous>, transform_indices = @transform_8, window_bounds = array<i64: 1, 96>}, {pipeline_mode = #tpu.pipeline_mode<synchronous>, transform_indices = @transform_9, window_bounds = array<i64: 1, 96>}, {pipeline_mode = #tpu.pipeline_mode<synchronous>, transform_indices = @transform_10, window_bounds = array<i64: 32, 96>}, {pipeline_mode = #tpu.pipeline_mode<synchronous>, transform_indices = @transform_11, window_bounds = array<i64: 32, 96>}, {pipeline_mode = #tpu.pipeline_mode<synchronous>, transform_indices = @transform_12, window_bounds = array<i64: 2, 1, 32>}, {transform_indices = @transform_13, window_bounds = array<i64: 64, 32>}, {transform_indices = @transform_14, window_bounds = array<i64: 64, 32>}]} {
    %c0_i32 = arith.constant 0 : i32
    %0 = arith.cmpi eq, %arg0, %c0_i32 : i32
    %1 = arith.extui %0 : i1 to i32
    %c0_i32_0 = arith.constant 0 : i32
    %2 = arith.cmpi ne, %1, %c0_i32_0 : i32
    scf.if %2 {
      %cst_133 = arith.constant 0.000000e+00 : f32
      %463 = vector.broadcast %cst_133 : f32 to vector<8x32xf32>
      %c0_134 = arith.constant 0 : index
      %c0_135 = arith.constant 0 : index
      %464 = vector.load %arg18[%c0_134, %c0_135] : memref<8x32xf32, #tpu.memory_space<vmem>>, vector<8x32xf32>
      tpu.vector_store %arg18[%c0_134, %c0_135], %463 {strides = array<i32>} : memref<8x32xf32, #tpu.memory_space<vmem>>, vector<8x32xf32>,
      %cst_136 = arith.constant 0.000000e+00 : f32
      %465 = vector.broadcast %cst_136 : f32 to vector<8x32xf32>
      %c0_137 = arith.constant 0 : index
      %c0_138 = arith.constant 0 : index
      %466 = vector.load %arg19[%c0_137, %c0_138] : memref<8x32xf32, #tpu.memory_space<vmem>>, vector<8x32xf32>
      tpu.vector_store %arg19[%c0_137, %c0_138], %465 {strides = array<i32>} : memref<8x32xf32, #tpu.memory_space<vmem>>, vector<8x32xf32>,
    } else {
    }
    %c0 = arith.constant 0 : index
    %c0_1 = arith.constant 0 : index
    %3 = vector.load %arg9[%c0, %c0_1] : memref<1x96xf32, #tpu.memory_space<vmem>>, vector<1x96xf32>
    %c0_2 = arith.constant 0 : index
    %c0_3 = arith.constant 0 : index
    %4 = vector.load %arg1[%c0_2, %c0_3] : memref<64x32xf32, #tpu.memory_space<vmem>>, vector<64x32xf32>
    %c0_4 = arith.constant 0 : index
    %c0_5 = arith.constant 0 : index
    %5 = vector.load %arg5[%c0_4, %c0_5] : memref<32x96xf32, #tpu.memory_space<vmem>>, vector<32x96xf32>
    %cst = arith.constant dense<0.000000e+00> : vector<64x96xf32>
    %6 = tpu.matmul %4, %5, %cst {dimension_numbers = #tpu.dot_dimension_numbers<[1], [0], [0], [1], [0, 0, 1, 1], [], []>} : vector<64x32xf32>, vector<32x96xf32>, vector<64x96xf32> -> vector<64x96xf32>
    %7 = vector.broadcast %3 : vector<1x96xf32> to vector<64x96xf32>
    %8 = arith.addf %7, %6 : vector<64x96xf32>
    %c0_6 = arith.constant 0 : index
    %c0_7 = arith.constant 0 : index
    %9 = vector.load %arg2[%c0_6, %c0_7] : memref<64x32xf32, #tpu.memory_space<vmem>>, vector<64x32xf32>
    %c0_8 = arith.constant 0 : index
    %c0_9 = arith.constant 0 : index
    %10 = vector.load %arg6[%c0_8, %c0_9] : memref<32x96xf32, #tpu.memory_space<vmem>>, vector<32x96xf32>
    %cst_10 = arith.constant dense<0.000000e+00> : vector<64x96xf32>
    %11 = tpu.matmul %9, %10, %cst_10 {dimension_numbers = #tpu.dot_dimension_numbers<[1], [0], [0], [1], [0, 0, 1, 1], [], []>} : vector<64x32xf32>, vector<32x96xf32>, vector<64x96xf32> -> vector<64x96xf32>
    %12 = arith.addf %8, %11 : vector<64x96xf32>
    %c0_11 = arith.constant 0 : index
    %c0_12 = arith.constant 0 : index
    %13 = vector.load %arg16[%c0_11, %c0_12] : memref<64x96xf32, #tpu.memory_space<vmem>>, vector<64x96xf32>
    tpu.vector_store %arg16[%c0_11, %c0_12], %12 {strides = array<i32>} : memref<64x96xf32, #tpu.memory_space<vmem>>, vector<64x96xf32>,
    %c0_13 = arith.constant 0 : index
    %c0_14 = arith.constant 0 : index
    %14 = vector.load %arg10[%c0_13, %c0_14] : memref<1x96xf32, #tpu.memory_space<vmem>>, vector<1x96xf32>
    %c0_15 = arith.constant 0 : index
    %c0_16 = arith.constant 0 : index
    %15 = vector.load %arg3[%c0_15, %c0_16] : memref<64x32xf32, #tpu.memory_space<vmem>>, vector<64x32xf32>
    %c0_17 = arith.constant 0 : index
    %c0_18 = arith.constant 0 : index
    %16 = vector.load %arg7[%c0_17, %c0_18] : memref<32x96xf32, #tpu.memory_space<vmem>>, vector<32x96xf32>
    %cst_19 = arith.constant dense<0.000000e+00> : vector<64x96xf32>
    %17 = tpu.matmul %15, %16, %cst_19 {dimension_numbers = #tpu.dot_dimension_numbers<[1], [0], [0], [1], [0, 0, 1, 1], [], []>} : vector<64x32xf32>, vector<32x96xf32>, vector<64x96xf32> -> vector<64x96xf32>
    %18 = vector.broadcast %14 : vector<1x96xf32> to vector<64x96xf32>
    %19 = arith.addf %18, %17 : vector<64x96xf32>
    %c0_20 = arith.constant 0 : index
    %c0_21 = arith.constant 0 : index
    %20 = vector.load %arg4[%c0_20, %c0_21] : memref<64x32xf32, #tpu.memory_space<vmem>>, vector<64x32xf32>
    %c0_22 = arith.constant 0 : index
    %c0_23 = arith.constant 0 : index
    %21 = vector.load %arg8[%c0_22, %c0_23] : memref<32x96xf32, #tpu.memory_space<vmem>>, vector<32x96xf32>
    %cst_24 = arith.constant dense<0.000000e+00> : vector<64x96xf32>
    %22 = tpu.matmul %20, %21, %cst_24 {dimension_numbers = #tpu.dot_dimension_numbers<[1], [0], [0], [1], [0, 0, 1, 1], [], []>} : vector<64x32xf32>, vector<32x96xf32>, vector<64x96xf32> -> vector<64x96xf32>
    %23 = arith.addf %19, %22 : vector<64x96xf32>
    %c0_25 = arith.constant 0 : index
    %c0_26 = arith.constant 0 : index
    %24 = vector.load %arg17[%c0_25, %c0_26] : memref<64x96xf32, #tpu.memory_space<vmem>>, vector<64x96xf32>
    tpu.vector_store %arg17[%c0_25, %c0_26], %23 {strides = array<i32>} : memref<64x96xf32, #tpu.memory_space<vmem>>, vector<64x96xf32>,
    %c0_27 = arith.constant 0 : index
    %c0_28 = arith.constant 0 : index
    %25 = vector.load %arg11[%c0_27, %c0_28] : memref<32x96xf32, #tpu.memory_space<vmem>>, vector<32x96xf32>
    %c0_29 = arith.constant 0 : index
    %c0_30 = arith.constant 0 : index
    %26 = vector.load %arg12[%c0_29, %c0_30] : memref<32x96xf32, #tpu.memory_space<vmem>>, vector<32x96xf32>
    %c0_31 = arith.constant 0 : index
    %c0_32 = arith.constant 0 : index
    %c0_33 = arith.constant 0 : index
    %27 = vector.load %arg13[%c0_31, %c0_32, %c0_33] : memref<2x1x32xf32, #tpu.memory_space<vmem>>, vector<1x1x32xf32>
    %28 = vector.shape_cast %27 : vector<1x1x32xf32> to vector<1x32xf32>
    %29 = vector.shape_cast %28 : vector<1x32xf32> to vector<1x32xf32>
    %30 = vector.broadcast %29 : vector<1x32xf32> to vector<8x32xf32>
    %c1 = arith.constant 1 : index
    %c0_34 = arith.constant 0 : index
    %c0_35 = arith.constant 0 : index
    %31 = vector.load %arg13[%c1, %c0_34, %c0_35] : memref<2x1x32xf32, #tpu.memory_space<vmem>>, vector<1x1x32xf32>
    %32 = vector.shape_cast %31 : vector<1x1x32xf32> to vector<1x32xf32>
    %33 = vector.shape_cast %32 : vector<1x32xf32> to vector<1x32xf32>
    %34 = vector.broadcast %33 : vector<1x32xf32> to vector<8x32xf32>
    %c0_36 = arith.constant 0 : index
    %c0_37 = arith.constant 0 : index
    %35 = vector.load %arg18[%c0_36, %c0_37] : memref<8x32xf32, #tpu.memory_space<vmem>>, vector<8x32xf32>
    %c0_38 = arith.constant 0 : index
    %c0_39 = arith.constant 0 : index
    %36 = vector.load %arg19[%c0_38, %c0_39] : memref<8x32xf32, #tpu.memory_space<vmem>>, vector<8x32xf32>
    %c0_i32_40 = arith.constant 0 : i32
    %c8_i32 = arith.constant 8 : i32
    %37 = arith.muli %c0_i32_40, %c8_i32 : i32
    %38 = tpu.assume_multiple %37, 8 : i32
    %c7_i32 = arith.constant 7 : i32
    %39 = arith.subi %c7_i32, %c0_i32_40 : i32
    %c8_i32_41 = arith.constant 8 : i32
    %40 = arith.muli %39, %c8_i32_41 : i32
    %41 = tpu.assume_multiple %40, 8 : i32
    %42 = arith.index_cast %38 : i32 to index
    %c0_42 = arith.constant 0 : index
    %43 = vector.load %arg16[%42, %c0_42] : memref<64x96xf32, #tpu.memory_space<vmem>>, vector<8x96xf32>
    %cst_43 = arith.constant dense<0.000000e+00> : vector<8x96xf32>
    %44 = tpu.matmul %35, %25, %cst_43 {dimension_numbers = #tpu.dot_dimension_numbers<[1], [0], [0], [1], [0, 0, 1, 1], [], []>} : vector<8x32xf32>, vector<32x96xf32>, vector<8x96xf32> -> vector<8x96xf32>
    %45 = vector.extract_strided_slice %43 {offsets = [0, 0], sizes = [8, 64], strides = [1, 1]} : vector<8x96xf32> to vector<8x64xf32>
    %46 = vector.extract_strided_slice %44 {offsets = [0, 0], sizes = [8, 64], strides = [1, 1]} : vector<8x96xf32> to vector<8x64xf32>
    %47 = arith.addf %45, %46 : vector<8x64xf32>
    %48 = arith.negf %47 : vector<8x64xf32>
    %49 = math.exp %48 : vector<8x64xf32>
    %cst_44 = arith.constant 1.000000e+00 : f32
    %50 = vector.broadcast %cst_44 : f32 to vector<8x64xf32>
    %51 = arith.addf %50, %49 : vector<8x64xf32>
    %52 = arith.divf %50, %51 : vector<8x64xf32>
    %53 = vector.extract_strided_slice %43 {offsets = [0, 64], sizes = [8, 32], strides = [1, 1]} : vector<8x96xf32> to vector<8x32xf32>
    %54 = vector.extract_strided_slice %52 {offsets = [0, 0], sizes = [8, 32], strides = [1, 1]} : vector<8x64xf32> to vector<8x32xf32>
    %55 = vector.extract_strided_slice %44 {offsets = [0, 64], sizes = [8, 32], strides = [1, 1]} : vector<8x96xf32> to vector<8x32xf32>
    %56 = arith.addf %55, %30 : vector<8x32xf32>
    %57 = arith.mulf %54, %56 : vector<8x32xf32>
    %58 = arith.addf %53, %57 : vector<8x32xf32>
    %59 = math.tanh %58 : vector<8x32xf32>
    %60 = vector.extract_strided_slice %52 {offsets = [0, 32], sizes = [8, 32], strides = [1, 1]} : vector<8x64xf32> to vector<8x32xf32>
    %61 = arith.subf %35, %59 : vector<8x32xf32>
    %62 = arith.mulf %60, %61 : vector<8x32xf32>
    %63 = arith.addf %59, %62 : vector<8x32xf32>
    %64 = arith.index_cast %41 : i32 to index
    %c0_45 = arith.constant 0 : index
    %65 = vector.load %arg17[%64, %c0_45] : memref<64x96xf32, #tpu.memory_space<vmem>>, vector<8x96xf32>
    %cst_46 = arith.constant dense<0.000000e+00> : vector<8x96xf32>
    %66 = tpu.matmul %36, %26, %cst_46 {dimension_numbers = #tpu.dot_dimension_numbers<[1], [0], [0], [1], [0, 0, 1, 1], [], []>} : vector<8x32xf32>, vector<32x96xf32>, vector<8x96xf32> -> vector<8x96xf32>
    %67 = vector.extract_strided_slice %65 {offsets = [0, 0], sizes = [8, 64], strides = [1, 1]} : vector<8x96xf32> to vector<8x64xf32>
    %68 = vector.extract_strided_slice %66 {offsets = [0, 0], sizes = [8, 64], strides = [1, 1]} : vector<8x96xf32> to vector<8x64xf32>
    %69 = arith.addf %67, %68 : vector<8x64xf32>
    %70 = arith.negf %69 : vector<8x64xf32>
    %71 = math.exp %70 : vector<8x64xf32>
    %cst_47 = arith.constant 1.000000e+00 : f32
    %72 = vector.broadcast %cst_47 : f32 to vector<8x64xf32>
    %73 = arith.addf %72, %71 : vector<8x64xf32>
    %74 = arith.divf %72, %73 : vector<8x64xf32>
    %75 = vector.extract_strided_slice %65 {offsets = [0, 64], sizes = [8, 32], strides = [1, 1]} : vector<8x96xf32> to vector<8x32xf32>
    %76 = vector.extract_strided_slice %74 {offsets = [0, 0], sizes = [8, 32], strides = [1, 1]} : vector<8x64xf32> to vector<8x32xf32>
    %77 = vector.extract_strided_slice %66 {offsets = [0, 64], sizes = [8, 32], strides = [1, 1]} : vector<8x96xf32> to vector<8x32xf32>
    %78 = arith.addf %77, %34 : vector<8x32xf32>
    %79 = arith.mulf %76, %78 : vector<8x32xf32>
    %80 = arith.addf %75, %79 : vector<8x32xf32>
    %81 = math.tanh %80 : vector<8x32xf32>
    %82 = vector.extract_strided_slice %74 {offsets = [0, 32], sizes = [8, 32], strides = [1, 1]} : vector<8x64xf32> to vector<8x32xf32>
    %83 = arith.subf %36, %81 : vector<8x32xf32>
    %84 = arith.mulf %82, %83 : vector<8x32xf32>
    %85 = arith.addf %81, %84 : vector<8x32xf32>
    %86 = arith.index_cast %38 : i32 to index
    %c0_48 = arith.constant 0 : index
    %87 = vector.load %arg14[%86, %c0_48] : memref<64x32xf32, #tpu.memory_space<vmem>>, vector<8x32xf32>
    tpu.vector_store %arg14[%86, %c0_48], %63 {strides = array<i32>} : memref<64x32xf32, #tpu.memory_space<vmem>>, vector<8x32xf32>,
    %88 = arith.index_cast %41 : i32 to index
    %c0_49 = arith.constant 0 : index
    %89 = vector.load %arg15[%88, %c0_49] : memref<64x32xf32, #tpu.memory_space<vmem>>, vector<8x32xf32>
    tpu.vector_store %arg15[%88, %c0_49], %85 {strides = array<i32>} : memref<64x32xf32, #tpu.memory_space<vmem>>, vector<8x32xf32>,
    %c1_i32 = arith.constant 1 : i32
    %c8_i32_50 = arith.constant 8 : i32
    %90 = arith.muli %c1_i32, %c8_i32_50 : i32
    %91 = tpu.assume_multiple %90, 8 : i32
    %c7_i32_51 = arith.constant 7 : i32
    %92 = arith.subi %c7_i32_51, %c1_i32 : i32
    %c8_i32_52 = arith.constant 8 : i32
    %93 = arith.muli %92, %c8_i32_52 : i32
    %94 = tpu.assume_multiple %93, 8 : i32
    %95 = arith.index_cast %91 : i32 to index
    %c0_53 = arith.constant 0 : index
    %96 = vector.load %arg16[%95, %c0_53] : memref<64x96xf32, #tpu.memory_space<vmem>>, vector<8x96xf32>
    %cst_54 = arith.constant dense<0.000000e+00> : vector<8x96xf32>
    %97 = tpu.matmul %63, %25, %cst_54 {dimension_numbers = #tpu.dot_dimension_numbers<[1], [0], [0], [1], [0, 0, 1, 1], [], []>} : vector<8x32xf32>, vector<32x96xf32>, vector<8x96xf32> -> vector<8x96xf32>
    %98 = vector.extract_strided_slice %96 {offsets = [0, 0], sizes = [8, 64], strides = [1, 1]} : vector<8x96xf32> to vector<8x64xf32>
    %99 = vector.extract_strided_slice %97 {offsets = [0, 0], sizes = [8, 64], strides = [1, 1]} : vector<8x96xf32> to vector<8x64xf32>
    %100 = arith.addf %98, %99 : vector<8x64xf32>
    %101 = arith.negf %100 : vector<8x64xf32>
    %102 = math.exp %101 : vector<8x64xf32>
    %cst_55 = arith.constant 1.000000e+00 : f32
    %103 = vector.broadcast %cst_55 : f32 to vector<8x64xf32>
    %104 = arith.addf %103, %102 : vector<8x64xf32>
    %105 = arith.divf %103, %104 : vector<8x64xf32>
    %106 = vector.extract_strided_slice %96 {offsets = [0, 64], sizes = [8, 32], strides = [1, 1]} : vector<8x96xf32> to vector<8x32xf32>
    %107 = vector.extract_strided_slice %105 {offsets = [0, 0], sizes = [8, 32], strides = [1, 1]} : vector<8x64xf32> to vector<8x32xf32>
    %108 = vector.extract_strided_slice %97 {offsets = [0, 64], sizes = [8, 32], strides = [1, 1]} : vector<8x96xf32> to vector<8x32xf32>
    %109 = arith.addf %108, %30 : vector<8x32xf32>
    %110 = arith.mulf %107, %109 : vector<8x32xf32>
    %111 = arith.addf %106, %110 : vector<8x32xf32>
    %112 = math.tanh %111 : vector<8x32xf32>
    %113 = vector.extract_strided_slice %105 {offsets = [0, 32], sizes = [8, 32], strides = [1, 1]} : vector<8x64xf32> to vector<8x32xf32>
    %114 = arith.subf %63, %112 : vector<8x32xf32>
    %115 = arith.mulf %113, %114 : vector<8x32xf32>
    %116 = arith.addf %112, %115 : vector<8x32xf32>
    %117 = arith.index_cast %94 : i32 to index
    %c0_56 = arith.constant 0 : index
    %118 = vector.load %arg17[%117, %c0_56] : memref<64x96xf32, #tpu.memory_space<vmem>>, vector<8x96xf32>
    %cst_57 = arith.constant dense<0.000000e+00> : vector<8x96xf32>
    %119 = tpu.matmul %85, %26, %cst_57 {dimension_numbers = #tpu.dot_dimension_numbers<[1], [0], [0], [1], [0, 0, 1, 1], [], []>} : vector<8x32xf32>, vector<32x96xf32>, vector<8x96xf32> -> vector<8x96xf32>
    %120 = vector.extract_strided_slice %118 {offsets = [0, 0], sizes = [8, 64], strides = [1, 1]} : vector<8x96xf32> to vector<8x64xf32>
    %121 = vector.extract_strided_slice %119 {offsets = [0, 0], sizes = [8, 64], strides = [1, 1]} : vector<8x96xf32> to vector<8x64xf32>
    %122 = arith.addf %120, %121 : vector<8x64xf32>
    %123 = arith.negf %122 : vector<8x64xf32>
    %124 = math.exp %123 : vector<8x64xf32>
    %cst_58 = arith.constant 1.000000e+00 : f32
    %125 = vector.broadcast %cst_58 : f32 to vector<8x64xf32>
    %126 = arith.addf %125, %124 : vector<8x64xf32>
    %127 = arith.divf %125, %126 : vector<8x64xf32>
    %128 = vector.extract_strided_slice %118 {offsets = [0, 64], sizes = [8, 32], strides = [1, 1]} : vector<8x96xf32> to vector<8x32xf32>
    %129 = vector.extract_strided_slice %127 {offsets = [0, 0], sizes = [8, 32], strides = [1, 1]} : vector<8x64xf32> to vector<8x32xf32>
    %130 = vector.extract_strided_slice %119 {offsets = [0, 64], sizes = [8, 32], strides = [1, 1]} : vector<8x96xf32> to vector<8x32xf32>
    %131 = arith.addf %130, %34 : vector<8x32xf32>
    %132 = arith.mulf %129, %131 : vector<8x32xf32>
    %133 = arith.addf %128, %132 : vector<8x32xf32>
    %134 = math.tanh %133 : vector<8x32xf32>
    %135 = vector.extract_strided_slice %127 {offsets = [0, 32], sizes = [8, 32], strides = [1, 1]} : vector<8x64xf32> to vector<8x32xf32>
    %136 = arith.subf %85, %134 : vector<8x32xf32>
    %137 = arith.mulf %135, %136 : vector<8x32xf32>
    %138 = arith.addf %134, %137 : vector<8x32xf32>
    %139 = arith.index_cast %91 : i32 to index
    %c0_59 = arith.constant 0 : index
    %140 = vector.load %arg14[%139, %c0_59] : memref<64x32xf32, #tpu.memory_space<vmem>>, vector<8x32xf32>
    tpu.vector_store %arg14[%139, %c0_59], %116 {strides = array<i32>} : memref<64x32xf32, #tpu.memory_space<vmem>>, vector<8x32xf32>,
    %141 = arith.index_cast %94 : i32 to index
    %c0_60 = arith.constant 0 : index
    %142 = vector.load %arg15[%141, %c0_60] : memref<64x32xf32, #tpu.memory_space<vmem>>, vector<8x32xf32>
    tpu.vector_store %arg15[%141, %c0_60], %138 {strides = array<i32>} : memref<64x32xf32, #tpu.memory_space<vmem>>, vector<8x32xf32>,
    %c2_i32 = arith.constant 2 : i32
    %c8_i32_61 = arith.constant 8 : i32
    %143 = arith.muli %c2_i32, %c8_i32_61 : i32
    %144 = tpu.assume_multiple %143, 8 : i32
    %c7_i32_62 = arith.constant 7 : i32
    %145 = arith.subi %c7_i32_62, %c2_i32 : i32
    %c8_i32_63 = arith.constant 8 : i32
    %146 = arith.muli %145, %c8_i32_63 : i32
    %147 = tpu.assume_multiple %146, 8 : i32
    %148 = arith.index_cast %144 : i32 to index
    %c0_64 = arith.constant 0 : index
    %149 = vector.load %arg16[%148, %c0_64] : memref<64x96xf32, #tpu.memory_space<vmem>>, vector<8x96xf32>
    %cst_65 = arith.constant dense<0.000000e+00> : vector<8x96xf32>
    %150 = tpu.matmul %116, %25, %cst_65 {dimension_numbers = #tpu.dot_dimension_numbers<[1], [0], [0], [1], [0, 0, 1, 1], [], []>} : vector<8x32xf32>, vector<32x96xf32>, vector<8x96xf32> -> vector<8x96xf32>
    %151 = vector.extract_strided_slice %149 {offsets = [0, 0], sizes = [8, 64], strides = [1, 1]} : vector<8x96xf32> to vector<8x64xf32>
    %152 = vector.extract_strided_slice %150 {offsets = [0, 0], sizes = [8, 64], strides = [1, 1]} : vector<8x96xf32> to vector<8x64xf32>
    %153 = arith.addf %151, %152 : vector<8x64xf32>
    %154 = arith.negf %153 : vector<8x64xf32>
    %155 = math.exp %154 : vector<8x64xf32>
    %cst_66 = arith.constant 1.000000e+00 : f32
    %156 = vector.broadcast %cst_66 : f32 to vector<8x64xf32>
    %157 = arith.addf %156, %155 : vector<8x64xf32>
    %158 = arith.divf %156, %157 : vector<8x64xf32>
    %159 = vector.extract_strided_slice %149 {offsets = [0, 64], sizes = [8, 32], strides = [1, 1]} : vector<8x96xf32> to vector<8x32xf32>
    %160 = vector.extract_strided_slice %158 {offsets = [0, 0], sizes = [8, 32], strides = [1, 1]} : vector<8x64xf32> to vector<8x32xf32>
    %161 = vector.extract_strided_slice %150 {offsets = [0, 64], sizes = [8, 32], strides = [1, 1]} : vector<8x96xf32> to vector<8x32xf32>
    %162 = arith.addf %161, %30 : vector<8x32xf32>
    %163 = arith.mulf %160, %162 : vector<8x32xf32>
    %164 = arith.addf %159, %163 : vector<8x32xf32>
    %165 = math.tanh %164 : vector<8x32xf32>
    %166 = vector.extract_strided_slice %158 {offsets = [0, 32], sizes = [8, 32], strides = [1, 1]} : vector<8x64xf32> to vector<8x32xf32>
    %167 = arith.subf %116, %165 : vector<8x32xf32>
    %168 = arith.mulf %166, %167 : vector<8x32xf32>
    %169 = arith.addf %165, %168 : vector<8x32xf32>
    %170 = arith.index_cast %147 : i32 to index
    %c0_67 = arith.constant 0 : index
    %171 = vector.load %arg17[%170, %c0_67] : memref<64x96xf32, #tpu.memory_space<vmem>>, vector<8x96xf32>
    %cst_68 = arith.constant dense<0.000000e+00> : vector<8x96xf32>
    %172 = tpu.matmul %138, %26, %cst_68 {dimension_numbers = #tpu.dot_dimension_numbers<[1], [0], [0], [1], [0, 0, 1, 1], [], []>} : vector<8x32xf32>, vector<32x96xf32>, vector<8x96xf32> -> vector<8x96xf32>
    %173 = vector.extract_strided_slice %171 {offsets = [0, 0], sizes = [8, 64], strides = [1, 1]} : vector<8x96xf32> to vector<8x64xf32>
    %174 = vector.extract_strided_slice %172 {offsets = [0, 0], sizes = [8, 64], strides = [1, 1]} : vector<8x96xf32> to vector<8x64xf32>
    %175 = arith.addf %173, %174 : vector<8x64xf32>
    %176 = arith.negf %175 : vector<8x64xf32>
    %177 = math.exp %176 : vector<8x64xf32>
    %cst_69 = arith.constant 1.000000e+00 : f32
    %178 = vector.broadcast %cst_69 : f32 to vector<8x64xf32>
    %179 = arith.addf %178, %177 : vector<8x64xf32>
    %180 = arith.divf %178, %179 : vector<8x64xf32>
    %181 = vector.extract_strided_slice %171 {offsets = [0, 64], sizes = [8, 32], strides = [1, 1]} : vector<8x96xf32> to vector<8x32xf32>
    %182 = vector.extract_strided_slice %180 {offsets = [0, 0], sizes = [8, 32], strides = [1, 1]} : vector<8x64xf32> to vector<8x32xf32>
    %183 = vector.extract_strided_slice %172 {offsets = [0, 64], sizes = [8, 32], strides = [1, 1]} : vector<8x96xf32> to vector<8x32xf32>
    %184 = arith.addf %183, %34 : vector<8x32xf32>
    %185 = arith.mulf %182, %184 : vector<8x32xf32>
    %186 = arith.addf %181, %185 : vector<8x32xf32>
    %187 = math.tanh %186 : vector<8x32xf32>
    %188 = vector.extract_strided_slice %180 {offsets = [0, 32], sizes = [8, 32], strides = [1, 1]} : vector<8x64xf32> to vector<8x32xf32>
    %189 = arith.subf %138, %187 : vector<8x32xf32>
    %190 = arith.mulf %188, %189 : vector<8x32xf32>
    %191 = arith.addf %187, %190 : vector<8x32xf32>
    %192 = arith.index_cast %144 : i32 to index
    %c0_70 = arith.constant 0 : index
    %193 = vector.load %arg14[%192, %c0_70] : memref<64x32xf32, #tpu.memory_space<vmem>>, vector<8x32xf32>
    tpu.vector_store %arg14[%192, %c0_70], %169 {strides = array<i32>} : memref<64x32xf32, #tpu.memory_space<vmem>>, vector<8x32xf32>,
    %194 = arith.index_cast %147 : i32 to index
    %c0_71 = arith.constant 0 : index
    %195 = vector.load %arg15[%194, %c0_71] : memref<64x32xf32, #tpu.memory_space<vmem>>, vector<8x32xf32>
    tpu.vector_store %arg15[%194, %c0_71], %191 {strides = array<i32>} : memref<64x32xf32, #tpu.memory_space<vmem>>, vector<8x32xf32>,
    %c3_i32 = arith.constant 3 : i32
    %c8_i32_72 = arith.constant 8 : i32
    %196 = arith.muli %c3_i32, %c8_i32_72 : i32
    %197 = tpu.assume_multiple %196, 8 : i32
    %c7_i32_73 = arith.constant 7 : i32
    %198 = arith.subi %c7_i32_73, %c3_i32 : i32
    %c8_i32_74 = arith.constant 8 : i32
    %199 = arith.muli %198, %c8_i32_74 : i32
    %200 = tpu.assume_multiple %199, 8 : i32
    %201 = arith.index_cast %197 : i32 to index
    %c0_75 = arith.constant 0 : index
    %202 = vector.load %arg16[%201, %c0_75] : memref<64x96xf32, #tpu.memory_space<vmem>>, vector<8x96xf32>
    %cst_76 = arith.constant dense<0.000000e+00> : vector<8x96xf32>
    %203 = tpu.matmul %169, %25, %cst_76 {dimension_numbers = #tpu.dot_dimension_numbers<[1], [0], [0], [1], [0, 0, 1, 1], [], []>} : vector<8x32xf32>, vector<32x96xf32>, vector<8x96xf32> -> vector<8x96xf32>
    %204 = vector.extract_strided_slice %202 {offsets = [0, 0], sizes = [8, 64], strides = [1, 1]} : vector<8x96xf32> to vector<8x64xf32>
    %205 = vector.extract_strided_slice %203 {offsets = [0, 0], sizes = [8, 64], strides = [1, 1]} : vector<8x96xf32> to vector<8x64xf32>
    %206 = arith.addf %204, %205 : vector<8x64xf32>
    %207 = arith.negf %206 : vector<8x64xf32>
    %208 = math.exp %207 : vector<8x64xf32>
    %cst_77 = arith.constant 1.000000e+00 : f32
    %209 = vector.broadcast %cst_77 : f32 to vector<8x64xf32>
    %210 = arith.addf %209, %208 : vector<8x64xf32>
    %211 = arith.divf %209, %210 : vector<8x64xf32>
    %212 = vector.extract_strided_slice %202 {offsets = [0, 64], sizes = [8, 32], strides = [1, 1]} : vector<8x96xf32> to vector<8x32xf32>
    %213 = vector.extract_strided_slice %211 {offsets = [0, 0], sizes = [8, 32], strides = [1, 1]} : vector<8x64xf32> to vector<8x32xf32>
    %214 = vector.extract_strided_slice %203 {offsets = [0, 64], sizes = [8, 32], strides = [1, 1]} : vector<8x96xf32> to vector<8x32xf32>
    %215 = arith.addf %214, %30 : vector<8x32xf32>
    %216 = arith.mulf %213, %215 : vector<8x32xf32>
    %217 = arith.addf %212, %216 : vector<8x32xf32>
    %218 = math.tanh %217 : vector<8x32xf32>
    %219 = vector.extract_strided_slice %211 {offsets = [0, 32], sizes = [8, 32], strides = [1, 1]} : vector<8x64xf32> to vector<8x32xf32>
    %220 = arith.subf %169, %218 : vector<8x32xf32>
    %221 = arith.mulf %219, %220 : vector<8x32xf32>
    %222 = arith.addf %218, %221 : vector<8x32xf32>
    %223 = arith.index_cast %200 : i32 to index
    %c0_78 = arith.constant 0 : index
    %224 = vector.load %arg17[%223, %c0_78] : memref<64x96xf32, #tpu.memory_space<vmem>>, vector<8x96xf32>
    %cst_79 = arith.constant dense<0.000000e+00> : vector<8x96xf32>
    %225 = tpu.matmul %191, %26, %cst_79 {dimension_numbers = #tpu.dot_dimension_numbers<[1], [0], [0], [1], [0, 0, 1, 1], [], []>} : vector<8x32xf32>, vector<32x96xf32>, vector<8x96xf32> -> vector<8x96xf32>
    %226 = vector.extract_strided_slice %224 {offsets = [0, 0], sizes = [8, 64], strides = [1, 1]} : vector<8x96xf32> to vector<8x64xf32>
    %227 = vector.extract_strided_slice %225 {offsets = [0, 0], sizes = [8, 64], strides = [1, 1]} : vector<8x96xf32> to vector<8x64xf32>
    %228 = arith.addf %226, %227 : vector<8x64xf32>
    %229 = arith.negf %228 : vector<8x64xf32>
    %230 = math.exp %229 : vector<8x64xf32>
    %cst_80 = arith.constant 1.000000e+00 : f32
    %231 = vector.broadcast %cst_80 : f32 to vector<8x64xf32>
    %232 = arith.addf %231, %230 : vector<8x64xf32>
    %233 = arith.divf %231, %232 : vector<8x64xf32>
    %234 = vector.extract_strided_slice %224 {offsets = [0, 64], sizes = [8, 32], strides = [1, 1]} : vector<8x96xf32> to vector<8x32xf32>
    %235 = vector.extract_strided_slice %233 {offsets = [0, 0], sizes = [8, 32], strides = [1, 1]} : vector<8x64xf32> to vector<8x32xf32>
    %236 = vector.extract_strided_slice %225 {offsets = [0, 64], sizes = [8, 32], strides = [1, 1]} : vector<8x96xf32> to vector<8x32xf32>
    %237 = arith.addf %236, %34 : vector<8x32xf32>
    %238 = arith.mulf %235, %237 : vector<8x32xf32>
    %239 = arith.addf %234, %238 : vector<8x32xf32>
    %240 = math.tanh %239 : vector<8x32xf32>
    %241 = vector.extract_strided_slice %233 {offsets = [0, 32], sizes = [8, 32], strides = [1, 1]} : vector<8x64xf32> to vector<8x32xf32>
    %242 = arith.subf %191, %240 : vector<8x32xf32>
    %243 = arith.mulf %241, %242 : vector<8x32xf32>
    %244 = arith.addf %240, %243 : vector<8x32xf32>
    %245 = arith.index_cast %197 : i32 to index
    %c0_81 = arith.constant 0 : index
    %246 = vector.load %arg14[%245, %c0_81] : memref<64x32xf32, #tpu.memory_space<vmem>>, vector<8x32xf32>
    tpu.vector_store %arg14[%245, %c0_81], %222 {strides = array<i32>} : memref<64x32xf32, #tpu.memory_space<vmem>>, vector<8x32xf32>,
    %247 = arith.index_cast %200 : i32 to index
    %c0_82 = arith.constant 0 : index
    %248 = vector.load %arg15[%247, %c0_82] : memref<64x32xf32, #tpu.memory_space<vmem>>, vector<8x32xf32>
    tpu.vector_store %arg15[%247, %c0_82], %244 {strides = array<i32>} : memref<64x32xf32, #tpu.memory_space<vmem>>, vector<8x32xf32>,
    %c4_i32 = arith.constant 4 : i32
    %c8_i32_83 = arith.constant 8 : i32
    %249 = arith.muli %c4_i32, %c8_i32_83 : i32
    %250 = tpu.assume_multiple %249, 8 : i32
    %c7_i32_84 = arith.constant 7 : i32
    %251 = arith.subi %c7_i32_84, %c4_i32 : i32
    %c8_i32_85 = arith.constant 8 : i32
    %252 = arith.muli %251, %c8_i32_85 : i32
    %253 = tpu.assume_multiple %252, 8 : i32
    %254 = arith.index_cast %250 : i32 to index
    %c0_86 = arith.constant 0 : index
    %255 = vector.load %arg16[%254, %c0_86] : memref<64x96xf32, #tpu.memory_space<vmem>>, vector<8x96xf32>
    %cst_87 = arith.constant dense<0.000000e+00> : vector<8x96xf32>
    %256 = tpu.matmul %222, %25, %cst_87 {dimension_numbers = #tpu.dot_dimension_numbers<[1], [0], [0], [1], [0, 0, 1, 1], [], []>} : vector<8x32xf32>, vector<32x96xf32>, vector<8x96xf32> -> vector<8x96xf32>
    %257 = vector.extract_strided_slice %255 {offsets = [0, 0], sizes = [8, 64], strides = [1, 1]} : vector<8x96xf32> to vector<8x64xf32>
    %258 = vector.extract_strided_slice %256 {offsets = [0, 0], sizes = [8, 64], strides = [1, 1]} : vector<8x96xf32> to vector<8x64xf32>
    %259 = arith.addf %257, %258 : vector<8x64xf32>
    %260 = arith.negf %259 : vector<8x64xf32>
    %261 = math.exp %260 : vector<8x64xf32>
    %cst_88 = arith.constant 1.000000e+00 : f32
    %262 = vector.broadcast %cst_88 : f32 to vector<8x64xf32>
    %263 = arith.addf %262, %261 : vector<8x64xf32>
    %264 = arith.divf %262, %263 : vector<8x64xf32>
    %265 = vector.extract_strided_slice %255 {offsets = [0, 64], sizes = [8, 32], strides = [1, 1]} : vector<8x96xf32> to vector<8x32xf32>
    %266 = vector.extract_strided_slice %264 {offsets = [0, 0], sizes = [8, 32], strides = [1, 1]} : vector<8x64xf32> to vector<8x32xf32>
    %267 = vector.extract_strided_slice %256 {offsets = [0, 64], sizes = [8, 32], strides = [1, 1]} : vector<8x96xf32> to vector<8x32xf32>
    %268 = arith.addf %267, %30 : vector<8x32xf32>
    %269 = arith.mulf %266, %268 : vector<8x32xf32>
    %270 = arith.addf %265, %269 : vector<8x32xf32>
    %271 = math.tanh %270 : vector<8x32xf32>
    %272 = vector.extract_strided_slice %264 {offsets = [0, 32], sizes = [8, 32], strides = [1, 1]} : vector<8x64xf32> to vector<8x32xf32>
    %273 = arith.subf %222, %271 : vector<8x32xf32>
    %274 = arith.mulf %272, %273 : vector<8x32xf32>
    %275 = arith.addf %271, %274 : vector<8x32xf32>
    %276 = arith.index_cast %253 : i32 to index
    %c0_89 = arith.constant 0 : index
    %277 = vector.load %arg17[%276, %c0_89] : memref<64x96xf32, #tpu.memory_space<vmem>>, vector<8x96xf32>
    %cst_90 = arith.constant dense<0.000000e+00> : vector<8x96xf32>
    %278 = tpu.matmul %244, %26, %cst_90 {dimension_numbers = #tpu.dot_dimension_numbers<[1], [0], [0], [1], [0, 0, 1, 1], [], []>} : vector<8x32xf32>, vector<32x96xf32>, vector<8x96xf32> -> vector<8x96xf32>
    %279 = vector.extract_strided_slice %277 {offsets = [0, 0], sizes = [8, 64], strides = [1, 1]} : vector<8x96xf32> to vector<8x64xf32>
    %280 = vector.extract_strided_slice %278 {offsets = [0, 0], sizes = [8, 64], strides = [1, 1]} : vector<8x96xf32> to vector<8x64xf32>
    %281 = arith.addf %279, %280 : vector<8x64xf32>
    %282 = arith.negf %281 : vector<8x64xf32>
    %283 = math.exp %282 : vector<8x64xf32>
    %cst_91 = arith.constant 1.000000e+00 : f32
    %284 = vector.broadcast %cst_91 : f32 to vector<8x64xf32>
    %285 = arith.addf %284, %283 : vector<8x64xf32>
    %286 = arith.divf %284, %285 : vector<8x64xf32>
    %287 = vector.extract_strided_slice %277 {offsets = [0, 64], sizes = [8, 32], strides = [1, 1]} : vector<8x96xf32> to vector<8x32xf32>
    %288 = vector.extract_strided_slice %286 {offsets = [0, 0], sizes = [8, 32], strides = [1, 1]} : vector<8x64xf32> to vector<8x32xf32>
    %289 = vector.extract_strided_slice %278 {offsets = [0, 64], sizes = [8, 32], strides = [1, 1]} : vector<8x96xf32> to vector<8x32xf32>
    %290 = arith.addf %289, %34 : vector<8x32xf32>
    %291 = arith.mulf %288, %290 : vector<8x32xf32>
    %292 = arith.addf %287, %291 : vector<8x32xf32>
    %293 = math.tanh %292 : vector<8x32xf32>
    %294 = vector.extract_strided_slice %286 {offsets = [0, 32], sizes = [8, 32], strides = [1, 1]} : vector<8x64xf32> to vector<8x32xf32>
    %295 = arith.subf %244, %293 : vector<8x32xf32>
    %296 = arith.mulf %294, %295 : vector<8x32xf32>
    %297 = arith.addf %293, %296 : vector<8x32xf32>
    %298 = arith.index_cast %250 : i32 to index
    %c0_92 = arith.constant 0 : index
    %299 = vector.load %arg14[%298, %c0_92] : memref<64x32xf32, #tpu.memory_space<vmem>>, vector<8x32xf32>
    tpu.vector_store %arg14[%298, %c0_92], %275 {strides = array<i32>} : memref<64x32xf32, #tpu.memory_space<vmem>>, vector<8x32xf32>,
    %300 = arith.index_cast %253 : i32 to index
    %c0_93 = arith.constant 0 : index
    %301 = vector.load %arg15[%300, %c0_93] : memref<64x32xf32, #tpu.memory_space<vmem>>, vector<8x32xf32>
    tpu.vector_store %arg15[%300, %c0_93], %297 {strides = array<i32>} : memref<64x32xf32, #tpu.memory_space<vmem>>, vector<8x32xf32>,
    %c5_i32 = arith.constant 5 : i32
    %c8_i32_94 = arith.constant 8 : i32
    %302 = arith.muli %c5_i32, %c8_i32_94 : i32
    %303 = tpu.assume_multiple %302, 8 : i32
    %c7_i32_95 = arith.constant 7 : i32
    %304 = arith.subi %c7_i32_95, %c5_i32 : i32
    %c8_i32_96 = arith.constant 8 : i32
    %305 = arith.muli %304, %c8_i32_96 : i32
    %306 = tpu.assume_multiple %305, 8 : i32
    %307 = arith.index_cast %303 : i32 to index
    %c0_97 = arith.constant 0 : index
    %308 = vector.load %arg16[%307, %c0_97] : memref<64x96xf32, #tpu.memory_space<vmem>>, vector<8x96xf32>
    %cst_98 = arith.constant dense<0.000000e+00> : vector<8x96xf32>
    %309 = tpu.matmul %275, %25, %cst_98 {dimension_numbers = #tpu.dot_dimension_numbers<[1], [0], [0], [1], [0, 0, 1, 1], [], []>} : vector<8x32xf32>, vector<32x96xf32>, vector<8x96xf32> -> vector<8x96xf32>
    %310 = vector.extract_strided_slice %308 {offsets = [0, 0], sizes = [8, 64], strides = [1, 1]} : vector<8x96xf32> to vector<8x64xf32>
    %311 = vector.extract_strided_slice %309 {offsets = [0, 0], sizes = [8, 64], strides = [1, 1]} : vector<8x96xf32> to vector<8x64xf32>
    %312 = arith.addf %310, %311 : vector<8x64xf32>
    %313 = arith.negf %312 : vector<8x64xf32>
    %314 = math.exp %313 : vector<8x64xf32>
    %cst_99 = arith.constant 1.000000e+00 : f32
    %315 = vector.broadcast %cst_99 : f32 to vector<8x64xf32>
    %316 = arith.addf %315, %314 : vector<8x64xf32>
    %317 = arith.divf %315, %316 : vector<8x64xf32>
    %318 = vector.extract_strided_slice %308 {offsets = [0, 64], sizes = [8, 32], strides = [1, 1]} : vector<8x96xf32> to vector<8x32xf32>
    %319 = vector.extract_strided_slice %317 {offsets = [0, 0], sizes = [8, 32], strides = [1, 1]} : vector<8x64xf32> to vector<8x32xf32>
    %320 = vector.extract_strided_slice %309 {offsets = [0, 64], sizes = [8, 32], strides = [1, 1]} : vector<8x96xf32> to vector<8x32xf32>
    %321 = arith.addf %320, %30 : vector<8x32xf32>
    %322 = arith.mulf %319, %321 : vector<8x32xf32>
    %323 = arith.addf %318, %322 : vector<8x32xf32>
    %324 = math.tanh %323 : vector<8x32xf32>
    %325 = vector.extract_strided_slice %317 {offsets = [0, 32], sizes = [8, 32], strides = [1, 1]} : vector<8x64xf32> to vector<8x32xf32>
    %326 = arith.subf %275, %324 : vector<8x32xf32>
    %327 = arith.mulf %325, %326 : vector<8x32xf32>
    %328 = arith.addf %324, %327 : vector<8x32xf32>
    %329 = arith.index_cast %306 : i32 to index
    %c0_100 = arith.constant 0 : index
    %330 = vector.load %arg17[%329, %c0_100] : memref<64x96xf32, #tpu.memory_space<vmem>>, vector<8x96xf32>
    %cst_101 = arith.constant dense<0.000000e+00> : vector<8x96xf32>
    %331 = tpu.matmul %297, %26, %cst_101 {dimension_numbers = #tpu.dot_dimension_numbers<[1], [0], [0], [1], [0, 0, 1, 1], [], []>} : vector<8x32xf32>, vector<32x96xf32>, vector<8x96xf32> -> vector<8x96xf32>
    %332 = vector.extract_strided_slice %330 {offsets = [0, 0], sizes = [8, 64], strides = [1, 1]} : vector<8x96xf32> to vector<8x64xf32>
    %333 = vector.extract_strided_slice %331 {offsets = [0, 0], sizes = [8, 64], strides = [1, 1]} : vector<8x96xf32> to vector<8x64xf32>
    %334 = arith.addf %332, %333 : vector<8x64xf32>
    %335 = arith.negf %334 : vector<8x64xf32>
    %336 = math.exp %335 : vector<8x64xf32>
    %cst_102 = arith.constant 1.000000e+00 : f32
    %337 = vector.broadcast %cst_102 : f32 to vector<8x64xf32>
    %338 = arith.addf %337, %336 : vector<8x64xf32>
    %339 = arith.divf %337, %338 : vector<8x64xf32>
    %340 = vector.extract_strided_slice %330 {offsets = [0, 64], sizes = [8, 32], strides = [1, 1]} : vector<8x96xf32> to vector<8x32xf32>
    %341 = vector.extract_strided_slice %339 {offsets = [0, 0], sizes = [8, 32], strides = [1, 1]} : vector<8x64xf32> to vector<8x32xf32>
    %342 = vector.extract_strided_slice %331 {offsets = [0, 64], sizes = [8, 32], strides = [1, 1]} : vector<8x96xf32> to vector<8x32xf32>
    %343 = arith.addf %342, %34 : vector<8x32xf32>
    %344 = arith.mulf %341, %343 : vector<8x32xf32>
    %345 = arith.addf %340, %344 : vector<8x32xf32>
    %346 = math.tanh %345 : vector<8x32xf32>
    %347 = vector.extract_strided_slice %339 {offsets = [0, 32], sizes = [8, 32], strides = [1, 1]} : vector<8x64xf32> to vector<8x32xf32>
    %348 = arith.subf %297, %346 : vector<8x32xf32>
    %349 = arith.mulf %347, %348 : vector<8x32xf32>
    %350 = arith.addf %346, %349 : vector<8x32xf32>
    %351 = arith.index_cast %303 : i32 to index
    %c0_103 = arith.constant 0 : index
    %352 = vector.load %arg14[%351, %c0_103] : memref<64x32xf32, #tpu.memory_space<vmem>>, vector<8x32xf32>
    tpu.vector_store %arg14[%351, %c0_103], %328 {strides = array<i32>} : memref<64x32xf32, #tpu.memory_space<vmem>>, vector<8x32xf32>,
    %353 = arith.index_cast %306 : i32 to index
    %c0_104 = arith.constant 0 : index
    %354 = vector.load %arg15[%353, %c0_104] : memref<64x32xf32, #tpu.memory_space<vmem>>, vector<8x32xf32>
    tpu.vector_store %arg15[%353, %c0_104], %350 {strides = array<i32>} : memref<64x32xf32, #tpu.memory_space<vmem>>, vector<8x32xf32>,
    %c6_i32 = arith.constant 6 : i32
    %c8_i32_105 = arith.constant 8 : i32
    %355 = arith.muli %c6_i32, %c8_i32_105 : i32
    %356 = tpu.assume_multiple %355, 8 : i32
    %c7_i32_106 = arith.constant 7 : i32
    %357 = arith.subi %c7_i32_106, %c6_i32 : i32
    %c8_i32_107 = arith.constant 8 : i32
    %358 = arith.muli %357, %c8_i32_107 : i32
    %359 = tpu.assume_multiple %358, 8 : i32
    %360 = arith.index_cast %356 : i32 to index
    %c0_108 = arith.constant 0 : index
    %361 = vector.load %arg16[%360, %c0_108] : memref<64x96xf32, #tpu.memory_space<vmem>>, vector<8x96xf32>
    %cst_109 = arith.constant dense<0.000000e+00> : vector<8x96xf32>
    %362 = tpu.matmul %328, %25, %cst_109 {dimension_numbers = #tpu.dot_dimension_numbers<[1], [0], [0], [1], [0, 0, 1, 1], [], []>} : vector<8x32xf32>, vector<32x96xf32>, vector<8x96xf32> -> vector<8x96xf32>
    %363 = vector.extract_strided_slice %361 {offsets = [0, 0], sizes = [8, 64], strides = [1, 1]} : vector<8x96xf32> to vector<8x64xf32>
    %364 = vector.extract_strided_slice %362 {offsets = [0, 0], sizes = [8, 64], strides = [1, 1]} : vector<8x96xf32> to vector<8x64xf32>
    %365 = arith.addf %363, %364 : vector<8x64xf32>
    %366 = arith.negf %365 : vector<8x64xf32>
    %367 = math.exp %366 : vector<8x64xf32>
    %cst_110 = arith.constant 1.000000e+00 : f32
    %368 = vector.broadcast %cst_110 : f32 to vector<8x64xf32>
    %369 = arith.addf %368, %367 : vector<8x64xf32>
    %370 = arith.divf %368, %369 : vector<8x64xf32>
    %371 = vector.extract_strided_slice %361 {offsets = [0, 64], sizes = [8, 32], strides = [1, 1]} : vector<8x96xf32> to vector<8x32xf32>
    %372 = vector.extract_strided_slice %370 {offsets = [0, 0], sizes = [8, 32], strides = [1, 1]} : vector<8x64xf32> to vector<8x32xf32>
    %373 = vector.extract_strided_slice %362 {offsets = [0, 64], sizes = [8, 32], strides = [1, 1]} : vector<8x96xf32> to vector<8x32xf32>
    %374 = arith.addf %373, %30 : vector<8x32xf32>
    %375 = arith.mulf %372, %374 : vector<8x32xf32>
    %376 = arith.addf %371, %375 : vector<8x32xf32>
    %377 = math.tanh %376 : vector<8x32xf32>
    %378 = vector.extract_strided_slice %370 {offsets = [0, 32], sizes = [8, 32], strides = [1, 1]} : vector<8x64xf32> to vector<8x32xf32>
    %379 = arith.subf %328, %377 : vector<8x32xf32>
    %380 = arith.mulf %378, %379 : vector<8x32xf32>
    %381 = arith.addf %377, %380 : vector<8x32xf32>
    %382 = arith.index_cast %359 : i32 to index
    %c0_111 = arith.constant 0 : index
    %383 = vector.load %arg17[%382, %c0_111] : memref<64x96xf32, #tpu.memory_space<vmem>>, vector<8x96xf32>
    %cst_112 = arith.constant dense<0.000000e+00> : vector<8x96xf32>
    %384 = tpu.matmul %350, %26, %cst_112 {dimension_numbers = #tpu.dot_dimension_numbers<[1], [0], [0], [1], [0, 0, 1, 1], [], []>} : vector<8x32xf32>, vector<32x96xf32>, vector<8x96xf32> -> vector<8x96xf32>
    %385 = vector.extract_strided_slice %383 {offsets = [0, 0], sizes = [8, 64], strides = [1, 1]} : vector<8x96xf32> to vector<8x64xf32>
    %386 = vector.extract_strided_slice %384 {offsets = [0, 0], sizes = [8, 64], strides = [1, 1]} : vector<8x96xf32> to vector<8x64xf32>
    %387 = arith.addf %385, %386 : vector<8x64xf32>
    %388 = arith.negf %387 : vector<8x64xf32>
    %389 = math.exp %388 : vector<8x64xf32>
    %cst_113 = arith.constant 1.000000e+00 : f32
    %390 = vector.broadcast %cst_113 : f32 to vector<8x64xf32>
    %391 = arith.addf %390, %389 : vector<8x64xf32>
    %392 = arith.divf %390, %391 : vector<8x64xf32>
    %393 = vector.extract_strided_slice %383 {offsets = [0, 64], sizes = [8, 32], strides = [1, 1]} : vector<8x96xf32> to vector<8x32xf32>
    %394 = vector.extract_strided_slice %392 {offsets = [0, 0], sizes = [8, 32], strides = [1, 1]} : vector<8x64xf32> to vector<8x32xf32>
    %395 = vector.extract_strided_slice %384 {offsets = [0, 64], sizes = [8, 32], strides = [1, 1]} : vector<8x96xf32> to vector<8x32xf32>
    %396 = arith.addf %395, %34 : vector<8x32xf32>
    %397 = arith.mulf %394, %396 : vector<8x32xf32>
    %398 = arith.addf %393, %397 : vector<8x32xf32>
    %399 = math.tanh %398 : vector<8x32xf32>
    %400 = vector.extract_strided_slice %392 {offsets = [0, 32], sizes = [8, 32], strides = [1, 1]} : vector<8x64xf32> to vector<8x32xf32>
    %401 = arith.subf %350, %399 : vector<8x32xf32>
    %402 = arith.mulf %400, %401 : vector<8x32xf32>
    %403 = arith.addf %399, %402 : vector<8x32xf32>
    %404 = arith.index_cast %356 : i32 to index
    %c0_114 = arith.constant 0 : index
    %405 = vector.load %arg14[%404, %c0_114] : memref<64x32xf32, #tpu.memory_space<vmem>>, vector<8x32xf32>
    tpu.vector_store %arg14[%404, %c0_114], %381 {strides = array<i32>} : memref<64x32xf32, #tpu.memory_space<vmem>>, vector<8x32xf32>,
    %406 = arith.index_cast %359 : i32 to index
    %c0_115 = arith.constant 0 : index
    %407 = vector.load %arg15[%406, %c0_115] : memref<64x32xf32, #tpu.memory_space<vmem>>, vector<8x32xf32>
    tpu.vector_store %arg15[%406, %c0_115], %403 {strides = array<i32>} : memref<64x32xf32, #tpu.memory_space<vmem>>, vector<8x32xf32>,
    %c7_i32_116 = arith.constant 7 : i32
    %c8_i32_117 = arith.constant 8 : i32
    %408 = arith.muli %c7_i32_116, %c8_i32_117 : i32
    %409 = tpu.assume_multiple %408, 8 : i32
    %c7_i32_118 = arith.constant 7 : i32
    %410 = arith.subi %c7_i32_118, %c7_i32_116 : i32
    %c8_i32_119 = arith.constant 8 : i32
    %411 = arith.muli %410, %c8_i32_119 : i32
    %412 = tpu.assume_multiple %411, 8 : i32
    %413 = arith.index_cast %409 : i32 to index
    %c0_120 = arith.constant 0 : index
    %414 = vector.load %arg16[%413, %c0_120] : memref<64x96xf32, #tpu.memory_space<vmem>>, vector<8x96xf32>
    %cst_121 = arith.constant dense<0.000000e+00> : vector<8x96xf32>
    %415 = tpu.matmul %381, %25, %cst_121 {dimension_numbers = #tpu.dot_dimension_numbers<[1], [0], [0], [1], [0, 0, 1, 1], [], []>} : vector<8x32xf32>, vector<32x96xf32>, vector<8x96xf32> -> vector<8x96xf32>
    %416 = vector.extract_strided_slice %414 {offsets = [0, 0], sizes = [8, 64], strides = [1, 1]} : vector<8x96xf32> to vector<8x64xf32>
    %417 = vector.extract_strided_slice %415 {offsets = [0, 0], sizes = [8, 64], strides = [1, 1]} : vector<8x96xf32> to vector<8x64xf32>
    %418 = arith.addf %416, %417 : vector<8x64xf32>
    %419 = arith.negf %418 : vector<8x64xf32>
    %420 = math.exp %419 : vector<8x64xf32>
    %cst_122 = arith.constant 1.000000e+00 : f32
    %421 = vector.broadcast %cst_122 : f32 to vector<8x64xf32>
    %422 = arith.addf %421, %420 : vector<8x64xf32>
    %423 = arith.divf %421, %422 : vector<8x64xf32>
    %424 = vector.extract_strided_slice %414 {offsets = [0, 64], sizes = [8, 32], strides = [1, 1]} : vector<8x96xf32> to vector<8x32xf32>
    %425 = vector.extract_strided_slice %423 {offsets = [0, 0], sizes = [8, 32], strides = [1, 1]} : vector<8x64xf32> to vector<8x32xf32>
    %426 = vector.extract_strided_slice %415 {offsets = [0, 64], sizes = [8, 32], strides = [1, 1]} : vector<8x96xf32> to vector<8x32xf32>
    %427 = arith.addf %426, %30 : vector<8x32xf32>
    %428 = arith.mulf %425, %427 : vector<8x32xf32>
    %429 = arith.addf %424, %428 : vector<8x32xf32>
    %430 = math.tanh %429 : vector<8x32xf32>
    %431 = vector.extract_strided_slice %423 {offsets = [0, 32], sizes = [8, 32], strides = [1, 1]} : vector<8x64xf32> to vector<8x32xf32>
    %432 = arith.subf %381, %430 : vector<8x32xf32>
    %433 = arith.mulf %431, %432 : vector<8x32xf32>
    %434 = arith.addf %430, %433 : vector<8x32xf32>
    %435 = arith.index_cast %412 : i32 to index
    %c0_123 = arith.constant 0 : index
    %436 = vector.load %arg17[%435, %c0_123] : memref<64x96xf32, #tpu.memory_space<vmem>>, vector<8x96xf32>
    %cst_124 = arith.constant dense<0.000000e+00> : vector<8x96xf32>
    %437 = tpu.matmul %403, %26, %cst_124 {dimension_numbers = #tpu.dot_dimension_numbers<[1], [0], [0], [1], [0, 0, 1, 1], [], []>} : vector<8x32xf32>, vector<32x96xf32>, vector<8x96xf32> -> vector<8x96xf32>
    %438 = vector.extract_strided_slice %436 {offsets = [0, 0], sizes = [8, 64], strides = [1, 1]} : vector<8x96xf32> to vector<8x64xf32>
    %439 = vector.extract_strided_slice %437 {offsets = [0, 0], sizes = [8, 64], strides = [1, 1]} : vector<8x96xf32> to vector<8x64xf32>
    %440 = arith.addf %438, %439 : vector<8x64xf32>
    %441 = arith.negf %440 : vector<8x64xf32>
    %442 = math.exp %441 : vector<8x64xf32>
    %cst_125 = arith.constant 1.000000e+00 : f32
    %443 = vector.broadcast %cst_125 : f32 to vector<8x64xf32>
    %444 = arith.addf %443, %442 : vector<8x64xf32>
    %445 = arith.divf %443, %444 : vector<8x64xf32>
    %446 = vector.extract_strided_slice %436 {offsets = [0, 64], sizes = [8, 32], strides = [1, 1]} : vector<8x96xf32> to vector<8x32xf32>
    %447 = vector.extract_strided_slice %445 {offsets = [0, 0], sizes = [8, 32], strides = [1, 1]} : vector<8x64xf32> to vector<8x32xf32>
    %448 = vector.extract_strided_slice %437 {offsets = [0, 64], sizes = [8, 32], strides = [1, 1]} : vector<8x96xf32> to vector<8x32xf32>
    %449 = arith.addf %448, %34 : vector<8x32xf32>
    %450 = arith.mulf %447, %449 : vector<8x32xf32>
    %451 = arith.addf %446, %450 : vector<8x32xf32>
    %452 = math.tanh %451 : vector<8x32xf32>
    %453 = vector.extract_strided_slice %445 {offsets = [0, 32], sizes = [8, 32], strides = [1, 1]} : vector<8x64xf32> to vector<8x32xf32>
    %454 = arith.subf %403, %452 : vector<8x32xf32>
    %455 = arith.mulf %453, %454 : vector<8x32xf32>
    %456 = arith.addf %452, %455 : vector<8x32xf32>
    %457 = arith.index_cast %409 : i32 to index
    %c0_126 = arith.constant 0 : index
    %458 = vector.load %arg14[%457, %c0_126] : memref<64x32xf32, #tpu.memory_space<vmem>>, vector<8x32xf32>
    tpu.vector_store %arg14[%457, %c0_126], %434 {strides = array<i32>} : memref<64x32xf32, #tpu.memory_space<vmem>>, vector<8x32xf32>,
    %459 = arith.index_cast %412 : i32 to index
    %c0_127 = arith.constant 0 : index
    %460 = vector.load %arg15[%459, %c0_127] : memref<64x32xf32, #tpu.memory_space<vmem>>, vector<8x32xf32>
    tpu.vector_store %arg15[%459, %c0_127], %456 {strides = array<i32>} : memref<64x32xf32, #tpu.memory_space<vmem>>, vector<8x32xf32>,
    %c8_i32_128 = arith.constant 8 : i32
    %c0_129 = arith.constant 0 : index
    %c0_130 = arith.constant 0 : index
    %461 = vector.load %arg18[%c0_129, %c0_130] : memref<8x32xf32, #tpu.memory_space<vmem>>, vector<8x32xf32>
    tpu.vector_store %arg18[%c0_129, %c0_130], %434 {strides = array<i32>} : memref<8x32xf32, #tpu.memory_space<vmem>>, vector<8x32xf32>,
    %c0_131 = arith.constant 0 : index
    %c0_132 = arith.constant 0 : index
    %462 = vector.load %arg19[%c0_131, %c0_132] : memref<8x32xf32, #tpu.memory_space<vmem>>, vector<8x32xf32>
    tpu.vector_store %arg19[%c0_131, %c0_132], %456 {strides = array<i32>} : memref<8x32xf32, #tpu.memory_space<vmem>>, vector<8x32xf32>,
    return
  }
  func.func @transform_0(%arg0: i32) -> (i32, i32) {
    %c0_i32 = arith.constant 0 : i32
    %c0_i32_0 = arith.constant 0 : i32
    return %arg0, %c0_i32 : i32, i32
  }
  func.func @transform_1(%arg0: i32) -> (i32, i32) {
    %c0_i32 = arith.constant 0 : i32
    %c0_i32_0 = arith.constant 0 : i32
    return %arg0, %c0_i32 : i32, i32
  }
  func.func @transform_2(%arg0: i32) -> (i32, i32) {
    %c0_i32 = arith.constant 0 : i32
    %0 = arith.subi %c0_i32, %arg0 : i32
    %c0_i32_0 = arith.constant 0 : i32
    %c0_i32_1 = arith.constant 0 : i32
    return %0, %c0_i32_0 : i32, i32
  }
  func.func @transform_3(%arg0: i32) -> (i32, i32) {
    %c0_i32 = arith.constant 0 : i32
    %0 = arith.subi %c0_i32, %arg0 : i32
    %c0_i32_0 = arith.constant 0 : i32
    %c0_i32_1 = arith.constant 0 : i32
    return %0, %c0_i32_0 : i32, i32
  }
  func.func @transform_4(%arg0: i32) -> (i32, i32) {
    %c0_i32 = arith.constant 0 : i32
    %c0_i32_0 = arith.constant 0 : i32
    %c0_i32_1 = arith.constant 0 : i32
    return %c0_i32, %c0_i32_0 : i32, i32
  }
  func.func @transform_5(%arg0: i32) -> (i32, i32) {
    %c0_i32 = arith.constant 0 : i32
    %c0_i32_0 = arith.constant 0 : i32
    %c0_i32_1 = arith.constant 0 : i32
    return %c0_i32, %c0_i32_0 : i32, i32
  }
  func.func @transform_6(%arg0: i32) -> (i32, i32) {
    %c0_i32 = arith.constant 0 : i32
    %c0_i32_0 = arith.constant 0 : i32
    %c0_i32_1 = arith.constant 0 : i32
    return %c0_i32, %c0_i32_0 : i32, i32
  }
  func.func @transform_7(%arg0: i32) -> (i32, i32) {
    %c0_i32 = arith.constant 0 : i32
    %c0_i32_0 = arith.constant 0 : i32
    %c0_i32_1 = arith.constant 0 : i32
    return %c0_i32, %c0_i32_0 : i32, i32
  }
  func.func @transform_8(%arg0: i32) -> (i32, i32) {
    %c0_i32 = arith.constant 0 : i32
    %c0_i32_0 = arith.constant 0 : i32
    %c0_i32_1 = arith.constant 0 : i32
    return %c0_i32, %c0_i32_0 : i32, i32
  }
  func.func @transform_9(%arg0: i32) -> (i32, i32) {
    %c0_i32 = arith.constant 0 : i32
    %c0_i32_0 = arith.constant 0 : i32
    %c0_i32_1 = arith.constant 0 : i32
    return %c0_i32, %c0_i32_0 : i32, i32
  }
  func.func @transform_10(%arg0: i32) -> (i32, i32) {
    %c0_i32 = arith.constant 0 : i32
    %c0_i32_0 = arith.constant 0 : i32
    %c0_i32_1 = arith.constant 0 : i32
    return %c0_i32, %c0_i32_0 : i32, i32
  }
  func.func @transform_11(%arg0: i32) -> (i32, i32) {
    %c0_i32 = arith.constant 0 : i32
    %c0_i32_0 = arith.constant 0 : i32
    %c0_i32_1 = arith.constant 0 : i32
    return %c0_i32, %c0_i32_0 : i32, i32
  }
  func.func @transform_12(%arg0: i32) -> (i32, i32, i32) {
    %c0_i32 = arith.constant 0 : i32
    %c0_i32_0 = arith.constant 0 : i32
    %c0_i32_1 = arith.constant 0 : i32
    %c0_i32_2 = arith.constant 0 : i32
    return %c0_i32, %c0_i32_0, %c0_i32_1 : i32, i32, i32
  }
  func.func @transform_13(%arg0: i32) -> (i32, i32) {
    %c0_i32 = arith.constant 0 : i32
    %c0_i32_0 = arith.constant 0 : i32
    return %arg0, %c0_i32 : i32, i32
  }
  func.func @transform_14(%arg0: i32) -> (i32, i32) {
    %c0_i32 = arith.constant 0 : i32
    %0 = arith.subi %c0_i32, %arg0 : i32
    %c0_i32_0 = arith.constant 0 : i32
    %c0_i32_1 = arith.constant 0 : i32
    return %0, %c0_i32_0 : i32, i32
  }
}

</mosaic_0001>

<llo_original>
// kernel: sentiment_bigru_forward.5
$region0: #{sentiment_bigru_forward.5}
  #allocation0 [shape = 'u32[]', space=smem, size = 0x4, offset = 0x4, fixed_abs, tag = 'smem constant byte address 0x4 - core index']
  #allocation1 [shape = 'u32[144,128]{1,0:T(1,128)}', space=vmem, size = 0x12000, scoped, tag = 'internal scratch']
  #allocation2 [shape = 'f32[1,1]{1,0:T(1,128)S(1)}', space=vmem, size = 0x200, scoped, tag = 'scoped memory for sentiment_bigru_forward.5']
  %s0 = inlined_call_operand.vmem [shape: f32[64,32], index: 0, kind: input, shape index: {}]
  %s1 = inlined_call_operand.vmem [shape: f32[64,32], index: 1, kind: input, shape index: {}]
  %s2 = inlined_call_operand.vmem [shape: f32[1,32], index: 2, kind: input, shape index: {}]
  %s3 = inlined_call_operand.vmem [shape: f32[1,32], index: 3, kind: input, shape index: {}]
  %s4 = inlined_call_operand.<no memory space> [shape: f32[1,1], index: 4, kind: input, shape index: {}]
  %s5 = inlined_call_operand.vmem [shape: f32[1,64], index: 5, kind: output, shape index: {}]
  %s6 = sld [smem:[#allocation0]]
  $region30: #{sentiment_bigru_forward.5} parent=0
    _
  %s8 = ssub.s32 1, %s6
  %s9 = scalar_select 0, %s8, %s6
  %v10 = vstv %s4
  %11 = vst [vmem:[#allocation2] sm:$0x1] %v10
  // Predicated region
  $region2: #{sentiment_bigru_forward.5} parent=0 // pred_check
    _
  $region3: #{sentiment_bigru_forward.5} parent=0 // pred_check_branch
    %13 = sbr.rel (0) target = $region5
  $region4: #{sentiment_bigru_forward.5} parent=0 // pred_region
    _
  $region5: #{sentiment_bigru_forward.5} parent=0 // pred_fallthru
    _
  // Predicated region
  $region6: #{sentiment_bigru_forward.5} parent=0 // pred_check
    _
  $region7: #{sentiment_bigru_forward.5} parent=0 // pred_check_branch
    %15 = sbr.rel (0) target = $region9
  $region8: #{sentiment_bigru_forward.5} parent=0 // pred_region
    _
  $region9: #{sentiment_bigru_forward.5} parent=0 // pred_fallthru
    _
  // Predicated region
  $region10: #{sentiment_bigru_forward.5} parent=0 // pred_check
    _
  $region11: #{sentiment_bigru_forward.5} parent=0 // pred_check_branch
    %17 = sbr.rel (0) target = $region13
  $region12: #{sentiment_bigru_forward.5} parent=0 // pred_region
    _
  $region13: #{sentiment_bigru_forward.5} parent=0 // pred_fallthru
    _
  // Predicated region
  $region14: #{sentiment_bigru_forward.5} parent=0 // pred_check
    _
  $region15: #{sentiment_bigru_forward.5} parent=0 // pred_check_branch
    %19 = sbr.rel (0) target = $region17
  $region16: #{sentiment_bigru_forward.5} parent=0 // pred_region
    _
  $region17: #{sentiment_bigru_forward.5} parent=0 // pred_fallthru
    _
  // Predicated region
  $region18: #{sentiment_bigru_forward.5} parent=0 // pred_check
    _
  $region19: #{sentiment_bigru_forward.5} parent=0 // pred_check_branch
    %21 = sbr.rel (0) target = $region21
  $region20: #{sentiment_bigru_forward.5} parent=0 // pred_region
    _
  $region21: #{sentiment_bigru_forward.5} parent=0 // pred_fallthru
    _
  %v22 = vld [vmem:[%s2] sm:$0x1]
  %v23 = vld [vmem:[%s0] sm:$0xff]
  %v24 = vld [vmem:[%s0 + $0x8] sm:$0xff]
  %v25 = vld [vmem:[%s0 + $0x10] sm:$0xff]
  %v26 = vld [vmem:[%s0 + $0x18] sm:$0xff]
  %v27 = vld [vmem:[%s0 + $0x20] sm:$0xff]
  %v28 = vld [vmem:[%s0 + $0x28] sm:$0xff]
  %v29 = vld [vmem:[%s0 + $0x30] sm:$0xff]
  %v30 = vld [vmem:[%s0 + $0x38] sm:$0xff]
  %v31 = vld [vmem:[%s3] sm:$0x1]
  %v32 = vld [vmem:[%s1] sm:$0xff]
  %v33 = vld [vmem:[%s1 + $0x8] sm:$0xff]
  %v34 = vld [vmem:[%s1 + $0x10] sm:$0xff]
  %v35 = vld [vmem:[%s1 + $0x18] sm:$0xff]
  %v36 = vld [vmem:[%s1 + $0x20] sm:$0xff]
  %v37 = vld [vmem:[%s1 + $0x28] sm:$0xff]
  %v38 = vld [vmem:[%s1 + $0x30] sm:$0xff]
  %v39 = vld [vmem:[%s1 + $0x38] sm:$0xff]
  %vm40 = vcmask 261120
  %v42 = vsel %vm40, %v31, 0
  %v45 = vsel %vm40, %v32, 0
  %v48 = vsel %vm40, %v33, 0
  %v51 = vsel %vm40, %v34, 0
  %v54 = vsel %vm40, %v35, 0
  %v57 = vsel %vm40, %v36, 0
  %v60 = vsel %vm40, %v37, 0
  %v63 = vsel %vm40, %v38, 0
  %v66 = vsel %vm40, %v39, 0
  %68 = vmatprep.subr.mxu0 0.0
  %69 = vmatpush1.xpose.msra.mxu0 %v45
  %70 = vmatprep.subr.mxu0 0.0
  %71 = vmatpush1.xpose.msra.mxu0 %v48
  %72 = vmatprep.subr.mxu0 0.0
  %73 = vmatpush1.xpose.msra.mxu0 %v51
  %74 = vmatprep.subr.mxu0 0.0
  %75 = vmatpush1.xpose.msra.mxu0 %v54
  %76 = vmatprep.subr.mxu0 0.0
  %77 = vmatpush1.xpose.msra.mxu0 %v57
  %78 = vmatprep.subr.mxu0 0.0
  %79 = vmatpush1.xpose.msra.mxu0 %v60
  %80 = vmatprep.subr.mxu0 0.0
  %81 = vmatpush1.xpose.msra.mxu0 %v63
  %82 = vmatprep.subr.mxu0 0.0
  %83 = vmatpush1.xpose.msra.mxu0 %v66
  %84 = vmatprep.subr.mxu0 0.0
  %85 = vmatpush1.xpose.msra.mxu0 0.0
  %86 = vmatprep.subr.mxu0 0.0
  %87 = vmatpush1.xpose.msra.mxu0 0.0
  %88 = vmatprep.subr.mxu0 0.0
  %89 = vmatpush1.xpose.msra.mxu0 0.0
  %90 = vmatprep.subr.mxu0 0.0
  %91 = vmatpush1.xpose.msra.mxu0 0.0
  %92 = vmatprep.subr.mxu0 0.0
  %93 = vmatpush1.xpose.msra.mxu0 0.0
  %94 = vmatprep.subr.mxu0 0.0
  %95 = vmatpush1.xpose.msra.mxu0 0.0
  %96 = vmatprep.subr.mxu0 0.0
  %97 = vmatpush1.xpose.msra.mxu0 0.0
  %98 = vmatprep.subr.mxu0 0.0
  %99 = vmatpush1.xpose.msra.mxu0 0.0
  %100 = vmatprep.subr.mxu0 0.0
  %101 = vmatpush1.xpose.msra.mxu0 0.0
  %102 = vmatprep.subr.mxu0 0.0
  %103 = vmatpush1.xpose.msra.mxu0 0.0
  %104 = vmatprep.subr.mxu0 0.0
  %105 = vmatpush1.xpose.msra.mxu0 0.0
  %106 = vmatprep.subr.mxu0 0.0
  %107 = vmatpush1.xpose.msra.mxu0 0.0
  %108 = vmatprep.subr.mxu0 0.0
  %109 = vmatpush1.xpose.msra.mxu0 0.0
  %110 = vmatprep.subr.mxu0 0.0
  %111 = vmatpush1.xpose.msra.mxu0 0.0
  %112 = vmatprep.subr.mxu0 0.0
  %113 = vmatpush1.xpose.msra.mxu0 0.0
  %114 = vmatprep.subr.mxu0 0.0
  %115 = vmatpush1.xpose.msra.mxu0 0.0
  %116 = vmatprep.subr.mxu0 0.0
  %117 = vmatpush1.xpose.msra.mxu0 0.0
  %118 = vmatprep.subr.mxu0 0.0
  %119 = vmatpush1.xpose.msra.mxu0 0.0
  %120 = vmatprep.subr.mxu0 0.0
  %121 = vmatpush1.xpose.msra.mxu0 0.0
  %122 = vmatprep.subr.mxu0 0.0
  %123 = vmatpush1.xpose.msra.mxu0 0.0
  %124 = vmatprep.subr.mxu0 0.0
  %125 = vmatpush1.xpose.msra.mxu0 0.0
  %126 = vmatprep.subr.mxu0 0.0
  %127 = vmatpush1.xpose.msra.mxu0 0.0
  %128 = vmatprep.subr.mxu0 0.0
  %129 = vmatpush1.xpose.msra.mxu0 0.0
  %130 = vmatprep.subr.mxu0 0.0
  %131 = vmatpush1.xpose.msra.mxu0 0.0
  %132 = vmatprep.mubr.f32.mxu0 0.0
  %133 = vmatmul.mubr.f32.gmra.mrb[0].mxu0 %v42
  %v134 = vpop.f32.mrb[0].mxu0
  %v135 = vadd.f32 0.0, %v134
  %v136 = vpop.f32.mrb[0].mxu0
  %137 = vdwg.mxu0
  %v139 = vsel %vm40, %v22, 0
  %v142 = vsel %vm40, %v23, 0
  %v145 = vsel %vm40, %v24, 0
  %v148 = vsel %vm40, %v25, 0
  %v151 = vsel %vm40, %v26, 0
  %v154 = vsel %vm40, %v27, 0
  %v157 = vsel %vm40, %v28, 0
  %v160 = vsel %vm40, %v29, 0
  %v163 = vsel %vm40, %v30, 0
  %165 = vmatprep.subr.mxu0 0.0
  %166 = vmatpush1.xpose.msra.mxu0 %v142
  %167 = vmatprep.subr.mxu0 0.0
  %168 = vmatpush1.xpose.msra.mxu0 %v145
  %169 = vmatprep.subr.mxu0 0.0
  %170 = vmatpush1.xpose.msra.mxu0 %v148
  %171 = vmatprep.subr.mxu0 0.0
  %172 = vmatpush1.xpose.msra.mxu0 %v151
  %173 = vmatprep.subr.mxu0 0.0
  %174 = vmatpush1.xpose.msra.mxu0 %v154
  %175 = vmatprep.subr.mxu0 0.0
  %176 = vmatpush1.xpose.msra.mxu0 %v157
  %177 = vmatprep.subr.mxu0 0.0
  %178 = vmatpush1.xpose.msra.mxu0 %v160
  %179 = vmatprep.subr.mxu0 0.0
  %180 = vmatpush1.xpose.msra.mxu0 %v163
  %181 = vmatprep.subr.mxu0 0.0
  %182 = vmatpush1.xpose.msra.mxu0 0.0
  %183 = vmatprep.subr.mxu0 0.0
  %184 = vmatpush1.xpose.msra.mxu0 0.0
  %185 = vmatprep.subr.mxu0 0.0
  %186 = vmatpush1.xpose.msra.mxu0 0.0
  %187 = vmatprep.subr.mxu0 0.0
  %188 = vmatpush1.xpose.msra.mxu0 0.0
  %189 = vmatprep.subr.mxu0 0.0
  %190 = vmatpush1.xpose.msra.mxu0 0.0
  %191 = vmatprep.subr.mxu0 0.0
  %192 = vmatpush1.xpose.msra.mxu0 0.0
  %193 = vmatprep.subr.mxu0 0.0
  %194 = vmatpush1.xpose.msra.mxu0 0.0
  %195 = vmatprep.subr.mxu0 0.0
  %196 = vmatpush1.xpose.msra.mxu0 0.0
  %197 = vmatprep.subr.mxu0 0.0
  %198 = vmatpush1.xpose.msra.mxu0 0.0
  %199 = vmatprep.subr.mxu0 0.0
  %200 = vmatpush1.xpose.msra.mxu0 0.0
  %201 = vmatprep.subr.mxu0 0.0
  %202 = vmatpush1.xpose.msra.mxu0 0.0
  %203 = vmatprep.subr.mxu0 0.0
  %204 = vmatpush1.xpose.msra.mxu0 0.0
  %205 = vmatprep.subr.mxu0 0.0
  %206 = vmatpush1.xpose.msra.mxu0 0.0
  %207 = vmatprep.subr.mxu0 0.0
  %208 = vmatpush1.xpose.msra.mxu0 0.0
  %209 = vmatprep.subr.mxu0 0.0
  %210 = vmatpush1.xpose.msra.mxu0 0.0
  %211 = vmatprep.subr.mxu0 0.0
  %212 = vmatpush1.xpose.msra.mxu0 0.0
  %213 = vmatprep.subr.mxu0 0.0
  %214 = vmatpush1.xpose.msra.mxu0 0.0
  %215 = vmatprep.subr.mxu0 0.0
  %216 = vmatpush1.xpose.msra.mxu0 0.0
  %217 = vmatprep.subr.mxu0 0.0
  %218 = vmatpush1.xpose.msra.mxu0 0.0
  %219 = vmatprep.subr.mxu0 0.0
  %220 = vmatpush1.xpose.msra.mxu0 0.0
  %221 = vmatprep.subr.mxu0 0.0
  %222 = vmatpush1.xpose.msra.mxu0 0.0
  %223 = vmatprep.subr.mxu0 0.0
  %224 = vmatpush1.xpose.msra.mxu0 0.0
  %225 = vmatprep.subr.mxu0 0.0
  %226 = vmatpush1.xpose.msra.mxu0 0.0
  %227 = vmatprep.subr.mxu0 0.0
  %228 = vmatpush1.xpose.msra.mxu0 0.0
  %229 = vmatprep.mubr.f32.mxu0 0.0
  %230 = vmatmul.mubr.f32.gmra.mrb[0].mxu0 %v139
  %v231 = vpop.f32.mrb[0].mxu0
  %v232 = vadd.f32 %v135, %v231
  %v233 = vpop.f32.mrb[0].mxu0
  %234 = vdwg.mxu0
  %v235 = vld [vmem:[#allocation2] sm:$0x1]
  %237 = vset.pattern.permute.xlu0 0
  %238 = vperm.xlu0 %237, %v235
  %v239 = vpop.permute.xlu0 %238
  %v241 = vlaneseq
  %v242 = vshrl.u32 %v241, 7
  %v243 = vsub.s32 0, %v242
  %v244 = vrot.slane %v239, %v243
  %v245 = vadd.f32 %v232, %v244
  %vm246 = vcmask 516096
  %247 = vst.msk [vmem:[%s5] sm:$0x1] %vm246, %v245
  // Predicated region
  $region22: #{sentiment_bigru_forward.5} parent=0 // pred_check
    _
  $region23: #{sentiment_bigru_forward.5} parent=0 // pred_check_branch
    %249 = sbr.rel (0) target = $region25
  $region24: #{sentiment_bigru_forward.5} parent=0 // pred_region
    _
  $region25: #{sentiment_bigru_forward.5} parent=0 // pred_fallthru
    _
  // Predicated region
  $region26: #{sentiment_bigru_forward.5} parent=0 // pred_check
    _
  $region27: #{sentiment_bigru_forward.5} parent=0 // pred_check_branch
    %251 = sbr.rel (0) target = $region29
  $region28: #{sentiment_bigru_forward.5} parent=0 // pred_region
    _
  $region29: #{sentiment_bigru_forward.5} parent=0 // pred_fallthru
    _

// kernel: sentiment_bigru_forward.3
$region0: #{sentiment_bigru_forward.3}
  #allocation0 [shape = 'u32[]', space=smem, size = 0x4, offset = 0x4, fixed_abs, tag = 'smem constant byte address 0x4 - core index']
  #allocation1 [shape = 'u32[144,128]{1,0:T(1,128)}', space=vmem, size = 0x12000, scoped, tag = 'internal scratch']
  #allocation2 [shape = 'f32[64,96]{1,0:T(8,128)}', space=vmem, size = 0x8000, scoped, tag = 'scratch operand']
  #allocation3 [shape = 'f32[64,96]{1,0:T(8,128)}', space=vmem, size = 0x8000, scoped, tag = 'scratch operand']
  #allocation4 [shape = 'f32[8,32]{1,0:T(8,128)}', space=vmem, size = 0x1000, scoped, tag = 'scratch operand']
  #allocation5 [shape = 'f32[8,32]{1,0:T(8,128)}', space=vmem, size = 0x1000, scoped, tag = 'scratch operand']
  %s0 = inlined_call_operand.vmem [shape: f32[64,16], index: 0, kind: input, shape index: {}, may-alias: {0,1}]
  %s1 = inlined_call_operand.vmem [shape: f32[64,16], index: 1, kind: input, shape index: {}, may-alias: {0,1}]
  %s2 = inlined_call_operand.vmem [shape: f32[16,96], index: 2, kind: input, shape index: {}]
  %s3 = inlined_call_operand.vmem [shape: f32[16,96], index: 3, kind: input, shape index: {}]
  %s4 = inlined_call_operand.vmem [shape: f32[1,96], index: 4, kind: input, shape index: {}]
  %s5 = inlined_call_operand.vmem [shape: f32[1,96], index: 5, kind: input, shape index: {}]
  %s6 = inlined_call_operand.vmem [shape: f32[32,96], index: 6, kind: input, shape index: {}]
  %s7 = inlined_call_operand.vmem [shape: f32[32,96], index: 7, kind: input, shape index: {}]
  %s8 = inlined_call_operand.vmem [shape: f32[2,1,32], index: 8, kind: input, shape index: {}]
  %s9 = inlined_call_operand.vmem [shape: f32[64,32], index: 9, kind: output, shape index: {0}]
  %s10 = inlined_call_operand.vmem [shape: f32[64,32], index: 10, kind: output, shape index: {1}]
  %11 = xla_tuple %s9, %s10
  %s12 = sld [smem:[#allocation0]]
  $region58: #{sentiment_bigru_forward.3} parent=0
    _
  %s14 = ssub.s32 1, %s12
  %s15 = scalar_select 0, %s14, %s12
  // Predicated region
  $region2: #{sentiment_bigru_forward.3} parent=0 // pred_check
    _
  $region3: #{sentiment_bigru_forward.3} parent=0 // pred_check_branch
    %17 = sbr.rel (0) target = $region5
  $region4: #{sentiment_bigru_forward.3} parent=0 // pred_region
    _
  $region5: #{sentiment_bigru_forward.3} parent=0 // pred_fallthru
    _
  // Predicated region
  $region6: #{sentiment_bigru_forward.3} parent=0 // pred_check
    _
  $region7: #{sentiment_bigru_forward.3} parent=0 // pred_check_branch
    %19 = sbr.rel (0) target = $region9
  $region8: #{sentiment_bigru_forward.3} parent=0 // pred_region
    %s20 = ssub.s32 0, 0
    %s21 = smul.u32 8, %s20
    %p22 = scmp.lt.s32.totalorder %s21, 7
    %s23 = scalar_select %p22, %s21, 7
    %s24 = smul.addr %s23, 8
    %s25 = scalar_lea.vmem %s1, %s24
    %s26 = ssub.s32 0, 0
    %s27 = smul.u32 8, %s26
  $region9: #{sentiment_bigru_forward.3} parent=0 // pred_fallthru
    _
  // Predicated region
  $region10: #{sentiment_bigru_forward.3} parent=0 // pred_check
    _
  $region11: #{sentiment_bigru_forward.3} parent=0 // pred_check_branch
    %29 = sbr.rel (0) target = $region13
  $region12: #{sentiment_bigru_forward.3} parent=0 // pred_region
    _
  $region13: #{sentiment_bigru_forward.3} parent=0 // pred_fallthru
    _
  // Predicated region
  $region14: #{sentiment_bigru_forward.3} parent=0 // pred_check
    _
  $region15: #{sentiment_bigru_forward.3} parent=0 // pred_check_branch
    %31 = sbr.rel (0) target = $region17
  $region16: #{sentiment_bigru_forward.3} parent=0 // pred_region
    _
  $region17: #{sentiment_bigru_forward.3} parent=0 // pred_fallthru
    _
  // Predicated region
  $region18: #{sentiment_bigru_forward.3} parent=0 // pred_check
    _
  $region19: #{sentiment_bigru_forward.3} parent=0 // pred_check_branch
    %33 = sbr.rel (0) target = $region21
  $region20: #{sentiment_bigru_forward.3} parent=0 // pred_region
    _
  $region21: #{sentiment_bigru_forward.3} parent=0 // pred_fallthru
    _
  // Predicated region
  $region22: #{sentiment_bigru_forward.3} parent=0 // pred_check
    _
  $region23: #{sentiment_bigru_forward.3} parent=0 // pred_check_branch
    %35 = sbr.rel (0) target = $region25
  $region24: #{sentiment_bigru_forward.3} parent=0 // pred_region
    _
  $region25: #{sentiment_bigru_forward.3} parent=0 // pred_fallthru
    _
  // Predicated region
  $region26: #{sentiment_bigru_forward.3} parent=0 // pred_check
    _
  $region27: #{sentiment_bigru_forward.3} parent=0 // pred_check_branch
    %37 = sbr.rel (0) target = $region29
  $region28: #{sentiment_bigru_forward.3} parent=0 // pred_region
    _
  $region29: #{sentiment_bigru_forward.3} parent=0 // pred_fallthru
    _
  // Predicated region
  $region30: #{sentiment_bigru_forward.3} parent=0 // pred_check
    _
  $region31: #{sentiment_bigru_forward.3} parent=0 // pred_check_branch
    %39 = sbr.rel (0) target = $region33
  $region32: #{sentiment_bigru_forward.3} parent=0 // pred_region
    _
  $region33: #{sentiment_bigru_forward.3} parent=0 // pred_fallthru
    _
  // Predicated region
  $region34: #{sentiment_bigru_forward.3} parent=0 // pred_check
    _
  $region35: #{sentiment_bigru_forward.3} parent=0 // pred_check_branch
    %41 = sbr.rel (0) target = $region37
  $region36: #{sentiment_bigru_forward.3} parent=0 // pred_region
    _
  $region37: #{sentiment_bigru_forward.3} parent=0 // pred_fallthru
    _
  %s42 = ssub.s32 0, 0
  %s43 = smul.u32 8, %s42
  %p44 = scmp.lt.s32.totalorder %s43, 7
  %s45 = scalar_select %p44, %s43, 7
  %s46 = smul.addr %s45, 8
  %s47 = scalar_lea.vmem %s1, %s46
  %s48 = ssub.s32 0, 0
  %s49 = smul.u32 8, %s48
  %p50 = scmp.lt.s32.totalorder %s49, 7
  %s51 = scalar_select %p50, %s49, 7
  %s52 = smul.addr %s51, 8
  %s53 = scalar_lea.vmem %s10, %s52
  %s54 = ssub.s32 0, 0
  %s55 = smul.u32 8, %s54
  %p56 = scmp.lt.s32.totalorder %s55, 7
  %s57 = scalar_select %p56, %s55, 7
  %s58 = smul.addr %s57, 8
  %s59 = scalar_lea.vmem %s1, %s58
  %s60 = ssub.s32 0, 0
  %s61 = smul.u32 8, %s60
  %s62 = ssub.s32 0, 0
  %s63 = smul.u32 8, %s62
  %p64 = scmp.lt.s32.totalorder %s63, 7
  %s65 = scalar_select %p64, %s63, 7
  %s66 = smul.addr %s65, 8
  %s67 = scalar_lea.vmem %s10, %s66
  %s68 = ssub.s32 0, 0
  %s69 = smul.u32 8, %s68
  %p70 = scmp.eq.s32.totalorder 0, 0
  // Predicated region
  $region38: #{sentiment_bigru_forward.3} parent=0 // pred_check
    %p71 = pneg %p70
  $region39: #{sentiment_bigru_forward.3} parent=0 // pred_check_branch
    %73 = sbr.rel (%p71) target = $region41
  $region40: #{sentiment_bigru_forward.3} parent=0 // pred_region
    %vm74 = vcmask 261120
    %75 = vst.msk [vmem:[#allocation4] sm:$0xff] %vm74, 0.0
    %76 = vst.msk [vmem:[#allocation5] sm:$0xff] %vm74, 0.0
  $region41: #{sentiment_bigru_forward.3} parent=0 // pred_fallthru
    _
  %v77 = vld [vmem:[%s4] sm:$0x1]
  %v78 = vld [vmem:[%s0] sm:$0xff]
  %v79 = vld [vmem:[%s0 + $0x8] sm:$0xff]
  %v80 = vld [vmem:[%s0 + $0x10] sm:$0xff]
  %v81 = vld [vmem:[%s0 + $0x18] sm:$0xff]
  %v82 = vld [vmem:[%s0 + $0x20] sm:$0xff]
  %v83 = vld [vmem:[%s0 + $0x28] sm:$0xff]
  %v84 = vld [vmem:[%s0 + $0x30] sm:$0xff]
  %v85 = vld [vmem:[%s0 + $0x38] sm:$0xff]
  %v86 = vld [vmem:[%s2] sm:$0xff]
  %v87 = vld [vmem:[%s2 + $0x8] sm:$0xff]
  %vm88 = vcmask 130048
  %v90 = vsel %vm88, %v78, 0
  %v93 = vsel %vm88, %v79, 0
  %v96 = vsel %vm88, %v80, 0
  %v99 = vsel %vm88, %v81, 0
  %v102 = vsel %vm88, %v82, 0
  %v105 = vsel %vm88, %v83, 0
  %v108 = vsel %vm88, %v84, 0
  %v111 = vsel %vm88, %v85, 0
  %113 = vmatprep.subr.mxu0 0.0
  %114 = vmatpush1.msra.mxu0 %v86
  %115 = vmatprep.subr.mxu0 0.0
  %116 = vmatpush1.msra.mxu0 %v87
  %117 = vmatprep.subr.mxu0 0.0
  %118 = vmatpush1.msra.mxu0 0.0
  %119 = vmatprep.subr.mxu0 0.0
  %120 = vmatpush1.msra.mxu0 0.0
  %121 = vmatprep.subr.mxu0 0.0
  %122 = vmatpush1.msra.mxu0 0.0
  %123 = vmatprep.subr.mxu0 0.0
  %124 = vmatpush1.msra.mxu0 0.0
  %125 = vmatprep.subr.mxu0 0.0
  %126 = vmatpush1.msra.mxu0 0.0
  %127 = vmatprep.subr.mxu0 0.0
  %128 = vmatpush1.msra.mxu0 0.0
  %129 = vmatprep.subr.mxu0 0.0
  %130 = vmatpush1.msra.mxu0 0.0
  %131 = vmatprep.subr.mxu0 0.0
  %132 = vmatpush1.msra.mxu0 0.0
  %133 = vmatprep.subr.mxu0 0.0
  %134 = vmatpush1.msra.mxu0 0.0
  %135 = vmatprep.subr.mxu0 0.0
  %136 = vmatpush1.msra.mxu0 0.0
  %137 = vmatprep.subr.mxu0 0.0
  %138 = vmatpush1.msra.mxu0 0.0
  %139 = vmatprep.subr.mxu0 0.0
  %140 = vmatpush1.msra.mxu0 0.0
  %141 = vmatprep.subr.mxu0 0.0
  %142 = vmatpush1.msra.mxu0 0.0
  %143 = vmatprep.subr.mxu0 0.0
  %144 = vmatpush1.msra.mxu0 0.0
  %145 = vmatprep.subr.mxu0 0.0
  %146 = vmatpush1.msra.mxu0 0.0
  %147 = vmatprep.subr.mxu0 0.0
  %148 = vmatpush1.msra.mxu0 0.0
  %149 = vmatprep.subr.mxu0 0.0
  %150 = vmatpush1.msra.mxu0 0.0
  %151 = vmatprep.subr.mxu0 0.0
  %152 = vmatpush1.msra.mxu0 0.0
  %153 = vmatprep.subr.mxu0 0.0
  %154 = vmatpush1.msra.mxu0 0.0
  %155 = vmatprep.subr.mxu0 0.0
  %156 = vmatpush1.msra.mxu0 0.0
  %157 = vmatprep.subr.mxu0 0.0
  %158 = vmatpush1.msra.mxu0 0.0
  %159 = vmatprep.subr.mxu0 0.0
  %160 = vmatpush1.msra.mxu0 0.0
  %161 = vmatprep.subr.mxu0 0.0
  %162 = vmatpush1.msra.mxu0 0.0
  %163 = vmatprep.subr.mxu0 0.0
  %164 = vmatpush1.msra.mxu0 0.0
  %165 = vmatprep.subr.mxu0 0.0
  %166 = vmatpush1.msra.mxu0 0.0
  %167 = vmatprep.subr.mxu0 0.0
  %168 = vmatpush1.msra.mxu0 0.0
  %169 = vmatprep.subr.mxu0 0.0
  %170 = vmatpush1.msra.mxu0 0.0
  %171 = vmatprep.subr.mxu0 0.0
  %172 = vmatpush1.msra.mxu0 0.0
  %173 = vmatprep.subr.mxu0 0.0
  %174 = vmatpush1.msra.mxu0 0.0
  %175 = vmatprep.subr.mxu0 0.0
  %176 = vmatpush1.msra.mxu0 0.0
  %177 = vmatprep.mubr.f32.mxu0 0.0
  %178 = vmatmul.mubr.f32.gmra.mrb[0].mxu0 %v90
  %v179 = vpop.f32.mrb[0].mxu0
  %v180 = vadd.f32 0.0, %v179
  %v181 = vpop.f32.mrb[0].mxu0
  %182 = vmatprep.mubr.f32.mxu0 0.0
  %183 = vmatmul.mubr.f32.gmra.mrb[0].mxu0 %v93
  %v184 = vpop.f32.mrb[0].mxu0
  %v185 = vadd.f32 0.0, %v184
  %v186 = vpop.f32.mrb[0].mxu0
  %187 = vmatprep.mubr.f32.mxu0 0.0
  %188 = vmatmul.mubr.f32.gmra.mrb[0].mxu0 %v96
  %v189 = vpop.f32.mrb[0].mxu0
  %v190 = vadd.f32 0.0, %v189
  %v191 = vpop.f32.mrb[0].mxu0
  %192 = vmatprep.mubr.f32.mxu0 0.0
  %193 = vmatmul.mubr.f32.gmra.mrb[0].mxu0 %v99
  %v194 = vpop.f32.mrb[0].mxu0
  %v195 = vadd.f32 0.0, %v194
  %v196 = vpop.f32.mrb[0].mxu0
  %197 = vmatprep.mubr.f32.mxu0 0.0
  %198 = vmatmul.mubr.f32.gmra.mrb[0].mxu0 %v102
  %v199 = vpop.f32.mrb[0].mxu0
  %v200 = vadd.f32 0.0, %v199
  %v201 = vpop.f32.mrb[0].mxu0
  %202 = vmatprep.mubr.f32.mxu0 0.0
  %203 = vmatmul.mubr.f32.gmra.mrb[0].mxu0 %v105
  %v204 = vpop.f32.mrb[0].mxu0
  %v205 = vadd.f32 0.0, %v204
  %v206 = vpop.f32.mrb[0].mxu0
  %207 = vmatprep.mubr.f32.mxu0 0.0
  %208 = vmatmul.mubr.f32.gmra.mrb[0].mxu0 %v108
  %v209 = vpop.f32.mrb[0].mxu0
  %v210 = vadd.f32 0.0, %v209
  %v211 = vpop.f32.mrb[0].mxu0
  %212 = vmatprep.mubr.f32.mxu0 0.0
  %213 = vmatmul.mubr.f32.gmra.mrb[0].mxu0 %v111
  %v214 = vpop.f32.mrb[0].mxu0
  %v215 = vadd.f32 0.0, %v214
  %v216 = vpop.f32.mrb[0].mxu0
  %217 = vdwg.mxu0
  %v219 = vlaneseq
  %v220 = vshrl.u32 %v219, 7
  %v221 = vsub.s32 0, %v220
  %v222 = vrot.slane %v77, %v221
  %v224 = vadd.f32 %v222, %v180
  %v225 = vadd.f32 %v222, %v185
  %v226 = vadd.f32 %v222, %v190
  %v227 = vadd.f32 %v222, %v195
  %v228 = vadd.f32 %v222, %v200
  %v229 = vadd.f32 %v222, %v205
  %v230 = vadd.f32 %v222, %v210
  %v231 = vadd.f32 %v222, %v215
  %vm232 = vcmask 785408
  %233 = vst.msk [vmem:[#allocation2] sm:$0xff] %vm232, %v224
  %234 = vst.msk [vmem:[#allocation2 + $0x8] sm:$0xff] %vm232, %v225
  %235 = vst.msk [vmem:[#allocation2 + $0x10] sm:$0xff] %vm232, %v226
  %236 = vst.msk [vmem:[#allocation2 + $0x18] sm:$0xff] %vm232, %v227
  %237 = vst.msk [vmem:[#allocation2 + $0x20] sm:$0xff] %vm232, %v228
  %238 = vst.msk [vmem:[#allocation2 + $0x28] sm:$0xff] %vm232, %v229
  %239 = vst.msk [vmem:[#allocation2 + $0x30] sm:$0xff] %vm232, %v230
  %240 = vst.msk [vmem:[#allocation2 + $0x38] sm:$0xff] %vm232, %v231
  %v241 = vld [vmem:[%s5] sm:$0x1]
  %v242 = vld [vmem:[%s59] sm:$0xff]
  %v243 = vld [vmem:[%s59 + $0x8] sm:$0xff]
  %v244 = vld [vmem:[%s59 + $0x10] sm:$0xff]
  %v245 = vld [vmem:[%s59 + $0x18] sm:$0xff]
  %v246 = vld [vmem:[%s59 + $0x20] sm:$0xff]
  %v247 = vld [vmem:[%s59 + $0x28] sm:$0xff]
  %v248 = vld [vmem:[%s59 + $0x30] sm:$0xff]
  %v249 = vld [vmem:[%s59 + $0x38] sm:$0xff]
  %v250 = vld [vmem:[%s3] sm:$0xff]
  %v251 = vld [vmem:[%s3 + $0x8] sm:$0xff]
  %v253 = vsel %vm88, %v242, 0
  %v256 = vsel %vm88, %v243, 0
  %v259 = vsel %vm88, %v244, 0
  %v262 = vsel %vm88, %v245, 0
  %v265 = vsel %vm88, %v246, 0
  %v268 = vsel %vm88, %v247, 0
  %v271 = vsel %vm88, %v248, 0
  %v274 = vsel %vm88, %v249, 0
  %276 = vmatprep.subr.mxu0 0.0
  %277 = vmatpush1.msra.mxu0 %v250
  %278 = vmatprep.subr.mxu0 0.0
  %279 = vmatpush1.msra.mxu0 %v251
  %280 = vmatprep.subr.mxu0 0.0
  %281 = vmatpush1.msra.mxu0 0.0
  %282 = vmatprep.subr.mxu0 0.0
  %283 = vmatpush1.msra.mxu0 0.0
  %284 = vmatprep.subr.mxu0 0.0
  %285 = vmatpush1.msra.mxu0 0.0
  %286 = vmatprep.subr.mxu0 0.0
  %287 = vmatpush1.msra.mxu0 0.0
  %288 = vmatprep.subr.mxu0 0.0
  %289 = vmatpush1.msra.mxu0 0.0
  %290 = vmatprep.subr.mxu0 0.0
  %291 = vmatpush1.msra.mxu0 0.0
  %292 = vmatprep.subr.mxu0 0.0
  %293 = vmatpush1.msra.mxu0 0.0
  %294 = vmatprep.subr.mxu0 0.0
  %295 = vmatpush1.msra.mxu0 0.0
  %296 = vmatprep.subr.mxu0 0.0
  %297 = vmatpush1.msra.mxu0 0.0
  %298 = vmatprep.subr.mxu0 0.0
  %299 = vmatpush1.msra.mxu0 0.0
  %300 = vmatprep.subr.mxu0 0.0
  %301 = vmatpush1.msra.mxu0 0.0
  %302 = vmatprep.subr.mxu0 0.0
  %303 = vmatpush1.msra.mxu0 0.0
  %304 = vmatprep.subr.mxu0 0.0
  %305 = vmatpush1.msra.mxu0 0.0
  %306 = vmatprep.subr.mxu0 0.0
  %307 = vmatpush1.msra.mxu0 0.0
  %308 = vmatprep.subr.mxu0 0.0
  %309 = vmatpush1.msra.mxu0 0.0
  %310 = vmatprep.subr.mxu0 0.0
  %311 = vmatpush1.msra.mxu0 0.0
  %312 = vmatprep.subr.mxu0 0.0
  %313 = vmatpush1.msra.mxu0 0.0
  %314 = vmatprep.subr.mxu0 0.0
  %315 = vmatpush1.msra.mxu0 0.0
  %316 = vmatprep.subr.mxu0 0.0
  %317 = vmatpush1.msra.mxu0 0.0
  %318 = vmatprep.subr.mxu0 0.0
  %319 = vmatpush1.msra.mxu0 0.0
  %320 = vmatprep.subr.mxu0 0.0
  %321 = vmatpush1.msra.mxu0 0.0
  %322 = vmatprep.subr.mxu0 0.0
  %323 = vmatpush1.msra.mxu0 0.0
  %324 = vmatprep.subr.mxu0 0.0
  %325 = vmatpush1.msra.mxu0 0.0
  %326 = vmatprep.subr.mxu0 0.0
  %327 = vmatpush1.msra.mxu0 0.0
  %328 = vmatprep.subr.mxu0 0.0
  %329 = vmatpush1.msra.mxu0 0.0
  %330 = vmatprep.subr.mxu0 0.0
  %331 = vmatpush1.msra.mxu0 0.0
  %332 = vmatprep.subr.mxu0 0.0
  %333 = vmatpush1.msra.mxu0 0.0
  %334 = vmatprep.subr.mxu0 0.0
  %335 = vmatpush1.msra.mxu0 0.0
  %336 = vmatprep.subr.mxu0 0.0
  %337 = vmatpush1.msra.mxu0 0.0
  %338 = vmatprep.subr.mxu0 0.0
  %339 = vmatpush1.msra.mxu0 0.0
  %340 = vmatprep.mubr.f32.mxu0 0.0
  %341 = vmatmul.mubr.f32.gmra.mrb[0].mxu0 %v253
  %v342 = vpop.f32.mrb[0].mxu0
  %v343 = vadd.f32 0.0, %v342
  %v344 = vpop.f32.mrb[0].mxu0
  %345 = vmatprep.mubr.f32.mxu0 0.0
  %346 = vmatmul.mubr.f32.gmra.mrb[0].mxu0 %v256
  %v347 = vpop.f32.mrb[0].mxu0
  %v348 = vadd.f32 0.0, %v347
  %v349 = vpop.f32.mrb[0].mxu0
  %350 = vmatprep.mubr.f32.mxu0 0.0
  %351 = vmatmul.mubr.f32.gmra.mrb[0].mxu0 %v259
  %v352 = vpop.f32.mrb[0].mxu0
  %v353 = vadd.f32 0.0, %v352
  %v354 = vpop.f32.mrb[0].mxu0
  %355 = vmatprep.mubr.f32.mxu0 0.0
  %356 = vmatmul.mubr.f32.gmra.mrb[0].mxu0 %v262
  %v357 = vpop.f32.mrb[0].mxu0
  %v358 = vadd.f32 0.0, %v357
  %v359 = vpop.f32.mrb[0].mxu0
  %360 = vmatprep.mubr.f32.mxu0 0.0
  %361 = vmatmul.mubr.f32.gmra.mrb[0].mxu0 %v265
  %v362 = vpop.f32.mrb[0].mxu0
  %v363 = vadd.f32 0.0, %v362
  %v364 = vpop.f32.mrb[0].mxu0
  %365 = vmatprep.mubr.f32.mxu0 0.0
  %366 = vmatmul.mubr.f32.gmra.mrb[0].mxu0 %v268
  %v367 = vpop.f32.mrb[0].mxu0
  %v368 = vadd.f32 0.0, %v367
  %v369 = vpop.f32.mrb[0].mxu0
  %370 = vmatprep.mubr.f32.mxu0 0.0
  %371 = vmatmul.mubr.f32.gmra.mrb[0].mxu0 %v271
  %v372 = vpop.f32.mrb[0].mxu0
  %v373 = vadd.f32 0.0, %v372
  %v374 = vpop.f32.mrb[0].mxu0
  %375 = vmatprep.mubr.f32.mxu0 0.0
  %376 = vmatmul.mubr.f32.gmra.mrb[0].mxu0 %v274
  %v377 = vpop.f32.mrb[0].mxu0
  %v378 = vadd.f32 0.0, %v377
  %v379 = vpop.f32.mrb[0].mxu0
  %380 = vdwg.mxu0
  %v382 = vlaneseq
  %v383 = vshrl.u32 %v382, 7
  %v384 = vsub.s32 0, %v383
  %v385 = vrot.slane %v241, %v384
  %v387 = vadd.f32 %v385, %v343
  %v388 = vadd.f32 %v385, %v348
  %v389 = vadd.f32 %v385, %v353
  %v390 = vadd.f32 %v385, %v358
  %v391 = vadd.f32 %v385, %v363
  %v392 = vadd.f32 %v385, %v368
  %v393 = vadd.f32 %v385, %v373
  %v394 = vadd.f32 %v385, %v378
  %395 = vst.msk [vmem:[#allocation3] sm:$0xff] %vm232, %v387
  %396 = vst.msk [vmem:[#allocation3 + $0x8] sm:$0xff] %vm232, %v388
  %397 = vst.msk [vmem:[#allocation3 + $0x10] sm:$0xff] %vm232, %v389
  %398 = vst.msk [vmem:[#allocation3 + $0x18] sm:$0xff] %vm232, %v390
  %399 = vst.msk [vmem:[#allocation3 + $0x20] sm:$0xff] %vm232, %v391
  %400 = vst.msk [vmem:[#allocation3 + $0x28] sm:$0xff] %vm232, %v392
  %401 = vst.msk [vmem:[#allocation3 + $0x30] sm:$0xff] %vm232, %v393
  %402 = vst.msk [vmem:[#allocation3 + $0x38] sm:$0xff] %vm232, %v394
  %v403 = vld [vmem:[%s6] sm:$0xff]
  %v404 = vld [vmem:[%s6 + $0x8] sm:$0xff]
  %v405 = vld [vmem:[%s6 + $0x10] sm:$0xff]
  %v406 = vld [vmem:[%s6 + $0x18] sm:$0xff]
  %v407 = vld [vmem:[%s7] sm:$0xff]
  %v408 = vld [vmem:[%s7 + $0x8] sm:$0xff]
  %v409 = vld [vmem:[%s7 + $0x10] sm:$0xff]
  %v410 = vld [vmem:[%s7 + $0x18] sm:$0xff]
  %v411 = vld [vmem:[%s8] sm:$0x1]
  %v413 = vlaneseq
  %v414 = vshrl.u32 %v413, 7
  %v415 = vsub.s32 0, %v414
  %v416 = vrot.slane %v411, %v415
  %s417 = scalar_lea.vmem %s8, 1
  %v418 = vld [vmem:[%s417] sm:$0x1]
  %v420 = vlaneseq
  %v421 = vshrl.u32 %v420, 7
  %v422 = vsub.s32 0, %v421
  %v423 = vrot.slane %v418, %v422
  %v424 = vld [vmem:[#allocation4] sm:$0xff]
  %v425 = vld [vmem:[#allocation5] sm:$0xff]
  %v426 = vld [vmem:[#allocation2] sm:$0xff]
  %vm427 = vcmask 261120
  %v429 = vsel %vm427, %v424, 0
  %431 = vmatprep.subr.mxu0 0.0
  %432 = vmatpush1.msra.mxu0 %v403
  %433 = vmatprep.subr.mxu0 0.0
  %434 = vmatpush1.msra.mxu0 %v404
  %435 = vmatprep.subr.mxu0 0.0
  %436 = vmatpush1.msra.mxu0 %v405
  %437 = vmatprep.subr.mxu0 0.0
  %438 = vmatpush1.msra.mxu0 %v406
  %439 = vmatprep.subr.mxu0 0.0
  %440 = vmatpush1.msra.mxu0 0.0
  %441 = vmatprep.subr.mxu0 0.0
  %442 = vmatpush1.msra.mxu0 0.0
  %443 = vmatprep.subr.mxu0 0.0
  %444 = vmatpush1.msra.mxu0 0.0
  %445 = vmatprep.subr.mxu0 0.0
  %446 = vmatpush1.msra.mxu0 0.0
  %447 = vmatprep.subr.mxu0 0.0
  %448 = vmatpush1.msra.mxu0 0.0
  %449 = vmatprep.subr.mxu0 0.0
  %450 = vmatpush1.msra.mxu0 0.0
  %451 = vmatprep.subr.mxu0 0.0
  %452 = vmatpush1.msra.mxu0 0.0
  %453 = vmatprep.subr.mxu0 0.0
  %454 = vmatpush1.msra.mxu0 0.0
  %455 = vmatprep.subr.mxu0 0.0
  %456 = vmatpush1.msra.mxu0 0.0
  %457 = vmatprep.subr.mxu0 0.0
  %458 = vmatpush1.msra.mxu0 0.0
  %459 = vmatprep.subr.mxu0 0.0
  %460 = vmatpush1.msra.mxu0 0.0
  %461 = vmatprep.subr.mxu0 0.0
  %462 = vmatpush1.msra.mxu0 0.0
  %463 = vmatprep.subr.mxu0 0.0
  %464 = vmatpush1.msra.mxu0 0.0
  %465 = vmatprep.subr.mxu0 0.0
  %466 = vmatpush1.msra.mxu0 0.0
  %467 = vmatprep.subr.mxu0 0.0
  %468 = vmatpush1.msra.mxu0 0.0
  %469 = vmatprep.subr.mxu0 0.0
  %470 = vmatpush1.msra.mxu0 0.0
  %471 = vmatprep.subr.mxu0 0.0
  %472 = vmatpush1.msra.mxu0 0.0
  %473 = vmatprep.subr.mxu0 0.0
  %474 = vmatpush1.msra.mxu0 0.0
  %475 = vmatprep.subr.mxu0 0.0
  %476 = vmatpush1.msra.mxu0 0.0
  %477 = vmatprep.subr.mxu0 0.0
  %478 = vmatpush1.msra.mxu0 0.0
  %479 = vmatprep.subr.mxu0 0.0
  %480 = vmatpush1.msra.mxu0 0.0
  %481 = vmatprep.subr.mxu0 0.0
  %482 = vmatpush1.msra.mxu0 0.0
  %483 = vmatprep.subr.mxu0 0.0
  %484 = vmatpush1.msra.mxu0 0.0
  %485 = vmatprep.subr.mxu0 0.0
  %486 = vmatpush1.msra.mxu0 0.0
  %487 = vmatprep.subr.mxu0 0.0
  %488 = vmatpush1.msra.mxu0 0.0
  %489 = vmatprep.subr.mxu0 0.0
  %490 = vmatpush1.msra.mxu0 0.0
  %491 = vmatprep.subr.mxu0 0.0
  %492 = vmatpush1.msra.mxu0 0.0
  %493 = vmatprep.subr.mxu0 0.0
  %494 = vmatpush1.msra.mxu0 0.0
  %495 = vmatprep.mubr.f32.mxu0 0.0
  %496 = vmatmul.mubr.f32.gmra.mrb[0].mxu0 %v429
  %v497 = vpop.f32.mrb[0].mxu0
  %v498 = vadd.f32 0.0, %v497
  %v499 = vpop.f32.mrb[0].mxu0
  %500 = vdwg.mxu0
  %v501 = vadd.f32 %v426, %v498
  %v502 = vxor.u32 %v501, 2147483648
  %v503 = vmul.f32 %v502, 1.442695
  %v504 = vpow.pop %v503
  %v505 = vadd.f32 %v504, 1.0
  %v506 = vrcp.pop %v505
  %v507 = vmul.f32 1.0, %v506
  %508 = vrot.lane.b32.xlu0 %v416, 64
  %v509 = vpop.permute.xlu0 %508
  %v511 = vadd.f32 %v498, %v509
  %513 = vrot.lane.b32.xlu0 %v511, 64
  %v514 = vpop.permute.xlu0 %513
  %v516 = vmul.f32 %v507, %v514
  %518 = vrot.lane.b32.xlu0 %v516, 64
  %v519 = vpop.permute.xlu0 %518
  %v521 = vadd.f32 %v426, %v519
  %v522 = vtanh.pop %v521
  %524 = vrot.lane.b32.xlu0 %v522, 64
  %v525 = vpop.permute.xlu0 %524
  %v527 = vsub.f32 %v424, %v525
  %529 = vrot.lane.b32.xlu0 %v527, 32
  %v530 = vpop.permute.xlu0 %529
  %v532 = vmul.f32 %v507, %v530
  %534 = vrot.lane.b32.xlu0 %v532, 32
  %v535 = vpop.permute.xlu0 %534
  %v537 = vadd.f32 %v522, %v535
  %s538 = scalar_lea.vmem [#allocation3], 56
  %v539 = vld [vmem:[%s538] sm:$0xff]
  %v541 = vsel %vm427, %v425, 0
  %543 = vmatprep.subr.mxu0 0.0
  %544 = vmatpush1.msra.mxu0 %v407
  %545 = vmatprep.subr.mxu0 0.0
  %546 = vmatpush1.msra.mxu0 %v408
  %547 = vmatprep.subr.mxu0 0.0
  %548 = vmatpush1.msra.mxu0 %v409
  %549 = vmatprep.subr.mxu0 0.0
  %550 = vmatpush1.msra.mxu0 %v410
  %551 = vmatprep.subr.mxu0 0.0
  %552 = vmatpush1.msra.mxu0 0.0
  %553 = vmatprep.subr.mxu0 0.0
  %554 = vmatpush1.msra.mxu0 0.0
  %555 = vmatprep.subr.mxu0 0.0
  %556 = vmatpush1.msra.mxu0 0.0
  %557 = vmatprep.subr.mxu0 0.0
  %558 = vmatpush1.msra.mxu0 0.0
  %559 = vmatprep.subr.mxu0 0.0
  %560 = vmatpush1.msra.mxu0 0.0
  %561 = vmatprep.subr.mxu0 0.0
  %562 = vmatpush1.msra.mxu0 0.0
  %563 = vmatprep.subr.mxu0 0.0
  %564 = vmatpush1.msra.mxu0 0.0
  %565 = vmatprep.subr.mxu0 0.0
  %566 = vmatpush1.msra.mxu0 0.0
  %567 = vmatprep.subr.mxu0 0.0
  %568 = vmatpush1.msra.mxu0 0.0
  %569 = vmatprep.subr.mxu0 0.0
  %570 = vmatpush1.msra.mxu0 0.0
  %571 = vmatprep.subr.mxu0 0.0
  %572 = vmatpush1.msra.mxu0 0.0
  %573 = vmatprep.subr.mxu0 0.0
  %574 = vmatpush1.msra.mxu0 0.0
  %575 = vmatprep.subr.mxu0 0.0
  %576 = vmatpush1.msra.mxu0 0.0
  %577 = vmatprep.subr.mxu0 0.0
  %578 = vmatpush1.msra.mxu0 0.0
  %579 = vmatprep.subr.mxu0 0.0
  %580 = vmatpush1.msra.mxu0 0.0
  %581 = vmatprep.subr.mxu0 0.0
  %582 = vmatpush1.msra.mxu0 0.0
  %583 = vmatprep.subr.mxu0 0.0
  %584 = vmatpush1.msra.mxu0 0.0
  %585 = vmatprep.subr.mxu0 0.0
  %586 = vmatpush1.msra.mxu0 0.0
  %587 = vmatprep.subr.mxu0 0.0
  %588 = vmatpush1.msra.mxu0 0.0
  %589 = vmatprep.subr.mxu0 0.0
  %590 = vmatpush1.msra.mxu0 0.0
  %591 = vmatprep.subr.mxu0 0.0
  %592 = vmatpush1.msra.mxu0 0.0
  %593 = vmatprep.subr.mxu0 0.0
  %594 = vmatpush1.msra.mxu0 0.0
  %595 = vmatprep.subr.mxu0 0.0
  %596 = vmatpush1.msra.mxu0 0.0
  %597 = vmatprep.subr.mxu0 0.0
  %598 = vmatpush1.msra.mxu0 0.0
  %599 = vmatprep.subr.mxu0 0.0
  %600 = vmatpush1.msra.mxu0 0.0
  %601 = vmatprep.subr.mxu0 0.0
  %602 = vmatpush1.msra.mxu0 0.0
  %603 = vmatprep.subr.mxu0 0.0
  %604 = vmatpush1.msra.mxu0 0.0
  %605 = vmatprep.subr.mxu0 0.0
  %606 = vmatpush1.msra.mxu0 0.0
  %607 = vmatprep.mubr.f32.mxu0 0.0
  %608 = vmatmul.mubr.f32.gmra.mrb[0].mxu0 %v541
  %v609 = vpop.f32.mrb[0].mxu0
  %v610 = vadd.f32 0.0, %v609
  %v611 = vpop.f32.mrb[0].mxu0
  %612 = vdwg.mxu0
  %v613 = vadd.f32 %v539, %v610
  %v614 = vxor.u32 %v613, 2147483648
  %v615 = vmul.f32 %v614, 1.442695
  %v616 = vpow.pop %v615
  %v617 = vadd.f32 %v616, 1.0
  %v618 = vrcp.pop %v617
  %v619 = vmul.f32 1.0, %v618
  %620 = vrot.lane.b32.xlu0 %v423, 64
  %v621 = vpop.permute.xlu0 %620
  %v623 = vadd.f32 %v610, %v621
  %625 = vrot.lane.b32.xlu0 %v623, 64
  %v626 = vpop.permute.xlu0 %625
  %v628 = vmul.f32 %v619, %v626
  %630 = vrot.lane.b32.xlu0 %v628, 64
  %v631 = vpop.permute.xlu0 %630
  %v633 = vadd.f32 %v539, %v631
  %v634 = vtanh.pop %v633
  %636 = vrot.lane.b32.xlu0 %v634, 64
  %v637 = vpop.permute.xlu0 %636
  %v639 = vsub.f32 %v425, %v637
  %641 = vrot.lane.b32.xlu0 %v639, 32
  %v642 = vpop.permute.xlu0 %641
  %v644 = vmul.f32 %v619, %v642
  %646 = vrot.lane.b32.xlu0 %v644, 32
  %v647 = vpop.permute.xlu0 %646
  %v649 = vadd.f32 %v634, %v647
  %651 = vrot.lane.b32.xlu0 %v537, 64
  %v652 = vpop.permute.xlu0 %651
  %654 = vst.msk [vmem:[%s9] sm:$0xff] %vm427, %v652
  %656 = vrot.lane.b32.xlu0 %v649, 64
  %v657 = vpop.permute.xlu0 %656
  %s659 = scalar_lea.vmem %s67, 56
  %660 = vst.msk [vmem:[%s659] sm:$0xff] %vm427, %v657
  %s661 = scalar_lea.vmem [#allocation2], 8
  %v662 = vld [vmem:[%s661] sm:$0xff]
  %v663 = vsel %vm427, %v652, 0
  %665 = vmatprep.subr.mxu0 0.0
  %666 = vmatpush1.msra.mxu0 %v403
  %667 = vmatprep.subr.mxu0 0.0
  %668 = vmatpush1.msra.mxu0 %v404
  %669 = vmatprep.subr.mxu0 0.0
  %670 = vmatpush1.msra.mxu0 %v405
  %671 = vmatprep.subr.mxu0 0.0
  %672 = vmatpush1.msra.mxu0 %v406
  %673 = vmatprep.subr.mxu0 0.0
  %674 = vmatpush1.msra.mxu0 0.0
  %675 = vmatprep.subr.mxu0 0.0
  %676 = vmatpush1.msra.mxu0 0.0
  %677 = vmatprep.subr.mxu0 0.0
  %678 = vmatpush1.msra.mxu0 0.0
  %679 = vmatprep.subr.mxu0 0.0
  %680 = vmatpush1.msra.mxu0 0.0
  %681 = vmatprep.subr.mxu0 0.0
  %682 = vmatpush1.msra.mxu0 0.0
  %683 = vmatprep.subr.mxu0 0.0
  %684 = vmatpush1.msra.mxu0 0.0
  %685 = vmatprep.subr.mxu0 0.0
  %686 = vmatpush1.msra.mxu0 0.0
  %687 = vmatprep.subr.mxu0 0.0
  %688 = vmatpush1.msra.mxu0 0.0
  %689 = vmatprep.subr.mxu0 0.0
  %690 = vmatpush1.msra.mxu0 0.0
  %691 = vmatprep.subr.mxu0 0.0
  %692 = vmatpush1.msra.mxu0 0.0
  %693 = vmatprep.subr.mxu0 0.0
  %694 = vmatpush1.msra.mxu0 0.0
  %695 = vmatprep.subr.mxu0 0.0
  %696 = vmatpush1.msra.mxu0 0.0
  %697 = vmatprep.subr.mxu0 0.0
  %698 = vmatpush1.msra.mxu0 0.0
  %699 = vmatprep.subr.mxu0 0.0
  %700 = vmatpush1.msra.mxu0 0.0
  %701 = vmatprep.subr.mxu0 0.0
  %702 = vmatpush1.msra.mxu0 0.0
  %703 = vmatprep.subr.mxu0 0.0
  %704 = vmatpush1.msra.mxu0 0.0
  %705 = vmatprep.subr.mxu0 0.0
  %706 = vmatpush1.msra.mxu0 0.0
  %707 = vmatprep.subr.mxu0 0.0
  %708 = vmatpush1.msra.mxu0 0.0
  %709 = vmatprep.subr.mxu0 0.0
  %710 = vmatpush1.msra.mxu0 0.0
  %711 = vmatprep.subr.mxu0 0.0
  %712 = vmatpush1.msra.mxu0 0.0
  %713 = vmatprep.subr.mxu0 0.0
  %714 = vmatpush1.msra.mxu0 0.0
  %715 = vmatprep.subr.mxu0 0.0
  %716 = vmatpush1.msra.mxu0 0.0
  %717 = vmatprep.subr.mxu0 0.0
  %718 = vmatpush1.msra.mxu0 0.0
  %719 = vmatprep.subr.mxu0 0.0
  %720 = vmatpush1.msra.mxu0 0.0
  %721 = vmatprep.subr.mxu0 0.0
  %722 = vmatpush1.msra.mxu0 0.0
  %723 = vmatprep.subr.mxu0 0.0
  %724 = vmatpush1.msra.mxu0 0.0
  %725 = vmatprep.subr.mxu0 0.0
  %726 = vmatpush1.msra.mxu0 0.0
  %727 = vmatprep.subr.mxu0 0.0
  %728 = vmatpush1.msra.mxu0 0.0
  %729 = vmatprep.mubr.f32.mxu0 0.0
  %730 = vmatmul.mubr.f32.gmra.mrb[0].mxu0 %v663
  %v731 = vpop.f32.mrb[0].mxu0
  %v732 = vadd.f32 0.0, %v731
  %v733 = vpop.f32.mrb[0].mxu0
  %734 = vdwg.mxu0
  %v735 = vadd.f32 %v662, %v732
  %v736 = vxor.u32 %v735, 2147483648
  %v737 = vmul.f32 %v736, 1.442695
  %v738 = vpow.pop %v737
  %v739 = vadd.f32 %v738, 1.0
  %v740 = vrcp.pop %v739
  %v741 = vmul.f32 1.0, %v740
  %v742 = vadd.f32 %v732, %v509
  %744 = vrot.lane.b32.xlu0 %v742, 64
  %v745 = vpop.permute.xlu0 %744
  %v747 = vmul.f32 %v741, %v745
  %749 = vrot.lane.b32.xlu0 %v747, 64
  %v750 = vpop.permute.xlu0 %749
  %v752 = vadd.f32 %v662, %v750
  %v753 = vtanh.pop %v752
  %v754 = vsub.f32 %v537, %v753
  %756 = vrot.lane.b32.xlu0 %v754, 96
  %v757 = vpop.permute.xlu0 %756
  %v759 = vmul.f32 %v741, %v757
  %761 = vrot.lane.b32.xlu0 %v759, 32
  %v762 = vpop.permute.xlu0 %761
  %v764 = vadd.f32 %v753, %v762
  %s765 = scalar_lea.vmem [#allocation3], 48
  %v766 = vld [vmem:[%s765] sm:$0xff]
  %v767 = vsel %vm427, %v657, 0
  %769 = vmatprep.subr.mxu0 0.0
  %770 = vmatpush1.msra.mxu0 %v407
  %771 = vmatprep.subr.mxu0 0.0
  %772 = vmatpush1.msra.mxu0 %v408
  %773 = vmatprep.subr.mxu0 0.0
  %774 = vmatpush1.msra.mxu0 %v409
  %775 = vmatprep.subr.mxu0 0.0
  %776 = vmatpush1.msra.mxu0 %v410
  %777 = vmatprep.subr.mxu0 0.0
  %778 = vmatpush1.msra.mxu0 0.0
  %779 = vmatprep.subr.mxu0 0.0
  %780 = vmatpush1.msra.mxu0 0.0
  %781 = vmatprep.subr.mxu0 0.0
  %782 = vmatpush1.msra.mxu0 0.0
  %783 = vmatprep.subr.mxu0 0.0
  %784 = vmatpush1.msra.mxu0 0.0
  %785 = vmatprep.subr.mxu0 0.0
  %786 = vmatpush1.msra.mxu0 0.0
  %787 = vmatprep.subr.mxu0 0.0
  %788 = vmatpush1.msra.mxu0 0.0
  %789 = vmatprep.subr.mxu0 0.0
  %790 = vmatpush1.msra.mxu0 0.0
  %791 = vmatprep.subr.mxu0 0.0
  %792 = vmatpush1.msra.mxu0 0.0
  %793 = vmatprep.subr.mxu0 0.0
  %794 = vmatpush1.msra.mxu0 0.0
  %795 = vmatprep.subr.mxu0 0.0
  %796 = vmatpush1.msra.mxu0 0.0
  %797 = vmatprep.subr.mxu0 0.0
  %798 = vmatpush1.msra.mxu0 0.0
  %799 = vmatprep.subr.mxu0 0.0
  %800 = vmatpush1.msra.mxu0 0.0
  %801 = vmatprep.subr.mxu0 0.0
  %802 = vmatpush1.msra.mxu0 0.0
  %803 = vmatprep.subr.mxu0 0.0
  %804 = vmatpush1.msra.mxu0 0.0
  %805 = vmatprep.subr.mxu0 0.0
  %806 = vmatpush1.msra.mxu0 0.0
  %807 = vmatprep.subr.mxu0 0.0
  %808 = vmatpush1.msra.mxu0 0.0
  %809 = vmatprep.subr.mxu0 0.0
  %810 = vmatpush1.msra.mxu0 0.0
  %811 = vmatprep.subr.mxu0 0.0
  %812 = vmatpush1.msra.mxu0 0.0
  %813 = vmatprep.subr.mxu0 0.0
  %814 = vmatpush1.msra.mxu0 0.0
  %815 = vmatprep.subr.mxu0 0.0
  %816 = vmatpush1.msra.mxu0 0.0
  %817 = vmatprep.subr.mxu0 0.0
  %818 = vmatpush1.msra.mxu0 0.0
  %819 = vmatprep.subr.mxu0 0.0
  %820 = vmatpush1.msra.mxu0 0.0
  %821 = vmatprep.subr.mxu0 0.0
  %822 = vmatpush1.msra.mxu0 0.0
  %823 = vmatprep.subr.mxu0 0.0
  %824 = vmatpush1.msra.mxu0 0.0
  %825 = vmatprep.subr.mxu0 0.0
  %826 = vmatpush1.msra.mxu0 0.0
  %827 = vmatprep.subr.mxu0 0.0
  %828 = vmatpush1.msra.mxu0 0.0
  %829 = vmatprep.subr.mxu0 0.0
  %830 = vmatpush1.msra.mxu0 0.0
  %831 = vmatprep.subr.mxu0 0.0
  %832 = vmatpush1.msra.mxu0 0.0
  %833 = vmatprep.mubr.f32.mxu0 0.0
  %834 = vmatmul.mubr.f32.gmra.mrb[0].mxu0 %v767
  %v835 = vpop.f32.mrb[0].mxu0
  %v836 = vadd.f32 0.0, %v835
  %v837 = vpop.f32.mrb[0].mxu0
  %838 = vdwg.mxu0
  %v839 = vadd.f32 %v766, %v836
  %v840 = vxor.u32 %v839, 2147483648
  %v841 = vmul.f32 %v840, 1.442695
  %v842 = vpow.pop %v841
  %v843 = vadd.f32 %v842, 1.0
  %v844 = vrcp.pop %v843
  %v845 = vmul.f32 1.0, %v844
  %v846 = vadd.f32 %v836, %v621
  %848 = vrot.lane.b32.xlu0 %v846, 64
  %v849 = vpop.permute.xlu0 %848
  %v851 = vmul.f32 %v845, %v849
  %853 = vrot.lane.b32.xlu0 %v851, 64
  %v854 = vpop.permute.xlu0 %853
  %v856 = vadd.f32 %v766, %v854
  %v857 = vtanh.pop %v856
  %v858 = vsub.f32 %v649, %v857
  %860 = vrot.lane.b32.xlu0 %v858, 96
  %v861 = vpop.permute.xlu0 %860
  %v863 = vmul.f32 %v845, %v861
  %865 = vrot.lane.b32.xlu0 %v863, 32
  %v866 = vpop.permute.xlu0 %865
  %v868 = vadd.f32 %v857, %v866
  %870 = vrot.lane.b32.xlu0 %v764, 64
  %v871 = vpop.permute.xlu0 %870
  %s873 = scalar_lea.vmem %s9, 8
  %874 = vst.msk [vmem:[%s873] sm:$0xff] %vm427, %v871
  %876 = vrot.lane.b32.xlu0 %v868, 64
  %v877 = vpop.permute.xlu0 %876
  %s879 = scalar_lea.vmem %s67, 48
  %880 = vst.msk [vmem:[%s879] sm:$0xff] %vm427, %v877
  %s881 = scalar_lea.vmem [#allocation2], 16
  %v882 = vld [vmem:[%s881] sm:$0xff]
  %v883 = vsel %vm427, %v871, 0
  %885 = vmatprep.subr.mxu0 0.0
  %886 = vmatpush1.msra.mxu0 %v403
  %887 = vmatprep.subr.mxu0 0.0
  %888 = vmatpush1.msra.mxu0 %v404
  %889 = vmatprep.subr.mxu0 0.0
  %890 = vmatpush1.msra.mxu0 %v405
  %891 = vmatprep.subr.mxu0 0.0
  %892 = vmatpush1.msra.mxu0 %v406
  %893 = vmatprep.subr.mxu0 0.0
  %894 = vmatpush1.msra.mxu0 0.0
  %895 = vmatprep.subr.mxu0 0.0
  %896 = vmatpush1.msra.mxu0 0.0
  %897 = vmatprep.subr.mxu0 0.0
  %898 = vmatpush1.msra.mxu0 0.0
  %899 = vmatprep.subr.mxu0 0.0
  %900 = vmatpush1.msra.mxu0 0.0
  %901 = vmatprep.subr.mxu0 0.0
  %902 = vmatpush1.msra.mxu0 0.0
  %903 = vmatprep.subr.mxu0 0.0
  %904 = vmatpush1.msra.mxu0 0.0
  %905 = vmatprep.subr.mxu0 0.0
  %906 = vmatpush1.msra.mxu0 0.0
  %907 = vmatprep.subr.mxu0 0.0
  %908 = vmatpush1.msra.mxu0 0.0
  %909 = vmatprep.subr.mxu0 0.0
  %910 = vmatpush1.msra.mxu0 0.0
  %911 = vmatprep.subr.mxu0 0.0
  %912 = vmatpush1.msra.mxu0 0.0
  %913 = vmatprep.subr.mxu0 0.0
  %914 = vmatpush1.msra.mxu0 0.0
  %915 = vmatprep.subr.mxu0 0.0
  %916 = vmatpush1.msra.mxu0 0.0
  %917 = vmatprep.subr.mxu0 0.0
  %918 = vmatpush1.msra.mxu0 0.0
  %919 = vmatprep.subr.mxu0 0.0
  %920 = vmatpush1.msra.mxu0 0.0
  %921 = vmatprep.subr.mxu0 0.0
  %922 = vmatpush1.msra.mxu0 0.0
  %923 = vmatprep.subr.mxu0 0.0
  %924 = vmatpush1.msra.mxu0 0.0
  %925 = vmatprep.subr.mxu0 0.0
  %926 = vmatpush1.msra.mxu0 0.0
  %927 = vmatprep.subr.mxu0 0.0
  %928 = vmatpush1.msra.mxu0 0.0
  %929 = vmatprep.subr.mxu0 0.0
  %930 = vmatpush1.msra.mxu0 0.0
  %931 = vmatprep.subr.mxu0 0.0
  %932 = vmatpush1.msra.mxu0 0.0
  %933 = vmatprep.subr.mxu0 0.0
  %934 = vmatpush1.msra.mxu0 0.0
  %935 = vmatprep.subr.mxu0 0.0
  %936 = vmatpush1.msra.mxu0 0.0
  %937 = vmatprep.subr.mxu0 0.0
  %938 = vmatpush1.msra.mxu0 0.0
  %939 = vmatprep.subr.mxu0 0.0
  %940 = vmatpush1.msra.mxu0 0.0
  %941 = vmatprep.subr.mxu0 0.0
  %942 = vmatpush1.msra.mxu0 0.0
  %943 = vmatprep.subr.mxu0 0.0
  %944 = vmatpush1.msra.mxu0 0.0
  %945 = vmatprep.subr.mxu0 0.0
  %946 = vmatpush1.msra.mxu0 0.0
  %947 = vmatprep.subr.mxu0 0.0
  %948 = vmatpush1.msra.mxu0 0.0
  %949 = vmatprep.mubr.f32.mxu0 0.0
  %950 = vmatmul.mubr.f32.gmra.mrb[0].mxu0 %v883
  %v951 = vpop.f32.mrb[0].mxu0
  %v952 = vadd.f32 0.0, %v951
  %v953 = vpop.f32.mrb[0].mxu0
  %954 = vdwg.mxu0
  %v955 = vadd.f32 %v882, %v952
  %v956 = vxor.u32 %v955, 2147483648
  %v957 = vmul.f32 %v956, 1.442695
  %v958 = vpow.pop %v957
  %v959 = vadd.f32 %v958, 1.0
  %v960 = vrcp.pop %v959
  %v961 = vmul.f32 1.0, %v960
  %v962 = vadd.f32 %v952, %v509
  %964 = vrot.lane.b32.xlu0 %v962, 64
  %v965 = vpop.permute.xlu0 %964
  %v967 = vmul.f32 %v961, %v965
  %969 = vrot.lane.b32.xlu0 %v967, 64
  %v970 = vpop.permute.xlu0 %969
  %v972 = vadd.f32 %v882, %v970
  %v973 = vtanh.pop %v972
  %v974 = vsub.f32 %v764, %v973
  %976 = vrot.lane.b32.xlu0 %v974, 96
  %v977 = vpop.permute.xlu0 %976
  %v979 = vmul.f32 %v961, %v977
  %981 = vrot.lane.b32.xlu0 %v979, 32
  %v982 = vpop.permute.xlu0 %981
  %v984 = vadd.f32 %v973, %v982
  %s985 = scalar_lea.vmem [#allocation3], 40
  %v986 = vld [vmem:[%s985] sm:$0xff]
  %v987 = vsel %vm427, %v877, 0
  %989 = vmatprep.subr.mxu0 0.0
  %990 = vmatpush1.msra.mxu0 %v407
  %991 = vmatprep.subr.mxu0 0.0
  %992 = vmatpush1.msra.mxu0 %v408
  %993 = vmatprep.subr.mxu0 0.0
  %994 = vmatpush1.msra.mxu0 %v409
  %995 = vmatprep.subr.mxu0 0.0
  %996 = vmatpush1.msra.mxu0 %v410
  %997 = vmatprep.subr.mxu0 0.0
  %998 = vmatpush1.msra.mxu0 0.0
  %999 = vmatprep.subr.mxu0 0.0
  %1000 = vmatpush1.msra.mxu0 0.0
  %1001 = vmatprep.subr.mxu0 0.0
  %1002 = vmatpush1.msra.mxu0 0.0
  %1003 = vmatprep.subr.mxu0 0.0
  %1004 = vmatpush1.msra.mxu0 0.0
  %1005 = vmatprep.subr.mxu0 0.0
  %1006 = vmatpush1.msra.mxu0 0.0
  %1007 = vmatprep.subr.mxu0 0.0
  %1008 = vmatpush1.msra.mxu0 0.0
  %1009 = vmatprep.subr.mxu0 0.0
  %1010 = vmatpush1.msra.mxu0 0.0
  %1011 = vmatprep.subr.mxu0 0.0
  %1012 = vmatpush1.msra.mxu0 0.0
  %1013 = vmatprep.subr.mxu0 0.0
  %1014 = vmatpush1.msra.mxu0 0.0
  %1015 = vmatprep.subr.mxu0 0.0
  %1016 = vmatpush1.msra.mxu0 0.0
  %1017 = vmatprep.subr.mxu0 0.0
  %1018 = vmatpush1.msra.mxu0 0.0
  %1019 = vmatprep.subr.mxu0 0.0
  %1020 = vmatpush1.msra.mxu0 0.0
  %1021 = vmatprep.subr.mxu0 0.0
  %1022 = vmatpush1.msra.mxu0 0.0
  %1023 = vmatprep.subr.mxu0 0.0
  %1024 = vmatpush1.msra.mxu0 0.0
  %1025 = vmatprep.subr.mxu0 0.0
  %1026 = vmatpush1.msra.mxu0 0.0
  %1027 = vmatprep.subr.mxu0 0.0
  %1028 = vmatpush1.msra.mxu0 0.0
  %1029 = vmatprep.subr.mxu0 0.0
  %1030 = vmatpush1.msra.mxu0 0.0
  %1031 = vmatprep.subr.mxu0 0.0
  %1032 = vmatpush1.msra.mxu0 0.0
  %1033 = vmatprep.subr.mxu0 0.0
  %1034 = vmatpush1.msra.mxu0 0.0
  %1035 = vmatprep.subr.mxu0 0.0
  %1036 = vmatpush1.msra.mxu0 0.0
  %1037 = vmatprep.subr.mxu0 0.0
  %1038 = vmatpush1.msra.mxu0 0.0
  %1039 = vmatprep.subr.mxu0 0.0
  %1040 = vmatpush1.msra.mxu0 0.0
  %1041 = vmatprep.subr.mxu0 0.0
  %1042 = vmatpush1.msra.mxu0 0.0
  %1043 = vmatprep.subr.mxu0 0.0
  %1044 = vmatpush1.msra.mxu0 0.0
  %1045 = vmatprep.subr.mxu0 0.0
  %1046 = vmatpush1.msra.mxu0 0.0
  %1047 = vmatprep.subr.mxu0 0.0
  %1048 = vmatpush1.msra.mxu0 0.0
  %1049 = vmatprep.subr.mxu0 0.0
  %1050 = vmatpush1.msra.mxu0 0.0
  %1051 = vmatprep.subr.mxu0 0.0
  %1052 = vmatpush1.msra.mxu0 0.0
  %1053 = vmatprep.mubr.f32.mxu0 0.0
  %1054 = vmatmul.mubr.f32.gmra.mrb[0].mxu0 %v987
  %v1055 = vpop.f32.mrb[0].mxu0
  %v1056 = vadd.f32 0.0, %v1055
  %v1057 = vpop.f32.mrb[0].mxu0
  %1058 = vdwg.mxu0
  %v1059 = vadd.f32 %v986, %v1056
  %v1060 = vxor.u32 %v1059, 2147483648
  %v1061 = vmul.f32 %v1060, 1.442695
  %v1062 = vpow.pop %v1061
  %v1063 = vadd.f32 %v1062, 1.0
  %v1064 = vrcp.pop %v1063
  %v1065 = vmul.f32 1.0, %v1064
  %v1066 = vadd.f32 %v1056, %v621
  %1068 = vrot.lane.b32.xlu0 %v1066, 64
  %v1069 = vpop.permute.xlu0 %1068
  %v1071 = vmul.f32 %v1065, %v1069
  %1073 = vrot.lane.b32.xlu0 %v1071, 64
  %v1074 = vpop.permute.xlu0 %1073
  %v1076 = vadd.f32 %v986, %v1074
  %v1077 = vtanh.pop %v1076
  %v1078 = vsub.f32 %v868, %v1077
  %1080 = vrot.lane.b32.xlu0 %v1078, 96
  %v1081 = vpop.permute.xlu0 %1080
  %v1083 = vmul.f32 %v1065, %v1081
  %1085 = vrot.lane.b32.xlu0 %v1083, 32
  %v1086 = vpop.permute.xlu0 %1085
  %v1088 = vadd.f32 %v1077, %v1086
  %1090 = vrot.lane.b32.xlu0 %v984, 64
  %v1091 = vpop.permute.xlu0 %1090
  %s1093 = scalar_lea.vmem %s9, 16
  %1094 = vst.msk [vmem:[%s1093] sm:$0xff] %vm427, %v1091
  %1096 = vrot.lane.b32.xlu0 %v1088, 64
  %v1097 = vpop.permute.xlu0 %1096
  %s1099 = scalar_lea.vmem %s67, 40
  %1100 = vst.msk [vmem:[%s1099] sm:$0xff] %vm427, %v1097
  %s1101 = scalar_lea.vmem [#allocation2], 24
  %v1102 = vld [vmem:[%s1101] sm:$0xff]
  %v1103 = vsel %vm427, %v1091, 0
  %1105 = vmatprep.subr.mxu0 0.0
  %1106 = vmatpush1.msra.mxu0 %v403
  %1107 = vmatprep.subr.mxu0 0.0
  %1108 = vmatpush1.msra.mxu0 %v404
  %1109 = vmatprep.subr.mxu0 0.0
  %1110 = vmatpush1.msra.mxu0 %v405
  %1111 = vmatprep.subr.mxu0 0.0
  %1112 = vmatpush1.msra.mxu0 %v406
  %1113 = vmatprep.subr.mxu0 0.0
  %1114 = vmatpush1.msra.mxu0 0.0
  %1115 = vmatprep.subr.mxu0 0.0
  %1116 = vmatpush1.msra.mxu0 0.0
  %1117 = vmatprep.subr.mxu0 0.0
  %1118 = vmatpush1.msra.mxu0 0.0
  %1119 = vmatprep.subr.mxu0 0.0
  %1120 = vmatpush1.msra.mxu0 0.0
  %1121 = vmatprep.subr.mxu0 0.0
  %1122 = vmatpush1.msra.mxu0 0.0
  %1123 = vmatprep.subr.mxu0 0.0
  %1124 = vmatpush1.msra.mxu0 0.0
  %1125 = vmatprep.subr.mxu0 0.0
  %1126 = vmatpush1.msra.mxu0 0.0
  %1127 = vmatprep.subr.mxu0 0.0
  %1128 = vmatpush1.msra.mxu0 0.0
  %1129 = vmatprep.subr.mxu0 0.0
  %1130 = vmatpush1.msra.mxu0 0.0
  %1131 = vmatprep.subr.mxu0 0.0
  %1132 = vmatpush1.msra.mxu0 0.0
  %1133 = vmatprep.subr.mxu0 0.0
  %1134 = vmatpush1.msra.mxu0 0.0
  %1135 = vmatprep.subr.mxu0 0.0
  %1136 = vmatpush1.msra.mxu0 0.0
  %1137 = vmatprep.subr.mxu0 0.0
  %1138 = vmatpush1.msra.mxu0 0.0
  %1139 = vmatprep.subr.mxu0 0.0
  %1140 = vmatpush1.msra.mxu0 0.0
  %1141 = vmatprep.subr.mxu0 0.0
  %1142 = vmatpush1.msra.mxu0 0.0
  %1143 = vmatprep.subr.mxu0 0.0
  %1144 = vmatpush1.msra.mxu0 0.0
  %1145 = vmatprep.subr.mxu0 0.0
  %1146 = vmatpush1.msra.mxu0 0.0
  %1147 = vmatprep.subr.mxu0 0.0
  %1148 = vmatpush1.msra.mxu0 0.0
  %1149 = vmatprep.subr.mxu0 0.0
  %1150 = vmatpush1.msra.mxu0 0.0
  %1151 = vmatprep.subr.mxu0 0.0
  %1152 = vmatpush1.msra.mxu0 0.0
  %1153 = vmatprep.subr.mxu0 0.0
  %1154 = vmatpush1.msra.mxu0 0.0
  %1155 = vmatprep.subr.mxu0 0.0
  %1156 = vmatpush1.msra.mxu0 0.0
  %1157 = vmatprep.subr.mxu0 0.0
  %1158 = vmatpush1.msra.mxu0 0.0
  %1159 = vmatprep.subr.mxu0 0.0
  %1160 = vmatpush1.msra.mxu0 0.0
  %1161 = vmatprep.subr.mxu0 0.0
  %1162 = vmatpush1.msra.mxu0 0.0
  %1163 = vmatprep.subr.mxu0 0.0
  %1164 = vmatpush1.msra.mxu0 0.0
  %1165 = vmatprep.subr.mxu0 0.0
  %1166 = vmatpush1.msra.mxu0 0.0
  %1167 = vmatprep.subr.mxu0 0.0
  %1168 = vmatpush1.msra.mxu0 0.0
  %1169 = vmatprep.mubr.f32.mxu0 0.0
  %1170 = vmatmul.mubr.f32.gmra.mrb[0].mxu0 %v1103
  %v1171 = vpop.f32.mrb[0].mxu0
  %v1172 = vadd.f32 0.0, %v1171
  %v1173 = vpop.f32.mrb[0].mxu0
  %1174 = vdwg.mxu0
  %v1175 = vadd.f32 %v1102, %v1172
  %v1176 = vxor.u32 %v1175, 2147483648
  %v1177 = vmul.f32 %v1176, 1.442695
  %v1178 = vpow.pop %v1177
  %v1179 = vadd.f32 %v1178, 1.0
  %v1180 = vrcp.pop %v1179
  %v1181 = vmul.f32 1.0, %v1180
  %v1182 = vadd.f32 %v1172, %v509
  %1184 = vrot.lane.b32.xlu0 %v1182, 64
  %v1185 = vpop.permute.xlu0 %1184
  %v1187 = vmul.f32 %v1181, %v1185
  %1189 = vrot.lane.b32.xlu0 %v1187, 64
  %v1190 = vpop.permute.xlu0 %1189
  %v1192 = vadd.f32 %v1102, %v1190
  %v1193 = vtanh.pop %v1192
  %v1194 = vsub.f32 %v984, %v1193
  %1196 = vrot.lane.b32.xlu0 %v1194, 96
  %v1197 = vpop.permute.xlu0 %1196
  %v1199 = vmul.f32 %v1181, %v1197
  %1201 = vrot.lane.b32.xlu0 %v1199, 32
  %v1202 = vpop.permute.xlu0 %1201
  %v1204 = vadd.f32 %v1193, %v1202
  %s1205 = scalar_lea.vmem [#allocation3], 32
  %v1206 = vld [vmem:[%s1205] sm:$0xff]
  %v1207 = vsel %vm427, %v1097, 0
  %1209 = vmatprep.subr.mxu0 0.0
  %1210 = vmatpush1.msra.mxu0 %v407
  %1211 = vmatprep.subr.mxu0 0.0
  %1212 = vmatpush1.msra.mxu0 %v408
  %1213 = vmatprep.subr.mxu0 0.0
  %1214 = vmatpush1.msra.mxu0 %v409
  %1215 = vmatprep.subr.mxu0 0.0
  %1216 = vmatpush1.msra.mxu0 %v410
  %1217 = vmatprep.subr.mxu0 0.0
  %1218 = vmatpush1.msra.mxu0 0.0
  %1219 = vmatprep.subr.mxu0 0.0
  %1220 = vmatpush1.msra.mxu0 0.0
  %1221 = vmatprep.subr.mxu0 0.0
  %1222 = vmatpush1.msra.mxu0 0.0
  %1223 = vmatprep.subr.mxu0 0.0
  %1224 = vmatpush1.msra.mxu0 0.0
  %1225 = vmatprep.subr.mxu0 0.0
  %1226 = vmatpush1.msra.mxu0 0.0
  %1227 = vmatprep.subr.mxu0 0.0
  %1228 = vmatpush1.msra.mxu0 0.0
  %1229 = vmatprep.subr.mxu0 0.0
  %1230 = vmatpush1.msra.mxu0 0.0
  %1231 = vmatprep.subr.mxu0 0.0
  %1232 = vmatpush1.msra.mxu0 0.0
  %1233 = vmatprep.subr.mxu0 0.0
  %1234 = vmatpush1.msra.mxu0 0.0
  %1235 = vmatprep.subr.mxu0 0.0
  %1236 = vmatpush1.msra.mxu0 0.0
  %1237 = vmatprep.subr.mxu0 0.0
  %1238 = vmatpush1.msra.mxu0 0.0
  %1239 = vmatprep.subr.mxu0 0.0
  %1240 = vmatpush1.msra.mxu0 0.0
  %1241 = vmatprep.subr.mxu0 0.0
  %1242 = vmatpush1.msra.mxu0 0.0
  %1243 = vmatprep.subr.mxu0 0.0
  %1244 = vmatpush1.msra.mxu0 0.0
  %1245 = vmatprep.subr.mxu0 0.0
  %1246 = vmatpush1.msra.mxu0 0.0
  %1247 = vmatprep.subr.mxu0 0.0
  %1248 = vmatpush1.msra.mxu0 0.0
  %1249 = vmatprep.subr.mxu0 0.0
  %1250 = vmatpush1.msra.mxu0 0.0
  %1251 = vmatprep.subr.mxu0 0.0
  %1252 = vmatpush1.msra.mxu0 0.0
  %1253 = vmatprep.subr.mxu0 0.0
  %1254 = vmatpush1.msra.mxu0 0.0
  %1255 = vmatprep.subr.mxu0 0.0
  %1256 = vmatpush1.msra.mxu0 0.0
  %1257 = vmatprep.subr.mxu0 0.0
  %1258 = vmatpush1.msra.mxu0 0.0
  %1259 = vmatprep.subr.mxu0 0.0
  %1260 = vmatpush1.msra.mxu0 0.0
  %1261 = vmatprep.subr.mxu0 0.0
  %1262 = vmatpush1.msra.mxu0 0.0
  %1263 = vmatprep.subr.mxu0 0.0
  %1264 = vmatpush1.msra.mxu0 0.0
  %1265 = vmatprep.subr.mxu0 0.0
  %1266 = vmatpush1.msra.mxu0 0.0
  %1267 = vmatprep.subr.mxu0 0.0
  %1268 = vmatpush1.msra.mxu0 0.0
  %1269 = vmatprep.subr.mxu0 0.0
  %1270 = vmatpush1.msra.mxu0 0.0
  %1271 = vmatprep.subr.mxu0 0.0
  %1272 = vmatpush1.msra.mxu0 0.0
  %1273 = vmatprep.mubr.f32.mxu0 0.0
  %1274 = vmatmul.mubr.f32.gmra.mrb[0].mxu0 %v1207
  %v1275 = vpop.f32.mrb[0].mxu0
  %v1276 = vadd.f32 0.0, %v1275
  %v1277 = vpop.f32.mrb[0].mxu0
  %1278 = vdwg.mxu0
  %v1279 = vadd.f32 %v1206, %v1276
  %v1280 = vxor.u32 %v1279, 2147483648
  %v1281 = vmul.f32 %v1280, 1.442695
  %v1282 = vpow.pop %v1281
  %v1283 = vadd.f32 %v1282, 1.0
  %v1284 = vrcp.pop %v1283
  %v1285 = vmul.f32 1.0, %v1284
  %v1286 = vadd.f32 %v1276, %v621
  %1288 = vrot.lane.b32.xlu0 %v1286, 64
  %v1289 = vpop.permute.xlu0 %1288
  %v1291 = vmul.f32 %v1285, %v1289
  %1293 = vrot.lane.b32.xlu0 %v1291, 64
  %v1294 = vpop.permute.xlu0 %1293
  %v1296 = vadd.f32 %v1206, %v1294
  %v1297 = vtanh.pop %v1296
  %v1298 = vsub.f32 %v1088, %v1297
  %1300 = vrot.lane.b32.xlu0 %v1298, 96
  %v1301 = vpop.permute.xlu0 %1300
  %v1303 = vmul.f32 %v1285, %v1301
  %1305 = vrot.lane.b32.xlu0 %v1303, 32
  %v1306 = vpop.permute.xlu0 %1305
  %v1308 = vadd.f32 %v1297, %v1306
  %1310 = vrot.lane.b32.xlu0 %v1204, 64
  %v1311 = vpop.permute.xlu0 %1310
  %s1313 = scalar_lea.vmem %s9, 24
  %1314 = vst.msk [vmem:[%s1313] sm:$0xff] %vm427, %v1311
  %1316 = vrot.lane.b32.xlu0 %v1308, 64
  %v1317 = vpop.permute.xlu0 %1316
  %s1319 = scalar_lea.vmem %s67, 32
  %1320 = vst.msk [vmem:[%s1319] sm:$0xff] %vm427, %v1317
  %s1321 = scalar_lea.vmem [#allocation2], 32
  %v1322 = vld [vmem:[%s1321] sm:$0xff]
  %v1323 = vsel %vm427, %v1311, 0
  %1325 = vmatprep.subr.mxu0 0.0
  %1326 = vmatpush1.msra.mxu0 %v403
  %1327 = vmatprep.subr.mxu0 0.0
  %1328 = vmatpush1.msra.mxu0 %v404
  %1329 = vmatprep.subr.mxu0 0.0
  %1330 = vmatpush1.msra.mxu0 %v405
  %1331 = vmatprep.subr.mxu0 0.0
  %1332 = vmatpush1.msra.mxu0 %v406
  %1333 = vmatprep.subr.mxu0 0.0
  %1334 = vmatpush1.msra.mxu0 0.0
  %1335 = vmatprep.subr.mxu0 0.0
  %1336 = vmatpush1.msra.mxu0 0.0
  %1337 = vmatprep.subr.mxu0 0.0
  %1338 = vmatpush1.msra.mxu0 0.0
  %1339 = vmatprep.subr.mxu0 0.0
  %1340 = vmatpush1.msra.mxu0 0.0
  %1341 = vmatprep.subr.mxu0 0.0
  %1342 = vmatpush1.msra.mxu0 0.0
  %1343 = vmatprep.subr.mxu0 0.0
  %1344 = vmatpush1.msra.mxu0 0.0
  %1345 = vmatprep.subr.mxu0 0.0
  %1346 = vmatpush1.msra.mxu0 0.0
  %1347 = vmatprep.subr.mxu0 0.0
  %1348 = vmatpush1.msra.mxu0 0.0
  %1349 = vmatprep.subr.mxu0 0.0
  %1350 = vmatpush1.msra.mxu0 0.0
  %1351 = vmatprep.subr.mxu0 0.0
  %1352 = vmatpush1.msra.mxu0 0.0
  %1353 = vmatprep.subr.mxu0 0.0
  %1354 = vmatpush1.msra.mxu0 0.0
  %1355 = vmatprep.subr.mxu0 0.0
  %1356 = vmatpush1.msra.mxu0 0.0
  %1357 = vmatprep.subr.mxu0 0.0
  %1358 = vmatpush1.msra.mxu0 0.0
  %1359 = vmatprep.subr.mxu0 0.0
  %1360 = vmatpush1.msra.mxu0 0.0
  %1361 = vmatprep.subr.mxu0 0.0
  %1362 = vmatpush1.msra.mxu0 0.0
  %1363 = vmatprep.subr.mxu0 0.0
  %1364 = vmatpush1.msra.mxu0 0.0
  %1365 = vmatprep.subr.mxu0 0.0
  %1366 = vmatpush1.msra.mxu0 0.0
  %1367 = vmatprep.subr.mxu0 0.0
  %1368 = vmatpush1.msra.mxu0 0.0
  %1369 = vmatprep.subr.mxu0 0.0
  %1370 = vmatpush1.msra.mxu0 0.0
  %1371 = vmatprep.subr.mxu0 0.0
  %1372 = vmatpush1.msra.mxu0 0.0
  %1373 = vmatprep.subr.mxu0 0.0
  %1374 = vmatpush1.msra.mxu0 0.0
  %1375 = vmatprep.subr.mxu0 0.0
  %1376 = vmatpush1.msra.mxu0 0.0
  %1377 = vmatprep.subr.mxu0 0.0
  %1378 = vmatpush1.msra.mxu0 0.0
  %1379 = vmatprep.subr.mxu0 0.0
  %1380 = vmatpush1.msra.mxu0 0.0
  %1381 = vmatprep.subr.mxu0 0.0
  %1382 = vmatpush1.msra.mxu0 0.0
  %1383 = vmatprep.subr.mxu0 0.0
  %1384 = vmatpush1.msra.mxu0 0.0
  %1385 = vmatprep.subr.mxu0 0.0
  %1386 = vmatpush1.msra.mxu0 0.0
  %1387 = vmatprep.subr.mxu0 0.0
  %1388 = vmatpush1.msra.mxu0 0.0
  %1389 = vmatprep.mubr.f32.mxu0 0.0
  %1390 = vmatmul.mubr.f32.gmra.mrb[0].mxu0 %v1323
  %v1391 = vpop.f32.mrb[0].mxu0
  %v1392 = vadd.f32 0.0, %v1391
  %v1393 = vpop.f32.mrb[0].mxu0
  %1394 = vdwg.mxu0
  %v1395 = vadd.f32 %v1322, %v1392
  %v1396 = vxor.u32 %v1395, 2147483648
  %v1397 = vmul.f32 %v1396, 1.442695
  %v1398 = vpow.pop %v1397
  %v1399 = vadd.f32 %v1398, 1.0
  %v1400 = vrcp.pop %v1399
  %v1401 = vmul.f32 1.0, %v1400
  %v1402 = vadd.f32 %v1392, %v509
  %1404 = vrot.lane.b32.xlu0 %v1402, 64
  %v1405 = vpop.permute.xlu0 %1404
  %v1407 = vmul.f32 %v1401, %v1405
  %1409 = vrot.lane.b32.xlu0 %v1407, 64
  %v1410 = vpop.permute.xlu0 %1409
  %v1412 = vadd.f32 %v1322, %v1410
  %v1413 = vtanh.pop %v1412
  %v1414 = vsub.f32 %v1204, %v1413
  %1416 = vrot.lane.b32.xlu0 %v1414, 96
  %v1417 = vpop.permute.xlu0 %1416
  %v1419 = vmul.f32 %v1401, %v1417
  %1421 = vrot.lane.b32.xlu0 %v1419, 32
  %v1422 = vpop.permute.xlu0 %1421
  %v1424 = vadd.f32 %v1413, %v1422
  %s1425 = scalar_lea.vmem [#allocation3], 24
  %v1426 = vld [vmem:[%s1425] sm:$0xff]
  %v1427 = vsel %vm427, %v1317, 0
  %1429 = vmatprep.subr.mxu0 0.0
  %1430 = vmatpush1.msra.mxu0 %v407
  %1431 = vmatprep.subr.mxu0 0.0
  %1432 = vmatpush1.msra.mxu0 %v408
  %1433 = vmatprep.subr.mxu0 0.0
  %1434 = vmatpush1.msra.mxu0 %v409
  %1435 = vmatprep.subr.mxu0 0.0
  %1436 = vmatpush1.msra.mxu0 %v410
  %1437 = vmatprep.subr.mxu0 0.0
  %1438 = vmatpush1.msra.mxu0 0.0
  %1439 = vmatprep.subr.mxu0 0.0
  %1440 = vmatpush1.msra.mxu0 0.0
  %1441 = vmatprep.subr.mxu0 0.0
  %1442 = vmatpush1.msra.mxu0 0.0
  %1443 = vmatprep.subr.mxu0 0.0
  %1444 = vmatpush1.msra.mxu0 0.0
  %1445 = vmatprep.subr.mxu0 0.0
  %1446 = vmatpush1.msra.mxu0 0.0
  %1447 = vmatprep.subr.mxu0 0.0
  %1448 = vmatpush1.msra.mxu0 0.0
  %1449 = vmatprep.subr.mxu0 0.0
  %1450 = vmatpush1.msra.mxu0 0.0
  %1451 = vmatprep.subr.mxu0 0.0
  %1452 = vmatpush1.msra.mxu0 0.0
  %1453 = vmatprep.subr.mxu0 0.0
  %1454 = vmatpush1.msra.mxu0 0.0
  %1455 = vmatprep.subr.mxu0 0.0
  %1456 = vmatpush1.msra.mxu0 0.0
  %1457 = vmatprep.subr.mxu0 0.0
  %1458 = vmatpush1.msra.mxu0 0.0
  %1459 = vmatprep.subr.mxu0 0.0
  %1460 = vmatpush1.msra.mxu0 0.0
  %1461 = vmatprep.subr.mxu0 0.0
  %1462 = vmatpush1.msra.mxu0 0.0
  %1463 = vmatprep.subr.mxu0 0.0
  %1464 = vmatpush1.msra.mxu0 0.0
  %1465 = vmatprep.subr.mxu0 0.0
  %1466 = vmatpush1.msra.mxu0 0.0
  %1467 = vmatprep.subr.mxu0 0.0
  %1468 = vmatpush1.msra.mxu0 0.0
  %1469 = vmatprep.subr.mxu0 0.0
  %1470 = vmatpush1.msra.mxu0 0.0
  %1471 = vmatprep.subr.mxu0 0.0
  %1472 = vmatpush1.msra.mxu0 0.0
  %1473 = vmatprep.subr.mxu0 0.0
  %1474 = vmatpush1.msra.mxu0 0.0
  %1475 = vmatprep.subr.mxu0 0.0
  %1476 = vmatpush1.msra.mxu0 0.0
  %1477 = vmatprep.subr.mxu0 0.0
  %1478 = vmatpush1.msra.mxu0 0.0
  %1479 = vmatprep.subr.mxu0 0.0
  %1480 = vmatpush1.msra.mxu0 0.0
  %1481 = vmatprep.subr.mxu0 0.0
  %1482 = vmatpush1.msra.mxu0 0.0
  %1483 = vmatprep.subr.mxu0 0.0
  %1484 = vmatpush1.msra.mxu0 0.0
  %1485 = vmatprep.subr.mxu0 0.0
  %1486 = vmatpush1.msra.mxu0 0.0
  %1487 = vmatprep.subr.mxu0 0.0
  %1488 = vmatpush1.msra.mxu0 0.0
  %1489 = vmatprep.subr.mxu0 0.0
  %1490 = vmatpush1.msra.mxu0 0.0
  %1491 = vmatprep.subr.mxu0 0.0
  %1492 = vmatpush1.msra.mxu0 0.0
  %1493 = vmatprep.mubr.f32.mxu0 0.0
  %1494 = vmatmul.mubr.f32.gmra.mrb[0].mxu0 %v1427
  %v1495 = vpop.f32.mrb[0].mxu0
  %v1496 = vadd.f32 0.0, %v1495
  %v1497 = vpop.f32.mrb[0].mxu0
  %1498 = vdwg.mxu0
  %v1499 = vadd.f32 %v1426, %v1496
  %v1500 = vxor.u32 %v1499, 2147483648
  %v1501 = vmul.f32 %v1500, 1.442695
  %v1502 = vpow.pop %v1501
  %v1503 = vadd.f32 %v1502, 1.0
  %v1504 = vrcp.pop %v1503
  %v1505 = vmul.f32 1.0, %v1504
  %v1506 = vadd.f32 %v1496, %v621
  %1508 = vrot.lane.b32.xlu0 %v1506, 64
  %v1509 = vpop.permute.xlu0 %1508
  %v1511 = vmul.f32 %v1505, %v1509
  %1513 = vrot.lane.b32.xlu0 %v1511, 64
  %v1514 = vpop.permute.xlu0 %1513
  %v1516 = vadd.f32 %v1426, %v1514
  %v1517 = vtanh.pop %v1516
  %v1518 = vsub.f32 %v1308, %v1517
  %1520 = vrot.lane.b32.xlu0 %v1518, 96
  %v1521 = vpop.permute.xlu0 %1520
  %v1523 = vmul.f32 %v1505, %v1521
  %1525 = vrot.lane.b32.xlu0 %v1523, 32
  %v1526 = vpop.permute.xlu0 %1525
  %v1528 = vadd.f32 %v1517, %v1526
  %1530 = vrot.lane.b32.xlu0 %v1424, 64
  %v1531 = vpop.permute.xlu0 %1530
  %s1533 = scalar_lea.vmem %s9, 32
  %1534 = vst.msk [vmem:[%s1533] sm:$0xff] %vm427, %v1531
  %1536 = vrot.lane.b32.xlu0 %v1528, 64
  %v1537 = vpop.permute.xlu0 %1536
  %s1539 = scalar_lea.vmem %s67, 24
  %1540 = vst.msk [vmem:[%s1539] sm:$0xff] %vm427, %v1537
  %s1541 = scalar_lea.vmem [#allocation2], 40
  %v1542 = vld [vmem:[%s1541] sm:$0xff]
  %v1543 = vsel %vm427, %v1531, 0
  %1545 = vmatprep.subr.mxu0 0.0
  %1546 = vmatpush1.msra.mxu0 %v403
  %1547 = vmatprep.subr.mxu0 0.0
  %1548 = vmatpush1.msra.mxu0 %v404
  %1549 = vmatprep.subr.mxu0 0.0
  %1550 = vmatpush1.msra.mxu0 %v405
  %1551 = vmatprep.subr.mxu0 0.0
  %1552 = vmatpush1.msra.mxu0 %v406
  %1553 = vmatprep.subr.mxu0 0.0
  %1554 = vmatpush1.msra.mxu0 0.0
  %1555 = vmatprep.subr.mxu0 0.0
  %1556 = vmatpush1.msra.mxu0 0.0
  %1557 = vmatprep.subr.mxu0 0.0
  %1558 = vmatpush1.msra.mxu0 0.0
  %1559 = vmatprep.subr.mxu0 0.0
  %1560 = vmatpush1.msra.mxu0 0.0
  %1561 = vmatprep.subr.mxu0 0.0
  %1562 = vmatpush1.msra.mxu0 0.0
  %1563 = vmatprep.subr.mxu0 0.0
  %1564 = vmatpush1.msra.mxu0 0.0
  %1565 = vmatprep.subr.mxu0 0.0
  %1566 = vmatpush1.msra.mxu0 0.0
  %1567 = vmatprep.subr.mxu0 0.0
  %1568 = vmatpush1.msra.mxu0 0.0
  %1569 = vmatprep.subr.mxu0 0.0
  %1570 = vmatpush1.msra.mxu0 0.0
  %1571 = vmatprep.subr.mxu0 0.0
  %1572 = vmatpush1.msra.mxu0 0.0
  %1573 = vmatprep.subr.mxu0 0.0
  %1574 = vmatpush1.msra.mxu0 0.0
  %1575 = vmatprep.subr.mxu0 0.0
  %1576 = vmatpush1.msra.mxu0 0.0
  %1577 = vmatprep.subr.mxu0 0.0
  %1578 = vmatpush1.msra.mxu0 0.0
  %1579 = vmatprep.subr.mxu0 0.0
  %1580 = vmatpush1.msra.mxu0 0.0
  %1581 = vmatprep.subr.mxu0 0.0
  %1582 = vmatpush1.msra.mxu0 0.0
  %1583 = vmatprep.subr.mxu0 0.0
  %1584 = vmatpush1.msra.mxu0 0.0
  %1585 = vmatprep.subr.mxu0 0.0
  %1586 = vmatpush1.msra.mxu0 0.0
  %1587 = vmatprep.subr.mxu0 0.0
  %1588 = vmatpush1.msra.mxu0 0.0
  %1589 = vmatprep.subr.mxu0 0.0
  %1590 = vmatpush1.msra.mxu0 0.0
  %1591 = vmatprep.subr.mxu0 0.0
  %1592 = vmatpush1.msra.mxu0 0.0
  %1593 = vmatprep.subr.mxu0 0.0
  %1594 = vmatpush1.msra.mxu0 0.0
  %1595 = vmatprep.subr.mxu0 0.0
  %1596 = vmatpush1.msra.mxu0 0.0
  %1597 = vmatprep.subr.mxu0 0.0
  %1598 = vmatpush1.msra.mxu0 0.0
  %1599 = vmatprep.subr.mxu0 0.0
  %1600 = vmatpush1.msra.mxu0 0.0
  %1601 = vmatprep.subr.mxu0 0.0
  %1602 = vmatpush1.msra.mxu0 0.0
  %1603 = vmatprep.subr.mxu0 0.0
  %1604 = vmatpush1.msra.mxu0 0.0
  %1605 = vmatprep.subr.mxu0 0.0
  %1606 = vmatpush1.msra.mxu0 0.0
  %1607 = vmatprep.subr.mxu0 0.0
  %1608 = vmatpush1.msra.mxu0 0.0
  %1609 = vmatprep.mubr.f32.mxu0 0.0
  %1610 = vmatmul.mubr.f32.gmra.mrb[0].mxu0 %v1543
  %v1611 = vpop.f32.mrb[0].mxu0
  %v1612 = vadd.f32 0.0, %v1611
  %v1613 = vpop.f32.mrb[0].mxu0
  %1614 = vdwg.mxu0
  %v1615 = vadd.f32 %v1542, %v1612
  %v1616 = vxor.u32 %v1615, 2147483648
  %v1617 = vmul.f32 %v1616, 1.442695
  %v1618 = vpow.pop %v1617
  %v1619 = vadd.f32 %v1618, 1.0
  %v1620 = vrcp.pop %v1619
  %v1621 = vmul.f32 1.0, %v1620
  %v1622 = vadd.f32 %v1612, %v509
  %1624 = vrot.lane.b32.xlu0 %v1622, 64
  %v1625 = vpop.permute.xlu0 %1624
  %v1627 = vmul.f32 %v1621, %v1625
  %1629 = vrot.lane.b32.xlu0 %v1627, 64
  %v1630 = vpop.permute.xlu0 %1629
  %v1632 = vadd.f32 %v1542, %v1630
  %v1633 = vtanh.pop %v1632
  %v1634 = vsub.f32 %v1424, %v1633
  %1636 = vrot.lane.b32.xlu0 %v1634, 96
  %v1637 = vpop.permute.xlu0 %1636
  %v1639 = vmul.f32 %v1621, %v1637
  %1641 = vrot.lane.b32.xlu0 %v1639, 32
  %v1642 = vpop.permute.xlu0 %1641
  %v1644 = vadd.f32 %v1633, %v1642
  %s1645 = scalar_lea.vmem [#allocation3], 16
  %v1646 = vld [vmem:[%s1645] sm:$0xff]
  %v1647 = vsel %vm427, %v1537, 0
  %1649 = vmatprep.subr.mxu0 0.0
  %1650 = vmatpush1.msra.mxu0 %v407
  %1651 = vmatprep.subr.mxu0 0.0
  %1652 = vmatpush1.msra.mxu0 %v408
  %1653 = vmatprep.subr.mxu0 0.0
  %1654 = vmatpush1.msra.mxu0 %v409
  %1655 = vmatprep.subr.mxu0 0.0
  %1656 = vmatpush1.msra.mxu0 %v410
  %1657 = vmatprep.subr.mxu0 0.0
  %1658 = vmatpush1.msra.mxu0 0.0
  %1659 = vmatprep.subr.mxu0 0.0
  %1660 = vmatpush1.msra.mxu0 0.0
  %1661 = vmatprep.subr.mxu0 0.0
  %1662 = vmatpush1.msra.mxu0 0.0
  %1663 = vmatprep.subr.mxu0 0.0
  %1664 = vmatpush1.msra.mxu0 0.0
  %1665 = vmatprep.subr.mxu0 0.0
  %1666 = vmatpush1.msra.mxu0 0.0
  %1667 = vmatprep.subr.mxu0 0.0
  %1668 = vmatpush1.msra.mxu0 0.0
  %1669 = vmatprep.subr.mxu0 0.0
  %1670 = vmatpush1.msra.mxu0 0.0
  %1671 = vmatprep.subr.mxu0 0.0
  %1672 = vmatpush1.msra.mxu0 0.0
  %1673 = vmatprep.subr.mxu0 0.0
  %1674 = vmatpush1.msra.mxu0 0.0
  %1675 = vmatprep.subr.mxu0 0.0
  %1676 = vmatpush1.msra.mxu0 0.0
  %1677 = vmatprep.subr.mxu0 0.0
  %1678 = vmatpush1.msra.mxu0 0.0
  %1679 = vmatprep.subr.mxu0 0.0
  %1680 = vmatpush1.msra.mxu0 0.0
  %1681 = vmatprep.subr.mxu0 0.0
  %1682 = vmatpush1.msra.mxu0 0.0
  %1683 = vmatprep.subr.mxu0 0.0
  %1684 = vmatpush1.msra.mxu0 0.0
  %1685 = vmatprep.subr.mxu0 0.0
  %1686 = vmatpush1.msra.mxu0 0.0
  %1687 = vmatprep.subr.mxu0 0.0
  %1688 = vmatpush1.msra.mxu0 0.0
  %1689 = vmatprep.subr.mxu0 0.0
  %1690 = vmatpush1.msra.mxu0 0.0
  %1691 = vmatprep.subr.mxu0 0.0
  %1692 = vmatpush1.msra.mxu0 0.0
  %1693 = vmatprep.subr.mxu0 0.0
  %1694 = vmatpush1.msra.mxu0 0.0
  %1695 = vmatprep.subr.mxu0 0.0
  %1696 = vmatpush1.msra.mxu0 0.0
  %1697 = vmatprep.subr.mxu0 0.0
  %1698 = vmatpush1.msra.mxu0 0.0
  %1699 = vmatprep.subr.mxu0 0.0
  %1700 = vmatpush1.msra.mxu0 0.0
  %1701 = vmatprep.subr.mxu0 0.0
  %1702 = vmatpush1.msra.mxu0 0.0
  %1703 = vmatprep.subr.mxu0 0.0
  %1704 = vmatpush1.msra.mxu0 0.0
  %1705 = vmatprep.subr.mxu0 0.0
  %1706 = vmatpush1.msra.mxu0 0.0
  %1707 = vmatprep.subr.mxu0 0.0
  %1708 = vmatpush1.msra.mxu0 0.0
  %1709 = vmatprep.subr.mxu0 0.0
  %1710 = vmatpush1.msra.mxu0 0.0
  %1711 = vmatprep.subr.mxu0 0.0
  %1712 = vmatpush1.msra.mxu0 0.0
  %1713 = vmatprep.mubr.f32.mxu0 0.0
  %1714 = vmatmul.mubr.f32.gmra.mrb[0].mxu0 %v1647
  %v1715 = vpop.f32.mrb[0].mxu0
  %v1716 = vadd.f32 0.0, %v1715
  %v1717 = vpop.f32.mrb[0].mxu0
  %1718 = vdwg.mxu0
  %v1719 = vadd.f32 %v1646, %v1716
  %v1720 = vxor.u32 %v1719, 2147483648
  %v1721 = vmul.f32 %v1720, 1.442695
  %v1722 = vpow.pop %v1721
  %v1723 = vadd.f32 %v1722, 1.0
  %v1724 = vrcp.pop %v1723
  %v1725 = vmul.f32 1.0, %v1724
  %v1726 = vadd.f32 %v1716, %v621
  %1728 = vrot.lane.b32.xlu0 %v1726, 64
  %v1729 = vpop.permute.xlu0 %1728
  %v1731 = vmul.f32 %v1725, %v1729
  %1733 = vrot.lane.b32.xlu0 %v1731, 64
  %v1734 = vpop.permute.xlu0 %1733
  %v1736 = vadd.f32 %v1646, %v1734
  %v1737 = vtanh.pop %v1736
  %v1738 = vsub.f32 %v1528, %v1737
  %1740 = vrot.lane.b32.xlu0 %v1738, 96
  %v1741 = vpop.permute.xlu0 %1740
  %v1743 = vmul.f32 %v1725, %v1741
  %1745 = vrot.lane.b32.xlu0 %v1743, 32
  %v1746 = vpop.permute.xlu0 %1745
  %v1748 = vadd.f32 %v1737, %v1746
  %1750 = vrot.lane.b32.xlu0 %v1644, 64
  %v1751 = vpop.permute.xlu0 %1750
  %s1753 = scalar_lea.vmem %s9, 40
  %1754 = vst.msk [vmem:[%s1753] sm:$0xff] %vm427, %v1751
  %1756 = vrot.lane.b32.xlu0 %v1748, 64
  %v1757 = vpop.permute.xlu0 %1756
  %s1759 = scalar_lea.vmem %s67, 16
  %1760 = vst.msk [vmem:[%s1759] sm:$0xff] %vm427, %v1757
  %s1761 = scalar_lea.vmem [#allocation2], 48
  %v1762 = vld [vmem:[%s1761] sm:$0xff]
  %v1763 = vsel %vm427, %v1751, 0
  %1765 = vmatprep.subr.mxu0 0.0
  %1766 = vmatpush1.msra.mxu0 %v403
  %1767 = vmatprep.subr.mxu0 0.0
  %1768 = vmatpush1.msra.mxu0 %v404
  %1769 = vmatprep.subr.mxu0 0.0
  %1770 = vmatpush1.msra.mxu0 %v405
  %1771 = vmatprep.subr.mxu0 0.0
  %1772 = vmatpush1.msra.mxu0 %v406
  %1773 = vmatprep.subr.mxu0 0.0
  %1774 = vmatpush1.msra.mxu0 0.0
  %1775 = vmatprep.subr.mxu0 0.0
  %1776 = vmatpush1.msra.mxu0 0.0
  %1777 = vmatprep.subr.mxu0 0.0
  %1778 = vmatpush1.msra.mxu0 0.0
  %1779 = vmatprep.subr.mxu0 0.0
  %1780 = vmatpush1.msra.mxu0 0.0
  %1781 = vmatprep.subr.mxu0 0.0
  %1782 = vmatpush1.msra.mxu0 0.0
  %1783 = vmatprep.subr.mxu0 0.0
  %1784 = vmatpush1.msra.mxu0 0.0
  %1785 = vmatprep.subr.mxu0 0.0
  %1786 = vmatpush1.msra.mxu0 0.0
  %1787 = vmatprep.subr.mxu0 0.0
  %1788 = vmatpush1.msra.mxu0 0.0
  %1789 = vmatprep.subr.mxu0 0.0
  %1790 = vmatpush1.msra.mxu0 0.0
  %1791 = vmatprep.subr.mxu0 0.0
  %1792 = vmatpush1.msra.mxu0 0.0
  %1793 = vmatprep.subr.mxu0 0.0
  %1794 = vmatpush1.msra.mxu0 0.0
  %1795 = vmatprep.subr.mxu0 0.0
  %1796 = vmatpush1.msra.mxu0 0.0
  %1797 = vmatprep.subr.mxu0 0.0
  %1798 = vmatpush1.msra.mxu0 0.0
  %1799 = vmatprep.subr.mxu0 0.0
  %1800 = vmatpush1.msra.mxu0 0.0
  %1801 = vmatprep.subr.mxu0 0.0
  %1802 = vmatpush1.msra.mxu0 0.0
  %1803 = vmatprep.subr.mxu0 0.0
  %1804 = vmatpush1.msra.mxu0 0.0
  %1805 = vmatprep.subr.mxu0 0.0
  %1806 = vmatpush1.msra.mxu0 0.0
  %1807 = vmatprep.subr.mxu0 0.0
  %1808 = vmatpush1.msra.mxu0 0.0
  %1809 = vmatprep.subr.mxu0 0.0
  %1810 = vmatpush1.msra.mxu0 0.0
  %1811 = vmatprep.subr.mxu0 0.0
  %1812 = vmatpush1.msra.mxu0 0.0
  %1813 = vmatprep.subr.mxu0 0.0
  %1814 = vmatpush1.msra.mxu0 0.0
  %1815 = vmatprep.subr.mxu0 0.0
  %1816 = vmatpush1.msra.mxu0 0.0
  %1817 = vmatprep.subr.mxu0 0.0
  %1818 = vmatpush1.msra.mxu0 0.0
  %1819 = vmatprep.subr.mxu0 0.0
  %1820 = vmatpush1.msra.mxu0 0.0
  %1821 = vmatprep.subr.mxu0 0.0
  %1822 = vmatpush1.msra.mxu0 0.0
  %1823 = vmatprep.subr.mxu0 0.0
  %1824 = vmatpush1.msra.mxu0 0.0
  %1825 = vmatprep.subr.mxu0 0.0
  %1826 = vmatpush1.msra.mxu0 0.0
  %1827 = vmatprep.subr.mxu0 0.0
  %1828 = vmatpush1.msra.mxu0 0.0
  %1829 = vmatprep.mubr.f32.mxu0 0.0
  %1830 = vmatmul.mubr.f32.gmra.mrb[0].mxu0 %v1763
  %v1831 = vpop.f32.mrb[0].mxu0
  %v1832 = vadd.f32 0.0, %v1831
  %v1833 = vpop.f32.mrb[0].mxu0
  %1834 = vdwg.mxu0
  %v1835 = vadd.f32 %v1762, %v1832
  %v1836 = vxor.u32 %v1835, 2147483648
  %v1837 = vmul.f32 %v1836, 1.442695
  %v1838 = vpow.pop %v1837
  %v1839 = vadd.f32 %v1838, 1.0
  %v1840 = vrcp.pop %v1839
  %v1841 = vmul.f32 1.0, %v1840
  %v1842 = vadd.f32 %v1832, %v509
  %1844 = vrot.lane.b32.xlu0 %v1842, 64
  %v1845 = vpop.permute.xlu0 %1844
  %v1847 = vmul.f32 %v1841, %v1845
  %1849 = vrot.lane.b32.xlu0 %v1847, 64
  %v1850 = vpop.permute.xlu0 %1849
  %v1852 = vadd.f32 %v1762, %v1850
  %v1853 = vtanh.pop %v1852
  %v1854 = vsub.f32 %v1644, %v1853
  %1856 = vrot.lane.b32.xlu0 %v1854, 96
  %v1857 = vpop.permute.xlu0 %1856
  %v1859 = vmul.f32 %v1841, %v1857
  %1861 = vrot.lane.b32.xlu0 %v1859, 32
  %v1862 = vpop.permute.xlu0 %1861
  %v1864 = vadd.f32 %v1853, %v1862
  %s1865 = scalar_lea.vmem [#allocation3], 8
  %v1866 = vld [vmem:[%s1865] sm:$0xff]
  %v1867 = vsel %vm427, %v1757, 0
  %1869 = vmatprep.subr.mxu0 0.0
  %1870 = vmatpush1.msra.mxu0 %v407
  %1871 = vmatprep.subr.mxu0 0.0
  %1872 = vmatpush1.msra.mxu0 %v408
  %1873 = vmatprep.subr.mxu0 0.0
  %1874 = vmatpush1.msra.mxu0 %v409
  %1875 = vmatprep.subr.mxu0 0.0
  %1876 = vmatpush1.msra.mxu0 %v410
  %1877 = vmatprep.subr.mxu0 0.0
  %1878 = vmatpush1.msra.mxu0 0.0
  %1879 = vmatprep.subr.mxu0 0.0
  %1880 = vmatpush1.msra.mxu0 0.0
  %1881 = vmatprep.subr.mxu0 0.0
  %1882 = vmatpush1.msra.mxu0 0.0
  %1883 = vmatprep.subr.mxu0 0.0
  %1884 = vmatpush1.msra.mxu0 0.0
  %1885 = vmatprep.subr.mxu0 0.0
  %1886 = vmatpush1.msra.mxu0 0.0
  %1887 = vmatprep.subr.mxu0 0.0
  %1888 = vmatpush1.msra.mxu0 0.0
  %1889 = vmatprep.subr.mxu0 0.0
  %1890 = vmatpush1.msra.mxu0 0.0
  %1891 = vmatprep.subr.mxu0 0.0
  %1892 = vmatpush1.msra.mxu0 0.0
  %1893 = vmatprep.subr.mxu0 0.0
  %1894 = vmatpush1.msra.mxu0 0.0
  %1895 = vmatprep.subr.mxu0 0.0
  %1896 = vmatpush1.msra.mxu0 0.0
  %1897 = vmatprep.subr.mxu0 0.0
  %1898 = vmatpush1.msra.mxu0 0.0
  %1899 = vmatprep.subr.mxu0 0.0
  %1900 = vmatpush1.msra.mxu0 0.0
  %1901 = vmatprep.subr.mxu0 0.0
  %1902 = vmatpush1.msra.mxu0 0.0
  %1903 = vmatprep.subr.mxu0 0.0
  %1904 = vmatpush1.msra.mxu0 0.0
  %1905 = vmatprep.subr.mxu0 0.0
  %1906 = vmatpush1.msra.mxu0 0.0
  %1907 = vmatprep.subr.mxu0 0.0
  %1908 = vmatpush1.msra.mxu0 0.0
  %1909 = vmatprep.subr.mxu0 0.0
  %1910 = vmatpush1.msra.mxu0 0.0
  %1911 = vmatprep.subr.mxu0 0.0
  %1912 = vmatpush1.msra.mxu0 0.0
  %1913 = vmatprep.subr.mxu0 0.0
  %1914 = vmatpush1.msra.mxu0 0.0
  %1915 = vmatprep.subr.mxu0 0.0
  %1916 = vmatpush1.msra.mxu0 0.0
  %1917 = vmatprep.subr.mxu0 0.0
  %1918 = vmatpush1.msra.mxu0 0.0
  %1919 = vmatprep.subr.mxu0 0.0
  %1920 = vmatpush1.msra.mxu0 0.0
  %1921 = vmatprep.subr.mxu0 0.0
  %1922 = vmatpush1.msra.mxu0 0.0
  %1923 = vmatprep.subr.mxu0 0.0
  %1924 = vmatpush1.msra.mxu0 0.0
  %1925 = vmatprep.subr.mxu0 0.0
  %1926 = vmatpush1.msra.mxu0 0.0
  %1927 = vmatprep.subr.mxu0 0.0
  %1928 = vmatpush1.msra.mxu0 0.0
  %1929 = vmatprep.subr.mxu0 0.0
  %1930 = vmatpush1.msra.mxu0 0.0
  %1931 = vmatprep.subr.mxu0 0.0
  %1932 = vmatpush1.msra.mxu0 0.0
  %1933 = vmatprep.mubr.f32.mxu0 0.0
  %1934 = vmatmul.mubr.f32.gmra.mrb[0].mxu0 %v1867
  %v1935 = vpop.f32.mrb[0].mxu0
  %v1936 = vadd.f32 0.0, %v1935
  %v1937 = vpop.f32.mrb[0].mxu0
  %1938 = vdwg.mxu0
  %v1939 = vadd.f32 %v1866, %v1936
  %v1940 = vxor.u32 %v1939, 2147483648
  %v1941 = vmul.f32 %v1940, 1.442695
  %v1942 = vpow.pop %v1941
  %v1943 = vadd.f32 %v1942, 1.0
  %v1944 = vrcp.pop %v1943
  %v1945 = vmul.f32 1.0, %v1944
  %v1946 = vadd.f32 %v1936, %v621
  %1948 = vrot.lane.b32.xlu0 %v1946, 64
  %v1949 = vpop.permute.xlu0 %1948
  %v1951 = vmul.f32 %v1945, %v1949
  %1953 = vrot.lane.b32.xlu0 %v1951, 64
  %v1954 = vpop.permute.xlu0 %1953
  %v1956 = vadd.f32 %v1866, %v1954
  %v1957 = vtanh.pop %v1956
  %v1958 = vsub.f32 %v1748, %v1957
  %1960 = vrot.lane.b32.xlu0 %v1958, 96
  %v1961 = vpop.permute.xlu0 %1960
  %v1963 = vmul.f32 %v1945, %v1961
  %1965 = vrot.lane.b32.xlu0 %v1963, 32
  %v1966 = vpop.permute.xlu0 %1965
  %v1968 = vadd.f32 %v1957, %v1966
  %1970 = vrot.lane.b32.xlu0 %v1864, 64
  %v1971 = vpop.permute.xlu0 %1970
  %s1973 = scalar_lea.vmem %s9, 48
  %1974 = vst.msk [vmem:[%s1973] sm:$0xff] %vm427, %v1971
  %1976 = vrot.lane.b32.xlu0 %v1968, 64
  %v1977 = vpop.permute.xlu0 %1976
  %s1979 = scalar_lea.vmem %s67, 8
  %1980 = vst.msk [vmem:[%s1979] sm:$0xff] %vm427, %v1977
  %s1981 = scalar_lea.vmem [#allocation2], 56
  %v1982 = vld [vmem:[%s1981] sm:$0xff]
  %v1983 = vsel %vm427, %v1971, 0
  %1985 = vmatprep.subr.mxu0 0.0
  %1986 = vmatpush1.msra.mxu0 %v403
  %1987 = vmatprep.subr.mxu0 0.0
  %1988 = vmatpush1.msra.mxu0 %v404
  %1989 = vmatprep.subr.mxu0 0.0
  %1990 = vmatpush1.msra.mxu0 %v405
  %1991 = vmatprep.subr.mxu0 0.0
  %1992 = vmatpush1.msra.mxu0 %v406
  %1993 = vmatprep.subr.mxu0 0.0
  %1994 = vmatpush1.msra.mxu0 0.0
  %1995 = vmatprep.subr.mxu0 0.0
  %1996 = vmatpush1.msra.mxu0 0.0
  %1997 = vmatprep.subr.mxu0 0.0
  %1998 = vmatpush1.msra.mxu0 0.0
  %1999 = vmatprep.subr.mxu0 0.0
  %2000 = vmatpush1.msra.mxu0 0.0
  %2001 = vmatprep.subr.mxu0 0.0
  %2002 = vmatpush1.msra.mxu0 0.0
  %2003 = vmatprep.subr.mxu0 0.0
  %2004 = vmatpush1.msra.mxu0 0.0
  %2005 = vmatprep.subr.mxu0 0.0
  %2006 = vmatpush1.msra.mxu0 0.0
  %2007 = vmatprep.subr.mxu0 0.0
  %2008 = vmatpush1.msra.mxu0 0.0
  %2009 = vmatprep.subr.mxu0 0.0
  %2010 = vmatpush1.msra.mxu0 0.0
  %2011 = vmatprep.subr.mxu0 0.0
  %2012 = vmatpush1.msra.mxu0 0.0
  %2013 = vmatprep.subr.mxu0 0.0
  %2014 = vmatpush1.msra.mxu0 0.0
  %2015 = vmatprep.subr.mxu0 0.0
  %2016 = vmatpush1.msra.mxu0 0.0
  %2017 = vmatprep.subr.mxu0 0.0
  %2018 = vmatpush1.msra.mxu0 0.0
  %2019 = vmatprep.subr.mxu0 0.0
  %2020 = vmatpush1.msra.mxu0 0.0
  %2021 = vmatprep.subr.mxu0 0.0
  %2022 = vmatpush1.msra.mxu0 0.0
  %2023 = vmatprep.subr.mxu0 0.0
  %2024 = vmatpush1.msra.mxu0 0.0
  %2025 = vmatprep.subr.mxu0 0.0
  %2026 = vmatpush1.msra.mxu0 0.0
  %2027 = vmatprep.subr.mxu0 0.0
  %2028 = vmatpush1.msra.mxu0 0.0
  %2029 = vmatprep.subr.mxu0 0.0
  %2030 = vmatpush1.msra.mxu0 0.0
  %2031 = vmatprep.subr.mxu0 0.0
  %2032 = vmatpush1.msra.mxu0 0.0
  %2033 = vmatprep.subr.mxu0 0.0
  %2034 = vmatpush1.msra.mxu0 0.0
  %2035 = vmatprep.subr.mxu0 0.0
  %2036 = vmatpush1.msra.mxu0 0.0
  %2037 = vmatprep.subr.mxu0 0.0
  %2038 = vmatpush1.msra.mxu0 0.0
  %2039 = vmatprep.subr.mxu0 0.0
  %2040 = vmatpush1.msra.mxu0 0.0
  %2041 = vmatprep.subr.mxu0 0.0
  %2042 = vmatpush1.msra.mxu0 0.0
  %2043 = vmatprep.subr.mxu0 0.0
  %2044 = vmatpush1.msra.mxu0 0.0
  %2045 = vmatprep.subr.mxu0 0.0
  %2046 = vmatpush1.msra.mxu0 0.0
  %2047 = vmatprep.subr.mxu0 0.0
  %2048 = vmatpush1.msra.mxu0 0.0
  %2049 = vmatprep.mubr.f32.mxu0 0.0
  %2050 = vmatmul.mubr.f32.gmra.mrb[0].mxu0 %v1983
  %v2051 = vpop.f32.mrb[0].mxu0
  %v2052 = vadd.f32 0.0, %v2051
  %v2053 = vpop.f32.mrb[0].mxu0
  %2054 = vdwg.mxu0
  %v2055 = vadd.f32 %v1982, %v2052
  %v2056 = vxor.u32 %v2055, 2147483648
  %v2057 = vmul.f32 %v2056, 1.442695
  %v2058 = vpow.pop %v2057
  %v2059 = vadd.f32 %v2058, 1.0
  %v2060 = vrcp.pop %v2059
  %v2061 = vmul.f32 1.0, %v2060
  %v2062 = vadd.f32 %v2052, %v509
  %2064 = vrot.lane.b32.xlu0 %v2062, 64
  %v2065 = vpop.permute.xlu0 %2064
  %v2067 = vmul.f32 %v2061, %v2065
  %2069 = vrot.lane.b32.xlu0 %v2067, 64
  %v2070 = vpop.permute.xlu0 %2069
  %v2072 = vadd.f32 %v1982, %v2070
  %v2073 = vtanh.pop %v2072
  %v2074 = vsub.f32 %v1864, %v2073
  %2076 = vrot.lane.b32.xlu0 %v2074, 96
  %v2077 = vpop.permute.xlu0 %2076
  %v2079 = vmul.f32 %v2061, %v2077
  %2081 = vrot.lane.b32.xlu0 %v2079, 32
  %v2082 = vpop.permute.xlu0 %2081
  %v2084 = vadd.f32 %v2073, %v2082
  %v2085 = vld [vmem:[#allocation3] sm:$0xff]
  %v2086 = vsel %vm427, %v1977, 0
  %2088 = vmatprep.subr.mxu0 0.0
  %2089 = vmatpush1.msra.mxu0 %v407
  %2090 = vmatprep.subr.mxu0 0.0
  %2091 = vmatpush1.msra.mxu0 %v408
  %2092 = vmatprep.subr.mxu0 0.0
  %2093 = vmatpush1.msra.mxu0 %v409
  %2094 = vmatprep.subr.mxu0 0.0
  %2095 = vmatpush1.msra.mxu0 %v410
  %2096 = vmatprep.subr.mxu0 0.0
  %2097 = vmatpush1.msra.mxu0 0.0
  %2098 = vmatprep.subr.mxu0 0.0
  %2099 = vmatpush1.msra.mxu0 0.0
  %2100 = vmatprep.subr.mxu0 0.0
  %2101 = vmatpush1.msra.mxu0 0.0
  %2102 = vmatprep.subr.mxu0 0.0
  %2103 = vmatpush1.msra.mxu0 0.0
  %2104 = vmatprep.subr.mxu0 0.0
  %2105 = vmatpush1.msra.mxu0 0.0
  %2106 = vmatprep.subr.mxu0 0.0
  %2107 = vmatpush1.msra.mxu0 0.0
  %2108 = vmatprep.subr.mxu0 0.0
  %2109 = vmatpush1.msra.mxu0 0.0
  %2110 = vmatprep.subr.mxu0 0.0
  %2111 = vmatpush1.msra.mxu0 0.0
  %2112 = vmatprep.subr.mxu0 0.0
  %2113 = vmatpush1.msra.mxu0 0.0
  %2114 = vmatprep.subr.mxu0 0.0
  %2115 = vmatpush1.msra.mxu0 0.0
  %2116 = vmatprep.subr.mxu0 0.0
  %2117 = vmatpush1.msra.mxu0 0.0
  %2118 = vmatprep.subr.mxu0 0.0
  %2119 = vmatpush1.msra.mxu0 0.0
  %2120 = vmatprep.subr.mxu0 0.0
  %2121 = vmatpush1.msra.mxu0 0.0
  %2122 = vmatprep.subr.mxu0 0.0
  %2123 = vmatpush1.msra.mxu0 0.0
  %2124 = vmatprep.subr.mxu0 0.0
  %2125 = vmatpush1.msra.mxu0 0.0
  %2126 = vmatprep.subr.mxu0 0.0
  %2127 = vmatpush1.msra.mxu0 0.0
  %2128 = vmatprep.subr.mxu0 0.0
  %2129 = vmatpush1.msra.mxu0 0.0
  %2130 = vmatprep.subr.mxu0 0.0
  %2131 = vmatpush1.msra.mxu0 0.0
  %2132 = vmatprep.subr.mxu0 0.0
  %2133 = vmatpush1.msra.mxu0 0.0
  %2134 = vmatprep.subr.mxu0 0.0
  %2135 = vmatpush1.msra.mxu0 0.0
  %2136 = vmatprep.subr.mxu0 0.0
  %2137 = vmatpush1.msra.mxu0 0.0
  %2138 = vmatprep.subr.mxu0 0.0
  %2139 = vmatpush1.msra.mxu0 0.0
  %2140 = vmatprep.subr.mxu0 0.0
  %2141 = vmatpush1.msra.mxu0 0.0
  %2142 = vmatprep.subr.mxu0 0.0
  %2143 = vmatpush1.msra.mxu0 0.0
  %2144 = vmatprep.subr.mxu0 0.0
  %2145 = vmatpush1.msra.mxu0 0.0
  %2146 = vmatprep.subr.mxu0 0.0
  %2147 = vmatpush1.msra.mxu0 0.0
  %2148 = vmatprep.subr.mxu0 0.0
  %2149 = vmatpush1.msra.mxu0 0.0
  %2150 = vmatprep.subr.mxu0 0.0
  %2151 = vmatpush1.msra.mxu0 0.0
  %2152 = vmatprep.mubr.f32.mxu0 0.0
  %2153 = vmatmul.mubr.f32.gmra.mrb[0].mxu0 %v2086
  %v2154 = vpop.f32.mrb[0].mxu0
  %v2155 = vadd.f32 0.0, %v2154
  %v2156 = vpop.f32.mrb[0].mxu0
  %2157 = vdwg.mxu0
  %v2158 = vadd.f32 %v2085, %v2155
  %v2159 = vxor.u32 %v2158, 2147483648
  %v2160 = vmul.f32 %v2159, 1.442695
  %v2161 = vpow.pop %v2160
  %v2162 = vadd.f32 %v2161, 1.0
  %v2163 = vrcp.pop %v2162
  %v2164 = vmul.f32 1.0, %v2163
  %v2165 = vadd.f32 %v2155, %v621
  %2167 = vrot.lane.b32.xlu0 %v2165, 64
  %v2168 = vpop.permute.xlu0 %2167
  %v2170 = vmul.f32 %v2164, %v2168
  %2172 = vrot.lane.b32.xlu0 %v2170, 64
  %v2173 = vpop.permute.xlu0 %2172
  %v2175 = vadd.f32 %v2085, %v2173
  %v2176 = vtanh.pop %v2175
  %v2177 = vsub.f32 %v1968, %v2176
  %2179 = vrot.lane.b32.xlu0 %v2177, 96
  %v2180 = vpop.permute.xlu0 %2179
  %v2182 = vmul.f32 %v2164, %v2180
  %2184 = vrot.lane.b32.xlu0 %v2182, 32
  %v2185 = vpop.permute.xlu0 %2184
  %v2187 = vadd.f32 %v2176, %v2185
  %2189 = vrot.lane.b32.xlu0 %v2084, 64
  %v2190 = vpop.permute.xlu0 %2189
  %s2192 = scalar_lea.vmem %s9, 56
  %2193 = vst.msk [vmem:[%s2192] sm:$0xff] %vm427, %v2190
  %2195 = vrot.lane.b32.xlu0 %v2187, 64
  %v2196 = vpop.permute.xlu0 %2195
  %2198 = vst.msk [vmem:[%s67] sm:$0xff] %vm427, %v2196
  %2199 = vst.msk [vmem:[#allocation4] sm:$0xff] %vm427, %v2190
  %2200 = vst.msk [vmem:[#allocation5] sm:$0xff] %vm427, %v2196
  %s2201 = ssub.s32 0, 0
  %s2202 = smul.u32 8, %s2201
  %p2203 = scmp.lt.s32.totalorder %s2202, 7
  %s2204 = scalar_select %p2203, %s2202, 7
  %s2205 = smul.addr %s2204, 8
  %s2206 = scalar_lea.vmem %s10, %s2205
  // Predicated region
  $region42: #{sentiment_bigru_forward.3} parent=0 // pred_check
    _
  $region43: #{sentiment_bigru_forward.3} parent=0 // pred_check_branch
    %2208 = sbr.rel (0) target = $region45
  $region44: #{sentiment_bigru_forward.3} parent=0 // pred_region
    _
  $region45: #{sentiment_bigru_forward.3} parent=0 // pred_fallthru
    _
  // Predicated region
  $region46: #{sentiment_bigru_forward.3} parent=0 // pred_check
    _
  $region47: #{sentiment_bigru_forward.3} parent=0 // pred_check_branch
    %2210 = sbr.rel (0) target = $region49
  $region48: #{sentiment_bigru_forward.3} parent=0 // pred_region
    %s2211 = ssub.s32 0, 0
    %s2212 = smul.u32 8, %s2211
  $region49: #{sentiment_bigru_forward.3} parent=0 // pred_fallthru
    _
  // Predicated region
  $region50: #{sentiment_bigru_forward.3} parent=0 // pred_check
    _
  $region51: #{sentiment_bigru_forward.3} parent=0 // pred_check_branch
    %2214 = sbr.rel (0) target = $region53
  $region52: #{sentiment_bigru_forward.3} parent=0 // pred_region
    _
  $region53: #{sentiment_bigru_forward.3} parent=0 // pred_fallthru
    _
  // Predicated region
  $region54: #{sentiment_bigru_forward.3} parent=0 // pred_check
    _
  $region55: #{sentiment_bigru_forward.3} parent=0 // pred_check_branch
    %2216 = sbr.rel (0) target = $region57
  $region56: #{sentiment_bigru_forward.3} parent=0 // pred_region
    %s2217 = ssub.s32 0, 0
    %s2218 = smul.u32 8, %s2217
    %p2219 = scmp.lt.s32.totalorder %s2218, 7
    %s2220 = scalar_select %p2219, %s2218, 7
    %s2221 = smul.addr %s2220, 8
    %s2222 = scalar_lea.vmem %s10, %s2221
  $region57: #{sentiment_bigru_forward.3} parent=0 // pred_fallthru
    _

// kernel: sentiment_bigru_forward.4
$region0: #{sentiment_bigru_forward.4}
  #allocation0 [shape = 'u32[]', space=smem, size = 0x4, offset = 0x4, fixed_abs, tag = 'smem constant byte address 0x4 - core index']
  #allocation1 [shape = 'u32[144,128]{1,0:T(1,128)}', space=vmem, size = 0x12000, scoped, tag = 'internal scratch']
  #allocation2 [shape = 'f32[64,96]{1,0:T(8,128)}', space=vmem, size = 0x8000, scoped, tag = 'scratch operand']
  #allocation3 [shape = 'f32[64,96]{1,0:T(8,128)}', space=vmem, size = 0x8000, scoped, tag = 'scratch operand']
  #allocation4 [shape = 'f32[8,32]{1,0:T(8,128)}', space=vmem, size = 0x1000, scoped, tag = 'scratch operand']
  #allocation5 [shape = 'f32[8,32]{1,0:T(8,128)}', space=vmem, size = 0x1000, scoped, tag = 'scratch operand']
  %s0 = inlined_call_operand.vmem [shape: f32[64,32], index: 0, kind: input, shape index: {}, may-alias: {0,2}]
  %s1 = inlined_call_operand.vmem [shape: f32[64,32], index: 1, kind: input, shape index: {}, may-alias: {1,3}]
  %s2 = inlined_call_operand.vmem [shape: f32[64,32], index: 2, kind: input, shape index: {}, may-alias: {0,2}]
  %s3 = inlined_call_operand.vmem [shape: f32[64,32], index: 3, kind: input, shape index: {}, may-alias: {1,3}]
  %s4 = inlined_call_operand.vmem [shape: f32[32,96], index: 4, kind: input, shape index: {}]
  %s5 = inlined_call_operand.vmem [shape: f32[32,96], index: 5, kind: input, shape index: {}]
  %s6 = inlined_call_operand.vmem [shape: f32[32,96], index: 6, kind: input, shape index: {}]
  %s7 = inlined_call_operand.vmem [shape: f32[32,96], index: 7, kind: input, shape index: {}]
  %s8 = inlined_call_operand.vmem [shape: f32[1,96], index: 8, kind: input, shape index: {}]
  %s9 = inlined_call_operand.vmem [shape: f32[1,96], index: 9, kind: input, shape index: {}]
  %s10 = inlined_call_operand.vmem [shape: f32[32,96], index: 10, kind: input, shape index: {}]
  %s11 = inlined_call_operand.vmem [shape: f32[32,96], index: 11, kind: input, shape index: {}]
  %s12 = inlined_call_operand.vmem [shape: f32[2,1,32], index: 12, kind: input, shape index: {}]
  %s13 = inlined_call_operand.vmem [shape: f32[64,32], index: 13, kind: output, shape index: {0}]
  %s14 = inlined_call_operand.vmem [shape: f32[64,32], index: 14, kind: output, shape index: {1}]
  %15 = xla_tuple %s13, %s14
  %s16 = sld [smem:[#allocation0]]
  $region74: #{sentiment_bigru_forward.4} parent=0
    _
  %s18 = ssub.s32 1, %s16
  %s19 = scalar_select 0, %s18, %s16
  // Predicated region
  $region2: #{sentiment_bigru_forward.4} parent=0 // pred_check
    _
  $region3: #{sentiment_bigru_forward.4} parent=0 // pred_check_branch
    %21 = sbr.rel (0) target = $region5
  $region4: #{sentiment_bigru_forward.4} parent=0 // pred_region
    _
  $region5: #{sentiment_bigru_forward.4} parent=0 // pred_fallthru
    _
  // Predicated region
  $region6: #{sentiment_bigru_forward.4} parent=0 // pred_check
    _
  $region7: #{sentiment_bigru_forward.4} parent=0 // pred_check_branch
    %23 = sbr.rel (0) target = $region9
  $region8: #{sentiment_bigru_forward.4} parent=0 // pred_region
    _
  $region9: #{sentiment_bigru_forward.4} parent=0 // pred_fallthru
    _
  // Predicated region
  $region10: #{sentiment_bigru_forward.4} parent=0 // pred_check
    _
  $region11: #{sentiment_bigru_forward.4} parent=0 // pred_check_branch
    %25 = sbr.rel (0) target = $region13
  $region12: #{sentiment_bigru_forward.4} parent=0 // pred_region
    %s26 = ssub.s32 0, 0
    %s27 = smul.u32 8, %s26
    %p28 = scmp.lt.s32.totalorder %s27, 7
    %s29 = scalar_select %p28, %s27, 7
    %s30 = smul.addr %s29, 8
    %s31 = scalar_lea.vmem %s2, %s30
    %s32 = ssub.s32 0, 0
    %s33 = smul.u32 8, %s32
  $region13: #{sentiment_bigru_forward.4} parent=0 // pred_fallthru
    _
  // Predicated region
  $region14: #{sentiment_bigru_forward.4} parent=0 // pred_check
    _
  $region15: #{sentiment_bigru_forward.4} parent=0 // pred_check_branch
    %35 = sbr.rel (0) target = $region17
  $region16: #{sentiment_bigru_forward.4} parent=0 // pred_region
    %s36 = ssub.s32 0, 0
    %s37 = smul.u32 8, %s36
    %p38 = scmp.lt.s32.totalorder %s37, 7
    %s39 = scalar_select %p38, %s37, 7
    %s40 = smul.addr %s39, 8
    %s41 = scalar_lea.vmem %s3, %s40
    %s42 = ssub.s32 0, 0
    %s43 = smul.u32 8, %s42
  $region17: #{sentiment_bigru_forward.4} parent=0 // pred_fallthru
    _
  // Predicated region
  $region18: #{sentiment_bigru_forward.4} parent=0 // pred_check
    _
  $region19: #{sentiment_bigru_forward.4} parent=0 // pred_check_branch
    %45 = sbr.rel (0) target = $region21
  $region20: #{sentiment_bigru_forward.4} parent=0 // pred_region
    _
  $region21: #{sentiment_bigru_forward.4} parent=0 // pred_fallthru
    _
  // Predicated region
  $region22: #{sentiment_bigru_forward.4} parent=0 // pred_check
    _
  $region23: #{sentiment_bigru_forward.4} parent=0 // pred_check_branch
    %47 = sbr.rel (0) target = $region25
  $region24: #{sentiment_bigru_forward.4} parent=0 // pred_region
    _
  $region25: #{sentiment_bigru_forward.4} parent=0 // pred_fallthru
    _
  // Predicated region
  $region26: #{sentiment_bigru_forward.4} parent=0 // pred_check
    _
  $region27: #{sentiment_bigru_forward.4} parent=0 // pred_check_branch
    %49 = sbr.rel (0) target = $region29
  $region28: #{sentiment_bigru_forward.4} parent=0 // pred_region
    _
  $region29: #{sentiment_bigru_forward.4} parent=0 // pred_fallthru
    _
  // Predicated region
  $region30: #{sentiment_bigru_forward.4} parent=0 // pred_check
    _
  $region31: #{sentiment_bigru_forward.4} parent=0 // pred_check_branch
    %51 = sbr.rel (0) target = $region33
  $region32: #{sentiment_bigru_forward.4} parent=0 // pred_region
    _
  $region33: #{sentiment_bigru_forward.4} parent=0 // pred_fallthru
    _
  // Predicated region
  $region34: #{sentiment_bigru_forward.4} parent=0 // pred_check
    _
  $region35: #{sentiment_bigru_forward.4} parent=0 // pred_check_branch
    %53 = sbr.rel (0) target = $region37
  $region36: #{sentiment_bigru_forward.4} parent=0 // pred_region
    _
  $region37: #{sentiment_bigru_forward.4} parent=0 // pred_fallthru
    _
  // Predicated region
  $region38: #{sentiment_bigru_forward.4} parent=0 // pred_check
    _
  $region39: #{sentiment_bigru_forward.4} parent=0 // pred_check_branch
    %55 = sbr.rel (0) target = $region41
  $region40: #{sentiment_bigru_forward.4} parent=0 // pred_region
    _
  $region41: #{sentiment_bigru_forward.4} parent=0 // pred_fallthru
    _
  // Predicated region
  $region42: #{sentiment_bigru_forward.4} parent=0 // pred_check
    _
  $region43: #{sentiment_bigru_forward.4} parent=0 // pred_check_branch
    %57 = sbr.rel (0) target = $region45
  $region44: #{sentiment_bigru_forward.4} parent=0 // pred_region
    _
  $region45: #{sentiment_bigru_forward.4} parent=0 // pred_fallthru
    _
  // Predicated region
  $region46: #{sentiment_bigru_forward.4} parent=0 // pred_check
    _
  $region47: #{sentiment_bigru_forward.4} parent=0 // pred_check_branch
    %59 = sbr.rel (0) target = $region49
  $region48: #{sentiment_bigru_forward.4} parent=0 // pred_region
    _
  $region49: #{sentiment_bigru_forward.4} parent=0 // pred_fallthru
    _
  // Predicated region
  $region50: #{sentiment_bigru_forward.4} parent=0 // pred_check
    _
  $region51: #{sentiment_bigru_forward.4} parent=0 // pred_check_branch
    %61 = sbr.rel (0) target = $region53
  $region52: #{sentiment_bigru_forward.4} parent=0 // pred_region
    _
  $region53: #{sentiment_bigru_forward.4} parent=0 // pred_fallthru
    _
  %s62 = ssub.s32 0, 0
  %s63 = smul.u32 8, %s62
  %p64 = scmp.lt.s32.totalorder %s63, 7
  %s65 = scalar_select %p64, %s63, 7
  %s66 = smul.addr %s65, 8
  %s67 = scalar_lea.vmem %s2, %s66
  %s68 = ssub.s32 0, 0
  %s69 = smul.u32 8, %s68
  %p70 = scmp.lt.s32.totalorder %s69, 7
  %s71 = scalar_select %p70, %s69, 7
  %s72 = smul.addr %s71, 8
  %s73 = scalar_lea.vmem %s3, %s72
  %s74 = ssub.s32 0, 0
  %s75 = smul.u32 8, %s74
  %p76 = scmp.lt.s32.totalorder %s75, 7
  %s77 = scalar_select %p76, %s75, 7
  %s78 = smul.addr %s77, 8
  %s79 = scalar_lea.vmem %s14, %s78
  %s80 = ssub.s32 0, 0
  %s81 = smul.u32 8, %s80
  %p82 = scmp.lt.s32.totalorder %s81, 7
  %s83 = scalar_select %p82, %s81, 7
  %s84 = smul.addr %s83, 8
  %s85 = scalar_lea.vmem %s2, %s84
  %s86 = ssub.s32 0, 0
  %s87 = smul.u32 8, %s86
  %s88 = ssub.s32 0, 0
  %s89 = smul.u32 8, %s88
  %p90 = scmp.lt.s32.totalorder %s89, 7
  %s91 = scalar_select %p90, %s89, 7
  %s92 = smul.addr %s91, 8
  %s93 = scalar_lea.vmem %s3, %s92
  %s94 = ssub.s32 0, 0
  %s95 = smul.u32 8, %s94
  %s96 = ssub.s32 0, 0
  %s97 = smul.u32 8, %s96
  %p98 = scmp.lt.s32.totalorder %s97, 7
  %s99 = scalar_select %p98, %s97, 7
  %s100 = smul.addr %s99, 8
  %s101 = scalar_lea.vmem %s14, %s100
  %s102 = ssub.s32 0, 0
  %s103 = smul.u32 8, %s102
  %p104 = scmp.eq.s32.totalorder 0, 0
  // Predicated region
  $region54: #{sentiment_bigru_forward.4} parent=0 // pred_check
    %p105 = pneg %p104
  $region55: #{sentiment_bigru_forward.4} parent=0 // pred_check_branch
    %107 = sbr.rel (%p105) target = $region57
  $region56: #{sentiment_bigru_forward.4} parent=0 // pred_region
    %vm108 = vcmask 261120
    %109 = vst.msk [vmem:[#allocation4] sm:$0xff] %vm108, 0.0
    %110 = vst.msk [vmem:[#allocation5] sm:$0xff] %vm108, 0.0
  $region57: #{sentiment_bigru_forward.4} parent=0 // pred_fallthru
    _
  %v111 = vld [vmem:[%s8] sm:$0x1]
  %v112 = vld [vmem:[%s0] sm:$0xff]
  %v113 = vld [vmem:[%s0 + $0x8] sm:$0xff]
  %v114 = vld [vmem:[%s0 + $0x10] sm:$0xff]
  %v115 = vld [vmem:[%s0 + $0x18] sm:$0xff]
  %v116 = vld [vmem:[%s0 + $0x20] sm:$0xff]
  %v117 = vld [vmem:[%s0 + $0x28] sm:$0xff]
  %v118 = vld [vmem:[%s0 + $0x30] sm:$0xff]
  %v119 = vld [vmem:[%s0 + $0x38] sm:$0xff]
  %v120 = vld [vmem:[%s4] sm:$0xff]
  %v121 = vld [vmem:[%s4 + $0x8] sm:$0xff]
  %v122 = vld [vmem:[%s4 + $0x10] sm:$0xff]
  %v123 = vld [vmem:[%s4 + $0x18] sm:$0xff]
  %vm124 = vcmask 261120
  %v126 = vsel %vm124, %v112, 0
  %v129 = vsel %vm124, %v113, 0
  %v132 = vsel %vm124, %v114, 0
  %v135 = vsel %vm124, %v115, 0
  %v138 = vsel %vm124, %v116, 0
  %v141 = vsel %vm124, %v117, 0
  %v144 = vsel %vm124, %v118, 0
  %v147 = vsel %vm124, %v119, 0
  %149 = vmatprep.subr.mxu0 0.0
  %150 = vmatpush1.msra.mxu0 %v120
  %151 = vmatprep.subr.mxu0 0.0
  %152 = vmatpush1.msra.mxu0 %v121
  %153 = vmatprep.subr.mxu0 0.0
  %154 = vmatpush1.msra.mxu0 %v122
  %155 = vmatprep.subr.mxu0 0.0
  %156 = vmatpush1.msra.mxu0 %v123
  %157 = vmatprep.subr.mxu0 0.0
  %158 = vmatpush1.msra.mxu0 0.0
  %159 = vmatprep.subr.mxu0 0.0
  %160 = vmatpush1.msra.mxu0 0.0
  %161 = vmatprep.subr.mxu0 0.0
  %162 = vmatpush1.msra.mxu0 0.0
  %163 = vmatprep.subr.mxu0 0.0
  %164 = vmatpush1.msra.mxu0 0.0
  %165 = vmatprep.subr.mxu0 0.0
  %166 = vmatpush1.msra.mxu0 0.0
  %167 = vmatprep.subr.mxu0 0.0
  %168 = vmatpush1.msra.mxu0 0.0
  %169 = vmatprep.subr.mxu0 0.0
  %170 = vmatpush1.msra.mxu0 0.0
  %171 = vmatprep.subr.mxu0 0.0
  %172 = vmatpush1.msra.mxu0 0.0
  %173 = vmatprep.subr.mxu0 0.0
  %174 = vmatpush1.msra.mxu0 0.0
  %175 = vmatprep.subr.mxu0 0.0
  %176 = vmatpush1.msra.mxu0 0.0
  %177 = vmatprep.subr.mxu0 0.0
  %178 = vmatpush1.msra.mxu0 0.0
  %179 = vmatprep.subr.mxu0 0.0
  %180 = vmatpush1.msra.mxu0 0.0
  %181 = vmatprep.subr.mxu0 0.0
  %182 = vmatpush1.msra.mxu0 0.0
  %183 = vmatprep.subr.mxu0 0.0
  %184 = vmatpush1.msra.mxu0 0.0
  %185 = vmatprep.subr.mxu0 0.0
  %186 = vmatpush1.msra.mxu0 0.0
  %187 = vmatprep.subr.mxu0 0.0
  %188 = vmatpush1.msra.mxu0 0.0
  %189 = vmatprep.subr.mxu0 0.0
  %190 = vmatpush1.msra.mxu0 0.0
  %191 = vmatprep.subr.mxu0 0.0
  %192 = vmatpush1.msra.mxu0 0.0
  %193 = vmatprep.subr.mxu0 0.0
  %194 = vmatpush1.msra.mxu0 0.0
  %195 = vmatprep.subr.mxu0 0.0
  %196 = vmatpush1.msra.mxu0 0.0
  %197 = vmatprep.subr.mxu0 0.0
  %198 = vmatpush1.msra.mxu0 0.0
  %199 = vmatprep.subr.mxu0 0.0
  %200 = vmatpush1.msra.mxu0 0.0
  %201 = vmatprep.subr.mxu0 0.0
  %202 = vmatpush1.msra.mxu0 0.0
  %203 = vmatprep.subr.mxu0 0.0
  %204 = vmatpush1.msra.mxu0 0.0
  %205 = vmatprep.subr.mxu0 0.0
  %206 = vmatpush1.msra.mxu0 0.0
  %207 = vmatprep.subr.mxu0 0.0
  %208 = vmatpush1.msra.mxu0 0.0
  %209 = vmatprep.subr.mxu0 0.0
  %210 = vmatpush1.msra.mxu0 0.0
  %211 = vmatprep.subr.mxu0 0.0
  %212 = vmatpush1.msra.mxu0 0.0
  %213 = vmatprep.mubr.f32.mxu0 0.0
  %214 = vmatmul.mubr.f32.gmra.mrb[0].mxu0 %v126
  %v215 = vpop.f32.mrb[0].mxu0
  %v216 = vadd.f32 0.0, %v215
  %v217 = vpop.f32.mrb[0].mxu0
  %218 = vmatprep.mubr.f32.mxu0 0.0
  %219 = vmatmul.mubr.f32.gmra.mrb[0].mxu0 %v129
  %v220 = vpop.f32.mrb[0].mxu0
  %v221 = vadd.f32 0.0, %v220
  %v222 = vpop.f32.mrb[0].mxu0
  %223 = vmatprep.mubr.f32.mxu0 0.0
  %224 = vmatmul.mubr.f32.gmra.mrb[0].mxu0 %v132
  %v225 = vpop.f32.mrb[0].mxu0
  %v226 = vadd.f32 0.0, %v225
  %v227 = vpop.f32.mrb[0].mxu0
  %228 = vmatprep.mubr.f32.mxu0 0.0
  %229 = vmatmul.mubr.f32.gmra.mrb[0].mxu0 %v135
  %v230 = vpop.f32.mrb[0].mxu0
  %v231 = vadd.f32 0.0, %v230
  %v232 = vpop.f32.mrb[0].mxu0
  %233 = vmatprep.mubr.f32.mxu0 0.0
  %234 = vmatmul.mubr.f32.gmra.mrb[0].mxu0 %v138
  %v235 = vpop.f32.mrb[0].mxu0
  %v236 = vadd.f32 0.0, %v235
  %v237 = vpop.f32.mrb[0].mxu0
  %238 = vmatprep.mubr.f32.mxu0 0.0
  %239 = vmatmul.mubr.f32.gmra.mrb[0].mxu0 %v141
  %v240 = vpop.f32.mrb[0].mxu0
  %v241 = vadd.f32 0.0, %v240
  %v242 = vpop.f32.mrb[0].mxu0
  %243 = vmatprep.mubr.f32.mxu0 0.0
  %244 = vmatmul.mubr.f32.gmra.mrb[0].mxu0 %v144
  %v245 = vpop.f32.mrb[0].mxu0
  %v246 = vadd.f32 0.0, %v245
  %v247 = vpop.f32.mrb[0].mxu0
  %248 = vmatprep.mubr.f32.mxu0 0.0
  %249 = vmatmul.mubr.f32.gmra.mrb[0].mxu0 %v147
  %v250 = vpop.f32.mrb[0].mxu0
  %v251 = vadd.f32 0.0, %v250
  %v252 = vpop.f32.mrb[0].mxu0
  %253 = vdwg.mxu0
  %v255 = vlaneseq
  %v256 = vshrl.u32 %v255, 7
  %v257 = vsub.s32 0, %v256
  %v258 = vrot.slane %v111, %v257
  %v260 = vadd.f32 %v258, %v216
  %v261 = vadd.f32 %v258, %v221
  %v262 = vadd.f32 %v258, %v226
  %v263 = vadd.f32 %v258, %v231
  %v264 = vadd.f32 %v258, %v236
  %v265 = vadd.f32 %v258, %v241
  %v266 = vadd.f32 %v258, %v246
  %v267 = vadd.f32 %v258, %v251
  %v268 = vld [vmem:[%s1] sm:$0xff]
  %v269 = vld [vmem:[%s1 + $0x8] sm:$0xff]
  %v270 = vld [vmem:[%s1 + $0x10] sm:$0xff]
  %v271 = vld [vmem:[%s1 + $0x18] sm:$0xff]
  %v272 = vld [vmem:[%s1 + $0x20] sm:$0xff]
  %v273 = vld [vmem:[%s1 + $0x28] sm:$0xff]
  %v274 = vld [vmem:[%s1 + $0x30] sm:$0xff]
  %v275 = vld [vmem:[%s1 + $0x38] sm:$0xff]
  %v276 = vld [vmem:[%s5] sm:$0xff]
  %v277 = vld [vmem:[%s5 + $0x8] sm:$0xff]
  %v278 = vld [vmem:[%s5 + $0x10] sm:$0xff]
  %v279 = vld [vmem:[%s5 + $0x18] sm:$0xff]
  %v281 = vsel %vm124, %v268, 0
  %v284 = vsel %vm124, %v269, 0
  %v287 = vsel %vm124, %v270, 0
  %v290 = vsel %vm124, %v271, 0
  %v293 = vsel %vm124, %v272, 0
  %v296 = vsel %vm124, %v273, 0
  %v299 = vsel %vm124, %v274, 0
  %v302 = vsel %vm124, %v275, 0
  %304 = vmatprep.subr.mxu0 0.0
  %305 = vmatpush1.msra.mxu0 %v276
  %306 = vmatprep.subr.mxu0 0.0
  %307 = vmatpush1.msra.mxu0 %v277
  %308 = vmatprep.subr.mxu0 0.0
  %309 = vmatpush1.msra.mxu0 %v278
  %310 = vmatprep.subr.mxu0 0.0
  %311 = vmatpush1.msra.mxu0 %v279
  %312 = vmatprep.subr.mxu0 0.0
  %313 = vmatpush1.msra.mxu0 0.0
  %314 = vmatprep.subr.mxu0 0.0
  %315 = vmatpush1.msra.mxu0 0.0
  %316 = vmatprep.subr.mxu0 0.0
  %317 = vmatpush1.msra.mxu0 0.0
  %318 = vmatprep.subr.mxu0 0.0
  %319 = vmatpush1.msra.mxu0 0.0
  %320 = vmatprep.subr.mxu0 0.0
  %321 = vmatpush1.msra.mxu0 0.0
  %322 = vmatprep.subr.mxu0 0.0
  %323 = vmatpush1.msra.mxu0 0.0
  %324 = vmatprep.subr.mxu0 0.0
  %325 = vmatpush1.msra.mxu0 0.0
  %326 = vmatprep.subr.mxu0 0.0
  %327 = vmatpush1.msra.mxu0 0.0
  %328 = vmatprep.subr.mxu0 0.0
  %329 = vmatpush1.msra.mxu0 0.0
  %330 = vmatprep.subr.mxu0 0.0
  %331 = vmatpush1.msra.mxu0 0.0
  %332 = vmatprep.subr.mxu0 0.0
  %333 = vmatpush1.msra.mxu0 0.0
  %334 = vmatprep.subr.mxu0 0.0
  %335 = vmatpush1.msra.mxu0 0.0
  %336 = vmatprep.subr.mxu0 0.0
  %337 = vmatpush1.msra.mxu0 0.0
  %338 = vmatprep.subr.mxu0 0.0
  %339 = vmatpush1.msra.mxu0 0.0
  %340 = vmatprep.subr.mxu0 0.0
  %341 = vmatpush1.msra.mxu0 0.0
  %342 = vmatprep.subr.mxu0 0.0
  %343 = vmatpush1.msra.mxu0 0.0
  %344 = vmatprep.subr.mxu0 0.0
  %345 = vmatpush1.msra.mxu0 0.0
  %346 = vmatprep.subr.mxu0 0.0
  %347 = vmatpush1.msra.mxu0 0.0
  %348 = vmatprep.subr.mxu0 0.0
  %349 = vmatpush1.msra.mxu0 0.0
  %350 = vmatprep.subr.mxu0 0.0
  %351 = vmatpush1.msra.mxu0 0.0
  %352 = vmatprep.subr.mxu0 0.0
  %353 = vmatpush1.msra.mxu0 0.0
  %354 = vmatprep.subr.mxu0 0.0
  %355 = vmatpush1.msra.mxu0 0.0
  %356 = vmatprep.subr.mxu0 0.0
  %357 = vmatpush1.msra.mxu0 0.0
  %358 = vmatprep.subr.mxu0 0.0
  %359 = vmatpush1.msra.mxu0 0.0
  %360 = vmatprep.subr.mxu0 0.0
  %361 = vmatpush1.msra.mxu0 0.0
  %362 = vmatprep.subr.mxu0 0.0
  %363 = vmatpush1.msra.mxu0 0.0
  %364 = vmatprep.subr.mxu0 0.0
  %365 = vmatpush1.msra.mxu0 0.0
  %366 = vmatprep.subr.mxu0 0.0
  %367 = vmatpush1.msra.mxu0 0.0
  %368 = vmatprep.mubr.f32.mxu0 0.0
  %369 = vmatmul.mubr.f32.gmra.mrb[0].mxu0 %v281
  %v370 = vpop.f32.mrb[0].mxu0
  %v371 = vadd.f32 0.0, %v370
  %v372 = vpop.f32.mrb[0].mxu0
  %373 = vmatprep.mubr.f32.mxu0 0.0
  %374 = vmatmul.mubr.f32.gmra.mrb[0].mxu0 %v284
  %v375 = vpop.f32.mrb[0].mxu0
  %v376 = vadd.f32 0.0, %v375
  %v377 = vpop.f32.mrb[0].mxu0
  %378 = vmatprep.mubr.f32.mxu0 0.0
  %379 = vmatmul.mubr.f32.gmra.mrb[0].mxu0 %v287
  %v380 = vpop.f32.mrb[0].mxu0
  %v381 = vadd.f32 0.0, %v380
  %v382 = vpop.f32.mrb[0].mxu0
  %383 = vmatprep.mubr.f32.mxu0 0.0
  %384 = vmatmul.mubr.f32.gmra.mrb[0].mxu0 %v290
  %v385 = vpop.f32.mrb[0].mxu0
  %v386 = vadd.f32 0.0, %v385
  %v387 = vpop.f32.mrb[0].mxu0
  %388 = vmatprep.mubr.f32.mxu0 0.0
  %389 = vmatmul.mubr.f32.gmra.mrb[0].mxu0 %v293
  %v390 = vpop.f32.mrb[0].mxu0
  %v391 = vadd.f32 0.0, %v390
  %v392 = vpop.f32.mrb[0].mxu0
  %393 = vmatprep.mubr.f32.mxu0 0.0
  %394 = vmatmul.mubr.f32.gmra.mrb[0].mxu0 %v296
  %v395 = vpop.f32.mrb[0].mxu0
  %v396 = vadd.f32 0.0, %v395
  %v397 = vpop.f32.mrb[0].mxu0
  %398 = vmatprep.mubr.f32.mxu0 0.0
  %399 = vmatmul.mubr.f32.gmra.mrb[0].mxu0 %v299
  %v400 = vpop.f32.mrb[0].mxu0
  %v401 = vadd.f32 0.0, %v400
  %v402 = vpop.f32.mrb[0].mxu0
  %403 = vmatprep.mubr.f32.mxu0 0.0
  %404 = vmatmul.mubr.f32.gmra.mrb[0].mxu0 %v302
  %v405 = vpop.f32.mrb[0].mxu0
  %v406 = vadd.f32 0.0, %v405
  %v407 = vpop.f32.mrb[0].mxu0
  %408 = vdwg.mxu0
  %v409 = vadd.f32 %v260, %v371
  %v410 = vadd.f32 %v261, %v376
  %v411 = vadd.f32 %v262, %v381
  %v412 = vadd.f32 %v263, %v386
  %v413 = vadd.f32 %v264, %v391
  %v414 = vadd.f32 %v265, %v396
  %v415 = vadd.f32 %v266, %v401
  %v416 = vadd.f32 %v267, %v406
  %vm417 = vcmask 785408
  %418 = vst.msk [vmem:[#allocation2] sm:$0xff] %vm417, %v409
  %419 = vst.msk [vmem:[#allocation2 + $0x8] sm:$0xff] %vm417, %v410
  %420 = vst.msk [vmem:[#allocation2 + $0x10] sm:$0xff] %vm417, %v411
  %421 = vst.msk [vmem:[#allocation2 + $0x18] sm:$0xff] %vm417, %v412
  %422 = vst.msk [vmem:[#allocation2 + $0x20] sm:$0xff] %vm417, %v413
  %423 = vst.msk [vmem:[#allocation2 + $0x28] sm:$0xff] %vm417, %v414
  %424 = vst.msk [vmem:[#allocation2 + $0x30] sm:$0xff] %vm417, %v415
  %425 = vst.msk [vmem:[#allocation2 + $0x38] sm:$0xff] %vm417, %v416
  %v426 = vld [vmem:[%s9] sm:$0x1]
  %v427 = vld [vmem:[%s85] sm:$0xff]
  %v428 = vld [vmem:[%s85 + $0x8] sm:$0xff]
  %v429 = vld [vmem:[%s85 + $0x10] sm:$0xff]
  %v430 = vld [vmem:[%s85 + $0x18] sm:$0xff]
  %v431 = vld [vmem:[%s85 + $0x20] sm:$0xff]
  %v432 = vld [vmem:[%s85 + $0x28] sm:$0xff]
  %v433 = vld [vmem:[%s85 + $0x30] sm:$0xff]
  %v434 = vld [vmem:[%s85 + $0x38] sm:$0xff]
  %v435 = vld [vmem:[%s6] sm:$0xff]
  %v436 = vld [vmem:[%s6 + $0x8] sm:$0xff]
  %v437 = vld [vmem:[%s6 + $0x10] sm:$0xff]
  %v438 = vld [vmem:[%s6 + $0x18] sm:$0xff]
  %v440 = vsel %vm124, %v427, 0
  %v443 = vsel %vm124, %v428, 0
  %v446 = vsel %vm124, %v429, 0
  %v449 = vsel %vm124, %v430, 0
  %v452 = vsel %vm124, %v431, 0
  %v455 = vsel %vm124, %v432, 0
  %v458 = vsel %vm124, %v433, 0
  %v461 = vsel %vm124, %v434, 0
  %463 = vmatprep.subr.mxu0 0.0
  %464 = vmatpush1.msra.mxu0 %v435
  %465 = vmatprep.subr.mxu0 0.0
  %466 = vmatpush1.msra.mxu0 %v436
  %467 = vmatprep.subr.mxu0 0.0
  %468 = vmatpush1.msra.mxu0 %v437
  %469 = vmatprep.subr.mxu0 0.0
  %470 = vmatpush1.msra.mxu0 %v438
  %471 = vmatprep.subr.mxu0 0.0
  %472 = vmatpush1.msra.mxu0 0.0
  %473 = vmatprep.subr.mxu0 0.0
  %474 = vmatpush1.msra.mxu0 0.0
  %475 = vmatprep.subr.mxu0 0.0
  %476 = vmatpush1.msra.mxu0 0.0
  %477 = vmatprep.subr.mxu0 0.0
  %478 = vmatpush1.msra.mxu0 0.0
  %479 = vmatprep.subr.mxu0 0.0
  %480 = vmatpush1.msra.mxu0 0.0
  %481 = vmatprep.subr.mxu0 0.0
  %482 = vmatpush1.msra.mxu0 0.0
  %483 = vmatprep.subr.mxu0 0.0
  %484 = vmatpush1.msra.mxu0 0.0
  %485 = vmatprep.subr.mxu0 0.0
  %486 = vmatpush1.msra.mxu0 0.0
  %487 = vmatprep.subr.mxu0 0.0
  %488 = vmatpush1.msra.mxu0 0.0
  %489 = vmatprep.subr.mxu0 0.0
  %490 = vmatpush1.msra.mxu0 0.0
  %491 = vmatprep.subr.mxu0 0.0
  %492 = vmatpush1.msra.mxu0 0.0
  %493 = vmatprep.subr.mxu0 0.0
  %494 = vmatpush1.msra.mxu0 0.0
  %495 = vmatprep.subr.mxu0 0.0
  %496 = vmatpush1.msra.mxu0 0.0
  %497 = vmatprep.subr.mxu0 0.0
  %498 = vmatpush1.msra.mxu0 0.0
  %499 = vmatprep.subr.mxu0 0.0
  %500 = vmatpush1.msra.mxu0 0.0
  %501 = vmatprep.subr.mxu0 0.0
  %502 = vmatpush1.msra.mxu0 0.0
  %503 = vmatprep.subr.mxu0 0.0
  %504 = vmatpush1.msra.mxu0 0.0
  %505 = vmatprep.subr.mxu0 0.0
  %506 = vmatpush1.msra.mxu0 0.0
  %507 = vmatprep.subr.mxu0 0.0
  %508 = vmatpush1.msra.mxu0 0.0
  %509 = vmatprep.subr.mxu0 0.0
  %510 = vmatpush1.msra.mxu0 0.0
  %511 = vmatprep.subr.mxu0 0.0
  %512 = vmatpush1.msra.mxu0 0.0
  %513 = vmatprep.subr.mxu0 0.0
  %514 = vmatpush1.msra.mxu0 0.0
  %515 = vmatprep.subr.mxu0 0.0
  %516 = vmatpush1.msra.mxu0 0.0
  %517 = vmatprep.subr.mxu0 0.0
  %518 = vmatpush1.msra.mxu0 0.0
  %519 = vmatprep.subr.mxu0 0.0
  %520 = vmatpush1.msra.mxu0 0.0
  %521 = vmatprep.subr.mxu0 0.0
  %522 = vmatpush1.msra.mxu0 0.0
  %523 = vmatprep.subr.mxu0 0.0
  %524 = vmatpush1.msra.mxu0 0.0
  %525 = vmatprep.subr.mxu0 0.0
  %526 = vmatpush1.msra.mxu0 0.0
  %527 = vmatprep.mubr.f32.mxu0 0.0
  %528 = vmatmul.mubr.f32.gmra.mrb[0].mxu0 %v440
  %v529 = vpop.f32.mrb[0].mxu0
  %v530 = vadd.f32 0.0, %v529
  %v531 = vpop.f32.mrb[0].mxu0
  %532 = vmatprep.mubr.f32.mxu0 0.0
  %533 = vmatmul.mubr.f32.gmra.mrb[0].mxu0 %v443
  %v534 = vpop.f32.mrb[0].mxu0
  %v535 = vadd.f32 0.0, %v534
  %v536 = vpop.f32.mrb[0].mxu0
  %537 = vmatprep.mubr.f32.mxu0 0.0
  %538 = vmatmul.mubr.f32.gmra.mrb[0].mxu0 %v446
  %v539 = vpop.f32.mrb[0].mxu0
  %v540 = vadd.f32 0.0, %v539
  %v541 = vpop.f32.mrb[0].mxu0
  %542 = vmatprep.mubr.f32.mxu0 0.0
  %543 = vmatmul.mubr.f32.gmra.mrb[0].mxu0 %v449
  %v544 = vpop.f32.mrb[0].mxu0
  %v545 = vadd.f32 0.0, %v544
  %v546 = vpop.f32.mrb[0].mxu0
  %547 = vmatprep.mubr.f32.mxu0 0.0
  %548 = vmatmul.mubr.f32.gmra.mrb[0].mxu0 %v452
  %v549 = vpop.f32.mrb[0].mxu0
  %v550 = vadd.f32 0.0, %v549
  %v551 = vpop.f32.mrb[0].mxu0
  %552 = vmatprep.mubr.f32.mxu0 0.0
  %553 = vmatmul.mubr.f32.gmra.mrb[0].mxu0 %v455
  %v554 = vpop.f32.mrb[0].mxu0
  %v555 = vadd.f32 0.0, %v554
  %v556 = vpop.f32.mrb[0].mxu0
  %557 = vmatprep.mubr.f32.mxu0 0.0
  %558 = vmatmul.mubr.f32.gmra.mrb[0].mxu0 %v458
  %v559 = vpop.f32.mrb[0].mxu0
  %v560 = vadd.f32 0.0, %v559
  %v561 = vpop.f32.mrb[0].mxu0
  %562 = vmatprep.mubr.f32.mxu0 0.0
  %563 = vmatmul.mubr.f32.gmra.mrb[0].mxu0 %v461
  %v564 = vpop.f32.mrb[0].mxu0
  %v565 = vadd.f32 0.0, %v564
  %v566 = vpop.f32.mrb[0].mxu0
  %567 = vdwg.mxu0
  %v569 = vlaneseq
  %v570 = vshrl.u32 %v569, 7
  %v571 = vsub.s32 0, %v570
  %v572 = vrot.slane %v426, %v571
  %v574 = vadd.f32 %v572, %v530
  %v575 = vadd.f32 %v572, %v535
  %v576 = vadd.f32 %v572, %v540
  %v577 = vadd.f32 %v572, %v545
  %v578 = vadd.f32 %v572, %v550
  %v579 = vadd.f32 %v572, %v555
  %v580 = vadd.f32 %v572, %v560
  %v581 = vadd.f32 %v572, %v565
  %v582 = vld [vmem:[%s93] sm:$0xff]
  %v583 = vld [vmem:[%s93 + $0x8] sm:$0xff]
  %v584 = vld [vmem:[%s93 + $0x10] sm:$0xff]
  %v585 = vld [vmem:[%s93 + $0x18] sm:$0xff]
  %v586 = vld [vmem:[%s93 + $0x20] sm:$0xff]
  %v587 = vld [vmem:[%s93 + $0x28] sm:$0xff]
  %v588 = vld [vmem:[%s93 + $0x30] sm:$0xff]
  %v589 = vld [vmem:[%s93 + $0x38] sm:$0xff]
  %v590 = vld [vmem:[%s7] sm:$0xff]
  %v591 = vld [vmem:[%s7 + $0x8] sm:$0xff]
  %v592 = vld [vmem:[%s7 + $0x10] sm:$0xff]
  %v593 = vld [vmem:[%s7 + $0x18] sm:$0xff]
  %v595 = vsel %vm124, %v582, 0
  %v598 = vsel %vm124, %v583, 0
  %v601 = vsel %vm124, %v584, 0
  %v604 = vsel %vm124, %v585, 0
  %v607 = vsel %vm124, %v586, 0
  %v610 = vsel %vm124, %v587, 0
  %v613 = vsel %vm124, %v588, 0
  %v616 = vsel %vm124, %v589, 0
  %618 = vmatprep.subr.mxu0 0.0
  %619 = vmatpush1.msra.mxu0 %v590
  %620 = vmatprep.subr.mxu0 0.0
  %621 = vmatpush1.msra.mxu0 %v591
  %622 = vmatprep.subr.mxu0 0.0
  %623 = vmatpush1.msra.mxu0 %v592
  %624 = vmatprep.subr.mxu0 0.0
  %625 = vmatpush1.msra.mxu0 %v593
  %626 = vmatprep.subr.mxu0 0.0
  %627 = vmatpush1.msra.mxu0 0.0
  %628 = vmatprep.subr.mxu0 0.0
  %629 = vmatpush1.msra.mxu0 0.0
  %630 = vmatprep.subr.mxu0 0.0
  %631 = vmatpush1.msra.mxu0 0.0
  %632 = vmatprep.subr.mxu0 0.0
  %633 = vmatpush1.msra.mxu0 0.0
  %634 = vmatprep.subr.mxu0 0.0
  %635 = vmatpush1.msra.mxu0 0.0
  %636 = vmatprep.subr.mxu0 0.0
  %637 = vmatpush1.msra.mxu0 0.0
  %638 = vmatprep.subr.mxu0 0.0
  %639 = vmatpush1.msra.mxu0 0.0
  %640 = vmatprep.subr.mxu0 0.0
  %641 = vmatpush1.msra.mxu0 0.0
  %642 = vmatprep.subr.mxu0 0.0
  %643 = vmatpush1.msra.mxu0 0.0
  %644 = vmatprep.subr.mxu0 0.0
  %645 = vmatpush1.msra.mxu0 0.0
  %646 = vmatprep.subr.mxu0 0.0
  %647 = vmatpush1.msra.mxu0 0.0
  %648 = vmatprep.subr.mxu0 0.0
  %649 = vmatpush1.msra.mxu0 0.0
  %650 = vmatprep.subr.mxu0 0.0
  %651 = vmatpush1.msra.mxu0 0.0
  %652 = vmatprep.subr.mxu0 0.0
  %653 = vmatpush1.msra.mxu0 0.0
  %654 = vmatprep.subr.mxu0 0.0
  %655 = vmatpush1.msra.mxu0 0.0
  %656 = vmatprep.subr.mxu0 0.0
  %657 = vmatpush1.msra.mxu0 0.0
  %658 = vmatprep.subr.mxu0 0.0
  %659 = vmatpush1.msra.mxu0 0.0
  %660 = vmatprep.subr.mxu0 0.0
  %661 = vmatpush1.msra.mxu0 0.0
  %662 = vmatprep.subr.mxu0 0.0
  %663 = vmatpush1.msra.mxu0 0.0
  %664 = vmatprep.subr.mxu0 0.0
  %665 = vmatpush1.msra.mxu0 0.0
  %666 = vmatprep.subr.mxu0 0.0
  %667 = vmatpush1.msra.mxu0 0.0
  %668 = vmatprep.subr.mxu0 0.0
  %669 = vmatpush1.msra.mxu0 0.0
  %670 = vmatprep.subr.mxu0 0.0
  %671 = vmatpush1.msra.mxu0 0.0
  %672 = vmatprep.subr.mxu0 0.0
  %673 = vmatpush1.msra.mxu0 0.0
  %674 = vmatprep.subr.mxu0 0.0
  %675 = vmatpush1.msra.mxu0 0.0
  %676 = vmatprep.subr.mxu0 0.0
  %677 = vmatpush1.msra.mxu0 0.0
  %678 = vmatprep.subr.mxu0 0.0
  %679 = vmatpush1.msra.mxu0 0.0
  %680 = vmatprep.subr.mxu0 0.0
  %681 = vmatpush1.msra.mxu0 0.0
  %682 = vmatprep.mubr.f32.mxu0 0.0
  %683 = vmatmul.mubr.f32.gmra.mrb[0].mxu0 %v595
  %v684 = vpop.f32.mrb[0].mxu0
  %v685 = vadd.f32 0.0, %v684
  %v686 = vpop.f32.mrb[0].mxu0
  %687 = vmatprep.mubr.f32.mxu0 0.0
  %688 = vmatmul.mubr.f32.gmra.mrb[0].mxu0 %v598
  %v689 = vpop.f32.mrb[0].mxu0
  %v690 = vadd.f32 0.0, %v689
  %v691 = vpop.f32.mrb[0].mxu0
  %692 = vmatprep.mubr.f32.mxu0 0.0
  %693 = vmatmul.mubr.f32.gmra.mrb[0].mxu0 %v601
  %v694 = vpop.f32.mrb[0].mxu0
  %v695 = vadd.f32 0.0, %v694
  %v696 = vpop.f32.mrb[0].mxu0
  %697 = vmatprep.mubr.f32.mxu0 0.0
  %698 = vmatmul.mubr.f32.gmra.mrb[0].mxu0 %v604
  %v699 = vpop.f32.mrb[0].mxu0
  %v700 = vadd.f32 0.0, %v699
  %v701 = vpop.f32.mrb[0].mxu0
  %702 = vmatprep.mubr.f32.mxu0 0.0
  %703 = vmatmul.mubr.f32.gmra.mrb[0].mxu0 %v607
  %v704 = vpop.f32.mrb[0].mxu0
  %v705 = vadd.f32 0.0, %v704
  %v706 = vpop.f32.mrb[0].mxu0
  %707 = vmatprep.mubr.f32.mxu0 0.0
  %708 = vmatmul.mubr.f32.gmra.mrb[0].mxu0 %v610
  %v709 = vpop.f32.mrb[0].mxu0
  %v710 = vadd.f32 0.0, %v709
  %v711 = vpop.f32.mrb[0].mxu0
  %712 = vmatprep.mubr.f32.mxu0 0.0
  %713 = vmatmul.mubr.f32.gmra.mrb[0].mxu0 %v613
  %v714 = vpop.f32.mrb[0].mxu0
  %v715 = vadd.f32 0.0, %v714
  %v716 = vpop.f32.mrb[0].mxu0
  %717 = vmatprep.mubr.f32.mxu0 0.0
  %718 = vmatmul.mubr.f32.gmra.mrb[0].mxu0 %v616
  %v719 = vpop.f32.mrb[0].mxu0
  %v720 = vadd.f32 0.0, %v719
  %v721 = vpop.f32.mrb[0].mxu0
  %722 = vdwg.mxu0
  %v723 = vadd.f32 %v574, %v685
  %v724 = vadd.f32 %v575, %v690
  %v725 = vadd.f32 %v576, %v695
  %v726 = vadd.f32 %v577, %v700
  %v727 = vadd.f32 %v578, %v705
  %v728 = vadd.f32 %v579, %v710
  %v729 = vadd.f32 %v580, %v715
  %v730 = vadd.f32 %v581, %v720
  %731 = vst.msk [vmem:[#allocation3] sm:$0xff] %vm417, %v723
  %732 = vst.msk [vmem:[#allocation3 + $0x8] sm:$0xff] %vm417, %v724
  %733 = vst.msk [vmem:[#allocation3 + $0x10] sm:$0xff] %vm417, %v725
  %734 = vst.msk [vmem:[#allocation3 + $0x18] sm:$0xff] %vm417, %v726
  %735 = vst.msk [vmem:[#allocation3 + $0x20] sm:$0xff] %vm417, %v727
  %736 = vst.msk [vmem:[#allocation3 + $0x28] sm:$0xff] %vm417, %v728
  %737 = vst.msk [vmem:[#allocation3 + $0x30] sm:$0xff] %vm417, %v729
  %738 = vst.msk [vmem:[#allocation3 + $0x38] sm:$0xff] %vm417, %v730
  %v739 = vld [vmem:[%s10] sm:$0xff]
  %v740 = vld [vmem:[%s10 + $0x8] sm:$0xff]
  %v741 = vld [vmem:[%s10 + $0x10] sm:$0xff]
  %v742 = vld [vmem:[%s10 + $0x18] sm:$0xff]
  %v743 = vld [vmem:[%s11] sm:$0xff]
  %v744 = vld [vmem:[%s11 + $0x8] sm:$0xff]
  %v745 = vld [vmem:[%s11 + $0x10] sm:$0xff]
  %v746 = vld [vmem:[%s11 + $0x18] sm:$0xff]
  %v747 = vld [vmem:[%s12] sm:$0x1]
  %v749 = vlaneseq
  %v750 = vshrl.u32 %v749, 7
  %v751 = vsub.s32 0, %v750
  %v752 = vrot.slane %v747, %v751
  %s753 = scalar_lea.vmem %s12, 1
  %v754 = vld [vmem:[%s753] sm:$0x1]
  %v756 = vlaneseq
  %v757 = vshrl.u32 %v756, 7
  %v758 = vsub.s32 0, %v757
  %v759 = vrot.slane %v754, %v758
  %v760 = vld [vmem:[#allocation4] sm:$0xff]
  %v761 = vld [vmem:[#allocation5] sm:$0xff]
  %v762 = vld [vmem:[#allocation2] sm:$0xff]
  %v764 = vsel %vm124, %v760, 0
  %766 = vmatprep.subr.mxu0 0.0
  %767 = vmatpush1.msra.mxu0 %v739
  %768 = vmatprep.subr.mxu0 0.0
  %769 = vmatpush1.msra.mxu0 %v740
  %770 = vmatprep.subr.mxu0 0.0
  %771 = vmatpush1.msra.mxu0 %v741
  %772 = vmatprep.subr.mxu0 0.0
  %773 = vmatpush1.msra.mxu0 %v742
  %774 = vmatprep.subr.mxu0 0.0
  %775 = vmatpush1.msra.mxu0 0.0
  %776 = vmatprep.subr.mxu0 0.0
  %777 = vmatpush1.msra.mxu0 0.0
  %778 = vmatprep.subr.mxu0 0.0
  %779 = vmatpush1.msra.mxu0 0.0
  %780 = vmatprep.subr.mxu0 0.0
  %781 = vmatpush1.msra.mxu0 0.0
  %782 = vmatprep.subr.mxu0 0.0
  %783 = vmatpush1.msra.mxu0 0.0
  %784 = vmatprep.subr.mxu0 0.0
  %785 = vmatpush1.msra.mxu0 0.0
  %786 = vmatprep.subr.mxu0 0.0
  %787 = vmatpush1.msra.mxu0 0.0
  %788 = vmatprep.subr.mxu0 0.0
  %789 = vmatpush1.msra.mxu0 0.0
  %790 = vmatprep.subr.mxu0 0.0
  %791 = vmatpush1.msra.mxu0 0.0
  %792 = vmatprep.subr.mxu0 0.0
  %793 = vmatpush1.msra.mxu0 0.0
  %794 = vmatprep.subr.mxu0 0.0
  %795 = vmatpush1.msra.mxu0 0.0
  %796 = vmatprep.subr.mxu0 0.0
  %797 = vmatpush1.msra.mxu0 0.0
  %798 = vmatprep.subr.mxu0 0.0
  %799 = vmatpush1.msra.mxu0 0.0
  %800 = vmatprep.subr.mxu0 0.0
  %801 = vmatpush1.msra.mxu0 0.0
  %802 = vmatprep.subr.mxu0 0.0
  %803 = vmatpush1.msra.mxu0 0.0
  %804 = vmatprep.subr.mxu0 0.0
  %805 = vmatpush1.msra.mxu0 0.0
  %806 = vmatprep.subr.mxu0 0.0
  %807 = vmatpush1.msra.mxu0 0.0
  %808 = vmatprep.subr.mxu0 0.0
  %809 = vmatpush1.msra.mxu0 0.0
  %810 = vmatprep.subr.mxu0 0.0
  %811 = vmatpush1.msra.mxu0 0.0
  %812 = vmatprep.subr.mxu0 0.0
  %813 = vmatpush1.msra.mxu0 0.0
  %814 = vmatprep.subr.mxu0 0.0
  %815 = vmatpush1.msra.mxu0 0.0
  %816 = vmatprep.subr.mxu0 0.0
  %817 = vmatpush1.msra.mxu0 0.0
  %818 = vmatprep.subr.mxu0 0.0
  %819 = vmatpush1.msra.mxu0 0.0
  %820 = vmatprep.subr.mxu0 0.0
  %821 = vmatpush1.msra.mxu0 0.0
  %822 = vmatprep.subr.mxu0 0.0
  %823 = vmatpush1.msra.mxu0 0.0
  %824 = vmatprep.subr.mxu0 0.0
  %825 = vmatpush1.msra.mxu0 0.0
  %826 = vmatprep.subr.mxu0 0.0
  %827 = vmatpush1.msra.mxu0 0.0
  %828 = vmatprep.subr.mxu0 0.0
  %829 = vmatpush1.msra.mxu0 0.0
  %830 = vmatprep.mubr.f32.mxu0 0.0
  %831 = vmatmul.mubr.f32.gmra.mrb[0].mxu0 %v764
  %v832 = vpop.f32.mrb[0].mxu0
  %v833 = vadd.f32 0.0, %v832
  %v834 = vpop.f32.mrb[0].mxu0
  %835 = vdwg.mxu0
  %v836 = vadd.f32 %v762, %v833
  %v837 = vxor.u32 %v836, 2147483648
  %v838 = vmul.f32 %v837, 1.442695
  %v839 = vpow.pop %v838
  %v840 = vadd.f32 %v839, 1.0
  %v841 = vrcp.pop %v840
  %v842 = vmul.f32 1.0, %v841
  %843 = vrot.lane.b32.xlu0 %v752, 64
  %v844 = vpop.permute.xlu0 %843
  %v846 = vadd.f32 %v833, %v844
  %848 = vrot.lane.b32.xlu0 %v846, 64
  %v849 = vpop.permute.xlu0 %848
  %v851 = vmul.f32 %v842, %v849
  %853 = vrot.lane.b32.xlu0 %v851, 64
  %v854 = vpop.permute.xlu0 %853
  %v856 = vadd.f32 %v762, %v854
  %v857 = vtanh.pop %v856
  %859 = vrot.lane.b32.xlu0 %v857, 64
  %v860 = vpop.permute.xlu0 %859
  %v862 = vsub.f32 %v760, %v860
  %864 = vrot.lane.b32.xlu0 %v862, 32
  %v865 = vpop.permute.xlu0 %864
  %v867 = vmul.f32 %v842, %v865
  %869 = vrot.lane.b32.xlu0 %v867, 32
  %v870 = vpop.permute.xlu0 %869
  %v872 = vadd.f32 %v857, %v870
  %s873 = scalar_lea.vmem [#allocation3], 56
  %v874 = vld [vmem:[%s873] sm:$0xff]
  %v876 = vsel %vm124, %v761, 0
  %878 = vmatprep.subr.mxu0 0.0
  %879 = vmatpush1.msra.mxu0 %v743
  %880 = vmatprep.subr.mxu0 0.0
  %881 = vmatpush1.msra.mxu0 %v744
  %882 = vmatprep.subr.mxu0 0.0
  %883 = vmatpush1.msra.mxu0 %v745
  %884 = vmatprep.subr.mxu0 0.0
  %885 = vmatpush1.msra.mxu0 %v746
  %886 = vmatprep.subr.mxu0 0.0
  %887 = vmatpush1.msra.mxu0 0.0
  %888 = vmatprep.subr.mxu0 0.0
  %889 = vmatpush1.msra.mxu0 0.0
  %890 = vmatprep.subr.mxu0 0.0
  %891 = vmatpush1.msra.mxu0 0.0
  %892 = vmatprep.subr.mxu0 0.0
  %893 = vmatpush1.msra.mxu0 0.0
  %894 = vmatprep.subr.mxu0 0.0
  %895 = vmatpush1.msra.mxu0 0.0
  %896 = vmatprep.subr.mxu0 0.0
  %897 = vmatpush1.msra.mxu0 0.0
  %898 = vmatprep.subr.mxu0 0.0
  %899 = vmatpush1.msra.mxu0 0.0
  %900 = vmatprep.subr.mxu0 0.0
  %901 = vmatpush1.msra.mxu0 0.0
  %902 = vmatprep.subr.mxu0 0.0
  %903 = vmatpush1.msra.mxu0 0.0
  %904 = vmatprep.subr.mxu0 0.0
  %905 = vmatpush1.msra.mxu0 0.0
  %906 = vmatprep.subr.mxu0 0.0
  %907 = vmatpush1.msra.mxu0 0.0
  %908 = vmatprep.subr.mxu0 0.0
  %909 = vmatpush1.msra.mxu0 0.0
  %910 = vmatprep.subr.mxu0 0.0
  %911 = vmatpush1.msra.mxu0 0.0
  %912 = vmatprep.subr.mxu0 0.0
  %913 = vmatpush1.msra.mxu0 0.0
  %914 = vmatprep.subr.mxu0 0.0
  %915 = vmatpush1.msra.mxu0 0.0
  %916 = vmatprep.subr.mxu0 0.0
  %917 = vmatpush1.msra.mxu0 0.0
  %918 = vmatprep.subr.mxu0 0.0
  %919 = vmatpush1.msra.mxu0 0.0
  %920 = vmatprep.subr.mxu0 0.0
  %921 = vmatpush1.msra.mxu0 0.0
  %922 = vmatprep.subr.mxu0 0.0
  %923 = vmatpush1.msra.mxu0 0.0
  %924 = vmatprep.subr.mxu0 0.0
  %925 = vmatpush1.msra.mxu0 0.0
  %926 = vmatprep.subr.mxu0 0.0
  %927 = vmatpush1.msra.mxu0 0.0
  %928 = vmatprep.subr.mxu0 0.0
  %929 = vmatpush1.msra.mxu0 0.0
  %930 = vmatprep.subr.mxu0 0.0
  %931 = vmatpush1.msra.mxu0 0.0
  %932 = vmatprep.subr.mxu0 0.0
  %933 = vmatpush1.msra.mxu0 0.0
  %934 = vmatprep.subr.mxu0 0.0
  %935 = vmatpush1.msra.mxu0 0.0
  %936 = vmatprep.subr.mxu0 0.0
  %937 = vmatpush1.msra.mxu0 0.0
  %938 = vmatprep.subr.mxu0 0.0
  %939 = vmatpush1.msra.mxu0 0.0
  %940 = vmatprep.subr.mxu0 0.0
  %941 = vmatpush1.msra.mxu0 0.0
  %942 = vmatprep.mubr.f32.mxu0 0.0
  %943 = vmatmul.mubr.f32.gmra.mrb[0].mxu0 %v876
  %v944 = vpop.f32.mrb[0].mxu0
  %v945 = vadd.f32 0.0, %v944
  %v946 = vpop.f32.mrb[0].mxu0
  %947 = vdwg.mxu0
  %v948 = vadd.f32 %v874, %v945
  %v949 = vxor.u32 %v948, 2147483648
  %v950 = vmul.f32 %v949, 1.442695
  %v951 = vpow.pop %v950
  %v952 = vadd.f32 %v951, 1.0
  %v953 = vrcp.pop %v952
  %v954 = vmul.f32 1.0, %v953
  %955 = vrot.lane.b32.xlu0 %v759, 64
  %v956 = vpop.permute.xlu0 %955
  %v958 = vadd.f32 %v945, %v956
  %960 = vrot.lane.b32.xlu0 %v958, 64
  %v961 = vpop.permute.xlu0 %960
  %v963 = vmul.f32 %v954, %v961
  %965 = vrot.lane.b32.xlu0 %v963, 64
  %v966 = vpop.permute.xlu0 %965
  %v968 = vadd.f32 %v874, %v966
  %v969 = vtanh.pop %v968
  %971 = vrot.lane.b32.xlu0 %v969, 64
  %v972 = vpop.permute.xlu0 %971
  %v974 = vsub.f32 %v761, %v972
  %976 = vrot.lane.b32.xlu0 %v974, 32
  %v977 = vpop.permute.xlu0 %976
  %v979 = vmul.f32 %v954, %v977
  %981 = vrot.lane.b32.xlu0 %v979, 32
  %v982 = vpop.permute.xlu0 %981
  %v984 = vadd.f32 %v969, %v982
  %986 = vrot.lane.b32.xlu0 %v872, 64
  %v987 = vpop.permute.xlu0 %986
  %989 = vst.msk [vmem:[%s13] sm:$0xff] %vm124, %v987
  %991 = vrot.lane.b32.xlu0 %v984, 64
  %v992 = vpop.permute.xlu0 %991
  %s994 = scalar_lea.vmem %s101, 56
  %995 = vst.msk [vmem:[%s994] sm:$0xff] %vm124, %v992
  %s996 = scalar_lea.vmem [#allocation2], 8
  %v997 = vld [vmem:[%s996] sm:$0xff]
  %v998 = vsel %vm124, %v987, 0
  %1000 = vmatprep.subr.mxu0 0.0
  %1001 = vmatpush1.msra.mxu0 %v739
  %1002 = vmatprep.subr.mxu0 0.0
  %1003 = vmatpush1.msra.mxu0 %v740
  %1004 = vmatprep.subr.mxu0 0.0
  %1005 = vmatpush1.msra.mxu0 %v741
  %1006 = vmatprep.subr.mxu0 0.0
  %1007 = vmatpush1.msra.mxu0 %v742
  %1008 = vmatprep.subr.mxu0 0.0
  %1009 = vmatpush1.msra.mxu0 0.0
  %1010 = vmatprep.subr.mxu0 0.0
  %1011 = vmatpush1.msra.mxu0 0.0
  %1012 = vmatprep.subr.mxu0 0.0
  %1013 = vmatpush1.msra.mxu0 0.0
  %1014 = vmatprep.subr.mxu0 0.0
  %1015 = vmatpush1.msra.mxu0 0.0
  %1016 = vmatprep.subr.mxu0 0.0
  %1017 = vmatpush1.msra.mxu0 0.0
  %1018 = vmatprep.subr.mxu0 0.0
  %1019 = vmatpush1.msra.mxu0 0.0
  %1020 = vmatprep.subr.mxu0 0.0
  %1021 = vmatpush1.msra.mxu0 0.0
  %1022 = vmatprep.subr.mxu0 0.0
  %1023 = vmatpush1.msra.mxu0 0.0
  %1024 = vmatprep.subr.mxu0 0.0
  %1025 = vmatpush1.msra.mxu0 0.0
  %1026 = vmatprep.subr.mxu0 0.0
  %1027 = vmatpush1.msra.mxu0 0.0
  %1028 = vmatprep.subr.mxu0 0.0
  %1029 = vmatpush1.msra.mxu0 0.0
  %1030 = vmatprep.subr.mxu0 0.0
  %1031 = vmatpush1.msra.mxu0 0.0
  %1032 = vmatprep.subr.mxu0 0.0
  %1033 = vmatpush1.msra.mxu0 0.0
  %1034 = vmatprep.subr.mxu0 0.0
  %1035 = vmatpush1.msra.mxu0 0.0
  %1036 = vmatprep.subr.mxu0 0.0
  %1037 = vmatpush1.msra.mxu0 0.0
  %1038 = vmatprep.subr.mxu0 0.0
  %1039 = vmatpush1.msra.mxu0 0.0
  %1040 = vmatprep.subr.mxu0 0.0
  %1041 = vmatpush1.msra.mxu0 0.0
  %1042 = vmatprep.subr.mxu0 0.0
  %1043 = vmatpush1.msra.mxu0 0.0
  %1044 = vmatprep.subr.mxu0 0.0
  %1045 = vmatpush1.msra.mxu0 0.0
  %1046 = vmatprep.subr.mxu0 0.0
  %1047 = vmatpush1.msra.mxu0 0.0
  %1048 = vmatprep.subr.mxu0 0.0
  %1049 = vmatpush1.msra.mxu0 0.0
  %1050 = vmatprep.subr.mxu0 0.0
  %1051 = vmatpush1.msra.mxu0 0.0
  %1052 = vmatprep.subr.mxu0 0.0
  %1053 = vmatpush1.msra.mxu0 0.0
  %1054 = vmatprep.subr.mxu0 0.0
  %1055 = vmatpush1.msra.mxu0 0.0
  %1056 = vmatprep.subr.mxu0 0.0
  %1057 = vmatpush1.msra.mxu0 0.0
  %1058 = vmatprep.subr.mxu0 0.0
  %1059 = vmatpush1.msra.mxu0 0.0
  %1060 = vmatprep.subr.mxu0 0.0
  %1061 = vmatpush1.msra.mxu0 0.0
  %1062 = vmatprep.subr.mxu0 0.0
  %1063 = vmatpush1.msra.mxu0 0.0
  %1064 = vmatprep.mubr.f32.mxu0 0.0
  %1065 = vmatmul.mubr.f32.gmra.mrb[0].mxu0 %v998
  %v1066 = vpop.f32.mrb[0].mxu0
  %v1067 = vadd.f32 0.0, %v1066
  %v1068 = vpop.f32.mrb[0].mxu0
  %1069 = vdwg.mxu0
  %v1070 = vadd.f32 %v997, %v1067
  %v1071 = vxor.u32 %v1070, 2147483648
  %v1072 = vmul.f32 %v1071, 1.442695
  %v1073 = vpow.pop %v1072
  %v1074 = vadd.f32 %v1073, 1.0
  %v1075 = vrcp.pop %v1074
  %v1076 = vmul.f32 1.0, %v1075
  %v1077 = vadd.f32 %v1067, %v844
  %1079 = vrot.lane.b32.xlu0 %v1077, 64
  %v1080 = vpop.permute.xlu0 %1079
  %v1082 = vmul.f32 %v1076, %v1080
  %1084 = vrot.lane.b32.xlu0 %v1082, 64
  %v1085 = vpop.permute.xlu0 %1084
  %v1087 = vadd.f32 %v997, %v1085
  %v1088 = vtanh.pop %v1087
  %v1089 = vsub.f32 %v872, %v1088
  %1091 = vrot.lane.b32.xlu0 %v1089, 96
  %v1092 = vpop.permute.xlu0 %1091
  %v1094 = vmul.f32 %v1076, %v1092
  %1096 = vrot.lane.b32.xlu0 %v1094, 32
  %v1097 = vpop.permute.xlu0 %1096
  %v1099 = vadd.f32 %v1088, %v1097
  %s1100 = scalar_lea.vmem [#allocation3], 48
  %v1101 = vld [vmem:[%s1100] sm:$0xff]
  %v1102 = vsel %vm124, %v992, 0
  %1104 = vmatprep.subr.mxu0 0.0
  %1105 = vmatpush1.msra.mxu0 %v743
  %1106 = vmatprep.subr.mxu0 0.0
  %1107 = vmatpush1.msra.mxu0 %v744
  %1108 = vmatprep.subr.mxu0 0.0
  %1109 = vmatpush1.msra.mxu0 %v745
  %1110 = vmatprep.subr.mxu0 0.0
  %1111 = vmatpush1.msra.mxu0 %v746
  %1112 = vmatprep.subr.mxu0 0.0
  %1113 = vmatpush1.msra.mxu0 0.0
  %1114 = vmatprep.subr.mxu0 0.0
  %1115 = vmatpush1.msra.mxu0 0.0
  %1116 = vmatprep.subr.mxu0 0.0
  %1117 = vmatpush1.msra.mxu0 0.0
  %1118 = vmatprep.subr.mxu0 0.0
  %1119 = vmatpush1.msra.mxu0 0.0
  %1120 = vmatprep.subr.mxu0 0.0
  %1121 = vmatpush1.msra.mxu0 0.0
  %1122 = vmatprep.subr.mxu0 0.0
  %1123 = vmatpush1.msra.mxu0 0.0
  %1124 = vmatprep.subr.mxu0 0.0
  %1125 = vmatpush1.msra.mxu0 0.0
  %1126 = vmatprep.subr.mxu0 0.0
  %1127 = vmatpush1.msra.mxu0 0.0
  %1128 = vmatprep.subr.mxu0 0.0
  %1129 = vmatpush1.msra.mxu0 0.0
  %1130 = vmatprep.subr.mxu0 0.0
  %1131 = vmatpush1.msra.mxu0 0.0
  %1132 = vmatprep.subr.mxu0 0.0
  %1133 = vmatpush1.msra.mxu0 0.0
  %1134 = vmatprep.subr.mxu0 0.0
  %1135 = vmatpush1.msra.mxu0 0.0
  %1136 = vmatprep.subr.mxu0 0.0
  %1137 = vmatpush1.msra.mxu0 0.0
  %1138 = vmatprep.subr.mxu0 0.0
  %1139 = vmatpush1.msra.mxu0 0.0
  %1140 = vmatprep.subr.mxu0 0.0
  %1141 = vmatpush1.msra.mxu0 0.0
  %1142 = vmatprep.subr.mxu0 0.0
  %1143 = vmatpush1.msra.mxu0 0.0
  %1144 = vmatprep.subr.mxu0 0.0
  %1145 = vmatpush1.msra.mxu0 0.0
  %1146 = vmatprep.subr.mxu0 0.0
  %1147 = vmatpush1.msra.mxu0 0.0
  %1148 = vmatprep.subr.mxu0 0.0
  %1149 = vmatpush1.msra.mxu0 0.0
  %1150 = vmatprep.subr.mxu0 0.0
  %1151 = vmatpush1.msra.mxu0 0.0
  %1152 = vmatprep.subr.mxu0 0.0
  %1153 = vmatpush1.msra.mxu0 0.0
  %1154 = vmatprep.subr.mxu0 0.0
  %1155 = vmatpush1.msra.mxu0 0.0
  %1156 = vmatprep.subr.mxu0 0.0
  %1157 = vmatpush1.msra.mxu0 0.0
  %1158 = vmatprep.subr.mxu0 0.0
  %1159 = vmatpush1.msra.mxu0 0.0
  %1160 = vmatprep.subr.mxu0 0.0
  %1161 = vmatpush1.msra.mxu0 0.0
  %1162 = vmatprep.subr.mxu0 0.0
  %1163 = vmatpush1.msra.mxu0 0.0
  %1164 = vmatprep.subr.mxu0 0.0
  %1165 = vmatpush1.msra.mxu0 0.0
  %1166 = vmatprep.subr.mxu0 0.0
  %1167 = vmatpush1.msra.mxu0 0.0
  %1168 = vmatprep.mubr.f32.mxu0 0.0
  %1169 = vmatmul.mubr.f32.gmra.mrb[0].mxu0 %v1102
  %v1170 = vpop.f32.mrb[0].mxu0
  %v1171 = vadd.f32 0.0, %v1170
  %v1172 = vpop.f32.mrb[0].mxu0
  %1173 = vdwg.mxu0
  %v1174 = vadd.f32 %v1101, %v1171
  %v1175 = vxor.u32 %v1174, 2147483648
  %v1176 = vmul.f32 %v1175, 1.442695
  %v1177 = vpow.pop %v1176
  %v1178 = vadd.f32 %v1177, 1.0
  %v1179 = vrcp.pop %v1178
  %v1180 = vmul.f32 1.0, %v1179
  %v1181 = vadd.f32 %v1171, %v956
  %1183 = vrot.lane.b32.xlu0 %v1181, 64
  %v1184 = vpop.permute.xlu0 %1183
  %v1186 = vmul.f32 %v1180, %v1184
  %1188 = vrot.lane.b32.xlu0 %v1186, 64
  %v1189 = vpop.permute.xlu0 %1188
  %v1191 = vadd.f32 %v1101, %v1189
  %v1192 = vtanh.pop %v1191
  %v1193 = vsub.f32 %v984, %v1192
  %1195 = vrot.lane.b32.xlu0 %v1193, 96
  %v1196 = vpop.permute.xlu0 %1195
  %v1198 = vmul.f32 %v1180, %v1196
  %1200 = vrot.lane.b32.xlu0 %v1198, 32
  %v1201 = vpop.permute.xlu0 %1200
  %v1203 = vadd.f32 %v1192, %v1201
  %1205 = vrot.lane.b32.xlu0 %v1099, 64
  %v1206 = vpop.permute.xlu0 %1205
  %s1208 = scalar_lea.vmem %s13, 8
  %1209 = vst.msk [vmem:[%s1208] sm:$0xff] %vm124, %v1206
  %1211 = vrot.lane.b32.xlu0 %v1203, 64
  %v1212 = vpop.permute.xlu0 %1211
  %s1214 = scalar_lea.vmem %s101, 48
  %1215 = vst.msk [vmem:[%s1214] sm:$0xff] %vm124, %v1212
  %s1216 = scalar_lea.vmem [#allocation2], 16
  %v1217 = vld [vmem:[%s1216] sm:$0xff]
  %v1218 = vsel %vm124, %v1206, 0
  %1220 = vmatprep.subr.mxu0 0.0
  %1221 = vmatpush1.msra.mxu0 %v739
  %1222 = vmatprep.subr.mxu0 0.0
  %1223 = vmatpush1.msra.mxu0 %v740
  %1224 = vmatprep.subr.mxu0 0.0
  %1225 = vmatpush1.msra.mxu0 %v741
  %1226 = vmatprep.subr.mxu0 0.0
  %1227 = vmatpush1.msra.mxu0 %v742
  %1228 = vmatprep.subr.mxu0 0.0
  %1229 = vmatpush1.msra.mxu0 0.0
  %1230 = vmatprep.subr.mxu0 0.0
  %1231 = vmatpush1.msra.mxu0 0.0
  %1232 = vmatprep.subr.mxu0 0.0
  %1233 = vmatpush1.msra.mxu0 0.0
  %1234 = vmatprep.subr.mxu0 0.0
  %1235 = vmatpush1.msra.mxu0 0.0
  %1236 = vmatprep.subr.mxu0 0.0
  %1237 = vmatpush1.msra.mxu0 0.0
  %1238 = vmatprep.subr.mxu0 0.0
  %1239 = vmatpush1.msra.mxu0 0.0
  %1240 = vmatprep.subr.mxu0 0.0
  %1241 = vmatpush1.msra.mxu0 0.0
  %1242 = vmatprep.subr.mxu0 0.0
  %1243 = vmatpush1.msra.mxu0 0.0
  %1244 = vmatprep.subr.mxu0 0.0
  %1245 = vmatpush1.msra.mxu0 0.0
  %1246 = vmatprep.subr.mxu0 0.0
  %1247 = vmatpush1.msra.mxu0 0.0
  %1248 = vmatprep.subr.mxu0 0.0
  %1249 = vmatpush1.msra.mxu0 0.0
  %1250 = vmatprep.subr.mxu0 0.0
  %1251 = vmatpush1.msra.mxu0 0.0
  %1252 = vmatprep.subr.mxu0 0.0
  %1253 = vmatpush1.msra.mxu0 0.0
  %1254 = vmatprep.subr.mxu0 0.0
  %1255 = vmatpush1.msra.mxu0 0.0
  %1256 = vmatprep.subr.mxu0 0.0
  %1257 = vmatpush1.msra.mxu0 0.0
  %1258 = vmatprep.subr.mxu0 0.0
  %1259 = vmatpush1.msra.mxu0 0.0
  %1260 = vmatprep.subr.mxu0 0.0
  %1261 = vmatpush1.msra.mxu0 0.0
  %1262 = vmatprep.subr.mxu0 0.0
  %1263 = vmatpush1.msra.mxu0 0.0
  %1264 = vmatprep.subr.mxu0 0.0
  %1265 = vmatpush1.msra.mxu0 0.0
  %1266 = vmatprep.subr.mxu0 0.0
  %1267 = vmatpush1.msra.mxu0 0.0
  %1268 = vmatprep.subr.mxu0 0.0
  %1269 = vmatpush1.msra.mxu0 0.0
  %1270 = vmatprep.subr.mxu0 0.0
  %1271 = vmatpush1.msra.mxu0 0.0
  %1272 = vmatprep.subr.mxu0 0.0
  %1273 = vmatpush1.msra.mxu0 0.0
  %1274 = vmatprep.subr.mxu0 0.0
  %1275 = vmatpush1.msra.mxu0 0.0
  %1276 = vmatprep.subr.mxu0 0.0
  %1277 = vmatpush1.msra.mxu0 0.0
  %1278 = vmatprep.subr.mxu0 0.0
  %1279 = vmatpush1.msra.mxu0 0.0
  %1280 = vmatprep.subr.mxu0 0.0
  %1281 = vmatpush1.msra.mxu0 0.0
  %1282 = vmatprep.subr.mxu0 0.0
  %1283 = vmatpush1.msra.mxu0 0.0
  %1284 = vmatprep.mubr.f32.mxu0 0.0
  %1285 = vmatmul.mubr.f32.gmra.mrb[0].mxu0 %v1218
  %v1286 = vpop.f32.mrb[0].mxu0
  %v1287 = vadd.f32 0.0, %v1286
  %v1288 = vpop.f32.mrb[0].mxu0
  %1289 = vdwg.mxu0
  %v1290 = vadd.f32 %v1217, %v1287
  %v1291 = vxor.u32 %v1290, 2147483648
  %v1292 = vmul.f32 %v1291, 1.442695
  %v1293 = vpow.pop %v1292
  %v1294 = vadd.f32 %v1293, 1.0
  %v1295 = vrcp.pop %v1294
  %v1296 = vmul.f32 1.0, %v1295
  %v1297 = vadd.f32 %v1287, %v844
  %1299 = vrot.lane.b32.xlu0 %v1297, 64
  %v1300 = vpop.permute.xlu0 %1299
  %v1302 = vmul.f32 %v1296, %v1300
  %1304 = vrot.lane.b32.xlu0 %v1302, 64
  %v1305 = vpop.permute.xlu0 %1304
  %v1307 = vadd.f32 %v1217, %v1305
  %v1308 = vtanh.pop %v1307
  %v1309 = vsub.f32 %v1099, %v1308
  %1311 = vrot.lane.b32.xlu0 %v1309, 96
  %v1312 = vpop.permute.xlu0 %1311
  %v1314 = vmul.f32 %v1296, %v1312
  %1316 = vrot.lane.b32.xlu0 %v1314, 32
  %v1317 = vpop.permute.xlu0 %1316
  %v1319 = vadd.f32 %v1308, %v1317
  %s1320 = scalar_lea.vmem [#allocation3], 40
  %v1321 = vld [vmem:[%s1320] sm:$0xff]
  %v1322 = vsel %vm124, %v1212, 0
  %1324 = vmatprep.subr.mxu0 0.0
  %1325 = vmatpush1.msra.mxu0 %v743
  %1326 = vmatprep.subr.mxu0 0.0
  %1327 = vmatpush1.msra.mxu0 %v744
  %1328 = vmatprep.subr.mxu0 0.0
  %1329 = vmatpush1.msra.mxu0 %v745
  %1330 = vmatprep.subr.mxu0 0.0
  %1331 = vmatpush1.msra.mxu0 %v746
  %1332 = vmatprep.subr.mxu0 0.0
  %1333 = vmatpush1.msra.mxu0 0.0
  %1334 = vmatprep.subr.mxu0 0.0
  %1335 = vmatpush1.msra.mxu0 0.0
  %1336 = vmatprep.subr.mxu0 0.0
  %1337 = vmatpush1.msra.mxu0 0.0
  %1338 = vmatprep.subr.mxu0 0.0
  %1339 = vmatpush1.msra.mxu0 0.0
  %1340 = vmatprep.subr.mxu0 0.0
  %1341 = vmatpush1.msra.mxu0 0.0
  %1342 = vmatprep.subr.mxu0 0.0
  %1343 = vmatpush1.msra.mxu0 0.0
  %1344 = vmatprep.subr.mxu0 0.0
  %1345 = vmatpush1.msra.mxu0 0.0
  %1346 = vmatprep.subr.mxu0 0.0
  %1347 = vmatpush1.msra.mxu0 0.0
  %1348 = vmatprep.subr.mxu0 0.0
  %1349 = vmatpush1.msra.mxu0 0.0
  %1350 = vmatprep.subr.mxu0 0.0
  %1351 = vmatpush1.msra.mxu0 0.0
  %1352 = vmatprep.subr.mxu0 0.0
  %1353 = vmatpush1.msra.mxu0 0.0
  %1354 = vmatprep.subr.mxu0 0.0
  %1355 = vmatpush1.msra.mxu0 0.0
  %1356 = vmatprep.subr.mxu0 0.0
  %1357 = vmatpush1.msra.mxu0 0.0
  %1358 = vmatprep.subr.mxu0 0.0
  %1359 = vmatpush1.msra.mxu0 0.0
  %1360 = vmatprep.subr.mxu0 0.0
  %1361 = vmatpush1.msra.mxu0 0.0
  %1362 = vmatprep.subr.mxu0 0.0
  %1363 = vmatpush1.msra.mxu0 0.0
  %1364 = vmatprep.subr.mxu0 0.0
  %1365 = vmatpush1.msra.mxu0 0.0
  %1366 = vmatprep.subr.mxu0 0.0
  %1367 = vmatpush1.msra.mxu0 0.0
  %1368 = vmatprep.subr.mxu0 0.0
  %1369 = vmatpush1.msra.mxu0 0.0
  %1370 = vmatprep.subr.mxu0 0.0
  %1371 = vmatpush1.msra.mxu0 0.0
  %1372 = vmatprep.subr.mxu0 0.0
  %1373 = vmatpush1.msra.mxu0 0.0
  %1374 = vmatprep.subr.mxu0 0.0
  %1375 = vmatpush1.msra.mxu0 0.0
  %1376 = vmatprep.subr.mxu0 0.0
  %1377 = vmatpush1.msra.mxu0 0.0
  %1378 = vmatprep.subr.mxu0 0.0
  %1379 = vmatpush1.msra.mxu0 0.0
  %1380 = vmatprep.subr.mxu0 0.0
  %1381 = vmatpush1.msra.mxu0 0.0
  %1382 = vmatprep.subr.mxu0 0.0
  %1383 = vmatpush1.msra.mxu0 0.0
  %1384 = vmatprep.subr.mxu0 0.0
  %1385 = vmatpush1.msra.mxu0 0.0
  %1386 = vmatprep.subr.mxu0 0.0
  %1387 = vmatpush1.msra.mxu0 0.0
  %1388 = vmatprep.mubr.f32.mxu0 0.0
  %1389 = vmatmul.mubr.f32.gmra.mrb[0].mxu0 %v1322
  %v1390 = vpop.f32.mrb[0].mxu0
  %v1391 = vadd.f32 0.0, %v1390
  %v1392 = vpop.f32.mrb[0].mxu0
  %1393 = vdwg.mxu0
  %v1394 = vadd.f32 %v1321, %v1391
  %v1395 = vxor.u32 %v1394, 2147483648
  %v1396 = vmul.f32 %v1395, 1.442695
  %v1397 = vpow.pop %v1396
  %v1398 = vadd.f32 %v1397, 1.0
  %v1399 = vrcp.pop %v1398
  %v1400 = vmul.f32 1.0, %v1399
  %v1401 = vadd.f32 %v1391, %v956
  %1403 = vrot.lane.b32.xlu0 %v1401, 64
  %v1404 = vpop.permute.xlu0 %1403
  %v1406 = vmul.f32 %v1400, %v1404
  %1408 = vrot.lane.b32.xlu0 %v1406, 64
  %v1409 = vpop.permute.xlu0 %1408
  %v1411 = vadd.f32 %v1321, %v1409
  %v1412 = vtanh.pop %v1411
  %v1413 = vsub.f32 %v1203, %v1412
  %1415 = vrot.lane.b32.xlu0 %v1413, 96
  %v1416 = vpop.permute.xlu0 %1415
  %v1418 = vmul.f32 %v1400, %v1416
  %1420 = vrot.lane.b32.xlu0 %v1418, 32
  %v1421 = vpop.permute.xlu0 %1420
  %v1423 = vadd.f32 %v1412, %v1421
  %1425 = vrot.lane.b32.xlu0 %v1319, 64
  %v1426 = vpop.permute.xlu0 %1425
  %s1428 = scalar_lea.vmem %s13, 16
  %1429 = vst.msk [vmem:[%s1428] sm:$0xff] %vm124, %v1426
  %1431 = vrot.lane.b32.xlu0 %v1423, 64
  %v1432 = vpop.permute.xlu0 %1431
  %s1434 = scalar_lea.vmem %s101, 40
  %1435 = vst.msk [vmem:[%s1434] sm:$0xff] %vm124, %v1432
  %s1436 = scalar_lea.vmem [#allocation2], 24
  %v1437 = vld [vmem:[%s1436] sm:$0xff]
  %v1438 = vsel %vm124, %v1426, 0
  %1440 = vmatprep.subr.mxu0 0.0
  %1441 = vmatpush1.msra.mxu0 %v739
  %1442 = vmatprep.subr.mxu0 0.0
  %1443 = vmatpush1.msra.mxu0 %v740
  %1444 = vmatprep.subr.mxu0 0.0
  %1445 = vmatpush1.msra.mxu0 %v741
  %1446 = vmatprep.subr.mxu0 0.0
  %1447 = vmatpush1.msra.mxu0 %v742
  %1448 = vmatprep.subr.mxu0 0.0
  %1449 = vmatpush1.msra.mxu0 0.0
  %1450 = vmatprep.subr.mxu0 0.0
  %1451 = vmatpush1.msra.mxu0 0.0
  %1452 = vmatprep.subr.mxu0 0.0
  %1453 = vmatpush1.msra.mxu0 0.0
  %1454 = vmatprep.subr.mxu0 0.0
  %1455 = vmatpush1.msra.mxu0 0.0
  %1456 = vmatprep.subr.mxu0 0.0
  %1457 = vmatpush1.msra.mxu0 0.0
  %1458 = vmatprep.subr.mxu0 0.0
  %1459 = vmatpush1.msra.mxu0 0.0
  %1460 = vmatprep.subr.mxu0 0.0
  %1461 = vmatpush1.msra.mxu0 0.0
  %1462 = vmatprep.subr.mxu0 0.0
  %1463 = vmatpush1.msra.mxu0 0.0
  %1464 = vmatprep.subr.mxu0 0.0
  %1465 = vmatpush1.msra.mxu0 0.0
  %1466 = vmatprep.subr.mxu0 0.0
  %1467 = vmatpush1.msra.mxu0 0.0
  %1468 = vmatprep.subr.mxu0 0.0
  %1469 = vmatpush1.msra.mxu0 0.0
  %1470 = vmatprep.subr.mxu0 0.0
  %1471 = vmatpush1.msra.mxu0 0.0
  %1472 = vmatprep.subr.mxu0 0.0
  %1473 = vmatpush1.msra.mxu0 0.0
  %1474 = vmatprep.subr.mxu0 0.0
  %1475 = vmatpush1.msra.mxu0 0.0
  %1476 = vmatprep.subr.mxu0 0.0
  %1477 = vmatpush1.msra.mxu0 0.0
  %1478 = vmatprep.subr.mxu0 0.0
  %1479 = vmatpush1.msra.mxu0 0.0
  %1480 = vmatprep.subr.mxu0 0.0
  %1481 = vmatpush1.msra.mxu0 0.0
  %1482 = vmatprep.subr.mxu0 0.0
  %1483 = vmatpush1.msra.mxu0 0.0
  %1484 = vmatprep.subr.mxu0 0.0
  %1485 = vmatpush1.msra.mxu0 0.0
  %1486 = vmatprep.subr.mxu0 0.0
  %1487 = vmatpush1.msra.mxu0 0.0
  %1488 = vmatprep.subr.mxu0 0.0
  %1489 = vmatpush1.msra.mxu0 0.0
  %1490 = vmatprep.subr.mxu0 0.0
  %1491 = vmatpush1.msra.mxu0 0.0
  %1492 = vmatprep.subr.mxu0 0.0
  %1493 = vmatpush1.msra.mxu0 0.0
  %1494 = vmatprep.subr.mxu0 0.0
  %1495 = vmatpush1.msra.mxu0 0.0
  %1496 = vmatprep.subr.mxu0 0.0
  %1497 = vmatpush1.msra.mxu0 0.0
  %1498 = vmatprep.subr.mxu0 0.0
  %1499 = vmatpush1.msra.mxu0 0.0
  %1500 = vmatprep.subr.mxu0 0.0
  %1501 = vmatpush1.msra.mxu0 0.0
  %1502 = vmatprep.subr.mxu0 0.0
  %1503 = vmatpush1.msra.mxu0 0.0
  %1504 = vmatprep.mubr.f32.mxu0 0.0
  %1505 = vmatmul.mubr.f32.gmra.mrb[0].mxu0 %v1438
  %v1506 = vpop.f32.mrb[0].mxu0
  %v1507 = vadd.f32 0.0, %v1506
  %v1508 = vpop.f32.mrb[0].mxu0
  %1509 = vdwg.mxu0
  %v1510 = vadd.f32 %v1437, %v1507
  %v1511 = vxor.u32 %v1510, 2147483648
  %v1512 = vmul.f32 %v1511, 1.442695
  %v1513 = vpow.pop %v1512
  %v1514 = vadd.f32 %v1513, 1.0
  %v1515 = vrcp.pop %v1514
  %v1516 = vmul.f32 1.0, %v1515
  %v1517 = vadd.f32 %v1507, %v844
  %1519 = vrot.lane.b32.xlu0 %v1517, 64
  %v1520 = vpop.permute.xlu0 %1519
  %v1522 = vmul.f32 %v1516, %v1520
  %1524 = vrot.lane.b32.xlu0 %v1522, 64
  %v1525 = vpop.permute.xlu0 %1524
  %v1527 = vadd.f32 %v1437, %v1525
  %v1528 = vtanh.pop %v1527
  %v1529 = vsub.f32 %v1319, %v1528
  %1531 = vrot.lane.b32.xlu0 %v1529, 96
  %v1532 = vpop.permute.xlu0 %1531
  %v1534 = vmul.f32 %v1516, %v1532
  %1536 = vrot.lane.b32.xlu0 %v1534, 32
  %v1537 = vpop.permute.xlu0 %1536
  %v1539 = vadd.f32 %v1528, %v1537
  %s1540 = scalar_lea.vmem [#allocation3], 32
  %v1541 = vld [vmem:[%s1540] sm:$0xff]
  %v1542 = vsel %vm124, %v1432, 0
  %1544 = vmatprep.subr.mxu0 0.0
  %1545 = vmatpush1.msra.mxu0 %v743
  %1546 = vmatprep.subr.mxu0 0.0
  %1547 = vmatpush1.msra.mxu0 %v744
  %1548 = vmatprep.subr.mxu0 0.0
  %1549 = vmatpush1.msra.mxu0 %v745
  %1550 = vmatprep.subr.mxu0 0.0
  %1551 = vmatpush1.msra.mxu0 %v746
  %1552 = vmatprep.subr.mxu0 0.0
  %1553 = vmatpush1.msra.mxu0 0.0
  %1554 = vmatprep.subr.mxu0 0.0
  %1555 = vmatpush1.msra.mxu0 0.0
  %1556 = vmatprep.subr.mxu0 0.0
  %1557 = vmatpush1.msra.mxu0 0.0
  %1558 = vmatprep.subr.mxu0 0.0
  %1559 = vmatpush1.msra.mxu0 0.0
  %1560 = vmatprep.subr.mxu0 0.0
  %1561 = vmatpush1.msra.mxu0 0.0
  %1562 = vmatprep.subr.mxu0 0.0
  %1563 = vmatpush1.msra.mxu0 0.0
  %1564 = vmatprep.subr.mxu0 0.0
  %1565 = vmatpush1.msra.mxu0 0.0
  %1566 = vmatprep.subr.mxu0 0.0
  %1567 = vmatpush1.msra.mxu0 0.0
  %1568 = vmatprep.subr.mxu0 0.0
  %1569 = vmatpush1.msra.mxu0 0.0
  %1570 = vmatprep.subr.mxu0 0.0
  %1571 = vmatpush1.msra.mxu0 0.0
  %1572 = vmatprep.subr.mxu0 0.0
  %1573 = vmatpush1.msra.mxu0 0.0
  %1574 = vmatprep.subr.mxu0 0.0
  %1575 = vmatpush1.msra.mxu0 0.0
  %1576 = vmatprep.subr.mxu0 0.0
  %1577 = vmatpush1.msra.mxu0 0.0
  %1578 = vmatprep.subr.mxu0 0.0
  %1579 = vmatpush1.msra.mxu0 0.0
  %1580 = vmatprep.subr.mxu0 0.0
  %1581 = vmatpush1.msra.mxu0 0.0
  %1582 = vmatprep.subr.mxu0 0.0
  %1583 = vmatpush1.msra.mxu0 0.0
  %1584 = vmatprep.subr.mxu0 0.0
  %1585 = vmatpush1.msra.mxu0 0.0
  %1586 = vmatprep.subr.mxu0 0.0
  %1587 = vmatpush1.msra.mxu0 0.0
  %1588 = vmatprep.subr.mxu0 0.0
  %1589 = vmatpush1.msra.mxu0 0.0
  %1590 = vmatprep.subr.mxu0 0.0
  %1591 = vmatpush1.msra.mxu0 0.0
  %1592 = vmatprep.subr.mxu0 0.0
  %1593 = vmatpush1.msra.mxu0 0.0
  %1594 = vmatprep.subr.mxu0 0.0
  %1595 = vmatpush1.msra.mxu0 0.0
  %1596 = vmatprep.subr.mxu0 0.0
  %1597 = vmatpush1.msra.mxu0 0.0
  %1598 = vmatprep.subr.mxu0 0.0
  %1599 = vmatpush1.msra.mxu0 0.0
  %1600 = vmatprep.subr.mxu0 0.0
  %1601 = vmatpush1.msra.mxu0 0.0
  %1602 = vmatprep.subr.mxu0 0.0
  %1603 = vmatpush1.msra.mxu0 0.0
  %1604 = vmatprep.subr.mxu0 0.0
  %1605 = vmatpush1.msra.mxu0 0.0
  %1606 = vmatprep.subr.mxu0 0.0
  %1607 = vmatpush1.msra.mxu0 0.0
  %1608 = vmatprep.mubr.f32.mxu0 0.0
  %1609 = vmatmul.mubr.f32.gmra.mrb[0].mxu0 %v1542
  %v1610 = vpop.f32.mrb[0].mxu0
  %v1611 = vadd.f32 0.0, %v1610
  %v1612 = vpop.f32.mrb[0].mxu0
  %1613 = vdwg.mxu0
  %v1614 = vadd.f32 %v1541, %v1611
  %v1615 = vxor.u32 %v1614, 2147483648
  %v1616 = vmul.f32 %v1615, 1.442695
  %v1617 = vpow.pop %v1616
  %v1618 = vadd.f32 %v1617, 1.0
  %v1619 = vrcp.pop %v1618
  %v1620 = vmul.f32 1.0, %v1619
  %v1621 = vadd.f32 %v1611, %v956
  %1623 = vrot.lane.b32.xlu0 %v1621, 64
  %v1624 = vpop.permute.xlu0 %1623
  %v1626 = vmul.f32 %v1620, %v1624
  %1628 = vrot.lane.b32.xlu0 %v1626, 64
  %v1629 = vpop.permute.xlu0 %1628
  %v1631 = vadd.f32 %v1541, %v1629
  %v1632 = vtanh.pop %v1631
  %v1633 = vsub.f32 %v1423, %v1632
  %1635 = vrot.lane.b32.xlu0 %v1633, 96
  %v1636 = vpop.permute.xlu0 %1635
  %v1638 = vmul.f32 %v1620, %v1636
  %1640 = vrot.lane.b32.xlu0 %v1638, 32
  %v1641 = vpop.permute.xlu0 %1640
  %v1643 = vadd.f32 %v1632, %v1641
  %1645 = vrot.lane.b32.xlu0 %v1539, 64
  %v1646 = vpop.permute.xlu0 %1645
  %s1648 = scalar_lea.vmem %s13, 24
  %1649 = vst.msk [vmem:[%s1648] sm:$0xff] %vm124, %v1646
  %1651 = vrot.lane.b32.xlu0 %v1643, 64
  %v1652 = vpop.permute.xlu0 %1651
  %s1654 = scalar_lea.vmem %s101, 32
  %1655 = vst.msk [vmem:[%s1654] sm:$0xff] %vm124, %v1652
  %s1656 = scalar_lea.vmem [#allocation2], 32
  %v1657 = vld [vmem:[%s1656] sm:$0xff]
  %v1658 = vsel %vm124, %v1646, 0
  %1660 = vmatprep.subr.mxu0 0.0
  %1661 = vmatpush1.msra.mxu0 %v739
  %1662 = vmatprep.subr.mxu0 0.0
  %1663 = vmatpush1.msra.mxu0 %v740
  %1664 = vmatprep.subr.mxu0 0.0
  %1665 = vmatpush1.msra.mxu0 %v741
  %1666 = vmatprep.subr.mxu0 0.0
  %1667 = vmatpush1.msra.mxu0 %v742
  %1668 = vmatprep.subr.mxu0 0.0
  %1669 = vmatpush1.msra.mxu0 0.0
  %1670 = vmatprep.subr.mxu0 0.0
  %1671 = vmatpush1.msra.mxu0 0.0
  %1672 = vmatprep.subr.mxu0 0.0
  %1673 = vmatpush1.msra.mxu0 0.0
  %1674 = vmatprep.subr.mxu0 0.0
  %1675 = vmatpush1.msra.mxu0 0.0
  %1676 = vmatprep.subr.mxu0 0.0
  %1677 = vmatpush1.msra.mxu0 0.0
  %1678 = vmatprep.subr.mxu0 0.0
  %1679 = vmatpush1.msra.mxu0 0.0
  %1680 = vmatprep.subr.mxu0 0.0
  %1681 = vmatpush1.msra.mxu0 0.0
  %1682 = vmatprep.subr.mxu0 0.0
  %1683 = vmatpush1.msra.mxu0 0.0
  %1684 = vmatprep.subr.mxu0 0.0
  %1685 = vmatpush1.msra.mxu0 0.0
  %1686 = vmatprep.subr.mxu0 0.0
  %1687 = vmatpush1.msra.mxu0 0.0
  %1688 = vmatprep.subr.mxu0 0.0
  %1689 = vmatpush1.msra.mxu0 0.0
  %1690 = vmatprep.subr.mxu0 0.0
  %1691 = vmatpush1.msra.mxu0 0.0
  %1692 = vmatprep.subr.mxu0 0.0
  %1693 = vmatpush1.msra.mxu0 0.0
  %1694 = vmatprep.subr.mxu0 0.0
  %1695 = vmatpush1.msra.mxu0 0.0
  %1696 = vmatprep.subr.mxu0 0.0
  %1697 = vmatpush1.msra.mxu0 0.0
  %1698 = vmatprep.subr.mxu0 0.0
  %1699 = vmatpush1.msra.mxu0 0.0
  %1700 = vmatprep.subr.mxu0 0.0
  %1701 = vmatpush1.msra.mxu0 0.0
  %1702 = vmatprep.subr.mxu0 0.0
  %1703 = vmatpush1.msra.mxu0 0.0
  %1704 = vmatprep.subr.mxu0 0.0
  %1705 = vmatpush1.msra.mxu0 0.0
  %1706 = vmatprep.subr.mxu0 0.0
  %1707 = vmatpush1.msra.mxu0 0.0
  %1708 = vmatprep.subr.mxu0 0.0
  %1709 = vmatpush1.msra.mxu0 0.0
  %1710 = vmatprep.subr.mxu0 0.0
  %1711 = vmatpush1.msra.mxu0 0.0
  %1712 = vmatprep.subr.mxu0 0.0
  %1713 = vmatpush1.msra.mxu0 0.0
  %1714 = vmatprep.subr.mxu0 0.0
  %1715 = vmatpush1.msra.mxu0 0.0
  %1716 = vmatprep.subr.mxu0 0.0
  %1717 = vmatpush1.msra.mxu0 0.0
  %1718 = vmatprep.subr.mxu0 0.0
  %1719 = vmatpush1.msra.mxu0 0.0
  %1720 = vmatprep.subr.mxu0 0.0
  %1721 = vmatpush1.msra.mxu0 0.0
  %1722 = vmatprep.subr.mxu0 0.0
  %1723 = vmatpush1.msra.mxu0 0.0
  %1724 = vmatprep.mubr.f32.mxu0 0.0
  %1725 = vmatmul.mubr.f32.gmra.mrb[0].mxu0 %v1658
  %v1726 = vpop.f32.mrb[0].mxu0
  %v1727 = vadd.f32 0.0, %v1726
  %v1728 = vpop.f32.mrb[0].mxu0
  %1729 = vdwg.mxu0
  %v1730 = vadd.f32 %v1657, %v1727
  %v1731 = vxor.u32 %v1730, 2147483648
  %v1732 = vmul.f32 %v1731, 1.442695
  %v1733 = vpow.pop %v1732
  %v1734 = vadd.f32 %v1733, 1.0
  %v1735 = vrcp.pop %v1734
  %v1736 = vmul.f32 1.0, %v1735
  %v1737 = vadd.f32 %v1727, %v844
  %1739 = vrot.lane.b32.xlu0 %v1737, 64
  %v1740 = vpop.permute.xlu0 %1739
  %v1742 = vmul.f32 %v1736, %v1740
  %1744 = vrot.lane.b32.xlu0 %v1742, 64
  %v1745 = vpop.permute.xlu0 %1744
  %v1747 = vadd.f32 %v1657, %v1745
  %v1748 = vtanh.pop %v1747
  %v1749 = vsub.f32 %v1539, %v1748
  %1751 = vrot.lane.b32.xlu0 %v1749, 96
  %v1752 = vpop.permute.xlu0 %1751
  %v1754 = vmul.f32 %v1736, %v1752
  %1756 = vrot.lane.b32.xlu0 %v1754, 32
  %v1757 = vpop.permute.xlu0 %1756
  %v1759 = vadd.f32 %v1748, %v1757
  %s1760 = scalar_lea.vmem [#allocation3], 24
  %v1761 = vld [vmem:[%s1760] sm:$0xff]
  %v1762 = vsel %vm124, %v1652, 0
  %1764 = vmatprep.subr.mxu0 0.0
  %1765 = vmatpush1.msra.mxu0 %v743
  %1766 = vmatprep.subr.mxu0 0.0
  %1767 = vmatpush1.msra.mxu0 %v744
  %1768 = vmatprep.subr.mxu0 0.0
  %1769 = vmatpush1.msra.mxu0 %v745
  %1770 = vmatprep.subr.mxu0 0.0
  %1771 = vmatpush1.msra.mxu0 %v746
  %1772 = vmatprep.subr.mxu0 0.0
  %1773 = vmatpush1.msra.mxu0 0.0
  %1774 = vmatprep.subr.mxu0 0.0
  %1775 = vmatpush1.msra.mxu0 0.0
  %1776 = vmatprep.subr.mxu0 0.0
  %1777 = vmatpush1.msra.mxu0 0.0
  %1778 = vmatprep.subr.mxu0 0.0
  %1779 = vmatpush1.msra.mxu0 0.0
  %1780 = vmatprep.subr.mxu0 0.0
  %1781 = vmatpush1.msra.mxu0 0.0
  %1782 = vmatprep.subr.mxu0 0.0
  %1783 = vmatpush1.msra.mxu0 0.0
  %1784 = vmatprep.subr.mxu0 0.0
  %1785 = vmatpush1.msra.mxu0 0.0
  %1786 = vmatprep.subr.mxu0 0.0
  %1787 = vmatpush1.msra.mxu0 0.0
  %1788 = vmatprep.subr.mxu0 0.0
  %1789 = vmatpush1.msra.mxu0 0.0
  %1790 = vmatprep.subr.mxu0 0.0
  %1791 = vmatpush1.msra.mxu0 0.0
  %1792 = vmatprep.subr.mxu0 0.0
  %1793 = vmatpush1.msra.mxu0 0.0
  %1794 = vmatprep.subr.mxu0 0.0
  %1795 = vmatpush1.msra.mxu0 0.0
  %1796 = vmatprep.subr.mxu0 0.0
  %1797 = vmatpush1.msra.mxu0 0.0
  %1798 = vmatprep.subr.mxu0 0.0
  %1799 = vmatpush1.msra.mxu0 0.0
  %1800 = vmatprep.subr.mxu0 0.0
  %1801 = vmatpush1.msra.mxu0 0.0
  %1802 = vmatprep.subr.mxu0 0.0
  %1803 = vmatpush1.msra.mxu0 0.0
  %1804 = vmatprep.subr.mxu0 0.0
  %1805 = vmatpush1.msra.mxu0 0.0
  %1806 = vmatprep.subr.mxu0 0.0
  %1807 = vmatpush1.msra.mxu0 0.0
  %1808 = vmatprep.subr.mxu0 0.0
  %1809 = vmatpush1.msra.mxu0 0.0
  %1810 = vmatprep.subr.mxu0 0.0
  %1811 = vmatpush1.msra.mxu0 0.0
  %1812 = vmatprep.subr.mxu0 0.0
  %1813 = vmatpush1.msra.mxu0 0.0
  %1814 = vmatprep.subr.mxu0 0.0
  %1815 = vmatpush1.msra.mxu0 0.0
  %1816 = vmatprep.subr.mxu0 0.0
  %1817 = vmatpush1.msra.mxu0 0.0
  %1818 = vmatprep.subr.mxu0 0.0
  %1819 = vmatpush1.msra.mxu0 0.0
  %1820 = vmatprep.subr.mxu0 0.0
  %1821 = vmatpush1.msra.mxu0 0.0
  %1822 = vmatprep.subr.mxu0 0.0
  %1823 = vmatpush1.msra.mxu0 0.0
  %1824 = vmatprep.subr.mxu0 0.0
  %1825 = vmatpush1.msra.mxu0 0.0
  %1826 = vmatprep.subr.mxu0 0.0
  %1827 = vmatpush1.msra.mxu0 0.0
  %1828 = vmatprep.mubr.f32.mxu0 0.0
  %1829 = vmatmul.mubr.f32.gmra.mrb[0].mxu0 %v1762
  %v1830 = vpop.f32.mrb[0].mxu0
  %v1831 = vadd.f32 0.0, %v1830
  %v1832 = vpop.f32.mrb[0].mxu0
  %1833 = vdwg.mxu0
  %v1834 = vadd.f32 %v1761, %v1831
  %v1835 = vxor.u32 %v1834, 2147483648
  %v1836 = vmul.f32 %v1835, 1.442695
  %v1837 = vpow.pop %v1836
  %v1838 = vadd.f32 %v1837, 1.0
  %v1839 = vrcp.pop %v1838
  %v1840 = vmul.f32 1.0, %v1839
  %v1841 = vadd.f32 %v1831, %v956
  %1843 = vrot.lane.b32.xlu0 %v1841, 64
  %v1844 = vpop.permute.xlu0 %1843
  %v1846 = vmul.f32 %v1840, %v1844
  %1848 = vrot.lane.b32.xlu0 %v1846, 64
  %v1849 = vpop.permute.xlu0 %1848
  %v1851 = vadd.f32 %v1761, %v1849
  %v1852 = vtanh.pop %v1851
  %v1853 = vsub.f32 %v1643, %v1852
  %1855 = vrot.lane.b32.xlu0 %v1853, 96
  %v1856 = vpop.permute.xlu0 %1855
  %v1858 = vmul.f32 %v1840, %v1856
  %1860 = vrot.lane.b32.xlu0 %v1858, 32
  %v1861 = vpop.permute.xlu0 %1860
  %v1863 = vadd.f32 %v1852, %v1861
  %1865 = vrot.lane.b32.xlu0 %v1759, 64
  %v1866 = vpop.permute.xlu0 %1865
  %s1868 = scalar_lea.vmem %s13, 32
  %1869 = vst.msk [vmem:[%s1868] sm:$0xff] %vm124, %v1866
  %1871 = vrot.lane.b32.xlu0 %v1863, 64
  %v1872 = vpop.permute.xlu0 %1871
  %s1874 = scalar_lea.vmem %s101, 24
  %1875 = vst.msk [vmem:[%s1874] sm:$0xff] %vm124, %v1872
  %s1876 = scalar_lea.vmem [#allocation2], 40
  %v1877 = vld [vmem:[%s1876] sm:$0xff]
  %v1878 = vsel %vm124, %v1866, 0
  %1880 = vmatprep.subr.mxu0 0.0
  %1881 = vmatpush1.msra.mxu0 %v739
  %1882 = vmatprep.subr.mxu0 0.0
  %1883 = vmatpush1.msra.mxu0 %v740
  %1884 = vmatprep.subr.mxu0 0.0
  %1885 = vmatpush1.msra.mxu0 %v741
  %1886 = vmatprep.subr.mxu0 0.0
  %1887 = vmatpush1.msra.mxu0 %v742
  %1888 = vmatprep.subr.mxu0 0.0
  %1889 = vmatpush1.msra.mxu0 0.0
  %1890 = vmatprep.subr.mxu0 0.0
  %1891 = vmatpush1.msra.mxu0 0.0
  %1892 = vmatprep.subr.mxu0 0.0
  %1893 = vmatpush1.msra.mxu0 0.0
  %1894 = vmatprep.subr.mxu0 0.0
  %1895 = vmatpush1.msra.mxu0 0.0
  %1896 = vmatprep.subr.mxu0 0.0
  %1897 = vmatpush1.msra.mxu0 0.0
  %1898 = vmatprep.subr.mxu0 0.0
  %1899 = vmatpush1.msra.mxu0 0.0
  %1900 = vmatprep.subr.mxu0 0.0
  %1901 = vmatpush1.msra.mxu0 0.0
  %1902 = vmatprep.subr.mxu0 0.0
  %1903 = vmatpush1.msra.mxu0 0.0
  %1904 = vmatprep.subr.mxu0 0.0
  %1905 = vmatpush1.msra.mxu0 0.0
  %1906 = vmatprep.subr.mxu0 0.0
  %1907 = vmatpush1.msra.mxu0 0.0
  %1908 = vmatprep.subr.mxu0 0.0
  %1909 = vmatpush1.msra.mxu0 0.0
  %1910 = vmatprep.subr.mxu0 0.0
  %1911 = vmatpush1.msra.mxu0 0.0
  %1912 = vmatprep.subr.mxu0 0.0
  %1913 = vmatpush1.msra.mxu0 0.0
  %1914 = vmatprep.subr.mxu0 0.0
  %1915 = vmatpush1.msra.mxu0 0.0
  %1916 = vmatprep.subr.mxu0 0.0
  %1917 = vmatpush1.msra.mxu0 0.0
  %1918 = vmatprep.subr.mxu0 0.0
  %1919 = vmatpush1.msra.mxu0 0.0
  %1920 = vmatprep.subr.mxu0 0.0
  %1921 = vmatpush1.msra.mxu0 0.0
  %1922 = vmatprep.subr.mxu0 0.0
  %1923 = vmatpush1.msra.mxu0 0.0
  %1924 = vmatprep.subr.mxu0 0.0
  %1925 = vmatpush1.msra.mxu0 0.0
  %1926 = vmatprep.subr.mxu0 0.0
  %1927 = vmatpush1.msra.mxu0 0.0
  %1928 = vmatprep.subr.mxu0 0.0
  %1929 = vmatpush1.msra.mxu0 0.0
  %1930 = vmatprep.subr.mxu0 0.0
  %1931 = vmatpush1.msra.mxu0 0.0
  %1932 = vmatprep.subr.mxu0 0.0
  %1933 = vmatpush1.msra.mxu0 0.0
  %1934 = vmatprep.subr.mxu0 0.0
  %1935 = vmatpush1.msra.mxu0 0.0
  %1936 = vmatprep.subr.mxu0 0.0
  %1937 = vmatpush1.msra.mxu0 0.0
  %1938 = vmatprep.subr.mxu0 0.0
  %1939 = vmatpush1.msra.mxu0 0.0
  %1940 = vmatprep.subr.mxu0 0.0
  %1941 = vmatpush1.msra.mxu0 0.0
  %1942 = vmatprep.subr.mxu0 0.0
  %1943 = vmatpush1.msra.mxu0 0.0
  %1944 = vmatprep.mubr.f32.mxu0 0.0
  %1945 = vmatmul.mubr.f32.gmra.mrb[0].mxu0 %v1878
  %v1946 = vpop.f32.mrb[0].mxu0
  %v1947 = vadd.f32 0.0, %v1946
  %v1948 = vpop.f32.mrb[0].mxu0
  %1949 = vdwg.mxu0
  %v1950 = vadd.f32 %v1877, %v1947
  %v1951 = vxor.u32 %v1950, 2147483648
  %v1952 = vmul.f32 %v1951, 1.442695
  %v1953 = vpow.pop %v1952
  %v1954 = vadd.f32 %v1953, 1.0
  %v1955 = vrcp.pop %v1954
  %v1956 = vmul.f32 1.0, %v1955
  %v1957 = vadd.f32 %v1947, %v844
  %1959 = vrot.lane.b32.xlu0 %v1957, 64
  %v1960 = vpop.permute.xlu0 %1959
  %v1962 = vmul.f32 %v1956, %v1960
  %1964 = vrot.lane.b32.xlu0 %v1962, 64
  %v1965 = vpop.permute.xlu0 %1964
  %v1967 = vadd.f32 %v1877, %v1965
  %v1968 = vtanh.pop %v1967
  %v1969 = vsub.f32 %v1759, %v1968
  %1971 = vrot.lane.b32.xlu0 %v1969, 96
  %v1972 = vpop.permute.xlu0 %1971
  %v1974 = vmul.f32 %v1956, %v1972
  %1976 = vrot.lane.b32.xlu0 %v1974, 32
  %v1977 = vpop.permute.xlu0 %1976
  %v1979 = vadd.f32 %v1968, %v1977
  %s1980 = scalar_lea.vmem [#allocation3], 16
  %v1981 = vld [vmem:[%s1980] sm:$0xff]
  %v1982 = vsel %vm124, %v1872, 0
  %1984 = vmatprep.subr.mxu0 0.0
  %1985 = vmatpush1.msra.mxu0 %v743
  %1986 = vmatprep.subr.mxu0 0.0
  %1987 = vmatpush1.msra.mxu0 %v744
  %1988 = vmatprep.subr.mxu0 0.0
  %1989 = vmatpush1.msra.mxu0 %v745
  %1990 = vmatprep.subr.mxu0 0.0
  %1991 = vmatpush1.msra.mxu0 %v746
  %1992 = vmatprep.subr.mxu0 0.0
  %1993 = vmatpush1.msra.mxu0 0.0
  %1994 = vmatprep.subr.mxu0 0.0
  %1995 = vmatpush1.msra.mxu0 0.0
  %1996 = vmatprep.subr.mxu0 0.0
  %1997 = vmatpush1.msra.mxu0 0.0
  %1998 = vmatprep.subr.mxu0 0.0
  %1999 = vmatpush1.msra.mxu0 0.0
  %2000 = vmatprep.subr.mxu0 0.0
  %2001 = vmatpush1.msra.mxu0 0.0
  %2002 = vmatprep.subr.mxu0 0.0
  %2003 = vmatpush1.msra.mxu0 0.0
  %2004 = vmatprep.subr.mxu0 0.0
  %2005 = vmatpush1.msra.mxu0 0.0
  %2006 = vmatprep.subr.mxu0 0.0
  %2007 = vmatpush1.msra.mxu0 0.0
  %2008 = vmatprep.subr.mxu0 0.0
  %2009 = vmatpush1.msra.mxu0 0.0
  %2010 = vmatprep.subr.mxu0 0.0
  %2011 = vmatpush1.msra.mxu0 0.0
  %2012 = vmatprep.subr.mxu0 0.0
  %2013 = vmatpush1.msra.mxu0 0.0
  %2014 = vmatprep.subr.mxu0 0.0
  %2015 = vmatpush1.msra.mxu0 0.0
  %2016 = vmatprep.subr.mxu0 0.0
  %2017 = vmatpush1.msra.mxu0 0.0
  %2018 = vmatprep.subr.mxu0 0.0
  %2019 = vmatpush1.msra.mxu0 0.0
  %2020 = vmatprep.subr.mxu0 0.0
  %2021 = vmatpush1.msra.mxu0 0.0
  %2022 = vmatprep.subr.mxu0 0.0
  %2023 = vmatpush1.msra.mxu0 0.0
  %2024 = vmatprep.subr.mxu0 0.0
  %2025 = vmatpush1.msra.mxu0 0.0
  %2026 = vmatprep.subr.mxu0 0.0
  %2027 = vmatpush1.msra.mxu0 0.0
  %2028 = vmatprep.subr.mxu0 0.0
  %2029 = vmatpush1.msra.mxu0 0.0
  %2030 = vmatprep.subr.mxu0 0.0
  %2031 = vmatpush1.msra.mxu0 0.0
  %2032 = vmatprep.subr.mxu0 0.0
  %2033 = vmatpush1.msra.mxu0 0.0
  %2034 = vmatprep.subr.mxu0 0.0
  %2035 = vmatpush1.msra.mxu0 0.0
  %2036 = vmatprep.subr.mxu0 0.0
  %2037 = vmatpush1.msra.mxu0 0.0
  %2038 = vmatprep.subr.mxu0 0.0
  %2039 = vmatpush1.msra.mxu0 0.0
  %2040 = vmatprep.subr.mxu0 0.0
  %2041 = vmatpush1.msra.mxu0 0.0
  %2042 = vmatprep.subr.mxu0 0.0
  %2043 = vmatpush1.msra.mxu0 0.0
  %2044 = vmatprep.subr.mxu0 0.0
  %2045 = vmatpush1.msra.mxu0 0.0
  %2046 = vmatprep.subr.mxu0 0.0
  %2047 = vmatpush1.msra.mxu0 0.0
  %2048 = vmatprep.mubr.f32.mxu0 0.0
  %2049 = vmatmul.mubr.f32.gmra.mrb[0].mxu0 %v1982
  %v2050 = vpop.f32.mrb[0].mxu0
  %v2051 = vadd.f32 0.0, %v2050
  %v2052 = vpop.f32.mrb[0].mxu0
  %2053 = vdwg.mxu0
  %v2054 = vadd.f32 %v1981, %v2051
  %v2055 = vxor.u32 %v2054, 2147483648
  %v2056 = vmul.f32 %v2055, 1.442695
  %v2057 = vpow.pop %v2056
  %v2058 = vadd.f32 %v2057, 1.0
  %v2059 = vrcp.pop %v2058
  %v2060 = vmul.f32 1.0, %v2059
  %v2061 = vadd.f32 %v2051, %v956
  %2063 = vrot.lane.b32.xlu0 %v2061, 64
  %v2064 = vpop.permute.xlu0 %2063
  %v2066 = vmul.f32 %v2060, %v2064
  %2068 = vrot.lane.b32.xlu0 %v2066, 64
  %v2069 = vpop.permute.xlu0 %2068
  %v2071 = vadd.f32 %v1981, %v2069
  %v2072 = vtanh.pop %v2071
  %v2073 = vsub.f32 %v1863, %v2072
  %2075 = vrot.lane.b32.xlu0 %v2073, 96
  %v2076 = vpop.permute.xlu0 %2075
  %v2078 = vmul.f32 %v2060, %v2076
  %2080 = vrot.lane.b32.xlu0 %v2078, 32
  %v2081 = vpop.permute.xlu0 %2080
  %v2083 = vadd.f32 %v2072, %v2081
  %2085 = vrot.lane.b32.xlu0 %v1979, 64
  %v2086 = vpop.permute.xlu0 %2085
  %s2088 = scalar_lea.vmem %s13, 40
  %2089 = vst.msk [vmem:[%s2088] sm:$0xff] %vm124, %v2086
  %2091 = vrot.lane.b32.xlu0 %v2083, 64
  %v2092 = vpop.permute.xlu0 %2091
  %s2094 = scalar_lea.vmem %s101, 16
  %2095 = vst.msk [vmem:[%s2094] sm:$0xff] %vm124, %v2092
  %s2096 = scalar_lea.vmem [#allocation2], 48
  %v2097 = vld [vmem:[%s2096] sm:$0xff]
  %v2098 = vsel %vm124, %v2086, 0
  %2100 = vmatprep.subr.mxu0 0.0
  %2101 = vmatpush1.msra.mxu0 %v739
  %2102 = vmatprep.subr.mxu0 0.0
  %2103 = vmatpush1.msra.mxu0 %v740
  %2104 = vmatprep.subr.mxu0 0.0
  %2105 = vmatpush1.msra.mxu0 %v741
  %2106 = vmatprep.subr.mxu0 0.0
  %2107 = vmatpush1.msra.mxu0 %v742
  %2108 = vmatprep.subr.mxu0 0.0
  %2109 = vmatpush1.msra.mxu0 0.0
  %2110 = vmatprep.subr.mxu0 0.0
  %2111 = vmatpush1.msra.mxu0 0.0
  %2112 = vmatprep.subr.mxu0 0.0
  %2113 = vmatpush1.msra.mxu0 0.0
  %2114 = vmatprep.subr.mxu0 0.0
  %2115 = vmatpush1.msra.mxu0 0.0
  %2116 = vmatprep.subr.mxu0 0.0
  %2117 = vmatpush1.msra.mxu0 0.0
  %2118 = vmatprep.subr.mxu0 0.0
  %2119 = vmatpush1.msra.mxu0 0.0
  %2120 = vmatprep.subr.mxu0 0.0
  %2121 = vmatpush1.msra.mxu0 0.0
  %2122 = vmatprep.subr.mxu0 0.0
  %2123 = vmatpush1.msra.mxu0 0.0
  %2124 = vmatprep.subr.mxu0 0.0
  %2125 = vmatpush1.msra.mxu0 0.0
  %2126 = vmatprep.subr.mxu0 0.0
  %2127 = vmatpush1.msra.mxu0 0.0
  %2128 = vmatprep.subr.mxu0 0.0
  %2129 = vmatpush1.msra.mxu0 0.0
  %2130 = vmatprep.subr.mxu0 0.0
  %2131 = vmatpush1.msra.mxu0 0.0
  %2132 = vmatprep.subr.mxu0 0.0
  %2133 = vmatpush1.msra.mxu0 0.0
  %2134 = vmatprep.subr.mxu0 0.0
  %2135 = vmatpush1.msra.mxu0 0.0
  %2136 = vmatprep.subr.mxu0 0.0
  %2137 = vmatpush1.msra.mxu0 0.0
  %2138 = vmatprep.subr.mxu0 0.0
  %2139 = vmatpush1.msra.mxu0 0.0
  %2140 = vmatprep.subr.mxu0 0.0
  %2141 = vmatpush1.msra.mxu0 0.0
  %2142 = vmatprep.subr.mxu0 0.0
  %2143 = vmatpush1.msra.mxu0 0.0
  %2144 = vmatprep.subr.mxu0 0.0
  %2145 = vmatpush1.msra.mxu0 0.0
  %2146 = vmatprep.subr.mxu0 0.0
  %2147 = vmatpush1.msra.mxu0 0.0
  %2148 = vmatprep.subr.mxu0 0.0
  %2149 = vmatpush1.msra.mxu0 0.0
  %2150 = vmatprep.subr.mxu0 0.0
  %2151 = vmatpush1.msra.mxu0 0.0
  %2152 = vmatprep.subr.mxu0 0.0
  %2153 = vmatpush1.msra.mxu0 0.0
  %2154 = vmatprep.subr.mxu0 0.0
  %2155 = vmatpush1.msra.mxu0 0.0
  %2156 = vmatprep.subr.mxu0 0.0
  %2157 = vmatpush1.msra.mxu0 0.0
  %2158 = vmatprep.subr.mxu0 0.0
  %2159 = vmatpush1.msra.mxu0 0.0
  %2160 = vmatprep.subr.mxu0 0.0
  %2161 = vmatpush1.msra.mxu0 0.0
  %2162 = vmatprep.subr.mxu0 0.0
  %2163 = vmatpush1.msra.mxu0 0.0
  %2164 = vmatprep.mubr.f32.mxu0 0.0
  %2165 = vmatmul.mubr.f32.gmra.mrb[0].mxu0 %v2098
  %v2166 = vpop.f32.mrb[0].mxu0
  %v2167 = vadd.f32 0.0, %v2166
  %v2168 = vpop.f32.mrb[0].mxu0
  %2169 = vdwg.mxu0
  %v2170 = vadd.f32 %v2097, %v2167
  %v2171 = vxor.u32 %v2170, 2147483648
  %v2172 = vmul.f32 %v2171, 1.442695
  %v2173 = vpow.pop %v2172
  %v2174 = vadd.f32 %v2173, 1.0
  %v2175 = vrcp.pop %v2174
  %v2176 = vmul.f32 1.0, %v2175
  %v2177 = vadd.f32 %v2167, %v844
  %2179 = vrot.lane.b32.xlu0 %v2177, 64
  %v2180 = vpop.permute.xlu0 %2179
  %v2182 = vmul.f32 %v2176, %v2180
  %2184 = vrot.lane.b32.xlu0 %v2182, 64
  %v2185 = vpop.permute.xlu0 %2184
  %v2187 = vadd.f32 %v2097, %v2185
  %v2188 = vtanh.pop %v2187
  %v2189 = vsub.f32 %v1979, %v2188
  %2191 = vrot.lane.b32.xlu0 %v2189, 96
  %v2192 = vpop.permute.xlu0 %2191
  %v2194 = vmul.f32 %v2176, %v2192
  %2196 = vrot.lane.b32.xlu0 %v2194, 32
  %v2197 = vpop.permute.xlu0 %2196
  %v2199 = vadd.f32 %v2188, %v2197
  %s2200 = scalar_lea.vmem [#allocation3], 8
  %v2201 = vld [vmem:[%s2200] sm:$0xff]
  %v2202 = vsel %vm124, %v2092, 0
  %2204 = vmatprep.subr.mxu0 0.0
  %2205 = vmatpush1.msra.mxu0 %v743
  %2206 = vmatprep.subr.mxu0 0.0
  %2207 = vmatpush1.msra.mxu0 %v744
  %2208 = vmatprep.subr.mxu0 0.0
  %2209 = vmatpush1.msra.mxu0 %v745
  %2210 = vmatprep.subr.mxu0 0.0
  %2211 = vmatpush1.msra.mxu0 %v746
  %2212 = vmatprep.subr.mxu0 0.0
  %2213 = vmatpush1.msra.mxu0 0.0
  %2214 = vmatprep.subr.mxu0 0.0
  %2215 = vmatpush1.msra.mxu0 0.0
  %2216 = vmatprep.subr.mxu0 0.0
  %2217 = vmatpush1.msra.mxu0 0.0
  %2218 = vmatprep.subr.mxu0 0.0
  %2219 = vmatpush1.msra.mxu0 0.0
  %2220 = vmatprep.subr.mxu0 0.0
  %2221 = vmatpush1.msra.mxu0 0.0
  %2222 = vmatprep.subr.mxu0 0.0
  %2223 = vmatpush1.msra.mxu0 0.0
  %2224 = vmatprep.subr.mxu0 0.0
  %2225 = vmatpush1.msra.mxu0 0.0
  %2226 = vmatprep.subr.mxu0 0.0
  %2227 = vmatpush1.msra.mxu0 0.0
  %2228 = vmatprep.subr.mxu0 0.0
  %2229 = vmatpush1.msra.mxu0 0.0
  %2230 = vmatprep.subr.mxu0 0.0
  %2231 = vmatpush1.msra.mxu0 0.0
  %2232 = vmatprep.subr.mxu0 0.0
  %2233 = vmatpush1.msra.mxu0 0.0
  %2234 = vmatprep.subr.mxu0 0.0
  %2235 = vmatpush1.msra.mxu0 0.0
  %2236 = vmatprep.subr.mxu0 0.0
  %2237 = vmatpush1.msra.mxu0 0.0
  %2238 = vmatprep.subr.mxu0 0.0
  %2239 = vmatpush1.msra.mxu0 0.0
  %2240 = vmatprep.subr.mxu0 0.0
  %2241 = vmatpush1.msra.mxu0 0.0
  %2242 = vmatprep.subr.mxu0 0.0
  %2243 = vmatpush1.msra.mxu0 0.0
  %2244 = vmatprep.subr.mxu0 0.0
  %2245 = vmatpush1.msra.mxu0 0.0
  %2246 = vmatprep.subr.mxu0 0.0
  %2247 = vmatpush1.msra.mxu0 0.0
  %2248 = vmatprep.subr.mxu0 0.0
  %2249 = vmatpush1.msra.mxu0 0.0
  %2250 = vmatprep.subr.mxu0 0.0
  %2251 = vmatpush1.msra.mxu0 0.0
  %2252 = vmatprep.subr.mxu0 0.0
  %2253 = vmatpush1.msra.mxu0 0.0
  %2254 = vmatprep.subr.mxu0 0.0
  %2255 = vmatpush1.msra.mxu0 0.0
  %2256 = vmatprep.subr.mxu0 0.0
  %2257 = vmatpush1.msra.mxu0 0.0
  %2258 = vmatprep.subr.mxu0 0.0
  %2259 = vmatpush1.msra.mxu0 0.0
  %2260 = vmatprep.subr.mxu0 0.0
  %2261 = vmatpush1.msra.mxu0 0.0
  %2262 = vmatprep.subr.mxu0 0.0
  %2263 = vmatpush1.msra.mxu0 0.0
  %2264 = vmatprep.subr.mxu0 0.0
  %2265 = vmatpush1.msra.mxu0 0.0
  %2266 = vmatprep.subr.mxu0 0.0
  %2267 = vmatpush1.msra.mxu0 0.0
  %2268 = vmatprep.mubr.f32.mxu0 0.0
  %2269 = vmatmul.mubr.f32.gmra.mrb[0].mxu0 %v2202
  %v2270 = vpop.f32.mrb[0].mxu0
  %v2271 = vadd.f32 0.0, %v2270
  %v2272 = vpop.f32.mrb[0].mxu0
  %2273 = vdwg.mxu0
  %v2274 = vadd.f32 %v2201, %v2271
  %v2275 = vxor.u32 %v2274, 2147483648
  %v2276 = vmul.f32 %v2275, 1.442695
  %v2277 = vpow.pop %v2276
  %v2278 = vadd.f32 %v2277, 1.0
  %v2279 = vrcp.pop %v2278
  %v2280 = vmul.f32 1.0, %v2279
  %v2281 = vadd.f32 %v2271, %v956
  %2283 = vrot.lane.b32.xlu0 %v2281, 64
  %v2284 = vpop.permute.xlu0 %2283
  %v2286 = vmul.f32 %v2280, %v2284
  %2288 = vrot.lane.b32.xlu0 %v2286, 64
  %v2289 = vpop.permute.xlu0 %2288
  %v2291 = vadd.f32 %v2201, %v2289
  %v2292 = vtanh.pop %v2291
  %v2293 = vsub.f32 %v2083, %v2292
  %2295 = vrot.lane.b32.xlu0 %v2293, 96
  %v2296 = vpop.permute.xlu0 %2295
  %v2298 = vmul.f32 %v2280, %v2296
  %2300 = vrot.lane.b32.xlu0 %v2298, 32
  %v2301 = vpop.permute.xlu0 %2300
  %v2303 = vadd.f32 %v2292, %v2301
  %2305 = vrot.lane.b32.xlu0 %v2199, 64
  %v2306 = vpop.permute.xlu0 %2305
  %s2308 = scalar_lea.vmem %s13, 48
  %2309 = vst.msk [vmem:[%s2308] sm:$0xff] %vm124, %v2306
  %2311 = vrot.lane.b32.xlu0 %v2303, 64
  %v2312 = vpop.permute.xlu0 %2311
  %s2314 = scalar_lea.vmem %s101, 8
  %2315 = vst.msk [vmem:[%s2314] sm:$0xff] %vm124, %v2312
  %s2316 = scalar_lea.vmem [#allocation2], 56
  %v2317 = vld [vmem:[%s2316] sm:$0xff]
  %v2318 = vsel %vm124, %v2306, 0
  %2320 = vmatprep.subr.mxu0 0.0
  %2321 = vmatpush1.msra.mxu0 %v739
  %2322 = vmatprep.subr.mxu0 0.0
  %2323 = vmatpush1.msra.mxu0 %v740
  %2324 = vmatprep.subr.mxu0 0.0
  %2325 = vmatpush1.msra.mxu0 %v741
  %2326 = vmatprep.subr.mxu0 0.0
  %2327 = vmatpush1.msra.mxu0 %v742
  %2328 = vmatprep.subr.mxu0 0.0
  %2329 = vmatpush1.msra.mxu0 0.0
  %2330 = vmatprep.subr.mxu0 0.0
  %2331 = vmatpush1.msra.mxu0 0.0
  %2332 = vmatprep.subr.mxu0 0.0
  %2333 = vmatpush1.msra.mxu0 0.0
  %2334 = vmatprep.subr.mxu0 0.0
  %2335 = vmatpush1.msra.mxu0 0.0
  %2336 = vmatprep.subr.mxu0 0.0
  %2337 = vmatpush1.msra.mxu0 0.0
  %2338 = vmatprep.subr.mxu0 0.0
  %2339 = vmatpush1.msra.mxu0 0.0
  %2340 = vmatprep.subr.mxu0 0.0
  %2341 = vmatpush1.msra.mxu0 0.0
  %2342 = vmatprep.subr.mxu0 0.0
  %2343 = vmatpush1.msra.mxu0 0.0
  %2344 = vmatprep.subr.mxu0 0.0
  %2345 = vmatpush1.msra.mxu0 0.0
  %2346 = vmatprep.subr.mxu0 0.0
  %2347 = vmatpush1.msra.mxu0 0.0
  %2348 = vmatprep.subr.mxu0 0.0
  %2349 = vmatpush1.msra.mxu0 0.0
  %2350 = vmatprep.subr.mxu0 0.0
  %2351 = vmatpush1.msra.mxu0 0.0
  %2352 = vmatprep.subr.mxu0 0.0
  %2353 = vmatpush1.msra.mxu0 0.0
  %2354 = vmatprep.subr.mxu0 0.0
  %2355 = vmatpush1.msra.mxu0 0.0
  %2356 = vmatprep.subr.mxu0 0.0
  %2357 = vmatpush1.msra.mxu0 0.0
  %2358 = vmatprep.subr.mxu0 0.0
  %2359 = vmatpush1.msra.mxu0 0.0
  %2360 = vmatprep.subr.mxu0 0.0
  %2361 = vmatpush1.msra.mxu0 0.0
  %2362 = vmatprep.subr.mxu0 0.0
  %2363 = vmatpush1.msra.mxu0 0.0
  %2364 = vmatprep.subr.mxu0 0.0
  %2365 = vmatpush1.msra.mxu0 0.0
  %2366 = vmatprep.subr.mxu0 0.0
  %2367 = vmatpush1.msra.mxu0 0.0
  %2368 = vmatprep.subr.mxu0 0.0
  %2369 = vmatpush1.msra.mxu0 0.0
  %2370 = vmatprep.subr.mxu0 0.0
  %2371 = vmatpush1.msra.mxu0 0.0
  %2372 = vmatprep.subr.mxu0 0.0
  %2373 = vmatpush1.msra.mxu0 0.0
  %2374 = vmatprep.subr.mxu0 0.0
  %2375 = vmatpush1.msra.mxu0 0.0
  %2376 = vmatprep.subr.mxu0 0.0
  %2377 = vmatpush1.msra.mxu0 0.0
  %2378 = vmatprep.subr.mxu0 0.0
  %2379 = vmatpush1.msra.mxu0 0.0
  %2380 = vmatprep.subr.mxu0 0.0
  %2381 = vmatpush1.msra.mxu0 0.0
  %2382 = vmatprep.subr.mxu0 0.0
  %2383 = vmatpush1.msra.mxu0 0.0
  %2384 = vmatprep.mubr.f32.mxu0 0.0
  %2385 = vmatmul.mubr.f32.gmra.mrb[0].mxu0 %v2318
  %v2386 = vpop.f32.mrb[0].mxu0
  %v2387 = vadd.f32 0.0, %v2386
  %v2388 = vpop.f32.mrb[0].mxu0
  %2389 = vdwg.mxu0
  %v2390 = vadd.f32 %v2317, %v2387
  %v2391 = vxor.u32 %v2390, 2147483648
  %v2392 = vmul.f32 %v2391, 1.442695
  %v2393 = vpow.pop %v2392
  %v2394 = vadd.f32 %v2393, 1.0
  %v2395 = vrcp.pop %v2394
  %v2396 = vmul.f32 1.0, %v2395
  %v2397 = vadd.f32 %v2387, %v844
  %2399 = vrot.lane.b32.xlu0 %v2397, 64
  %v2400 = vpop.permute.xlu0 %2399
  %v2402 = vmul.f32 %v2396, %v2400
  %2404 = vrot.lane.b32.xlu0 %v2402, 64
  %v2405 = vpop.permute.xlu0 %2404
  %v2407 = vadd.f32 %v2317, %v2405
  %v2408 = vtanh.pop %v2407
  %v2409 = vsub.f32 %v2199, %v2408
  %2411 = vrot.lane.b32.xlu0 %v2409, 96
  %v2412 = vpop.permute.xlu0 %2411
  %v2414 = vmul.f32 %v2396, %v2412
  %2416 = vrot.lane.b32.xlu0 %v2414, 32
  %v2417 = vpop.permute.xlu0 %2416
  %v2419 = vadd.f32 %v2408, %v2417
  %v2420 = vld [vmem:[#allocation3] sm:$0xff]
  %v2421 = vsel %vm124, %v2312, 0
  %2423 = vmatprep.subr.mxu0 0.0
  %2424 = vmatpush1.msra.mxu0 %v743
  %2425 = vmatprep.subr.mxu0 0.0
  %2426 = vmatpush1.msra.mxu0 %v744
  %2427 = vmatprep.subr.mxu0 0.0
  %2428 = vmatpush1.msra.mxu0 %v745
  %2429 = vmatprep.subr.mxu0 0.0
  %2430 = vmatpush1.msra.mxu0 %v746
  %2431 = vmatprep.subr.mxu0 0.0
  %2432 = vmatpush1.msra.mxu0 0.0
  %2433 = vmatprep.subr.mxu0 0.0
  %2434 = vmatpush1.msra.mxu0 0.0
  %2435 = vmatprep.subr.mxu0 0.0
  %2436 = vmatpush1.msra.mxu0 0.0
  %2437 = vmatprep.subr.mxu0 0.0
  %2438 = vmatpush1.msra.mxu0 0.0
  %2439 = vmatprep.subr.mxu0 0.0
  %2440 = vmatpush1.msra.mxu0 0.0
  %2441 = vmatprep.subr.mxu0 0.0
  %2442 = vmatpush1.msra.mxu0 0.0
  %2443 = vmatprep.subr.mxu0 0.0
  %2444 = vmatpush1.msra.mxu0 0.0
  %2445 = vmatprep.subr.mxu0 0.0
  %2446 = vmatpush1.msra.mxu0 0.0
  %2447 = vmatprep.subr.mxu0 0.0
  %2448 = vmatpush1.msra.mxu0 0.0
  %2449 = vmatprep.subr.mxu0 0.0
  %2450 = vmatpush1.msra.mxu0 0.0
  %2451 = vmatprep.subr.mxu0 0.0
  %2452 = vmatpush1.msra.mxu0 0.0
  %2453 = vmatprep.subr.mxu0 0.0
  %2454 = vmatpush1.msra.mxu0 0.0
  %2455 = vmatprep.subr.mxu0 0.0
  %2456 = vmatpush1.msra.mxu0 0.0
  %2457 = vmatprep.subr.mxu0 0.0
  %2458 = vmatpush1.msra.mxu0 0.0
  %2459 = vmatprep.subr.mxu0 0.0
  %2460 = vmatpush1.msra.mxu0 0.0
  %2461 = vmatprep.subr.mxu0 0.0
  %2462 = vmatpush1.msra.mxu0 0.0
  %2463 = vmatprep.subr.mxu0 0.0
  %2464 = vmatpush1.msra.mxu0 0.0
  %2465 = vmatprep.subr.mxu0 0.0
  %2466 = vmatpush1.msra.mxu0 0.0
  %2467 = vmatprep.subr.mxu0 0.0
  %2468 = vmatpush1.msra.mxu0 0.0
  %2469 = vmatprep.subr.mxu0 0.0
  %2470 = vmatpush1.msra.mxu0 0.0
  %2471 = vmatprep.subr.mxu0 0.0
  %2472 = vmatpush1.msra.mxu0 0.0
  %2473 = vmatprep.subr.mxu0 0.0
  %2474 = vmatpush1.msra.mxu0 0.0
  %2475 = vmatprep.subr.mxu0 0.0
  %2476 = vmatpush1.msra.mxu0 0.0
  %2477 = vmatprep.subr.mxu0 0.0
  %2478 = vmatpush1.msra.mxu0 0.0
  %2479 = vmatprep.subr.mxu0 0.0
  %2480 = vmatpush1.msra.mxu0 0.0
  %2481 = vmatprep.subr.mxu0 0.0
  %2482 = vmatpush1.msra.mxu0 0.0
  %2483 = vmatprep.subr.mxu0 0.0
  %2484 = vmatpush1.msra.mxu0 0.0
  %2485 = vmatprep.subr.mxu0 0.0
  %2486 = vmatpush1.msra.mxu0 0.0
  %2487 = vmatprep.mubr.f32.mxu0 0.0
  %2488 = vmatmul.mubr.f32.gmra.mrb[0].mxu0 %v2421
  %v2489 = vpop.f32.mrb[0].mxu0
  %v2490 = vadd.f32 0.0, %v2489
  %v2491 = vpop.f32.mrb[0].mxu0
  %2492 = vdwg.mxu0
  %v2493 = vadd.f32 %v2420, %v2490
  %v2494 = vxor.u32 %v2493, 2147483648
  %v2495 = vmul.f32 %v2494, 1.442695
  %v2496 = vpow.pop %v2495
  %v2497 = vadd.f32 %v2496, 1.0
  %v2498 = vrcp.pop %v2497
  %v2499 = vmul.f32 1.0, %v2498
  %v2500 = vadd.f32 %v2490, %v956
  %2502 = vrot.lane.b32.xlu0 %v2500, 64
  %v2503 = vpop.permute.xlu0 %2502
  %v2505 = vmul.f32 %v2499, %v2503
  %2507 = vrot.lane.b32.xlu0 %v2505, 64
  %v2508 = vpop.permute.xlu0 %2507
  %v2510 = vadd.f32 %v2420, %v2508
  %v2511 = vtanh.pop %v2510
  %v2512 = vsub.f32 %v2303, %v2511
  %2514 = vrot.lane.b32.xlu0 %v2512, 96
  %v2515 = vpop.permute.xlu0 %2514
  %v2517 = vmul.f32 %v2499, %v2515
  %2519 = vrot.lane.b32.xlu0 %v2517, 32
  %v2520 = vpop.permute.xlu0 %2519
  %v2522 = vadd.f32 %v2511, %v2520
  %2524 = vrot.lane.b32.xlu0 %v2419, 64
  %v2525 = vpop.permute.xlu0 %2524
  %s2527 = scalar_lea.vmem %s13, 56
  %2528 = vst.msk [vmem:[%s2527] sm:$0xff] %vm124, %v2525
  %2530 = vrot.lane.b32.xlu0 %v2522, 64
  %v2531 = vpop.permute.xlu0 %2530
  %2533 = vst.msk [vmem:[%s101] sm:$0xff] %vm124, %v2531
  %2534 = vst.msk [vmem:[#allocation4] sm:$0xff] %vm124, %v2525
  %2535 = vst.msk [vmem:[#allocation5] sm:$0xff] %vm124, %v2531
  %s2536 = ssub.s32 0, 0
  %s2537 = smul.u32 8, %s2536
  %p2538 = scmp.lt.s32.totalorder %s2537, 7
  %s2539 = scalar_select %p2538, %s2537, 7
  %s2540 = smul.addr %s2539, 8
  %s2541 = scalar_lea.vmem %s14, %s2540
  // Predicated region
  $region58: #{sentiment_bigru_forward.4} parent=0 // pred_check
    _
  $region59: #{sentiment_bigru_forward.4} parent=0 // pred_check_branch
    %2543 = sbr.rel (0) target = $region61
  $region60: #{sentiment_bigru_forward.4} parent=0 // pred_region
    _
  $region61: #{sentiment_bigru_forward.4} parent=0 // pred_fallthru
    _
  // Predicated region
  $region62: #{sentiment_bigru_forward.4} parent=0 // pred_check
    _
  $region63: #{sentiment_bigru_forward.4} parent=0 // pred_check_branch
    %2545 = sbr.rel (0) target = $region65
  $region64: #{sentiment_bigru_forward.4} parent=0 // pred_region
    %s2546 = ssub.s32 0, 0
    %s2547 = smul.u32 8, %s2546
  $region65: #{sentiment_bigru_forward.4} parent=0 // pred_fallthru
    _
  // Predicated region
  $region66: #{sentiment_bigru_forward.4} parent=0 // pred_check
    _
  $region67: #{sentiment_bigru_forward.4} parent=0 // pred_check_branch
    %2549 = sbr.rel (0) target = $region69
  $region68: #{sentiment_bigru_forward.4} parent=0 // pred_region
    _
  $region69: #{sentiment_bigru_forward.4} parent=0 // pred_fallthru
    _
  // Predicated region
  $region70: #{sentiment_bigru_forward.4} parent=0 // pred_check
    _
  $region71: #{sentiment_bigru_forward.4} parent=0 // pred_check_branch
    %2551 = sbr.rel (0) target = $region73
  $region72: #{sentiment_bigru_forward.4} parent=0 // pred_region
    %s2552 = ssub.s32 0, 0
    %s2553 = smul.u32 8, %s2552
    %p2554 = scmp.lt.s32.totalorder %s2553, 7
    %s2555 = scalar_select %p2554, %s2553, 7
    %s2556 = smul.addr %s2555, 8
    %s2557 = scalar_lea.vmem %s14, %s2556
  $region73: #{sentiment_bigru_forward.4} parent=0 // pred_fallthru
    _

</llo_original>
